<compile_context>
chip_gen: v7x
topology: tpu7x:2x2x1
jax: 0.10.0
libtpu: 0.0.40
codegen_flags: <defaults>
</compile_context>

<pallas_src>
import math
import functools

import numpy as np
import jax
import jax.numpy as jnp
from jax.experimental import pallas as pl
from jax.experimental.pallas import tpu as pltpu


# ----------------------------------------------------------------------------
# helpers
# ----------------------------------------------------------------------------
def _layernorm(x, gamma, beta, eps):
    # x: [B, S, D] f32; gamma/beta: [1, D] f32 (broadcast over B, S)
    mean = jnp.mean(x, axis=-1, keepdims=True)
    var = jnp.mean((x - mean) ** 2, axis=-1, keepdims=True)
    return (x - mean) * jax.lax.rsqrt(var + eps) * gamma + beta


def _fixed_spec(shape):
    n = len(shape)
    return pl.BlockSpec(shape, lambda l, _n=n: (0,) * _n)


def _layer_spec(shape):
    # stacked per-layer weight [L, *shape]; leading layer dim is squeezed in the kernel
    n = len(shape)
    return pl.BlockSpec((None, *shape), lambda l, _n=n: (l,) + (0,) * _n)


# ----------------------------------------------------------------------------
# fused encoder kernel: grid axis = layer index
# ----------------------------------------------------------------------------
def encoder_kernel(src_ref, w_emb_ref, b_emb_ref, pos_ref, ln0_g_ref, ln0_b_ref,
                   wqkv_ref, bqkv_ref, wo_ref, bo_ref, ln1_g_ref, ln1_b_ref,
                   w1_ref, b1_ref, w2_ref, b2_ref, ln2_g_ref, ln2_b_ref,
                   out_ref, h_ref, *, n_head, scale_emb):
    l = pl.program_id(0)
    B, S, D = h_ref.shape
    dh = D // n_head
    scale = 1.0 / math.sqrt(dh)

    # ---- step 0 only: linear embedding + positional add + encoder LayerNorm(1e-6) ----
    @pl.when(l == 0)
    def _embed():
        N = src_ref.shape[-1]
        x = src_ref[...].reshape(B * S, N).astype(jnp.bfloat16)
        emb = jnp.dot(x, w_emb_ref[...],
                      preferred_element_type=jnp.float32) + b_emb_ref[...]
        emb = emb.reshape(B, S, D)
        if scale_emb:
            emb = emb * (D ** 0.5)                  # BEFORE pos-enc, matching PyTorch
        emb = emb + pos_ref[...][:, None, :]        # pos indexed by BATCH dim (faithful)
        h_ref[...] = _layernorm(emb, ln0_g_ref[...], ln0_b_ref[...], 1e-6)

    # ---- transformer encoder layer `l` (post-norm, ReLU FFN, dropout = identity) ----
    h = h_ref[...]                                  # [B, S, D] f32, resident in VMEM
    x2 = h.reshape(B * S, D).astype(jnp.bfloat16)

    # fused Q/K/V projection: one [D, 3D] bf16 matmul, f32 accumulate
    qkv = jnp.dot(x2, wqkv_ref[...],
                  preferred_element_type=jnp.float32) + bqkv_ref[...]   # [B*S, 3D] f32

    # pack heads along a leading (head, batch) axis -> single batched einsum per stage
    def split_heads(off):
        return jnp.concatenate(
            [qkv[:, off + hh * dh: off + (hh + 1) * dh].reshape(B, S, dh)
             for hh in range(n_head)], axis=0)      # [n_head*B, S, dh]

    q = split_heads(0)
    k = split_heads(D)
    v = split_heads(2 * D)

    s = jnp.einsum('bqd,bkd->bqk', q, k, preferred_element_type=jnp.float32) * scale
    s = s - jnp.max(s, axis=-1, keepdims=True)
    p = jnp.exp(s)
    p = p * pl.reciprocal(jnp.sum(p, axis=-1, keepdims=True), approx=True)
    o = jnp.einsum('bqk,bkd->bqd', p, v, preferred_element_type=jnp.float32)

    # merge heads back (PyTorch head-concat order) and project with one K=512 matmul
    o = jnp.concatenate([o[hh * B:(hh + 1) * B] for hh in range(n_head)], axis=-1)
    attn = jnp.dot(o.reshape(B * S, D).astype(jnp.bfloat16), wo_ref[...],
                   preferred_element_type=jnp.float32) + bo_ref[...]

    y = h + attn.reshape(B, S, D)                   # residual (dropout1 = identity)
    h1 = _layernorm(y, ln1_g_ref[...], ln1_b_ref[...], 1e-5)

    # position-wise FFN (ReLU), bf16 weights, f32 accumulate
    f_in = h1.reshape(B * S, D).astype(jnp.bfloat16)
    ff = jnp.dot(f_in, w1_ref[...], preferred_element_type=jnp.float32) + b1_ref[...]
    ff = jnp.maximum(ff, 0.0).astype(jnp.bfloat16)
    ff = jnp.dot(ff, w2_ref[...], preferred_element_type=jnp.float32) + b2_ref[...]

    z = h1 + ff.reshape(B, S, D)                    # residual (dropout2 = identity)
    h_new = _layernorm(z, ln2_g_ref[...], ln2_b_ref[...], 1e-5)
    h_ref[...] = h_new

    @pl.when(l == pl.num_programs(0) - 1)
    def _store():
        out_ref[...] = h_new


# ----------------------------------------------------------------------------
# Encoder forward (single pallas_call, grid over layers)
# ----------------------------------------------------------------------------
def encoder_forward(src_seq, params, *, n_head, scale_emb=False):
    B, S, N = src_seq.shape
    D = params['w_emb'].shape[1]
    DI = params['w1'].shape[-1]
    L = params['wqkv'].shape[0]

    kernel = functools.partial(encoder_kernel, n_head=n_head, scale_emb=scale_emb)

    in_specs = [
        _fixed_spec((B, S, N)),                      # src_seq
        _fixed_spec((N, D)), _fixed_spec((1, D)),    # w_emb (bf16), b_emb
        _fixed_spec((B, D)),                         # pos (batch-indexed, faithful)
        _fixed_spec((1, D)), _fixed_spec((1, D)),    # ln0 gamma / beta
        _layer_spec((D, 3 * D)), _layer_spec((1, 3 * D)),   # wqkv (bf16), bqkv
        _layer_spec((D, D)), _layer_spec((1, D)),           # wo   (bf16), bo
        _layer_spec((1, D)), _layer_spec((1, D)),           # ln1 gamma / beta
        _layer_spec((D, DI)), _layer_spec((1, DI)),         # w1   (bf16), b1
        _layer_spec((DI, D)), _layer_spec((1, D)),          # w2   (bf16), b2
        _layer_spec((1, D)), _layer_spec((1, D)),           # ln2 gamma / beta
    ]

    out = pl.pallas_call(
        kernel,
        out_shape=jax.ShapeDtypeStruct((B, S, D), jnp.float32),
        grid_spec=pltpu.PrefetchScalarGridSpec(
            num_scalar_prefetch=0,
            grid=(L,),
            in_specs=in_specs,
            out_specs=pl.BlockSpec((B, S, D), lambda l: (0, 0, 0)),
            scratch_shapes=[pltpu.VMEM((B, S, D), jnp.float32)],   # persistent activation
        ),
        compiler_params=pltpu.CompilerParams(
            dimension_semantics=("arbitrary",),      # layers are sequentially dependent
            vmem_limit_bytes=32 * 1024 * 1024,
        ),
    )(
        src_seq,
        params['w_emb'], params['b_emb'],
        params['pos_table'][:B, 0, :],               # faithful batch-dim indexing
        params['ln0_g'], params['ln0_b'],
        params['wqkv'], params['bqkv'], params['wo'], params['bo'],
        params['ln1_g'], params['ln1_b'],
        params['w1'], params['b1'], params['w2'], params['b2'],
        params['ln2_g'], params['ln2_b'],
    )
    return (out,)


# ----------------------------------------------------------------------------
# deterministic parameter construction (per-layer weights stacked along axis 0)
# matmul weights are bf16, biases / LayerNorm params / pos table stay f32
# ----------------------------------------------------------------------------
def make_params(key, n_src_sequence, d_model, d_inner, n_layers, n_position):
    def nrm(k, shape, scale=0.02, dtype=jnp.float32):
        return (scale * jax.random.normal(k, shape)).astype(dtype)

    keys = jax.random.split(key, 4 + 8 * n_layers)
    ki = iter(keys)

    # sinusoidal positional table: [n_position, 1, d_model]
    position = np.arange(n_position, dtype=np.float64)[:, None]
    div_term = np.exp(np.arange(0, d_model, 2, dtype=np.float64)
                      * (-math.log(10000.0) / d_model))
    pos_table = np.zeros((n_position, 1, d_model), np.float32)
    pos_table[:, 0, 0::2] = np.sin(position * div_term)
    pos_table[:, 0, 1::2] = np.cos(position * div_term)

    params = {
        'w_emb': nrm(next(ki), (n_src_sequence, d_model), dtype=jnp.bfloat16),
        'b_emb': nrm(next(ki), (1, d_model)),
        'pos_table': jnp.asarray(pos_table),
        'ln0_g': jnp.ones((1, d_model), jnp.float32),
        'ln0_b': jnp.zeros((1, d_model), jnp.float32),
    }

    wqkv, bqkv, wo, bo = [], [], [], []
    ln1_g, ln1_b, ln2_g, ln2_b = [], [], [], []
    w1, b1, w2, b2 = [], [], [], []
    for _ in range(n_layers):
        wqkv.append(nrm(next(ki), (d_model, 3 * d_model), dtype=jnp.bfloat16))
        bqkv.append(nrm(next(ki), (1, 3 * d_model)))
        wo.append(nrm(next(ki), (d_model, d_model), dtype=jnp.bfloat16))
        bo.append(nrm(next(ki), (1, d_model)))
        ln1_g.append(jnp.ones((1, d_model), jnp.float32))
        ln1_b.append(jnp.zeros((1, d_model), jnp.float32))
        w1.append(nrm(next(ki), (d_model, d_inner), dtype=jnp.bfloat16))
        b1.append(nrm(next(ki), (1, d_inner)))
        w2.append(nrm(next(ki), (d_inner, d_model), dtype=jnp.bfloat16))
        b2.append(nrm(next(ki), (1, d_model)))
        ln2_g.append(jnp.ones((1, d_model), jnp.float32))
        ln2_b.append(jnp.zeros((1, d_model), jnp.float32))

    params.update({
        'wqkv': jnp.stack(wqkv), 'bqkv': jnp.stack(bqkv),
        'wo': jnp.stack(wo), 'bo': jnp.stack(bo),
        'ln1_g': jnp.stack(ln1_g), 'ln1_b': jnp.stack(ln1_b),
        'w1': jnp.stack(w1), 'b1': jnp.stack(b1),
        'w2': jnp.stack(w2), 'b2': jnp.stack(b2),
        'ln2_g': jnp.stack(ln2_g), 'ln2_b': jnp.stack(ln2_b),
    })
    return params


if __name__ == "__main__":
    # d_model / nhead are hardcoded to 512 / 8 by the module's layer stack
    B, S = 2, 8
    N_SRC_SEQUENCE = 16
    D_MODEL = 512
    N_HEAD = 8
    D_INNER = 256
    N_LAYERS = 2
    N_POSITION = 200

    key = jax.random.PRNGKey(0)
    k_params, k_src = jax.random.split(key)
    params = make_params(k_params, N_SRC_SEQUENCE, D_MODEL, D_INNER, N_LAYERS, N_POSITION)

    src_seq = jax.random.normal(k_src, (B, S, N_SRC_SEQUENCE), dtype=jnp.float32)
    src_mask = None   # accepted by the PyTorch forward but never used

    (enc_output,) = encoder_forward(src_seq, params, n_head=N_HEAD, scale_emb=False)
    enc_output = jax.block_until_ready(enc_output)

    assert enc_output.shape == (B, S, D_MODEL)
    assert bool(jnp.all(jnp.isfinite(enc_output)))
    print("KERNEL_OK")
</pallas_src>

<mosaic_0001>
module attributes {stable_mosaic.version = 11 : i64} {
  func.func @encoder_kernel(%arg0: i32, %arg1: memref<2x8x16xf32, #tpu.memory_space<vmem>>, %arg2: memref<16x512xbf16, #tpu.memory_space<vmem>>, %arg3: memref<1x512xf32, #tpu.memory_space<vmem>>, %arg4: memref<2x512xf32, #tpu.memory_space<vmem>>, %arg5: memref<1x512xf32, #tpu.memory_space<vmem>>, %arg6: memref<1x512xf32, #tpu.memory_space<vmem>>, %arg7: memref<1x512x1536xbf16, #tpu.memory_space<vmem>>, %arg8: memref<1x1x1536xf32, #tpu.memory_space<vmem>>, %arg9: memref<1x512x512xbf16, #tpu.memory_space<vmem>>, %arg10: memref<1x1x512xf32, #tpu.memory_space<vmem>>, %arg11: memref<1x1x512xf32, #tpu.memory_space<vmem>>, %arg12: memref<1x1x512xf32, #tpu.memory_space<vmem>>, %arg13: memref<1x512x256xbf16, #tpu.memory_space<vmem>>, %arg14: memref<1x1x256xf32, #tpu.memory_space<vmem>>, %arg15: memref<1x256x512xbf16, #tpu.memory_space<vmem>>, %arg16: memref<1x1x512xf32, #tpu.memory_space<vmem>>, %arg17: memref<1x1x512xf32, #tpu.memory_space<vmem>>, %arg18: memref<1x1x512xf32, #tpu.memory_space<vmem>>, %arg19: memref<2x8x512xf32, #tpu.memory_space<vmem>>, %arg20: memref<2x8x512xf32, #tpu.memory_space<vmem>>) attributes {dimension_semantics = [#tpu.dimension_semantics<arbitrary>], iteration_bounds = array<i64: 2>, scalar_prefetch = 0 : i64, scratch_operands = 1 : i64, tpu.core_type = #tpu.core_type<tc>, window_params = [{pipeline_mode = #tpu.pipeline_mode<synchronous>, transform_indices = @transform_0, window_bounds = array<i64: 2, 8, 16>}, {pipeline_mode = #tpu.pipeline_mode<synchronous>, transform_indices = @transform_1, window_bounds = array<i64: 16, 512>}, {pipeline_mode = #tpu.pipeline_mode<synchronous>, transform_indices = @transform_2, window_bounds = array<i64: 1, 512>}, {pipeline_mode = #tpu.pipeline_mode<synchronous>, transform_indices = @transform_3, window_bounds = array<i64: 2, 512>}, {pipeline_mode = #tpu.pipeline_mode<synchronous>, transform_indices = @transform_4, window_bounds = array<i64: 1, 512>}, {pipeline_mode = #tpu.pipeline_mode<synchronous>, transform_indices = @transform_5, window_bounds = array<i64: 1, 512>}, {transform_indices = @transform_6, window_bounds = array<i64: 1, 512, 1536>}, {transform_indices = @transform_7, window_bounds = array<i64: 1, 1, 1536>}, {transform_indices = @transform_8, window_bounds = array<i64: 1, 512, 512>}, {transform_indices = @transform_9, window_bounds = array<i64: 1, 1, 512>}, {transform_indices = @transform_10, window_bounds = array<i64: 1, 1, 512>}, {transform_indices = @transform_11, window_bounds = array<i64: 1, 1, 512>}, {transform_indices = @transform_12, window_bounds = array<i64: 1, 512, 256>}, {transform_indices = @transform_13, window_bounds = array<i64: 1, 1, 256>}, {transform_indices = @transform_14, window_bounds = array<i64: 1, 256, 512>}, {transform_indices = @transform_15, window_bounds = array<i64: 1, 1, 512>}, {transform_indices = @transform_16, window_bounds = array<i64: 1, 1, 512>}, {transform_indices = @transform_17, window_bounds = array<i64: 1, 1, 512>}, {pipeline_mode = #tpu.pipeline_mode<synchronous>, transform_indices = @transform_18, window_bounds = array<i64: 2, 8, 512>}]} {
    %c0_i32 = arith.constant 0 : i32
    %0 = arith.cmpi eq, %arg0, %c0_i32 : i32
    %1 = arith.extui %0 : i1 to i32
    %c0_i32_0 = arith.constant 0 : i32
    %2 = arith.cmpi ne, %1, %c0_i32_0 : i32
    scf.if %2 {
      %c0_62 = arith.constant 0 : index
      %c0_63 = arith.constant 0 : index
      %c0_64 = arith.constant 0 : index
      %179 = vector.load %arg1[%c0_62, %c0_63, %c0_64] : memref<2x8x16xf32, #tpu.memory_space<vmem>>, vector<2x8x16xf32>
      %180 = vector.shape_cast %179 : vector<2x8x16xf32> to vector<16x16xf32>
      %181 = arith.truncf %180 : vector<16x16xf32> to vector<16x16xbf16>
      %c0_65 = arith.constant 0 : index
      %c0_66 = arith.constant 0 : index
      %182 = vector.load %arg2[%c0_65, %c0_66] : memref<16x512xbf16, #tpu.memory_space<vmem>>, vector<16x512xbf16>
      %cst_67 = arith.constant dense<0.000000e+00> : vector<16x512xf32>
      %183 = tpu.matmul %181, %182, %cst_67 {dimension_numbers = #tpu.dot_dimension_numbers<[1], [0], [0], [1], [0, 0, 1, 1], [], []>} : vector<16x16xbf16>, vector<16x512xbf16>, vector<16x512xf32> -> vector<16x512xf32>
      %c0_68 = arith.constant 0 : index
      %c0_69 = arith.constant 0 : index
      %184 = vector.load %arg3[%c0_68, %c0_69] : memref<1x512xf32, #tpu.memory_space<vmem>>, vector<1x512xf32>
      %185 = vector.broadcast %184 : vector<1x512xf32> to vector<16x512xf32>
      %186 = arith.addf %183, %185 : vector<16x512xf32>
      %187 = vector.shape_cast %186 : vector<16x512xf32> to vector<2x8x512xf32>
      %c0_70 = arith.constant 0 : index
      %c0_71 = arith.constant 0 : index
      %188 = vector.load %arg4[%c0_70, %c0_71] : memref<2x512xf32, #tpu.memory_space<vmem>>, vector<2x512xf32>
      %189 = vector.shape_cast %188 : vector<2x512xf32> to vector<2x1x512xf32>
      %190 = vector.broadcast %189 : vector<2x1x512xf32> to vector<2x8x512xf32>
      %191 = arith.addf %187, %190 : vector<2x8x512xf32>
      %c0_72 = arith.constant 0 : index
      %c0_73 = arith.constant 0 : index
      %192 = vector.load %arg5[%c0_72, %c0_73] : memref<1x512xf32, #tpu.memory_space<vmem>>, vector<1x512xf32>
      %c0_74 = arith.constant 0 : index
      %c0_75 = arith.constant 0 : index
      %193 = vector.load %arg6[%c0_74, %c0_75] : memref<1x512xf32, #tpu.memory_space<vmem>>, vector<1x512xf32>
      %cst_76 = arith.constant dense<0.000000e+00> : vector<2x8xf32>
      %194 = vector.multi_reduction <add>, %191, %cst_76 [2] : vector<2x8x512xf32> to vector<2x8xf32>
      %195 = vector.shape_cast %194 : vector<2x8xf32> to vector<2x8x1xf32>
      %cst_77 = arith.constant 5.120000e+02 : f32
      %196 = vector.broadcast %cst_77 : f32 to vector<2x8x1xf32>
      %197 = arith.divf %195, %196 : vector<2x8x1xf32>
      %198 = vector.broadcast %197 : vector<2x8x1xf32> to vector<2x8x512xf32>
      %199 = arith.subf %191, %198 : vector<2x8x512xf32>
      %200 = arith.mulf %199, %199 : vector<2x8x512xf32>
      %cst_78 = arith.constant dense<0.000000e+00> : vector<2x8xf32>
      %201 = vector.multi_reduction <add>, %200, %cst_78 [2] : vector<2x8x512xf32> to vector<2x8xf32>
      %202 = vector.shape_cast %201 : vector<2x8xf32> to vector<2x8x1xf32>
      %cst_79 = arith.constant 5.120000e+02 : f32
      %203 = vector.broadcast %cst_79 : f32 to vector<2x8x1xf32>
      %204 = arith.divf %202, %203 : vector<2x8x1xf32>
      %205 = vector.broadcast %197 : vector<2x8x1xf32> to vector<2x8x512xf32>
      %206 = arith.subf %191, %205 : vector<2x8x512xf32>
      %cst_80 = arith.constant 9.99999997E-7 : f32
      %207 = vector.broadcast %cst_80 : f32 to vector<2x8x1xf32>
      %208 = arith.addf %204, %207 : vector<2x8x1xf32>
      %209 = math.rsqrt %208 : vector<2x8x1xf32>
      %210 = vector.broadcast %209 : vector<2x8x1xf32> to vector<2x8x512xf32>
      %211 = arith.mulf %206, %210 : vector<2x8x512xf32>
      %212 = vector.shape_cast %192 : vector<1x512xf32> to vector<1x1x512xf32>
      %213 = vector.broadcast %212 : vector<1x1x512xf32> to vector<2x8x512xf32>
      %214 = arith.mulf %211, %213 : vector<2x8x512xf32>
      %215 = vector.shape_cast %193 : vector<1x512xf32> to vector<1x1x512xf32>
      %216 = vector.broadcast %215 : vector<1x1x512xf32> to vector<2x8x512xf32>
      %217 = arith.addf %214, %216 : vector<2x8x512xf32>
      %c0_81 = arith.constant 0 : index
      %c0_82 = arith.constant 0 : index
      %c0_83 = arith.constant 0 : index
      %218 = vector.load %arg20[%c0_81, %c0_82, %c0_83] : memref<2x8x512xf32, #tpu.memory_space<vmem>>, vector<2x8x512xf32>
      tpu.vector_store %arg20[%c0_81, %c0_82, %c0_83], %217 {strides = array<i32>} : memref<2x8x512xf32, #tpu.memory_space<vmem>>, vector<2x8x512xf32>,
    } else {
    }
    %c0 = arith.constant 0 : index
    %c0_1 = arith.constant 0 : index
    %c0_2 = arith.constant 0 : index
    %3 = vector.load %arg20[%c0, %c0_1, %c0_2] : memref<2x8x512xf32, #tpu.memory_space<vmem>>, vector<2x8x512xf32>
    %4 = vector.shape_cast %3 : vector<2x8x512xf32> to vector<16x512xf32>
    %5 = arith.truncf %4 : vector<16x512xf32> to vector<16x512xbf16>
    %c0_3 = arith.constant 0 : index
    %c0_4 = arith.constant 0 : index
    %c0_5 = arith.constant 0 : index
    %6 = vector.load %arg7[%c0_3, %c0_4, %c0_5] : memref<1x512x1536xbf16, #tpu.memory_space<vmem>>, vector<1x512x1536xbf16>
    %7 = vector.shape_cast %6 : vector<1x512x1536xbf16> to vector<512x1536xbf16>
    %cst = arith.constant dense<0.000000e+00> : vector<16x1536xf32>
    %8 = tpu.matmul %5, %7, %cst {dimension_numbers = #tpu.dot_dimension_numbers<[1], [0], [0], [1], [0, 0, 1, 1], [], []>} : vector<16x512xbf16>, vector<512x1536xbf16>, vector<16x1536xf32> -> vector<16x1536xf32>
    %c0_6 = arith.constant 0 : index
    %c0_7 = arith.constant 0 : index
    %c0_8 = arith.constant 0 : index
    %9 = vector.load %arg8[%c0_6, %c0_7, %c0_8] : memref<1x1x1536xf32, #tpu.memory_space<vmem>>, vector<1x1x1536xf32>
    %10 = vector.shape_cast %9 : vector<1x1x1536xf32> to vector<1x1536xf32>
    %11 = vector.broadcast %10 : vector<1x1536xf32> to vector<16x1536xf32>
    %12 = arith.addf %8, %11 : vector<16x1536xf32>
    %13 = vector.extract_strided_slice %12 {offsets = [0, 0], sizes = [16, 64], strides = [1, 1]} : vector<16x1536xf32> to vector<16x64xf32>
    %14 = vector.shape_cast %13 : vector<16x64xf32> to vector<2x8x64xf32>
    %15 = vector.extract_strided_slice %12 {offsets = [0, 64], sizes = [16, 64], strides = [1, 1]} : vector<16x1536xf32> to vector<16x64xf32>
    %16 = vector.shape_cast %15 : vector<16x64xf32> to vector<2x8x64xf32>
    %17 = vector.extract_strided_slice %12 {offsets = [0, 128], sizes = [16, 64], strides = [1, 1]} : vector<16x1536xf32> to vector<16x64xf32>
    %18 = vector.shape_cast %17 : vector<16x64xf32> to vector<2x8x64xf32>
    %19 = vector.extract_strided_slice %12 {offsets = [0, 192], sizes = [16, 64], strides = [1, 1]} : vector<16x1536xf32> to vector<16x64xf32>
    %20 = vector.shape_cast %19 : vector<16x64xf32> to vector<2x8x64xf32>
    %21 = vector.extract_strided_slice %12 {offsets = [0, 256], sizes = [16, 64], strides = [1, 1]} : vector<16x1536xf32> to vector<16x64xf32>
    %22 = vector.shape_cast %21 : vector<16x64xf32> to vector<2x8x64xf32>
    %23 = vector.extract_strided_slice %12 {offsets = [0, 320], sizes = [16, 64], strides = [1, 1]} : vector<16x1536xf32> to vector<16x64xf32>
    %24 = vector.shape_cast %23 : vector<16x64xf32> to vector<2x8x64xf32>
    %25 = vector.extract_strided_slice %12 {offsets = [0, 384], sizes = [16, 64], strides = [1, 1]} : vector<16x1536xf32> to vector<16x64xf32>
    %26 = vector.shape_cast %25 : vector<16x64xf32> to vector<2x8x64xf32>
    %27 = vector.extract_strided_slice %12 {offsets = [0, 448], sizes = [16, 64], strides = [1, 1]} : vector<16x1536xf32> to vector<16x64xf32>
    %28 = vector.shape_cast %27 : vector<16x64xf32> to vector<2x8x64xf32>
    %29 = tpu.concatenate %14, %16, %18, %20, %22, %24, %26, %28 in 0 : vector<2x8x64xf32>, vector<2x8x64xf32>, vector<2x8x64xf32>, vector<2x8x64xf32>, vector<2x8x64xf32>, vector<2x8x64xf32>, vector<2x8x64xf32>, vector<2x8x64xf32> -> vector<16x8x64xf32>
    %30 = vector.extract_strided_slice %12 {offsets = [0, 512], sizes = [16, 64], strides = [1, 1]} : vector<16x1536xf32> to vector<16x64xf32>
    %31 = vector.shape_cast %30 : vector<16x64xf32> to vector<2x8x64xf32>
    %32 = vector.extract_strided_slice %12 {offsets = [0, 576], sizes = [16, 64], strides = [1, 1]} : vector<16x1536xf32> to vector<16x64xf32>
    %33 = vector.shape_cast %32 : vector<16x64xf32> to vector<2x8x64xf32>
    %34 = vector.extract_strided_slice %12 {offsets = [0, 640], sizes = [16, 64], strides = [1, 1]} : vector<16x1536xf32> to vector<16x64xf32>
    %35 = vector.shape_cast %34 : vector<16x64xf32> to vector<2x8x64xf32>
    %36 = vector.extract_strided_slice %12 {offsets = [0, 704], sizes = [16, 64], strides = [1, 1]} : vector<16x1536xf32> to vector<16x64xf32>
    %37 = vector.shape_cast %36 : vector<16x64xf32> to vector<2x8x64xf32>
    %38 = vector.extract_strided_slice %12 {offsets = [0, 768], sizes = [16, 64], strides = [1, 1]} : vector<16x1536xf32> to vector<16x64xf32>
    %39 = vector.shape_cast %38 : vector<16x64xf32> to vector<2x8x64xf32>
    %40 = vector.extract_strided_slice %12 {offsets = [0, 832], sizes = [16, 64], strides = [1, 1]} : vector<16x1536xf32> to vector<16x64xf32>
    %41 = vector.shape_cast %40 : vector<16x64xf32> to vector<2x8x64xf32>
    %42 = vector.extract_strided_slice %12 {offsets = [0, 896], sizes = [16, 64], strides = [1, 1]} : vector<16x1536xf32> to vector<16x64xf32>
    %43 = vector.shape_cast %42 : vector<16x64xf32> to vector<2x8x64xf32>
    %44 = vector.extract_strided_slice %12 {offsets = [0, 960], sizes = [16, 64], strides = [1, 1]} : vector<16x1536xf32> to vector<16x64xf32>
    %45 = vector.shape_cast %44 : vector<16x64xf32> to vector<2x8x64xf32>
    %46 = tpu.concatenate %31, %33, %35, %37, %39, %41, %43, %45 in 0 : vector<2x8x64xf32>, vector<2x8x64xf32>, vector<2x8x64xf32>, vector<2x8x64xf32>, vector<2x8x64xf32>, vector<2x8x64xf32>, vector<2x8x64xf32>, vector<2x8x64xf32> -> vector<16x8x64xf32>
    %47 = vector.extract_strided_slice %12 {offsets = [0, 1024], sizes = [16, 64], strides = [1, 1]} : vector<16x1536xf32> to vector<16x64xf32>
    %48 = vector.shape_cast %47 : vector<16x64xf32> to vector<2x8x64xf32>
    %49 = vector.extract_strided_slice %12 {offsets = [0, 1088], sizes = [16, 64], strides = [1, 1]} : vector<16x1536xf32> to vector<16x64xf32>
    %50 = vector.shape_cast %49 : vector<16x64xf32> to vector<2x8x64xf32>
    %51 = vector.extract_strided_slice %12 {offsets = [0, 1152], sizes = [16, 64], strides = [1, 1]} : vector<16x1536xf32> to vector<16x64xf32>
    %52 = vector.shape_cast %51 : vector<16x64xf32> to vector<2x8x64xf32>
    %53 = vector.extract_strided_slice %12 {offsets = [0, 1216], sizes = [16, 64], strides = [1, 1]} : vector<16x1536xf32> to vector<16x64xf32>
    %54 = vector.shape_cast %53 : vector<16x64xf32> to vector<2x8x64xf32>
    %55 = vector.extract_strided_slice %12 {offsets = [0, 1280], sizes = [16, 64], strides = [1, 1]} : vector<16x1536xf32> to vector<16x64xf32>
    %56 = vector.shape_cast %55 : vector<16x64xf32> to vector<2x8x64xf32>
    %57 = vector.extract_strided_slice %12 {offsets = [0, 1344], sizes = [16, 64], strides = [1, 1]} : vector<16x1536xf32> to vector<16x64xf32>
    %58 = vector.shape_cast %57 : vector<16x64xf32> to vector<2x8x64xf32>
    %59 = vector.extract_strided_slice %12 {offsets = [0, 1408], sizes = [16, 64], strides = [1, 1]} : vector<16x1536xf32> to vector<16x64xf32>
    %60 = vector.shape_cast %59 : vector<16x64xf32> to vector<2x8x64xf32>
    %61 = vector.extract_strided_slice %12 {offsets = [0, 1472], sizes = [16, 64], strides = [1, 1]} : vector<16x1536xf32> to vector<16x64xf32>
    %62 = vector.shape_cast %61 : vector<16x64xf32> to vector<2x8x64xf32>
    %63 = tpu.concatenate %48, %50, %52, %54, %56, %58, %60, %62 in 0 : vector<2x8x64xf32>, vector<2x8x64xf32>, vector<2x8x64xf32>, vector<2x8x64xf32>, vector<2x8x64xf32>, vector<2x8x64xf32>, vector<2x8x64xf32>, vector<2x8x64xf32> -> vector<16x8x64xf32>
    "tpu.trace_start"() <{level = 10 : i32, message = "bqd,bkd->bqk"}> : () -> ()
    %cst_9 = arith.constant dense<0.000000e+00> : vector<16x8x8xf32>
    %64 = tpu.matmul %29, %46, %cst_9 {dimension_numbers = #tpu.dot_dimension_numbers<[2], [2], [1], [1], [0, 0, 0, 1, 1, 1], [0], [0]>} : vector<16x8x64xf32>, vector<16x8x64xf32>, vector<16x8x8xf32> -> vector<16x8x8xf32>
    "tpu.trace_stop"() : () -> ()
    %cst_10 = arith.constant 1.250000e-01 : f32
    %65 = vector.broadcast %cst_10 : f32 to vector<16x8x8xf32>
    %66 = arith.mulf %64, %65 : vector<16x8x8xf32>
    %cst_11 = arith.constant dense<0xFF800000> : vector<16x8xf32>
    %67 = vector.multi_reduction <maximumf>, %66, %cst_11 [2] : vector<16x8x8xf32> to vector<16x8xf32>
    %68 = vector.shape_cast %67 : vector<16x8xf32> to vector<16x8x1xf32>
    %69 = vector.broadcast %68 : vector<16x8x1xf32> to vector<16x8x8xf32>
    %70 = arith.subf %66, %69 : vector<16x8x8xf32>
    %71 = math.exp %70 : vector<16x8x8xf32>
    %cst_12 = arith.constant dense<0.000000e+00> : vector<16x8xf32>
    %72 = vector.multi_reduction <add>, %71, %cst_12 [2] : vector<16x8x8xf32> to vector<16x8xf32>
    %73 = vector.shape_cast %72 : vector<16x8xf32> to vector<16x8x1xf32>
    %74 = tpu.reciprocal %73 {approx = true} : vector<16x8x1xf32> -> vector<16x8x1xf32>
    %75 = vector.broadcast %74 : vector<16x8x1xf32> to vector<16x8x8xf32>
    %76 = arith.mulf %71, %75 : vector<16x8x8xf32>
    "tpu.trace_start"() <{level = 10 : i32, message = "bqk,bkd->bqd"}> : () -> ()
    %cst_13 = arith.constant dense<0.000000e+00> : vector<16x8x64xf32>
    %77 = tpu.matmul %76, %63, %cst_13 {dimension_numbers = #tpu.dot_dimension_numbers<[2], [1], [1], [2], [0, 0, 0, 1, 1, 2], [0], [0]>} : vector<16x8x8xf32>, vector<16x8x64xf32>, vector<16x8x64xf32> -> vector<16x8x64xf32>
    "tpu.trace_stop"() : () -> ()
    %78 = vector.extract_strided_slice %77 {offsets = [0, 0, 0], sizes = [2, 8, 64], strides = [1, 1, 1]} : vector<16x8x64xf32> to vector<2x8x64xf32>
    %79 = vector.extract_strided_slice %77 {offsets = [2, 0, 0], sizes = [2, 8, 64], strides = [1, 1, 1]} : vector<16x8x64xf32> to vector<2x8x64xf32>
    %80 = vector.extract_strided_slice %77 {offsets = [4, 0, 0], sizes = [2, 8, 64], strides = [1, 1, 1]} : vector<16x8x64xf32> to vector<2x8x64xf32>
    %81 = vector.extract_strided_slice %77 {offsets = [6, 0, 0], sizes = [2, 8, 64], strides = [1, 1, 1]} : vector<16x8x64xf32> to vector<2x8x64xf32>
    %82 = vector.extract_strided_slice %77 {offsets = [8, 0, 0], sizes = [2, 8, 64], strides = [1, 1, 1]} : vector<16x8x64xf32> to vector<2x8x64xf32>
    %83 = vector.extract_strided_slice %77 {offsets = [10, 0, 0], sizes = [2, 8, 64], strides = [1, 1, 1]} : vector<16x8x64xf32> to vector<2x8x64xf32>
    %84 = vector.extract_strided_slice %77 {offsets = [12, 0, 0], sizes = [2, 8, 64], strides = [1, 1, 1]} : vector<16x8x64xf32> to vector<2x8x64xf32>
    %85 = vector.extract_strided_slice %77 {offsets = [14, 0, 0], sizes = [2, 8, 64], strides = [1, 1, 1]} : vector<16x8x64xf32> to vector<2x8x64xf32>
    %86 = tpu.concatenate %78, %79, %80, %81, %82, %83, %84, %85 in 2 : vector<2x8x64xf32>, vector<2x8x64xf32>, vector<2x8x64xf32>, vector<2x8x64xf32>, vector<2x8x64xf32>, vector<2x8x64xf32>, vector<2x8x64xf32>, vector<2x8x64xf32> -> vector<2x8x512xf32>
    %87 = vector.shape_cast %86 : vector<2x8x512xf32> to vector<16x512xf32>
    %88 = arith.truncf %87 : vector<16x512xf32> to vector<16x512xbf16>
    %c0_14 = arith.constant 0 : index
    %c0_15 = arith.constant 0 : index
    %c0_16 = arith.constant 0 : index
    %89 = vector.load %arg9[%c0_14, %c0_15, %c0_16] : memref<1x512x512xbf16, #tpu.memory_space<vmem>>, vector<1x512x512xbf16>
    %90 = vector.shape_cast %89 : vector<1x512x512xbf16> to vector<512x512xbf16>
    %cst_17 = arith.constant dense<0.000000e+00> : vector<16x512xf32>
    %91 = tpu.matmul %88, %90, %cst_17 {dimension_numbers = #tpu.dot_dimension_numbers<[1], [0], [0], [1], [0, 0, 1, 1], [], []>} : vector<16x512xbf16>, vector<512x512xbf16>, vector<16x512xf32> -> vector<16x512xf32>
    %c0_18 = arith.constant 0 : index
    %c0_19 = arith.constant 0 : index
    %c0_20 = arith.constant 0 : index
    %92 = vector.load %arg10[%c0_18, %c0_19, %c0_20] : memref<1x1x512xf32, #tpu.memory_space<vmem>>, vector<1x1x512xf32>
    %93 = vector.shape_cast %92 : vector<1x1x512xf32> to vector<1x512xf32>
    %94 = vector.broadcast %93 : vector<1x512xf32> to vector<16x512xf32>
    %95 = arith.addf %91, %94 : vector<16x512xf32>
    %96 = vector.shape_cast %95 : vector<16x512xf32> to vector<2x8x512xf32>
    %97 = arith.addf %3, %96 : vector<2x8x512xf32>
    %c0_21 = arith.constant 0 : index
    %c0_22 = arith.constant 0 : index
    %c0_23 = arith.constant 0 : index
    %98 = vector.load %arg11[%c0_21, %c0_22, %c0_23] : memref<1x1x512xf32, #tpu.memory_space<vmem>>, vector<1x1x512xf32>
    %99 = vector.shape_cast %98 : vector<1x1x512xf32> to vector<1x512xf32>
    %c0_24 = arith.constant 0 : index
    %c0_25 = arith.constant 0 : index
    %c0_26 = arith.constant 0 : index
    %100 = vector.load %arg12[%c0_24, %c0_25, %c0_26] : memref<1x1x512xf32, #tpu.memory_space<vmem>>, vector<1x1x512xf32>
    %101 = vector.shape_cast %100 : vector<1x1x512xf32> to vector<1x512xf32>
    %cst_27 = arith.constant dense<0.000000e+00> : vector<2x8xf32>
    %102 = vector.multi_reduction <add>, %97, %cst_27 [2] : vector<2x8x512xf32> to vector<2x8xf32>
    %103 = vector.shape_cast %102 : vector<2x8xf32> to vector<2x8x1xf32>
    %cst_28 = arith.constant 5.120000e+02 : f32
    %104 = vector.broadcast %cst_28 : f32 to vector<2x8x1xf32>
    %105 = arith.divf %103, %104 : vector<2x8x1xf32>
    %106 = vector.broadcast %105 : vector<2x8x1xf32> to vector<2x8x512xf32>
    %107 = arith.subf %97, %106 : vector<2x8x512xf32>
    %108 = arith.mulf %107, %107 : vector<2x8x512xf32>
    %cst_29 = arith.constant dense<0.000000e+00> : vector<2x8xf32>
    %109 = vector.multi_reduction <add>, %108, %cst_29 [2] : vector<2x8x512xf32> to vector<2x8xf32>
    %110 = vector.shape_cast %109 : vector<2x8xf32> to vector<2x8x1xf32>
    %cst_30 = arith.constant 5.120000e+02 : f32
    %111 = vector.broadcast %cst_30 : f32 to vector<2x8x1xf32>
    %112 = arith.divf %110, %111 : vector<2x8x1xf32>
    %113 = vector.broadcast %105 : vector<2x8x1xf32> to vector<2x8x512xf32>
    %114 = arith.subf %97, %113 : vector<2x8x512xf32>
    %cst_31 = arith.constant 9.99999974E-6 : f32
    %115 = vector.broadcast %cst_31 : f32 to vector<2x8x1xf32>
    %116 = arith.addf %112, %115 : vector<2x8x1xf32>
    %117 = math.rsqrt %116 : vector<2x8x1xf32>
    %118 = vector.broadcast %117 : vector<2x8x1xf32> to vector<2x8x512xf32>
    %119 = arith.mulf %114, %118 : vector<2x8x512xf32>
    %120 = vector.shape_cast %99 : vector<1x512xf32> to vector<1x1x512xf32>
    %121 = vector.broadcast %120 : vector<1x1x512xf32> to vector<2x8x512xf32>
    %122 = arith.mulf %119, %121 : vector<2x8x512xf32>
    %123 = vector.shape_cast %101 : vector<1x512xf32> to vector<1x1x512xf32>
    %124 = vector.broadcast %123 : vector<1x1x512xf32> to vector<2x8x512xf32>
    %125 = arith.addf %122, %124 : vector<2x8x512xf32>
    %126 = vector.shape_cast %125 : vector<2x8x512xf32> to vector<16x512xf32>
    %127 = arith.truncf %126 : vector<16x512xf32> to vector<16x512xbf16>
    %c0_32 = arith.constant 0 : index
    %c0_33 = arith.constant 0 : index
    %c0_34 = arith.constant 0 : index
    %128 = vector.load %arg13[%c0_32, %c0_33, %c0_34] : memref<1x512x256xbf16, #tpu.memory_space<vmem>>, vector<1x512x256xbf16>
    %129 = vector.shape_cast %128 : vector<1x512x256xbf16> to vector<512x256xbf16>
    %cst_35 = arith.constant dense<0.000000e+00> : vector<16x256xf32>
    %130 = tpu.matmul %127, %129, %cst_35 {dimension_numbers = #tpu.dot_dimension_numbers<[1], [0], [0], [1], [0, 0, 1, 1], [], []>} : vector<16x512xbf16>, vector<512x256xbf16>, vector<16x256xf32> -> vector<16x256xf32>
    %c0_36 = arith.constant 0 : index
    %c0_37 = arith.constant 0 : index
    %c0_38 = arith.constant 0 : index
    %131 = vector.load %arg14[%c0_36, %c0_37, %c0_38] : memref<1x1x256xf32, #tpu.memory_space<vmem>>, vector<1x1x256xf32>
    %132 = vector.shape_cast %131 : vector<1x1x256xf32> to vector<1x256xf32>
    %133 = vector.broadcast %132 : vector<1x256xf32> to vector<16x256xf32>
    %134 = arith.addf %130, %133 : vector<16x256xf32>
    %cst_39 = arith.constant 0.000000e+00 : f32
    %135 = vector.broadcast %cst_39 : f32 to vector<16x256xf32>
    %136 = arith.maximumf %134, %135 : vector<16x256xf32>
    %137 = arith.truncf %136 : vector<16x256xf32> to vector<16x256xbf16>
    %c0_40 = arith.constant 0 : index
    %c0_41 = arith.constant 0 : index
    %c0_42 = arith.constant 0 : index
    %138 = vector.load %arg15[%c0_40, %c0_41, %c0_42] : memref<1x256x512xbf16, #tpu.memory_space<vmem>>, vector<1x256x512xbf16>
    %139 = vector.shape_cast %138 : vector<1x256x512xbf16> to vector<256x512xbf16>
    %cst_43 = arith.constant dense<0.000000e+00> : vector<16x512xf32>
    %140 = tpu.matmul %137, %139, %cst_43 {dimension_numbers = #tpu.dot_dimension_numbers<[1], [0], [0], [1], [0, 0, 1, 1], [], []>} : vector<16x256xbf16>, vector<256x512xbf16>, vector<16x512xf32> -> vector<16x512xf32>
    %c0_44 = arith.constant 0 : index
    %c0_45 = arith.constant 0 : index
    %c0_46 = arith.constant 0 : index
    %141 = vector.load %arg16[%c0_44, %c0_45, %c0_46] : memref<1x1x512xf32, #tpu.memory_space<vmem>>, vector<1x1x512xf32>
    %142 = vector.shape_cast %141 : vector<1x1x512xf32> to vector<1x512xf32>
    %143 = vector.broadcast %142 : vector<1x512xf32> to vector<16x512xf32>
    %144 = arith.addf %140, %143 : vector<16x512xf32>
    %145 = vector.shape_cast %144 : vector<16x512xf32> to vector<2x8x512xf32>
    %146 = arith.addf %125, %145 : vector<2x8x512xf32>
    %c0_47 = arith.constant 0 : index
    %c0_48 = arith.constant 0 : index
    %c0_49 = arith.constant 0 : index
    %147 = vector.load %arg17[%c0_47, %c0_48, %c0_49] : memref<1x1x512xf32, #tpu.memory_space<vmem>>, vector<1x1x512xf32>
    %148 = vector.shape_cast %147 : vector<1x1x512xf32> to vector<1x512xf32>
    %c0_50 = arith.constant 0 : index
    %c0_51 = arith.constant 0 : index
    %c0_52 = arith.constant 0 : index
    %149 = vector.load %arg18[%c0_50, %c0_51, %c0_52] : memref<1x1x512xf32, #tpu.memory_space<vmem>>, vector<1x1x512xf32>
    %150 = vector.shape_cast %149 : vector<1x1x512xf32> to vector<1x512xf32>
    %cst_53 = arith.constant dense<0.000000e+00> : vector<2x8xf32>
    %151 = vector.multi_reduction <add>, %146, %cst_53 [2] : vector<2x8x512xf32> to vector<2x8xf32>
    %152 = vector.shape_cast %151 : vector<2x8xf32> to vector<2x8x1xf32>
    %cst_54 = arith.constant 5.120000e+02 : f32
    %153 = vector.broadcast %cst_54 : f32 to vector<2x8x1xf32>
    %154 = arith.divf %152, %153 : vector<2x8x1xf32>
    %155 = vector.broadcast %154 : vector<2x8x1xf32> to vector<2x8x512xf32>
    %156 = arith.subf %146, %155 : vector<2x8x512xf32>
    %157 = arith.mulf %156, %156 : vector<2x8x512xf32>
    %cst_55 = arith.constant dense<0.000000e+00> : vector<2x8xf32>
    %158 = vector.multi_reduction <add>, %157, %cst_55 [2] : vector<2x8x512xf32> to vector<2x8xf32>
    %159 = vector.shape_cast %158 : vector<2x8xf32> to vector<2x8x1xf32>
    %cst_56 = arith.constant 5.120000e+02 : f32
    %160 = vector.broadcast %cst_56 : f32 to vector<2x8x1xf32>
    %161 = arith.divf %159, %160 : vector<2x8x1xf32>
    %162 = vector.broadcast %154 : vector<2x8x1xf32> to vector<2x8x512xf32>
    %163 = arith.subf %146, %162 : vector<2x8x512xf32>
    %cst_57 = arith.constant 9.99999974E-6 : f32
    %164 = vector.broadcast %cst_57 : f32 to vector<2x8x1xf32>
    %165 = arith.addf %161, %164 : vector<2x8x1xf32>
    %166 = math.rsqrt %165 : vector<2x8x1xf32>
    %167 = vector.broadcast %166 : vector<2x8x1xf32> to vector<2x8x512xf32>
    %168 = arith.mulf %163, %167 : vector<2x8x512xf32>
    %169 = vector.shape_cast %148 : vector<1x512xf32> to vector<1x1x512xf32>
    %170 = vector.broadcast %169 : vector<1x1x512xf32> to vector<2x8x512xf32>
    %171 = arith.mulf %168, %170 : vector<2x8x512xf32>
    %172 = vector.shape_cast %150 : vector<1x512xf32> to vector<1x1x512xf32>
    %173 = vector.broadcast %172 : vector<1x1x512xf32> to vector<2x8x512xf32>
    %174 = arith.addf %171, %173 : vector<2x8x512xf32>
    %c0_58 = arith.constant 0 : index
    %c0_59 = arith.constant 0 : index
    %c0_60 = arith.constant 0 : index
    %175 = vector.load %arg20[%c0_58, %c0_59, %c0_60] : memref<2x8x512xf32, #tpu.memory_space<vmem>>, vector<2x8x512xf32>
    tpu.vector_store %arg20[%c0_58, %c0_59, %c0_60], %174 {strides = array<i32>} : memref<2x8x512xf32, #tpu.memory_space<vmem>>, vector<2x8x512xf32>,
    %c1_i32 = arith.constant 1 : i32
    %176 = arith.cmpi eq, %arg0, %c1_i32 : i32
    %177 = arith.extui %176 : i1 to i32
    %c0_i32_61 = arith.constant 0 : i32
    %178 = arith.cmpi ne, %177, %c0_i32_61 : i32
    scf.if %178 {
      %c0_62 = arith.constant 0 : index
      %c0_63 = arith.constant 0 : index
      %c0_64 = arith.constant 0 : index
      %179 = vector.load %arg19[%c0_62, %c0_63, %c0_64] : memref<2x8x512xf32, #tpu.memory_space<vmem>>, vector<2x8x512xf32>
      tpu.vector_store %arg19[%c0_62, %c0_63, %c0_64], %174 {strides = array<i32>} : memref<2x8x512xf32, #tpu.memory_space<vmem>>, vector<2x8x512xf32>,
    } else {
    }
    return
  }
  func.func @transform_0(%arg0: i32) -> (i32, i32, i32) {
    %c0_i32 = arith.constant 0 : i32
    %c0_i32_0 = arith.constant 0 : i32
    %c0_i32_1 = arith.constant 0 : i32
    %c0_i32_2 = arith.constant 0 : i32
    return %c0_i32, %c0_i32_0, %c0_i32_1 : i32, i32, i32
  }
  func.func @transform_1(%arg0: i32) -> (i32, i32) {
    %c0_i32 = arith.constant 0 : i32
    %c0_i32_0 = arith.constant 0 : i32
    %c0_i32_1 = arith.constant 0 : i32
    return %c0_i32, %c0_i32_0 : i32, i32
  }
  func.func @transform_2(%arg0: i32) -> (i32, i32) {
    %c0_i32 = arith.constant 0 : i32
    %c0_i32_0 = arith.constant 0 : i32
    %c0_i32_1 = arith.constant 0 : i32
    return %c0_i32, %c0_i32_0 : i32, i32
  }
  func.func @transform_3(%arg0: i32) -> (i32, i32) {
    %c0_i32 = arith.constant 0 : i32
    %c0_i32_0 = arith.constant 0 : i32
    %c0_i32_1 = arith.constant 0 : i32
    return %c0_i32, %c0_i32_0 : i32, i32
  }
  func.func @transform_4(%arg0: i32) -> (i32, i32) {
    %c0_i32 = arith.constant 0 : i32
    %c0_i32_0 = arith.constant 0 : i32
    %c0_i32_1 = arith.constant 0 : i32
    return %c0_i32, %c0_i32_0 : i32, i32
  }
  func.func @transform_5(%arg0: i32) -> (i32, i32) {
    %c0_i32 = arith.constant 0 : i32
    %c0_i32_0 = arith.constant 0 : i32
    %c0_i32_1 = arith.constant 0 : i32
    return %c0_i32, %c0_i32_0 : i32, i32
  }
  func.func @transform_6(%arg0: i32) -> (i32, i32, i32) {
    %c0_i32 = arith.constant 0 : i32
    %c0_i32_0 = arith.constant 0 : i32
    %c0_i32_1 = arith.constant 0 : i32
    return %arg0, %c0_i32, %c0_i32_0 : i32, i32, i32
  }
  func.func @transform_7(%arg0: i32) -> (i32, i32, i32) {
    %c0_i32 = arith.constant 0 : i32
    %c0_i32_0 = arith.constant 0 : i32
    %c0_i32_1 = arith.constant 0 : i32
    return %arg0, %c0_i32, %c0_i32_0 : i32, i32, i32
  }
  func.func @transform_8(%arg0: i32) -> (i32, i32, i32) {
    %c0_i32 = arith.constant 0 : i32
    %c0_i32_0 = arith.constant 0 : i32
    %c0_i32_1 = arith.constant 0 : i32
    return %arg0, %c0_i32, %c0_i32_0 : i32, i32, i32
  }
  func.func @transform_9(%arg0: i32) -> (i32, i32, i32) {
    %c0_i32 = arith.constant 0 : i32
    %c0_i32_0 = arith.constant 0 : i32
    %c0_i32_1 = arith.constant 0 : i32
    return %arg0, %c0_i32, %c0_i32_0 : i32, i32, i32
  }
  func.func @transform_10(%arg0: i32) -> (i32, i32, i32) {
    %c0_i32 = arith.constant 0 : i32
    %c0_i32_0 = arith.constant 0 : i32
    %c0_i32_1 = arith.constant 0 : i32
    return %arg0, %c0_i32, %c0_i32_0 : i32, i32, i32
  }
  func.func @transform_11(%arg0: i32) -> (i32, i32, i32) {
    %c0_i32 = arith.constant 0 : i32
    %c0_i32_0 = arith.constant 0 : i32
    %c0_i32_1 = arith.constant 0 : i32
    return %arg0, %c0_i32, %c0_i32_0 : i32, i32, i32
  }
  func.func @transform_12(%arg0: i32) -> (i32, i32, i32) {
    %c0_i32 = arith.constant 0 : i32
    %c0_i32_0 = arith.constant 0 : i32
    %c0_i32_1 = arith.constant 0 : i32
    return %arg0, %c0_i32, %c0_i32_0 : i32, i32, i32
  }
  func.func @transform_13(%arg0: i32) -> (i32, i32, i32) {
    %c0_i32 = arith.constant 0 : i32
    %c0_i32_0 = arith.constant 0 : i32
    %c0_i32_1 = arith.constant 0 : i32
    return %arg0, %c0_i32, %c0_i32_0 : i32, i32, i32
  }
  func.func @transform_14(%arg0: i32) -> (i32, i32, i32) {
    %c0_i32 = arith.constant 0 : i32
    %c0_i32_0 = arith.constant 0 : i32
    %c0_i32_1 = arith.constant 0 : i32
    return %arg0, %c0_i32, %c0_i32_0 : i32, i32, i32
  }
  func.func @transform_15(%arg0: i32) -> (i32, i32, i32) {
    %c0_i32 = arith.constant 0 : i32
    %c0_i32_0 = arith.constant 0 : i32
    %c0_i32_1 = arith.constant 0 : i32
    return %arg0, %c0_i32, %c0_i32_0 : i32, i32, i32
  }
  func.func @transform_16(%arg0: i32) -> (i32, i32, i32) {
    %c0_i32 = arith.constant 0 : i32
    %c0_i32_0 = arith.constant 0 : i32
    %c0_i32_1 = arith.constant 0 : i32
    return %arg0, %c0_i32, %c0_i32_0 : i32, i32, i32
  }
  func.func @transform_17(%arg0: i32) -> (i32, i32, i32) {
    %c0_i32 = arith.constant 0 : i32
    %c0_i32_0 = arith.constant 0 : i32
    %c0_i32_1 = arith.constant 0 : i32
    return %arg0, %c0_i32, %c0_i32_0 : i32, i32, i32
  }
  func.func @transform_18(%arg0: i32) -> (i32, i32, i32) {
    %c0_i32 = arith.constant 0 : i32
    %c0_i32_0 = arith.constant 0 : i32
    %c0_i32_1 = arith.constant 0 : i32
    %c0_i32_2 = arith.constant 0 : i32
    return %c0_i32, %c0_i32_0, %c0_i32_1 : i32, i32, i32
  }
}

</mosaic_0001>

<llo_original>
// kernel: tpu_custom_call.1
$region0: #{tpu_custom_call.1}
  #allocation0 [shape = 'u32[]', space=smem, size = 0x4, offset = 0x4, fixed_abs, tag = 'smem constant byte address 0x4 - core index']
  #allocation1 [shape = 'u32[144,128]{1,0:T(1,128)}', space=vmem, size = 0x12000, scoped, tag = 'internal scratch']
  #allocation2 [shape = 'f32[2,8,512]{2,1,0:T(8,128)}', space=vmem, size = 0x8000, scoped, tag = 'scratch operand']
  %s0 = inlined_call_operand.hbm [shape: f32[2,8,16], index: 0, kind: input, shape index: {}]
  %s1 = inlined_call_operand.hbm [shape: bf16[16,512], index: 1, kind: input, shape index: {}]
  %s2 = inlined_call_operand.hbm [shape: f32[1,512], index: 2, kind: input, shape index: {}]
  %s3 = inlined_call_operand.hbm [shape: f32[2,512], index: 3, kind: input, shape index: {}]
  %s4 = inlined_call_operand.hbm [shape: f32[1,512], index: 4, kind: input, shape index: {}]
  %s5 = inlined_call_operand.hbm [shape: f32[1,512], index: 5, kind: input, shape index: {}]
  %s6 = inlined_call_operand.hbm [shape: bf16[2,512,1536], index: 6, kind: input, shape index: {}]
  %s7 = inlined_call_operand.hbm [shape: f32[2,1,1536], index: 7, kind: input, shape index: {}]
  %s8 = inlined_call_operand.hbm [shape: bf16[2,512,512], index: 8, kind: input, shape index: {}]
  %s9 = inlined_call_operand.hbm [shape: f32[2,1,512], index: 9, kind: input, shape index: {}]
  %s10 = inlined_call_operand.hbm [shape: f32[2,1,512], index: 10, kind: input, shape index: {}]
  %s11 = inlined_call_operand.hbm [shape: f32[2,1,512], index: 11, kind: input, shape index: {}]
  %s12 = inlined_call_operand.hbm [shape: bf16[2,512,256], index: 12, kind: input, shape index: {}]
  %s13 = inlined_call_operand.hbm [shape: f32[2,1,256], index: 13, kind: input, shape index: {}]
  %s14 = inlined_call_operand.hbm [shape: bf16[2,256,512], index: 14, kind: input, shape index: {}]
  %s15 = inlined_call_operand.hbm [shape: f32[2,1,512], index: 15, kind: input, shape index: {}]
  %s16 = inlined_call_operand.hbm [shape: f32[2,1,512], index: 16, kind: input, shape index: {}]
  %s17 = inlined_call_operand.hbm [shape: f32[2,1,512], index: 17, kind: input, shape index: {}]
  %s18 = inlined_call_operand.hbm [shape: f32[2,8,512], index: 18, kind: output, shape index: {}]
  %s19 = sld [smem:[#allocation0]]
  $region185: #{tpu_custom_call.1} parent=0
    _
  %s21 = ssub.s32 1, %s19
  %s22 = scalar_select 0, %s21, %s19
  $region1: #{tpu_custom_call.1} parent=0
    #allocation3 [shape = 'u8[8192]{0}', space=vmem, size = 0x2000, scoped, tag = 'input window, operand 0, single buffered']
    #allocation4 [shape = 's32[2]{0}', space=sflag, size = 0x8, scoped, tag = 'scoped memory for tpu_custom_call.1']
    #allocation5 [shape = 's32[2]{0}', space=sflag, size = 0x8, scoped, tag = 'scoped memory for tpu_custom_call.1']
    #allocation6 [shape = 'u8[16384]{0}', space=vmem, size = 0x4000, scoped, tag = 'input window, operand 1, single buffered']
    #allocation7 [shape = 's32[1]{0}', space=sflag, size = 0x4, scoped, tag = 'scoped memory for tpu_custom_call.1']
    #allocation8 [shape = 'u8[2048]{0}', space=vmem, size = 0x800, scoped, tag = 'input window, operand 2, single buffered']
    #allocation9 [shape = 'u8[4096]{0}', space=vmem, size = 0x1000, scoped, tag = 'input window, operand 3, single buffered']
    #allocation10 [shape = 's32[1]{0}', space=sflag, size = 0x4, scoped, tag = 'scoped memory for tpu_custom_call.1']
    #allocation11 [shape = 'u8[2048]{0}', space=vmem, size = 0x800, scoped, tag = 'input window, operand 4, single buffered']
    #allocation12 [shape = 'u8[2048]{0}', space=vmem, size = 0x800, scoped, tag = 'input window, operand 5, single buffered']
    #allocation13 [shape = 's32[1]{0}', space=sflag, size = 0x4, scoped, tag = 'scoped memory for tpu_custom_call.1']
    #allocation14 [shape = 'u8[3145728]{0}', space=vmem, size = 0x300000, scoped, tag = 'input window, operand 6']
    #allocation15 [shape = 'u8[12288]{0}', space=vmem, size = 0x3000, scoped, tag = 'input window, operand 7']
    #allocation16 [shape = 'u8[1048576]{0}', space=vmem, size = 0x100000, scoped, tag = 'input window, operand 8']
    #allocation17 [shape = 'u8[4096]{0}', space=vmem, size = 0x1000, scoped, tag = 'input window, operand 9']
    #allocation18 [shape = 'u8[4096]{0}', space=vmem, size = 0x1000, scoped, tag = 'input window, operand 10']
    #allocation19 [shape = 'u8[4096]{0}', space=vmem, size = 0x1000, scoped, tag = 'input window, operand 11']
    #allocation20 [shape = 'u8[524288]{0}', space=vmem, size = 0x80000, scoped, tag = 'input window, operand 12']
    #allocation21 [shape = 'u8[2048]{0}', space=vmem, size = 0x800, scoped, tag = 'input window, operand 13']
    #allocation22 [shape = 'u8[524288]{0}', space=vmem, size = 0x80000, scoped, tag = 'input window, operand 14']
    #allocation23 [shape = 'u8[4096]{0}', space=vmem, size = 0x1000, scoped, tag = 'input window, operand 15']
    #allocation24 [shape = 'u8[4096]{0}', space=vmem, size = 0x1000, scoped, tag = 'input window, operand 16']
    #allocation25 [shape = 'u8[4096]{0}', space=vmem, size = 0x1000, scoped, tag = 'input window, operand 17']
    #allocation26 [shape = 'u8[32768]{0}', space=vmem, size = 0x8000, scoped, tag = 'output window, operand 0, single buffered']
    %23 = vsyncpa [#allocation4], 0
    %24 = vsyncpa [#allocation7], 0
    %25 = vsyncpa [#allocation10], 0
    %26 = vsyncpa [#allocation13], 0
    %27 = vsyncpa [#allocation5], 0
    loop: start=0, step=1, limit=4
    $region2: #{tpu_custom_call.1} parent=1 // loop_pre_header
      _
    $region3: #{tpu_custom_call.1} parent=1 // loop_header
      %s29 = sphi 0, %s33
      %p30 = scmp.ge.s32.totalorder %s29, 4
      %s37 = sphi 0, %s37
      %s39 = sphi 0, %s37
      %s40 = sphi 0, %s39
      %s54 = sphi 0, %s40
      %s58 = sphi 0, %s58
      %s60 = sphi 0, %s58
      %s61 = sphi 0, %s60
      %s75 = sphi 0, %s61
      %s79 = sphi 0, %s79
      %s81 = sphi 0, %s79
      %s82 = sphi 0, %s81
      %s96 = sphi 0, %s82
      %s100 = sphi 0, %s100
      %s102 = sphi 0, %s100
      %s103 = sphi 0, %s102
      %s117 = sphi 0, %s103
      %s121 = sphi 0, %s121
      %s123 = sphi 0, %s121
      %s124 = sphi 0, %s123
      %s138 = sphi 0, %s124
      %s142 = sphi 0, %s142
      %s144 = sphi 0, %s142
      %s145 = sphi 0, %s144
      %s159 = sphi 0, %s145
      %s165 = sphi 0, %s167
      %s168 = sphi 0, %s165
      %s169 = sphi 0, %s168
      %s185 = sphi 0, %s169
      %s191 = sphi 0, %s193
      %s194 = sphi 0, %s191
      %s195 = sphi 0, %s194
      %s211 = sphi 0, %s195
      %s217 = sphi 0, %s219
      %s220 = sphi 0, %s217
      %s221 = sphi 0, %s220
      %s237 = sphi 0, %s221
      %s243 = sphi 0, %s245
      %s246 = sphi 0, %s243
      %s247 = sphi 0, %s246
      %s263 = sphi 0, %s247
      %s269 = sphi 0, %s271
      %s272 = sphi 0, %s269
      %s273 = sphi 0, %s272
      %s289 = sphi 0, %s273
      %s295 = sphi 0, %s297
      %s298 = sphi 0, %s295
      %s299 = sphi 0, %s298
      %s315 = sphi 0, %s299
      %s321 = sphi 0, %s323
      %s324 = sphi 0, %s321
      %s325 = sphi 0, %s324
      %s341 = sphi 0, %s325
      %s347 = sphi 0, %s349
      %s350 = sphi 0, %s347
      %s351 = sphi 0, %s350
      %s367 = sphi 0, %s351
      %s373 = sphi 0, %s375
      %s376 = sphi 0, %s373
      %s377 = sphi 0, %s376
      %s393 = sphi 0, %s377
      %s399 = sphi 0, %s401
      %s402 = sphi 0, %s399
      %s403 = sphi 0, %s402
      %s419 = sphi 0, %s403
      %s425 = sphi 0, %s427
      %s428 = sphi 0, %s425
      %s429 = sphi 0, %s428
      %s445 = sphi 0, %s429
      %s451 = sphi 0, %s453
      %s454 = sphi 0, %s451
      %s455 = sphi 0, %s454
      %s471 = sphi 0, %s455
      %s475 = sphi 0, %s475
      %s477 = sphi 0, %s475
      %s478 = sphi 0, %s477
      %s492 = sphi 0, %s478
    $region4: #{tpu_custom_call.1} parent=1 // loop_header_branch
      %32 = sbr.rel (%p30) target = $region8
    $region5: #{tpu_custom_call.1} parent=1 // loop_body
      %s34 = ssub.s32 %s29, 1
      %s35 = ssub.s32 %s29, 2
      %s36 = sadd.s32 %s29, 1
      %s38 = sadd.s32 %s37, 1
      %p41 = scmp.eq.s32.totalorder %s29, 1
      %p42 = scmp.ne.s32.totalorder %s37, %s39
      %p43 = scmp.eq.s32.totalorder %s29, 0
      %p44 = por %p42, %p43
      %p45 = scmp.ne.s32.totalorder %s37, %s39
      %p46 = scmp.eq.s32.totalorder %s34, 1
      %p47 = por %p45, %p46
      %p48 = scmp.ne.s32.totalorder %s39, %s40
      %p49 = scmp.eq.s32.totalorder %s34, 0
      %p50 = por %p48, %p49
      %p51 = scmp.ne.s32.totalorder %s39, %s40
      %p52 = scmp.eq.s32.totalorder %s35, 1
      %p53 = por %p51, %p52
      %p55 = scmp.ne.s32.totalorder %s40, %s54
      %p56 = scmp.eq.s32.totalorder %s35, 0
      %p57 = por %p55, %p56
      %s59 = sadd.s32 %s58, 1
      %p62 = scmp.eq.s32.totalorder %s29, 1
      %p63 = scmp.ne.s32.totalorder %s58, %s60
      %p64 = scmp.eq.s32.totalorder %s29, 0
      %p65 = por %p63, %p64
      %p66 = scmp.ne.s32.totalorder %s58, %s60
      %p67 = scmp.eq.s32.totalorder %s34, 1
      %p68 = por %p66, %p67
      %p69 = scmp.ne.s32.totalorder %s60, %s61
      %p70 = scmp.eq.s32.totalorder %s34, 0
      %p71 = por %p69, %p70
      %p72 = scmp.ne.s32.totalorder %s60, %s61
      %p73 = scmp.eq.s32.totalorder %s35, 1
      %p74 = por %p72, %p73
      %p76 = scmp.ne.s32.totalorder %s61, %s75
      %p77 = scmp.eq.s32.totalorder %s35, 0
      %p78 = por %p76, %p77
      %s80 = sadd.s32 %s79, 1
      %p83 = scmp.eq.s32.totalorder %s29, 1
      %p84 = scmp.ne.s32.totalorder %s79, %s81
      %p85 = scmp.eq.s32.totalorder %s29, 0
      %p86 = por %p84, %p85
      %p87 = scmp.ne.s32.totalorder %s79, %s81
      %p88 = scmp.eq.s32.totalorder %s34, 1
      %p89 = por %p87, %p88
      %p90 = scmp.ne.s32.totalorder %s81, %s82
      %p91 = scmp.eq.s32.totalorder %s34, 0
      %p92 = por %p90, %p91
      %p93 = scmp.ne.s32.totalorder %s81, %s82
      %p94 = scmp.eq.s32.totalorder %s35, 1
      %p95 = por %p93, %p94
      %p97 = scmp.ne.s32.totalorder %s82, %s96
      %p98 = scmp.eq.s32.totalorder %s35, 0
      %p99 = por %p97, %p98
      %s101 = sadd.s32 %s100, 1
      %p104 = scmp.eq.s32.totalorder %s29, 1
      %p105 = scmp.ne.s32.totalorder %s100, %s102
      %p106 = scmp.eq.s32.totalorder %s29, 0
      %p107 = por %p105, %p106
      %p108 = scmp.ne.s32.totalorder %s100, %s102
      %p109 = scmp.eq.s32.totalorder %s34, 1
      %p110 = por %p108, %p109
      %p111 = scmp.ne.s32.totalorder %s102, %s103
      %p112 = scmp.eq.s32.totalorder %s34, 0
      %p113 = por %p111, %p112
      %p114 = scmp.ne.s32.totalorder %s102, %s103
      %p115 = scmp.eq.s32.totalorder %s35, 1
      %p116 = por %p114, %p115
      %p118 = scmp.ne.s32.totalorder %s103, %s117
      %p119 = scmp.eq.s32.totalorder %s35, 0
      %p120 = por %p118, %p119
      %s122 = sadd.s32 %s121, 1
      %p125 = scmp.eq.s32.totalorder %s29, 1
      %p126 = scmp.ne.s32.totalorder %s121, %s123
      %p127 = scmp.eq.s32.totalorder %s29, 0
      %p128 = por %p126, %p127
      %p129 = scmp.ne.s32.totalorder %s121, %s123
      %p130 = scmp.eq.s32.totalorder %s34, 1
      %p131 = por %p129, %p130
      %p132 = scmp.ne.s32.totalorder %s123, %s124
      %p133 = scmp.eq.s32.totalorder %s34, 0
      %p134 = por %p132, %p133
      %p135 = scmp.ne.s32.totalorder %s123, %s124
      %p136 = scmp.eq.s32.totalorder %s35, 1
      %p137 = por %p135, %p136
      %p139 = scmp.ne.s32.totalorder %s124, %s138
      %p140 = scmp.eq.s32.totalorder %s35, 0
      %p141 = por %p139, %p140
      %s143 = sadd.s32 %s142, 1
      %p146 = scmp.eq.s32.totalorder %s29, 1
      %p147 = scmp.ne.s32.totalorder %s142, %s144
      %p148 = scmp.eq.s32.totalorder %s29, 0
      %p149 = por %p147, %p148
      %p150 = scmp.ne.s32.totalorder %s142, %s144
      %p151 = scmp.eq.s32.totalorder %s34, 1
      %p152 = por %p150, %p151
      %p153 = scmp.ne.s32.totalorder %s144, %s145
      %p154 = scmp.eq.s32.totalorder %s34, 0
      %p155 = por %p153, %p154
      %p156 = scmp.ne.s32.totalorder %s144, %s145
      %p157 = scmp.eq.s32.totalorder %s35, 1
      %p158 = por %p156, %p157
      %p160 = scmp.ne.s32.totalorder %s145, %s159
      %p161 = scmp.eq.s32.totalorder %s35, 0
      %p162 = por %p160, %p161
      %s163 = ssub.s32 %s29, %s36
      %p164 = scmp.eq.s32.totalorder %s163, 0
      %s166 = sadd.s32 %s165, 1
      %s167 = scalar_select %p164, %s165, %s166
      %p170 = pneg %p164
      %p171 = scmp.eq.s32.totalorder %s29, 1
      %p172 = por %p170, %p171
      %p173 = scmp.ne.s32.totalorder %s165, %s168
      %p174 = scmp.eq.s32.totalorder %s29, 0
      %p175 = por %p173, %p174
      %p176 = scmp.ne.s32.totalorder %s165, %s168
      %p177 = scmp.eq.s32.totalorder %s34, 1
      %p178 = por %p176, %p177
      %p179 = scmp.ne.s32.totalorder %s168, %s169
      %p180 = scmp.eq.s32.totalorder %s34, 0
      %p181 = por %p179, %p180
      %p182 = scmp.ne.s32.totalorder %s168, %s169
      %p183 = scmp.eq.s32.totalorder %s35, 1
      %p184 = por %p182, %p183
      %p186 = scmp.ne.s32.totalorder %s169, %s185
      %p187 = scmp.eq.s32.totalorder %s35, 0
      %p188 = por %p186, %p187
      %s189 = ssub.s32 %s29, %s36
      %p190 = scmp.eq.s32.totalorder %s189, 0
      %s192 = sadd.s32 %s191, 1
      %s193 = scalar_select %p190, %s191, %s192
      %p196 = pneg %p190
      %p197 = scmp.eq.s32.totalorder %s29, 1
      %p198 = por %p196, %p197
      %p199 = scmp.ne.s32.totalorder %s191, %s194
      %p200 = scmp.eq.s32.totalorder %s29, 0
      %p201 = por %p199, %p200
      %p202 = scmp.ne.s32.totalorder %s191, %s194
      %p203 = scmp.eq.s32.totalorder %s34, 1
      %p204 = por %p202, %p203
      %p205 = scmp.ne.s32.totalorder %s194, %s195
      %p206 = scmp.eq.s32.totalorder %s34, 0
      %p207 = por %p205, %p206
      %p208 = scmp.ne.s32.totalorder %s194, %s195
      %p209 = scmp.eq.s32.totalorder %s35, 1
      %p210 = por %p208, %p209
      %p212 = scmp.ne.s32.totalorder %s195, %s211
      %p213 = scmp.eq.s32.totalorder %s35, 0
      %p214 = por %p212, %p213
      %s215 = ssub.s32 %s29, %s36
      %p216 = scmp.eq.s32.totalorder %s215, 0
      %s218 = sadd.s32 %s217, 1
      %s219 = scalar_select %p216, %s217, %s218
      %p222 = pneg %p216
      %p223 = scmp.eq.s32.totalorder %s29, 1
      %p224 = por %p222, %p223
      %p225 = scmp.ne.s32.totalorder %s217, %s220
      %p226 = scmp.eq.s32.totalorder %s29, 0
      %p227 = por %p225, %p226
      %p228 = scmp.ne.s32.totalorder %s217, %s220
      %p229 = scmp.eq.s32.totalorder %s34, 1
      %p230 = por %p228, %p229
      %p231 = scmp.ne.s32.totalorder %s220, %s221
      %p232 = scmp.eq.s32.totalorder %s34, 0
      %p233 = por %p231, %p232
      %p234 = scmp.ne.s32.totalorder %s220, %s221
      %p235 = scmp.eq.s32.totalorder %s35, 1
      %p236 = por %p234, %p235
      %p238 = scmp.ne.s32.totalorder %s221, %s237
      %p239 = scmp.eq.s32.totalorder %s35, 0
      %p240 = por %p238, %p239
      %s241 = ssub.s32 %s29, %s36
      %p242 = scmp.eq.s32.totalorder %s241, 0
      %s244 = sadd.s32 %s243, 1
      %s245 = scalar_select %p242, %s243, %s244
      %p248 = pneg %p242
      %p249 = scmp.eq.s32.totalorder %s29, 1
      %p250 = por %p248, %p249
      %p251 = scmp.ne.s32.totalorder %s243, %s246
      %p252 = scmp.eq.s32.totalorder %s29, 0
      %p253 = por %p251, %p252
      %p254 = scmp.ne.s32.totalorder %s243, %s246
      %p255 = scmp.eq.s32.totalorder %s34, 1
      %p256 = por %p254, %p255
      %p257 = scmp.ne.s32.totalorder %s246, %s247
      %p258 = scmp.eq.s32.totalorder %s34, 0
      %p259 = por %p257, %p258
      %p260 = scmp.ne.s32.totalorder %s246, %s247
      %p261 = scmp.eq.s32.totalorder %s35, 1
      %p262 = por %p260, %p261
      %p264 = scmp.ne.s32.totalorder %s247, %s263
      %p265 = scmp.eq.s32.totalorder %s35, 0
      %p266 = por %p264, %p265
      %s267 = ssub.s32 %s29, %s36
      %p268 = scmp.eq.s32.totalorder %s267, 0
      %s270 = sadd.s32 %s269, 1
      %s271 = scalar_select %p268, %s269, %s270
      %p274 = pneg %p268
      %p275 = scmp.eq.s32.totalorder %s29, 1
      %p276 = por %p274, %p275
      %p277 = scmp.ne.s32.totalorder %s269, %s272
      %p278 = scmp.eq.s32.totalorder %s29, 0
      %p279 = por %p277, %p278
      %p280 = scmp.ne.s32.totalorder %s269, %s272
      %p281 = scmp.eq.s32.totalorder %s34, 1
      %p282 = por %p280, %p281
      %p283 = scmp.ne.s32.totalorder %s272, %s273
      %p284 = scmp.eq.s32.totalorder %s34, 0
      %p285 = por %p283, %p284
      %p286 = scmp.ne.s32.totalorder %s272, %s273
      %p287 = scmp.eq.s32.totalorder %s35, 1
      %p288 = por %p286, %p287
      %p290 = scmp.ne.s32.totalorder %s273, %s289
      %p291 = scmp.eq.s32.totalorder %s35, 0
      %p292 = por %p290, %p291
      %s293 = ssub.s32 %s29, %s36
      %p294 = scmp.eq.s32.totalorder %s293, 0
      %s296 = sadd.s32 %s295, 1
      %s297 = scalar_select %p294, %s295, %s296
      %p300 = pneg %p294
      %p301 = scmp.eq.s32.totalorder %s29, 1
      %p302 = por %p300, %p301
      %p303 = scmp.ne.s32.totalorder %s295, %s298
      %p304 = scmp.eq.s32.totalorder %s29, 0
      %p305 = por %p303, %p304
      %p306 = scmp.ne.s32.totalorder %s295, %s298
      %p307 = scmp.eq.s32.totalorder %s34, 1
      %p308 = por %p306, %p307
      %p309 = scmp.ne.s32.totalorder %s298, %s299
      %p310 = scmp.eq.s32.totalorder %s34, 0
      %p311 = por %p309, %p310
      %p312 = scmp.ne.s32.totalorder %s298, %s299
      %p313 = scmp.eq.s32.totalorder %s35, 1
      %p314 = por %p312, %p313
      %p316 = scmp.ne.s32.totalorder %s299, %s315
      %p317 = scmp.eq.s32.totalorder %s35, 0
      %p318 = por %p316, %p317
      %s319 = ssub.s32 %s29, %s36
      %p320 = scmp.eq.s32.totalorder %s319, 0
      %s322 = sadd.s32 %s321, 1
      %s323 = scalar_select %p320, %s321, %s322
      %p326 = pneg %p320
      %p327 = scmp.eq.s32.totalorder %s29, 1
      %p328 = por %p326, %p327
      %p329 = scmp.ne.s32.totalorder %s321, %s324
      %p330 = scmp.eq.s32.totalorder %s29, 0
      %p331 = por %p329, %p330
      %p332 = scmp.ne.s32.totalorder %s321, %s324
      %p333 = scmp.eq.s32.totalorder %s34, 1
      %p334 = por %p332, %p333
      %p335 = scmp.ne.s32.totalorder %s324, %s325
      %p336 = scmp.eq.s32.totalorder %s34, 0
      %p337 = por %p335, %p336
      %p338 = scmp.ne.s32.totalorder %s324, %s325
      %p339 = scmp.eq.s32.totalorder %s35, 1
      %p340 = por %p338, %p339
      %p342 = scmp.ne.s32.totalorder %s325, %s341
      %p343 = scmp.eq.s32.totalorder %s35, 0
      %p344 = por %p342, %p343
      %s345 = ssub.s32 %s29, %s36
      %p346 = scmp.eq.s32.totalorder %s345, 0
      %s348 = sadd.s32 %s347, 1
      %s349 = scalar_select %p346, %s347, %s348
      %p352 = pneg %p346
      %p353 = scmp.eq.s32.totalorder %s29, 1
      %p354 = por %p352, %p353
      %p355 = scmp.ne.s32.totalorder %s347, %s350
      %p356 = scmp.eq.s32.totalorder %s29, 0
      %p357 = por %p355, %p356
      %p358 = scmp.ne.s32.totalorder %s347, %s350
      %p359 = scmp.eq.s32.totalorder %s34, 1
      %p360 = por %p358, %p359
      %p361 = scmp.ne.s32.totalorder %s350, %s351
      %p362 = scmp.eq.s32.totalorder %s34, 0
      %p363 = por %p361, %p362
      %p364 = scmp.ne.s32.totalorder %s350, %s351
      %p365 = scmp.eq.s32.totalorder %s35, 1
      %p366 = por %p364, %p365
      %p368 = scmp.ne.s32.totalorder %s351, %s367
      %p369 = scmp.eq.s32.totalorder %s35, 0
      %p370 = por %p368, %p369
      %s371 = ssub.s32 %s29, %s36
      %p372 = scmp.eq.s32.totalorder %s371, 0
      %s374 = sadd.s32 %s373, 1
      %s375 = scalar_select %p372, %s373, %s374
      %p378 = pneg %p372
      %p379 = scmp.eq.s32.totalorder %s29, 1
      %p380 = por %p378, %p379
      %p381 = scmp.ne.s32.totalorder %s373, %s376
      %p382 = scmp.eq.s32.totalorder %s29, 0
      %p383 = por %p381, %p382
      %p384 = scmp.ne.s32.totalorder %s373, %s376
      %p385 = scmp.eq.s32.totalorder %s34, 1
      %p386 = por %p384, %p385
      %p387 = scmp.ne.s32.totalorder %s376, %s377
      %p388 = scmp.eq.s32.totalorder %s34, 0
      %p389 = por %p387, %p388
      %p390 = scmp.ne.s32.totalorder %s376, %s377
      %p391 = scmp.eq.s32.totalorder %s35, 1
      %p392 = por %p390, %p391
      %p394 = scmp.ne.s32.totalorder %s377, %s393
      %p395 = scmp.eq.s32.totalorder %s35, 0
      %p396 = por %p394, %p395
      %s397 = ssub.s32 %s29, %s36
      %p398 = scmp.eq.s32.totalorder %s397, 0
      %s400 = sadd.s32 %s399, 1
      %s401 = scalar_select %p398, %s399, %s400
      %p404 = pneg %p398
      %p405 = scmp.eq.s32.totalorder %s29, 1
      %p406 = por %p404, %p405
      %p407 = scmp.ne.s32.totalorder %s399, %s402
      %p408 = scmp.eq.s32.totalorder %s29, 0
      %p409 = por %p407, %p408
      %p410 = scmp.ne.s32.totalorder %s399, %s402
      %p411 = scmp.eq.s32.totalorder %s34, 1
      %p412 = por %p410, %p411
      %p413 = scmp.ne.s32.totalorder %s402, %s403
      %p414 = scmp.eq.s32.totalorder %s34, 0
      %p415 = por %p413, %p414
      %p416 = scmp.ne.s32.totalorder %s402, %s403
      %p417 = scmp.eq.s32.totalorder %s35, 1
      %p418 = por %p416, %p417
      %p420 = scmp.ne.s32.totalorder %s403, %s419
      %p421 = scmp.eq.s32.totalorder %s35, 0
      %p422 = por %p420, %p421
      %s423 = ssub.s32 %s29, %s36
      %p424 = scmp.eq.s32.totalorder %s423, 0
      %s426 = sadd.s32 %s425, 1
      %s427 = scalar_select %p424, %s425, %s426
      %p430 = pneg %p424
      %p431 = scmp.eq.s32.totalorder %s29, 1
      %p432 = por %p430, %p431
      %p433 = scmp.ne.s32.totalorder %s425, %s428
      %p434 = scmp.eq.s32.totalorder %s29, 0
      %p435 = por %p433, %p434
      %p436 = scmp.ne.s32.totalorder %s425, %s428
      %p437 = scmp.eq.s32.totalorder %s34, 1
      %p438 = por %p436, %p437
      %p439 = scmp.ne.s32.totalorder %s428, %s429
      %p440 = scmp.eq.s32.totalorder %s34, 0
      %p441 = por %p439, %p440
      %p442 = scmp.ne.s32.totalorder %s428, %s429
      %p443 = scmp.eq.s32.totalorder %s35, 1
      %p444 = por %p442, %p443
      %p446 = scmp.ne.s32.totalorder %s429, %s445
      %p447 = scmp.eq.s32.totalorder %s35, 0
      %p448 = por %p446, %p447
      %s449 = ssub.s32 %s29, %s36
      %p450 = scmp.eq.s32.totalorder %s449, 0
      %s452 = sadd.s32 %s451, 1
      %s453 = scalar_select %p450, %s451, %s452
      %p456 = pneg %p450
      %p457 = scmp.eq.s32.totalorder %s29, 1
      %p458 = por %p456, %p457
      %p459 = scmp.ne.s32.totalorder %s451, %s454
      %p460 = scmp.eq.s32.totalorder %s29, 0
      %p461 = por %p459, %p460
      %p462 = scmp.ne.s32.totalorder %s451, %s454
      %p463 = scmp.eq.s32.totalorder %s34, 1
      %p464 = por %p462, %p463
      %p465 = scmp.ne.s32.totalorder %s454, %s455
      %p466 = scmp.eq.s32.totalorder %s34, 0
      %p467 = por %p465, %p466
      %p468 = scmp.ne.s32.totalorder %s454, %s455
      %p469 = scmp.eq.s32.totalorder %s35, 1
      %p470 = por %p468, %p469
      %p472 = scmp.ne.s32.totalorder %s455, %s471
      %p473 = scmp.eq.s32.totalorder %s35, 0
      %p474 = por %p472, %p473
      %s476 = sadd.s32 %s475, 1
      %p479 = scmp.eq.s32.totalorder %s29, 1
      %p480 = scmp.ne.s32.totalorder %s475, %s477
      %p481 = scmp.eq.s32.totalorder %s29, 0
      %p482 = por %p480, %p481
      %p483 = scmp.ne.s32.totalorder %s475, %s477
      %p484 = scmp.eq.s32.totalorder %s34, 1
      %p485 = por %p483, %p484
      %p486 = scmp.ne.s32.totalorder %s477, %s478
      %p487 = scmp.eq.s32.totalorder %s34, 0
      %p488 = por %p486, %p487
      %p489 = scmp.ne.s32.totalorder %s477, %s478
      %p490 = scmp.eq.s32.totalorder %s35, 1
      %p491 = por %p489, %p490
      %p493 = scmp.ne.s32.totalorder %s478, %s492
      %p494 = scmp.eq.s32.totalorder %s35, 0
      %p495 = por %p493, %p494
      %p496 = scmp.le.s32.totalorder 1, %s29
      %p497 = scmp.lt.s32.totalorder %s29, 3
      %p498 = pnand %p496, %p497
      %p499 = pneg %p498
      // Predicated region
      $region9: #{tpu_custom_call.1} parent=5 // pred_check
        _
      $region10: #{tpu_custom_call.1} parent=5 // pred_check_branch
        %501 = sbr.rel (%p498) target = $region12
      $region11: #{tpu_custom_call.1} parent=5 // pred_region
        %s502 = ssub.s32 %s29, 1
        // Predicated region
        $region13: #{tpu_custom_call.1} parent=11 // pred_check
          %p503 = pneg %p50
        $region14: #{tpu_custom_call.1} parent=11 // pred_check_branch
          %505 = sbr.rel (%p503) target = $region16
        $region15: #{tpu_custom_call.1} parent=11 // pred_region
          %s507 = ssub.s32 256, 256
          %508 = vsyncadd [#allocation4], %s507
          %s509 = sshll.u32 [#allocation3], 4
          %s510 = int_to_ptr.vmem [resolvable:$true] %s509
          %515 = dma.hbm_to_vmem [thread:$0]  %s0, 256, %s510, [#allocation4], 128, 128, 8
        $region16: #{tpu_custom_call.1} parent=11 // pred_fallthru
          _
        // Predicated region
        $region17: #{tpu_custom_call.1} parent=11 // pred_check
          %p516 = pneg %p71
        $region18: #{tpu_custom_call.1} parent=11 // pred_check_branch
          %518 = sbr.rel (%p516) target = $region20
        $region19: #{tpu_custom_call.1} parent=11 // pred_region
          %s520 = ssub.s32 512, 512
          %521 = vsyncadd [#allocation7], %s520
          %s522 = sshll.u32 [#allocation6], 4
          %s523 = int_to_ptr.vmem [resolvable:$true] %s522
          %528 = dma.hbm_to_vmem [thread:$0]  %s1, 512, %s523, [#allocation7], 256, 256, 16
        $region20: #{tpu_custom_call.1} parent=11 // pred_fallthru
          _
        // Predicated region
        $region21: #{tpu_custom_call.1} parent=11 // pred_check
          %p529 = pneg %p92
        $region22: #{tpu_custom_call.1} parent=11 // pred_check_branch
          %531 = sbr.rel (%p529) target = $region24
        $region23: #{tpu_custom_call.1} parent=11 // pred_region
          %s533 = ssub.s32 64, 64
          %534 = vsyncadd [#allocation7], %s533
          %s536 = sshll.u32 [#allocation8], 4
          %s537 = int_to_ptr.vmem [resolvable:$true] %s536
          %539 = dma.hbm_to_vmem [thread:$0]  %s2, 64, %s537, [#allocation7]
        $region24: #{tpu_custom_call.1} parent=11 // pred_fallthru
          _
        // Predicated region
        $region25: #{tpu_custom_call.1} parent=11 // pred_check
          %p540 = pneg %p113
        $region26: #{tpu_custom_call.1} parent=11 // pred_check_branch
          %542 = sbr.rel (%p540) target = $region28
        $region27: #{tpu_custom_call.1} parent=11 // pred_region
          %s544 = ssub.s32 128, 128
          %545 = vsyncadd [#allocation10], %s544
          %s547 = sshll.u32 [#allocation9], 4
          %s548 = int_to_ptr.vmem [resolvable:$true] %s547
          %550 = dma.hbm_to_vmem [thread:$0]  %s3, 128, %s548, [#allocation10]
        $region28: #{tpu_custom_call.1} parent=11 // pred_fallthru
          _
        // Predicated region
        $region29: #{tpu_custom_call.1} parent=11 // pred_check
          %p551 = pneg %p134
        $region30: #{tpu_custom_call.1} parent=11 // pred_check_branch
          %553 = sbr.rel (%p551) target = $region32
        $region31: #{tpu_custom_call.1} parent=11 // pred_region
          %s555 = ssub.s32 64, 64
          %556 = vsyncadd [#allocation10], %s555
          %s558 = sshll.u32 [#allocation11], 4
          %s559 = int_to_ptr.vmem [resolvable:$true] %s558
          %561 = dma.hbm_to_vmem [thread:$0]  %s4, 64, %s559, [#allocation10]
        $region32: #{tpu_custom_call.1} parent=11 // pred_fallthru
          _
        // Predicated region
        $region33: #{tpu_custom_call.1} parent=11 // pred_check
          %p562 = pneg %p155
        $region34: #{tpu_custom_call.1} parent=11 // pred_check_branch
          %564 = sbr.rel (%p562) target = $region36
        $region35: #{tpu_custom_call.1} parent=11 // pred_region
          %s566 = ssub.s32 64, 64
          %567 = vsyncadd [#allocation13], %s566
          %s569 = sshll.u32 [#allocation12], 4
          %s570 = int_to_ptr.vmem [resolvable:$true] %s569
          %572 = dma.hbm_to_vmem [thread:$0]  %s5, 64, %s570, [#allocation13]
        $region36: #{tpu_custom_call.1} parent=11 // pred_fallthru
          _
      $region12: #{tpu_custom_call.1} parent=5 // pred_fallthru
        _
      %p573 = scmp.lt.s32.totalorder %s29, 2
      // Predicated region
      $region37: #{tpu_custom_call.1} parent=5 // pred_check
        %p574 = pneg %p573
      $region38: #{tpu_custom_call.1} parent=5 // pred_check_branch
        %576 = sbr.rel (%p574) target = $region40
      $region39: #{tpu_custom_call.1} parent=5 // pred_region
        // Predicated region
        $region41: #{tpu_custom_call.1} parent=39 // pred_check
          %p577 = pneg %p175
        $region42: #{tpu_custom_call.1} parent=39 // pred_check_branch
          %579 = sbr.rel (%p577) target = $region44
        $region43: #{tpu_custom_call.1} parent=39 // pred_region
          %s580 = sand.u32 %s29, 1
          %s581 = scalar_lea.sflag [#allocation4], %s580
          %s582 = sand.u32 %s165, 1
          %s583 = smul.addr %s582, 3072
          %s584 = scalar_lea.vmem [#allocation14], %s583
          %s586 = ssub.s32 49152, 49152
          %587 = vsyncadd %s581, %s586
          %s588 = smul.addr %s29, 768
          %s589 = smul.addr %s588, 64
          %s590 = scalar_lea.hbm %s6, %s589
          %s591 = sshll.u32 %s584, 4
          %s592 = int_to_ptr.vmem [resolvable:$true] %s591
          %597 = dma.hbm_to_vmem [thread:$0]  %s590, 49152, %s592, %s581, 768, 768, 48
        $region44: #{tpu_custom_call.1} parent=39 // pred_fallthru
          _
        // Predicated region
        $region45: #{tpu_custom_call.1} parent=39 // pred_check
          %p598 = pneg %p201
        $region46: #{tpu_custom_call.1} parent=39 // pred_check_branch
          %600 = sbr.rel (%p598) target = $region48
        $region47: #{tpu_custom_call.1} parent=39 // pred_region
          %s601 = sand.u32 %s29, 1
          %s602 = scalar_lea.sflag [#allocation4], %s601
          %s603 = sand.u32 %s191, 1
          %s604 = smul.addr %s603, 12
          %s605 = scalar_lea.vmem [#allocation15], %s604
          %s607 = ssub.s32 192, 192
          %608 = vsyncadd %s602, %s607
          %s609 = smul.addr %s29, 12
          %s610 = smul.addr %s609, 16
          %s611 = scalar_lea.hbm %s7, %s610
          %s613 = sshll.u32 %s605, 4
          %s614 = int_to_ptr.vmem [resolvable:$true] %s613
          %616 = dma.hbm_to_vmem [thread:$0]  %s611, 192, %s614, %s602
        $region48: #{tpu_custom_call.1} parent=39 // pred_fallthru
          _
        // Predicated region
        $region49: #{tpu_custom_call.1} parent=39 // pred_check
          %p617 = pneg %p227
        $region50: #{tpu_custom_call.1} parent=39 // pred_check_branch
          %619 = sbr.rel (%p617) target = $region52
        $region51: #{tpu_custom_call.1} parent=39 // pred_region
          %s620 = sand.u32 %s29, 1
          %s621 = scalar_lea.sflag [#allocation4], %s620
          %s622 = sand.u32 %s217, 1
          %s623 = smul.addr %s622, 1024
          %s624 = scalar_lea.vmem [#allocation16], %s623
          %s626 = ssub.s32 16384, 16384
          %627 = vsyncadd %s621, %s626
          %s628 = smul.addr %s29, 256
          %s629 = smul.addr %s628, 64
          %s630 = scalar_lea.hbm %s8, %s629
          %s631 = sshll.u32 %s624, 4
          %s632 = int_to_ptr.vmem [resolvable:$true] %s631
          %637 = dma.hbm_to_vmem [thread:$0]  %s630, 16384, %s632, %s621, 256, 256, 16
        $region52: #{tpu_custom_call.1} parent=39 // pred_fallthru
          _
        // Predicated region
        $region53: #{tpu_custom_call.1} parent=39 // pred_check
          %p638 = pneg %p253
        $region54: #{tpu_custom_call.1} parent=39 // pred_check_branch
          %640 = sbr.rel (%p638) target = $region56
        $region55: #{tpu_custom_call.1} parent=39 // pred_region
          %s641 = sand.u32 %s29, 1
          %s642 = scalar_lea.sflag [#allocation4], %s641
          %s643 = sand.u32 %s243, 1
          %s644 = smul.addr %s643, 4
          %s645 = scalar_lea.vmem [#allocation17], %s644
          %s647 = ssub.s32 64, 64
          %648 = vsyncadd %s642, %s647
          %s649 = smul.addr %s29, 4
          %s650 = smul.addr %s649, 16
          %s651 = scalar_lea.hbm %s9, %s650
          %s653 = sshll.u32 %s645, 4
          %s654 = int_to_ptr.vmem [resolvable:$true] %s653
          %656 = dma.hbm_to_vmem [thread:$0]  %s651, 64, %s654, %s642
        $region56: #{tpu_custom_call.1} parent=39 // pred_fallthru
          _
        // Predicated region
        $region57: #{tpu_custom_call.1} parent=39 // pred_check
          %p657 = pneg %p279
        $region58: #{tpu_custom_call.1} parent=39 // pred_check_branch
          %659 = sbr.rel (%p657) target = $region60
        $region59: #{tpu_custom_call.1} parent=39 // pred_region
          %s660 = sand.u32 %s29, 1
          %s661 = scalar_lea.sflag [#allocation4], %s660
          %s662 = sand.u32 %s269, 1
          %s663 = smul.addr %s662, 4
          %s664 = scalar_lea.vmem [#allocation18], %s663
          %s666 = ssub.s32 64, 64
          %667 = vsyncadd %s661, %s666
          %s668 = smul.addr %s29, 4
          %s669 = smul.addr %s668, 16
          %s670 = scalar_lea.hbm %s10, %s669
          %s672 = sshll.u32 %s664, 4
          %s673 = int_to_ptr.vmem [resolvable:$true] %s672
          %675 = dma.hbm_to_vmem [thread:$0]  %s670, 64, %s673, %s661
        $region60: #{tpu_custom_call.1} parent=39 // pred_fallthru
          _
        // Predicated region
        $region61: #{tpu_custom_call.1} parent=39 // pred_check
          %p676 = pneg %p305
        $region62: #{tpu_custom_call.1} parent=39 // pred_check_branch
          %678 = sbr.rel (%p676) target = $region64
        $region63: #{tpu_custom_call.1} parent=39 // pred_region
          %s679 = sand.u32 %s29, 1
          %s680 = scalar_lea.sflag [#allocation4], %s679
          %s681 = sand.u32 %s295, 1
          %s682 = smul.addr %s681, 4
          %s683 = scalar_lea.vmem [#allocation19], %s682
          %s685 = ssub.s32 64, 64
          %686 = vsyncadd %s680, %s685
          %s687 = smul.addr %s29, 4
          %s688 = smul.addr %s687, 16
          %s689 = scalar_lea.hbm %s11, %s688
          %s691 = sshll.u32 %s683, 4
          %s692 = int_to_ptr.vmem [resolvable:$true] %s691
          %694 = dma.hbm_to_vmem [thread:$0]  %s689, 64, %s692, %s680
        $region64: #{tpu_custom_call.1} parent=39 // pred_fallthru
          _
        // Predicated region
        $region65: #{tpu_custom_call.1} parent=39 // pred_check
          %p695 = pneg %p331
        $region66: #{tpu_custom_call.1} parent=39 // pred_check_branch
          %697 = sbr.rel (%p695) target = $region68
        $region67: #{tpu_custom_call.1} parent=39 // pred_region
          %s698 = sand.u32 %s29, 1
          %s699 = scalar_lea.sflag [#allocation4], %s698
          %s700 = sand.u32 %s321, 1
          %s701 = smul.addr %s700, 512
          %s702 = scalar_lea.vmem [#allocation20], %s701
          %s704 = ssub.s32 8192, 8192
          %705 = vsyncadd %s699, %s704
          %s706 = smul.addr %s29, 128
          %s707 = smul.addr %s706, 64
          %s708 = scalar_lea.hbm %s12, %s707
          %s709 = sshll.u32 %s702, 4
          %s710 = int_to_ptr.vmem [resolvable:$true] %s709
          %715 = dma.hbm_to_vmem [thread:$0]  %s708, 8192, %s710, %s699, 128, 128, 8
        $region68: #{tpu_custom_call.1} parent=39 // pred_fallthru
          _
        // Predicated region
        $region69: #{tpu_custom_call.1} parent=39 // pred_check
          %p716 = pneg %p357
        $region70: #{tpu_custom_call.1} parent=39 // pred_check_branch
          %718 = sbr.rel (%p716) target = $region72
        $region71: #{tpu_custom_call.1} parent=39 // pred_region
          %s719 = sand.u32 %s29, 1
          %s720 = scalar_lea.sflag [#allocation4], %s719
          %s721 = sand.u32 %s347, 1
          %s722 = smul.addr %s721, 2
          %s723 = scalar_lea.vmem [#allocation21], %s722
          %s725 = ssub.s32 32, 32
          %726 = vsyncadd %s720, %s725
          %s727 = smul.addr %s29, 2
          %s728 = smul.addr %s727, 16
          %s729 = scalar_lea.hbm %s13, %s728
          %s731 = sshll.u32 %s723, 4
          %s732 = int_to_ptr.vmem [resolvable:$true] %s731
          %734 = dma.hbm_to_vmem [thread:$0]  %s729, 32, %s732, %s720
        $region72: #{tpu_custom_call.1} parent=39 // pred_fallthru
          _
        // Predicated region
        $region73: #{tpu_custom_call.1} parent=39 // pred_check
          %p735 = pneg %p383
        $region74: #{tpu_custom_call.1} parent=39 // pred_check_branch
          %737 = sbr.rel (%p735) target = $region76
        $region75: #{tpu_custom_call.1} parent=39 // pred_region
          %s738 = sand.u32 %s29, 1
          %s739 = scalar_lea.sflag [#allocation4], %s738
          %s740 = sand.u32 %s373, 1
          %s741 = smul.addr %s740, 512
          %s742 = scalar_lea.vmem [#allocation22], %s741
          %s744 = ssub.s32 8192, 8192
          %745 = vsyncadd %s739, %s744
          %s746 = smul.addr %s29, 128
          %s747 = smul.addr %s746, 64
          %s748 = scalar_lea.hbm %s14, %s747
          %s749 = sshll.u32 %s742, 4
          %s750 = int_to_ptr.vmem [resolvable:$true] %s749
          %755 = dma.hbm_to_vmem [thread:$0]  %s748, 8192, %s750, %s739, 256, 256, 16
        $region76: #{tpu_custom_call.1} parent=39 // pred_fallthru
          _
        // Predicated region
        $region77: #{tpu_custom_call.1} parent=39 // pred_check
          %p756 = pneg %p409
        $region78: #{tpu_custom_call.1} parent=39 // pred_check_branch
          %758 = sbr.rel (%p756) target = $region80
        $region79: #{tpu_custom_call.1} parent=39 // pred_region
          %s759 = sand.u32 %s29, 1
          %s760 = scalar_lea.sflag [#allocation4], %s759
          %s761 = sand.u32 %s399, 1
          %s762 = smul.addr %s761, 4
          %s763 = scalar_lea.vmem [#allocation23], %s762
          %s765 = ssub.s32 64, 64
          %766 = vsyncadd %s760, %s765
          %s767 = smul.addr %s29, 4
          %s768 = smul.addr %s767, 16
          %s769 = scalar_lea.hbm %s15, %s768
          %s771 = sshll.u32 %s763, 4
          %s772 = int_to_ptr.vmem [resolvable:$true] %s771
          %774 = dma.hbm_to_vmem [thread:$0]  %s769, 64, %s772, %s760
        $region80: #{tpu_custom_call.1} parent=39 // pred_fallthru
          _
        // Predicated region
        $region81: #{tpu_custom_call.1} parent=39 // pred_check
          %p775 = pneg %p435
        $region82: #{tpu_custom_call.1} parent=39 // pred_check_branch
          %777 = sbr.rel (%p775) target = $region84
        $region83: #{tpu_custom_call.1} parent=39 // pred_region
          %s778 = sand.u32 %s29, 1
          %s779 = scalar_lea.sflag [#allocation4], %s778
          %s780 = sand.u32 %s425, 1
          %s781 = smul.addr %s780, 4
          %s782 = scalar_lea.vmem [#allocation24], %s781
          %s784 = ssub.s32 64, 64
          %785 = vsyncadd %s779, %s784
          %s786 = smul.addr %s29, 4
          %s787 = smul.addr %s786, 16
          %s788 = scalar_lea.hbm %s16, %s787
          %s790 = sshll.u32 %s782, 4
          %s791 = int_to_ptr.vmem [resolvable:$true] %s790
          %793 = dma.hbm_to_vmem [thread:$0]  %s788, 64, %s791, %s779
        $region84: #{tpu_custom_call.1} parent=39 // pred_fallthru
          _
        // Predicated region
        $region85: #{tpu_custom_call.1} parent=39 // pred_check
          %p794 = pneg %p461
        $region86: #{tpu_custom_call.1} parent=39 // pred_check_branch
          %796 = sbr.rel (%p794) target = $region88
        $region87: #{tpu_custom_call.1} parent=39 // pred_region
          %s797 = sand.u32 %s29, 1
          %s798 = scalar_lea.sflag [#allocation4], %s797
          %s799 = sand.u32 %s451, 1
          %s800 = smul.addr %s799, 4
          %s801 = scalar_lea.vmem [#allocation25], %s800
          %s803 = ssub.s32 64, 64
          %804 = vsyncadd %s798, %s803
          %s805 = smul.addr %s29, 4
          %s806 = smul.addr %s805, 16
          %s807 = scalar_lea.hbm %s17, %s806
          %s809 = sshll.u32 %s801, 4
          %s810 = int_to_ptr.vmem [resolvable:$true] %s809
          %812 = dma.hbm_to_vmem [thread:$0]  %s807, 64, %s810, %s798
        $region88: #{tpu_custom_call.1} parent=39 // pred_fallthru
          _
      $region40: #{tpu_custom_call.1} parent=5 // pred_fallthru
        _
      %p813 = scmp.le.s32.totalorder 1, %s29
      %p814 = scmp.lt.s32.totalorder %s29, 3
      %p815 = pnand %p813, %p814
      %p816 = pneg %p815
      // Predicated region
      $region89: #{tpu_custom_call.1} parent=5 // pred_check
        _
      $region90: #{tpu_custom_call.1} parent=5 // pred_check_branch
        %818 = sbr.rel (%p815) target = $region92
      $region91: #{tpu_custom_call.1} parent=5 // pred_region
        %s819 = ssub.s32 %s29, 1
        // Predicated region
        $region93: #{tpu_custom_call.1} parent=91 // pred_check
          %p820 = pneg %p50
        $region94: #{tpu_custom_call.1} parent=91 // pred_check_branch
          %822 = sbr.rel (%p820) target = $region96
        $region95: #{tpu_custom_call.1} parent=91 // pred_region
          %823 = dma.done [#allocation4], 256
        $region96: #{tpu_custom_call.1} parent=91 // pred_fallthru
          _
        // Predicated region
        $region97: #{tpu_custom_call.1} parent=91 // pred_check
          %p824 = pneg %p71
        $region98: #{tpu_custom_call.1} parent=91 // pred_check_branch
          %826 = sbr.rel (%p824) target = $region100
        $region99: #{tpu_custom_call.1} parent=91 // pred_region
          %827 = dma.done [#allocation7], 512
        $region100: #{tpu_custom_call.1} parent=91 // pred_fallthru
          _
        // Predicated region
        $region101: #{tpu_custom_call.1} parent=91 // pred_check
          %p828 = pneg %p92
        $region102: #{tpu_custom_call.1} parent=91 // pred_check_branch
          %830 = sbr.rel (%p828) target = $region104
        $region103: #{tpu_custom_call.1} parent=91 // pred_region
          %831 = dma.done [#allocation7], 64
        $region104: #{tpu_custom_call.1} parent=91 // pred_fallthru
          _
        // Predicated region
        $region105: #{tpu_custom_call.1} parent=91 // pred_check
          %p832 = pneg %p113
        $region106: #{tpu_custom_call.1} parent=91 // pred_check_branch
          %834 = sbr.rel (%p832) target = $region108
        $region107: #{tpu_custom_call.1} parent=91 // pred_region
          %835 = dma.done [#allocation10], 128
        $region108: #{tpu_custom_call.1} parent=91 // pred_fallthru
          _
        // Predicated region
        $region109: #{tpu_custom_call.1} parent=91 // pred_check
          %p836 = pneg %p134
        $region110: #{tpu_custom_call.1} parent=91 // pred_check_branch
          %838 = sbr.rel (%p836) target = $region112
        $region111: #{tpu_custom_call.1} parent=91 // pred_region
          %839 = dma.done [#allocation10], 64
        $region112: #{tpu_custom_call.1} parent=91 // pred_fallthru
          _
        // Predicated region
        $region113: #{tpu_custom_call.1} parent=91 // pred_check
          %p840 = pneg %p155
        $region114: #{tpu_custom_call.1} parent=91 // pred_check_branch
          %842 = sbr.rel (%p840) target = $region116
        $region115: #{tpu_custom_call.1} parent=91 // pred_region
          %843 = dma.done [#allocation13], 64
        $region116: #{tpu_custom_call.1} parent=91 // pred_fallthru
          _
        %s844 = sand.u32 %s34, 1
        %s845 = scalar_lea.sflag [#allocation4], %s844
        %s846 = sand.u32 %s168, 1
        %s847 = smul.addr %s846, 3072
        %s848 = scalar_lea.vmem [#allocation14], %s847
        // Predicated region
        $region117: #{tpu_custom_call.1} parent=91 // pred_check
          %p849 = pneg %p181
        $region118: #{tpu_custom_call.1} parent=91 // pred_check_branch
          %851 = sbr.rel (%p849) target = $region120
        $region119: #{tpu_custom_call.1} parent=91 // pred_region
          %852 = dma.done %s845, 49152
        $region120: #{tpu_custom_call.1} parent=91 // pred_fallthru
          _
        %s853 = sand.u32 %s34, 1
        %s854 = scalar_lea.sflag [#allocation4], %s853
        %s855 = sand.u32 %s194, 1
        %s856 = smul.addr %s855, 12
        %s857 = scalar_lea.vmem [#allocation15], %s856
        // Predicated region
        $region121: #{tpu_custom_call.1} parent=91 // pred_check
          %p858 = pneg %p207
        $region122: #{tpu_custom_call.1} parent=91 // pred_check_branch
          %860 = sbr.rel (%p858) target = $region124
        $region123: #{tpu_custom_call.1} parent=91 // pred_region
          %861 = dma.done %s854, 192
        $region124: #{tpu_custom_call.1} parent=91 // pred_fallthru
          _
        %s862 = sand.u32 %s34, 1
        %s863 = scalar_lea.sflag [#allocation4], %s862
        %s864 = sand.u32 %s220, 1
        %s865 = smul.addr %s864, 1024
        %s866 = scalar_lea.vmem [#allocation16], %s865
        // Predicated region
        $region125: #{tpu_custom_call.1} parent=91 // pred_check
          %p867 = pneg %p233
        $region126: #{tpu_custom_call.1} parent=91 // pred_check_branch
          %869 = sbr.rel (%p867) target = $region128
        $region127: #{tpu_custom_call.1} parent=91 // pred_region
          %870 = dma.done %s863, 16384
        $region128: #{tpu_custom_call.1} parent=91 // pred_fallthru
          _
        %s871 = sand.u32 %s34, 1
        %s872 = scalar_lea.sflag [#allocation4], %s871
        %s873 = sand.u32 %s246, 1
        %s874 = smul.addr %s873, 4
        %s875 = scalar_lea.vmem [#allocation17], %s874
        // Predicated region
        $region129: #{tpu_custom_call.1} parent=91 // pred_check
          %p876 = pneg %p259
        $region130: #{tpu_custom_call.1} parent=91 // pred_check_branch
          %878 = sbr.rel (%p876) target = $region132
        $region131: #{tpu_custom_call.1} parent=91 // pred_region
          %879 = dma.done %s872, 64
        $region132: #{tpu_custom_call.1} parent=91 // pred_fallthru
          _
        %s880 = sand.u32 %s34, 1
        %s881 = scalar_lea.sflag [#allocation4], %s880
        %s882 = sand.u32 %s272, 1
        %s883 = smul.addr %s882, 4
        %s884 = scalar_lea.vmem [#allocation18], %s883
        // Predicated region
        $region133: #{tpu_custom_call.1} parent=91 // pred_check
          %p885 = pneg %p285
        $region134: #{tpu_custom_call.1} parent=91 // pred_check_branch
          %887 = sbr.rel (%p885) target = $region136
        $region135: #{tpu_custom_call.1} parent=91 // pred_region
          %888 = dma.done %s881, 64
        $region136: #{tpu_custom_call.1} parent=91 // pred_fallthru
          _
        %s889 = sand.u32 %s34, 1
        %s890 = scalar_lea.sflag [#allocation4], %s889
        %s891 = sand.u32 %s298, 1
        %s892 = smul.addr %s891, 4
        %s893 = scalar_lea.vmem [#allocation19], %s892
        // Predicated region
        $region137: #{tpu_custom_call.1} parent=91 // pred_check
          %p894 = pneg %p311
        $region138: #{tpu_custom_call.1} parent=91 // pred_check_branch
          %896 = sbr.rel (%p894) target = $region140
        $region139: #{tpu_custom_call.1} parent=91 // pred_region
          %897 = dma.done %s890, 64
        $region140: #{tpu_custom_call.1} parent=91 // pred_fallthru
          _
        %s898 = sand.u32 %s34, 1
        %s899 = scalar_lea.sflag [#allocation4], %s898
        %s900 = sand.u32 %s324, 1
        %s901 = smul.addr %s900, 512
        %s902 = scalar_lea.vmem [#allocation20], %s901
        // Predicated region
        $region141: #{tpu_custom_call.1} parent=91 // pred_check
          %p903 = pneg %p337
        $region142: #{tpu_custom_call.1} parent=91 // pred_check_branch
          %905 = sbr.rel (%p903) target = $region144
        $region143: #{tpu_custom_call.1} parent=91 // pred_region
          %906 = dma.done %s899, 8192
        $region144: #{tpu_custom_call.1} parent=91 // pred_fallthru
          _
        %s907 = sand.u32 %s34, 1
        %s908 = scalar_lea.sflag [#allocation4], %s907
        %s909 = sand.u32 %s350, 1
        %s910 = smul.addr %s909, 2
        %s911 = scalar_lea.vmem [#allocation21], %s910
        // Predicated region
        $region145: #{tpu_custom_call.1} parent=91 // pred_check
          %p912 = pneg %p363
        $region146: #{tpu_custom_call.1} parent=91 // pred_check_branch
          %914 = sbr.rel (%p912) target = $region148
        $region147: #{tpu_custom_call.1} parent=91 // pred_region
          %915 = dma.done %s908, 32
        $region148: #{tpu_custom_call.1} parent=91 // pred_fallthru
          _
        %s916 = sand.u32 %s34, 1
        %s917 = scalar_lea.sflag [#allocation4], %s916
        %s918 = sand.u32 %s376, 1
        %s919 = smul.addr %s918, 512
        %s920 = scalar_lea.vmem [#allocation22], %s919
        // Predicated region
        $region149: #{tpu_custom_call.1} parent=91 // pred_check
          %p921 = pneg %p389
        $region150: #{tpu_custom_call.1} parent=91 // pred_check_branch
          %923 = sbr.rel (%p921) target = $region152
        $region151: #{tpu_custom_call.1} parent=91 // pred_region
          %924 = dma.done %s917, 8192
        $region152: #{tpu_custom_call.1} parent=91 // pred_fallthru
          _
        %s925 = sand.u32 %s34, 1
        %s926 = scalar_lea.sflag [#allocation4], %s925
        %s927 = sand.u32 %s402, 1
        %s928 = smul.addr %s927, 4
        %s929 = scalar_lea.vmem [#allocation23], %s928
        // Predicated region
        $region153: #{tpu_custom_call.1} parent=91 // pred_check
          %p930 = pneg %p415
        $region154: #{tpu_custom_call.1} parent=91 // pred_check_branch
          %932 = sbr.rel (%p930) target = $region156
        $region155: #{tpu_custom_call.1} parent=91 // pred_region
          %933 = dma.done %s926, 64
        $region156: #{tpu_custom_call.1} parent=91 // pred_fallthru
          _
        %s934 = sand.u32 %s34, 1
        %s935 = scalar_lea.sflag [#allocation4], %s934
        %s936 = sand.u32 %s428, 1
        %s937 = smul.addr %s936, 4
        %s938 = scalar_lea.vmem [#allocation24], %s937
        // Predicated region
        $region157: #{tpu_custom_call.1} parent=91 // pred_check
          %p939 = pneg %p441
        $region158: #{tpu_custom_call.1} parent=91 // pred_check_branch
          %941 = sbr.rel (%p939) target = $region160
        $region159: #{tpu_custom_call.1} parent=91 // pred_region
          %942 = dma.done %s935, 64
        $region160: #{tpu_custom_call.1} parent=91 // pred_fallthru
          _
        %s943 = sand.u32 %s34, 1
        %s944 = scalar_lea.sflag [#allocation4], %s943
        %s945 = sand.u32 %s454, 1
        %s946 = smul.addr %s945, 4
        %s947 = scalar_lea.vmem [#allocation25], %s946
        // Predicated region
        $region161: #{tpu_custom_call.1} parent=91 // pred_check
          %p948 = pneg %p467
        $region162: #{tpu_custom_call.1} parent=91 // pred_check_branch
          %950 = sbr.rel (%p948) target = $region164
        $region163: #{tpu_custom_call.1} parent=91 // pred_region
          %951 = dma.done %s944, 64
        $region164: #{tpu_custom_call.1} parent=91 // pred_fallthru
          _
        %p952 = pneg %p50
        %p953 = pneg %p47
        %p954 = pneg %p71
        %p955 = pneg %p68
        %p956 = pneg %p92
        %p957 = pneg %p89
        %p958 = pneg %p113
        %p959 = pneg %p110
        %p960 = pneg %p134
        %p961 = pneg %p131
        %p962 = pneg %p155
        %p963 = pneg %p152
        %s964 = sand.u32 %s34, 1
        %s965 = scalar_lea.sflag [#allocation4], %s964
        %s966 = sand.u32 %s168, 1
        %s967 = smul.addr %s966, 3072
        %s968 = scalar_lea.vmem [#allocation14], %s967
        %p969 = pneg %p181
        %p970 = pneg %p178
        %s971 = sand.u32 %s34, 1
        %s972 = scalar_lea.sflag [#allocation4], %s971
        %s973 = sand.u32 %s194, 1
        %s974 = smul.addr %s973, 12
        %s975 = scalar_lea.vmem [#allocation15], %s974
        %p976 = pneg %p207
        %p977 = pneg %p204
        %s978 = sand.u32 %s34, 1
        %s979 = scalar_lea.sflag [#allocation4], %s978
        %s980 = sand.u32 %s220, 1
        %s981 = smul.addr %s980, 1024
        %s982 = scalar_lea.vmem [#allocation16], %s981
        %p983 = pneg %p233
        %p984 = pneg %p230
        %s985 = sand.u32 %s34, 1
        %s986 = scalar_lea.sflag [#allocation4], %s985
        %s987 = sand.u32 %s246, 1
        %s988 = smul.addr %s987, 4
        %s989 = scalar_lea.vmem [#allocation17], %s988
        %p990 = pneg %p259
        %p991 = pneg %p256
        %s992 = sand.u32 %s34, 1
        %s993 = scalar_lea.sflag [#allocation4], %s992
        %s994 = sand.u32 %s272, 1
        %s995 = smul.addr %s994, 4
        %s996 = scalar_lea.vmem [#allocation18], %s995
        %p997 = pneg %p285
        %p998 = pneg %p282
        %s999 = sand.u32 %s34, 1
        %s1000 = scalar_lea.sflag [#allocation4], %s999
        %s1001 = sand.u32 %s298, 1
        %s1002 = smul.addr %s1001, 4
        %s1003 = scalar_lea.vmem [#allocation19], %s1002
        %p1004 = pneg %p311
        %p1005 = pneg %p308
        %s1006 = sand.u32 %s34, 1
        %s1007 = scalar_lea.sflag [#allocation4], %s1006
        %s1008 = sand.u32 %s324, 1
        %s1009 = smul.addr %s1008, 512
        %s1010 = scalar_lea.vmem [#allocation20], %s1009
        %p1011 = pneg %p337
        %p1012 = pneg %p334
        %s1013 = sand.u32 %s34, 1
        %s1014 = scalar_lea.sflag [#allocation4], %s1013
        %s1015 = sand.u32 %s350, 1
        %s1016 = smul.addr %s1015, 2
        %s1017 = scalar_lea.vmem [#allocation21], %s1016
        %p1018 = pneg %p363
        %p1019 = pneg %p360
        %s1020 = sand.u32 %s34, 1
        %s1021 = scalar_lea.sflag [#allocation4], %s1020
        %s1022 = sand.u32 %s376, 1
        %s1023 = smul.addr %s1022, 512
        %s1024 = scalar_lea.vmem [#allocation22], %s1023
        %p1025 = pneg %p389
        %p1026 = pneg %p386
        %s1027 = sand.u32 %s34, 1
        %s1028 = scalar_lea.sflag [#allocation4], %s1027
        %s1029 = sand.u32 %s402, 1
        %s1030 = smul.addr %s1029, 4
        %s1031 = scalar_lea.vmem [#allocation23], %s1030
        %p1032 = pneg %p415
        %p1033 = pneg %p412
        %s1034 = sand.u32 %s34, 1
        %s1035 = scalar_lea.sflag [#allocation4], %s1034
        %s1036 = sand.u32 %s428, 1
        %s1037 = smul.addr %s1036, 4
        %s1038 = scalar_lea.vmem [#allocation24], %s1037
        %p1039 = pneg %p441
        %p1040 = pneg %p438
        %s1041 = sand.u32 %s34, 1
        %s1042 = scalar_lea.sflag [#allocation4], %s1041
        %s1043 = sand.u32 %s454, 1
        %s1044 = smul.addr %s1043, 4
        %s1045 = scalar_lea.vmem [#allocation25], %s1044
        %p1046 = pneg %p467
        %p1047 = pneg %p464
        %p1048 = pneg %p488
        %p1049 = pneg %p485
        %p1051 = scmp.eq.s32.totalorder %s34, 0
        // Predicated region
        $region165: #{tpu_custom_call.1} parent=91 // pred_check
          %p1052 = pneg %p1051
        $region166: #{tpu_custom_call.1} parent=91 // pred_check_branch
          %1054 = sbr.rel (%p1052) target = $region168
        $region167: #{tpu_custom_call.1} parent=91 // pred_region
          %v1055 = vld [vmem:[#allocation3] sm:$0xff]
          %v1056 = vld [vmem:[#allocation3 + $0x8] sm:$0xff]
          %v1057 = vpack.c.bf16 %v1056, %v1055
          %v1058 = vld [vmem:[#allocation6] sm:$0xff]
          %v1059 = vld [vmem:[#allocation6 + $0x8] sm:$0xff]
          %v1060 = vld [vmem:[#allocation6 + $0x10] sm:$0xff]
          %v1061 = vld [vmem:[#allocation6 + $0x18] sm:$0xff]
          %v1062 = vld [vmem:[#allocation8] sm:$0xf]
          %v1064 = vlaneseq
          %v1065 = vshrl.u32 %v1064, 7
          %v1066 = vsub.s32 0, %v1065
          %v1067 = vrot.slane %v1062, %v1066
          %v1068 = vlaneseq
          %v1069 = vshrl.u32 %v1068, 7
          %v1070 = vsub.s32 1, %v1069
          %v1071 = vrot.slane %v1062, %v1070
          %v1072 = vlaneseq
          %v1073 = vshrl.u32 %v1072, 7
          %v1074 = vsub.s32 2, %v1073
          %v1075 = vrot.slane %v1062, %v1074
          %v1076 = vlaneseq
          %v1077 = vshrl.u32 %v1076, 7
          %v1078 = vsub.s32 3, %v1077
          %v1079 = vrot.slane %v1062, %v1078
          %v1088 = vunpack.c.l.b16 %v1058
          %v1089 = vunpack.c.h.b16 %v1058
          %v1090 = vunpack.c.l.b16 %v1059
          %v1091 = vunpack.c.h.b16 %v1059
          %v1092 = vunpack.c.l.b16 %v1060
          %v1093 = vunpack.c.h.b16 %v1060
          %v1094 = vunpack.c.l.b16 %v1061
          %v1095 = vunpack.c.h.b16 %v1061
          %v1096 = vpack.c.b16 %v1092, %v1088
          %v1097 = vpack.c.b16 %v1093, %v1089
          %v1098 = vpack.c.b16 %v1094, %v1090
          %v1099 = vpack.c.b16 %v1095, %v1091
          %vm1104 = vcmask 130048
          %v1106 = vsel %vm1104, %v1057, 0
          %1108 = vmatprep.subr.bf16.mxu0 %v1097
          %1109 = vmatpush1.bf16.msra.mxu0 %v1096
          %1110 = vmatprep.subr.bf16.mxu0 0
          %1111 = vmatpush1.bf16.msra.mxu0 0
          %1112 = vmatprep.subr.bf16.mxu0 0
          %1113 = vmatpush1.bf16.msra.mxu0 0
          %1114 = vmatprep.subr.bf16.mxu0 0
          %1115 = vmatpush1.bf16.msra.mxu0 0
          %1116 = vmatprep.subr.bf16.mxu0 0
          %1117 = vmatpush1.bf16.msra.mxu0 0
          %1118 = vmatprep.subr.bf16.mxu0 0
          %1119 = vmatpush1.bf16.msra.mxu0 0
          %1120 = vmatprep.subr.bf16.mxu0 0
          %1121 = vmatpush1.bf16.msra.mxu0 0
          %1122 = vmatprep.subr.bf16.mxu0 0
          %1123 = vmatpush1.bf16.msra.mxu0 0
          %1124 = vmatprep.subr.bf16.mxu0 0
          %1125 = vmatpush1.bf16.msra.mxu0 0
          %1126 = vmatprep.subr.bf16.mxu0 0
          %1127 = vmatpush1.bf16.msra.mxu0 0
          %1128 = vmatprep.subr.bf16.mxu0 0
          %1129 = vmatpush1.bf16.msra.mxu0 0
          %1130 = vmatprep.subr.bf16.mxu0 0
          %1131 = vmatpush1.bf16.msra.mxu0 0
          %1132 = vmatprep.subr.bf16.mxu0 0
          %1133 = vmatpush1.bf16.msra.mxu0 0
          %1134 = vmatprep.subr.bf16.mxu0 0
          %1135 = vmatpush1.bf16.msra.mxu0 0
          %1136 = vmatprep.subr.bf16.mxu0 0
          %1137 = vmatpush1.bf16.msra.mxu0 0
          %1138 = vmatprep.subr.bf16.mxu0 0
          %1139 = vmatpush1.bf16.msra.mxu0 0
          %1140 = vmatprep.mubr.bf16.mxu0 0
          %1141 = vmatmul.mubr.bf16.gmra.mrb[0].mxu0 %v1106
          %v1142 = vpop.f32.mrb[0].mxu0
          %v1143 = vadd.f32 %v1067, %v1142
          %v1144 = vpop.f32.mrb[0].mxu0
          %v1145 = vadd.f32 %v1071, %v1144
          %v1146 = vpop.f32.mrb[0].mxu0
          %v1147 = vadd.f32 %v1067, %v1146
          %v1148 = vpop.f32.mrb[0].mxu0
          %v1149 = vadd.f32 %v1071, %v1148
          %1150 = vdwg.mxu0
          %1151 = vmatprep.subr.bf16.mxu0 %v1099
          %1152 = vmatpush1.bf16.msra.mxu0 %v1098
          %1153 = vmatprep.subr.bf16.mxu0 0
          %1154 = vmatpush1.bf16.msra.mxu0 0
          %1155 = vmatprep.subr.bf16.mxu0 0
          %1156 = vmatpush1.bf16.msra.mxu0 0
          %1157 = vmatprep.subr.bf16.mxu0 0
          %1158 = vmatpush1.bf16.msra.mxu0 0
          %1159 = vmatprep.subr.bf16.mxu0 0
          %1160 = vmatpush1.bf16.msra.mxu0 0
          %1161 = vmatprep.subr.bf16.mxu0 0
          %1162 = vmatpush1.bf16.msra.mxu0 0
          %1163 = vmatprep.subr.bf16.mxu0 0
          %1164 = vmatpush1.bf16.msra.mxu0 0
          %1165 = vmatprep.subr.bf16.mxu0 0
          %1166 = vmatpush1.bf16.msra.mxu0 0
          %1167 = vmatprep.subr.bf16.mxu0 0
          %1168 = vmatpush1.bf16.msra.mxu0 0
          %1169 = vmatprep.subr.bf16.mxu0 0
          %1170 = vmatpush1.bf16.msra.mxu0 0
          %1171 = vmatprep.subr.bf16.mxu0 0
          %1172 = vmatpush1.bf16.msra.mxu0 0
          %1173 = vmatprep.subr.bf16.mxu0 0
          %1174 = vmatpush1.bf16.msra.mxu0 0
          %1175 = vmatprep.subr.bf16.mxu0 0
          %1176 = vmatpush1.bf16.msra.mxu0 0
          %1177 = vmatprep.subr.bf16.mxu0 0
          %1178 = vmatpush1.bf16.msra.mxu0 0
          %1179 = vmatprep.subr.bf16.mxu0 0
          %1180 = vmatpush1.bf16.msra.mxu0 0
          %1181 = vmatprep.subr.bf16.mxu0 0
          %1182 = vmatpush1.bf16.msra.mxu0 0
          %1183 = vmatprep.mubr.bf16.mxu0 0
          %1184 = vmatmul.mubr.bf16.gmra.mrb[0].mxu0 %v1106
          %v1185 = vpop.f32.mrb[0].mxu0
          %v1186 = vadd.f32 %v1075, %v1185
          %v1187 = vpop.f32.mrb[0].mxu0
          %v1188 = vadd.f32 %v1079, %v1187
          %v1189 = vpop.f32.mrb[0].mxu0
          %v1190 = vadd.f32 %v1075, %v1189
          %v1191 = vpop.f32.mrb[0].mxu0
          %v1192 = vadd.f32 %v1079, %v1191
          %1193 = vdwg.mxu0
          %v1194 = vld [vmem:[#allocation9] sm:$0xff]
          %v1197 = vunpack.c.l.s4 1966171168
          %v1198 = vunpack.c.0.s8 %v1197
          %v1199 = vlaneseq
          %v1200 = vshrl.u32 %v1199, 7
          %v1201 = vsub.s32 %v1198, %v1200
          %v1202 = vrot.slane %v1194, %v1201
          %v1203 = vcombine.high %v1202, %v1202
          %v1204 = vlaneseq
          %v1205 = vshrl.u32 %v1204, 7
          %v1206 = vsub.s32 0, %v1205
          %v1207 = vrot.slane %v1202, %v1206
          %v1208 = vlaneseq
          %v1209 = vshrl.u32 %v1208, 7
          %v1210 = vsub.s32 1, %v1209
          %v1211 = vrot.slane %v1202, %v1210
          %v1212 = vlaneseq
          %v1213 = vshrl.u32 %v1212, 7
          %v1214 = vsub.s32 2, %v1213
          %v1215 = vrot.slane %v1202, %v1214
          %v1216 = vlaneseq
          %v1217 = vshrl.u32 %v1216, 7
          %v1218 = vsub.s32 3, %v1217
          %v1219 = vrot.slane %v1202, %v1218
          %v1220 = vlaneseq
          %v1221 = vshrl.u32 %v1220, 7
          %v1222 = vsub.s32 0, %v1221
          %v1223 = vrot.slane %v1203, %v1222
          %v1224 = vlaneseq
          %v1225 = vshrl.u32 %v1224, 7
          %v1226 = vsub.s32 1, %v1225
          %v1227 = vrot.slane %v1203, %v1226
          %v1228 = vlaneseq
          %v1229 = vshrl.u32 %v1228, 7
          %v1230 = vsub.s32 2, %v1229
          %v1231 = vrot.slane %v1203, %v1230
          %v1232 = vlaneseq
          %v1233 = vshrl.u32 %v1232, 7
          %v1234 = vsub.s32 3, %v1233
          %v1235 = vrot.slane %v1203, %v1234
          %v1244 = vadd.f32 %v1143, %v1207
          %v1245 = vadd.f32 %v1145, %v1211
          %v1246 = vadd.f32 %v1186, %v1215
          %v1247 = vadd.f32 %v1188, %v1219
          %v1248 = vadd.f32 %v1147, %v1223
          %v1249 = vadd.f32 %v1149, %v1227
          %v1250 = vadd.f32 %v1190, %v1231
          %v1251 = vadd.f32 %v1192, %v1235
          %v1252 = vld [vmem:[#allocation11] sm:$0xf]
          %v1253 = vld [vmem:[#allocation12] sm:$0xf]
          %v1254 = vadd.f32 %v1244, %v1245
          %v1255 = vadd.f32 %v1254, %v1246
          %v1256 = vadd.f32 %v1255, %v1247
          %1257 = vadd.xlane.f32.xlu0 %v1256
          %v1258 = vpop.xlane.xlu0 %1257
          %v1259 = vadd.f32 %v1248, %v1249
          %v1260 = vadd.f32 %v1259, %v1250
          %v1261 = vadd.f32 %v1260, %v1251
          %1262 = vadd.xlane.f32.xlu0 %v1261
          %v1263 = vpop.xlane.xlu0 %1262
          %v1264 = vrcp.pop 512.0
          %v1265 = vmul.f32 %v1258, %v1264
          %v1266 = vmul.f32 %v1263, %v1264
          %v1267 = vsub.f32 %v1244, %v1265
          %v1268 = vsub.f32 %v1245, %v1265
          %v1269 = vsub.f32 %v1246, %v1265
          %v1270 = vsub.f32 %v1247, %v1265
          %v1271 = vsub.f32 %v1248, %v1266
          %v1272 = vsub.f32 %v1249, %v1266
          %v1273 = vsub.f32 %v1250, %v1266
          %v1274 = vsub.f32 %v1251, %v1266
          %v1275 = vmul.f32 %v1267, %v1267
          %v1276 = vmul.f32 %v1268, %v1268
          %v1277 = vmul.f32 %v1269, %v1269
          %v1278 = vmul.f32 %v1270, %v1270
          %v1279 = vmul.f32 %v1271, %v1271
          %v1280 = vmul.f32 %v1272, %v1272
          %v1281 = vmul.f32 %v1273, %v1273
          %v1282 = vmul.f32 %v1274, %v1274
          %v1283 = vadd.f32 %v1275, %v1276
          %v1284 = vadd.f32 %v1283, %v1277
          %v1285 = vadd.f32 %v1284, %v1278
          %1286 = vadd.xlane.f32.xlu0 %v1285
          %v1287 = vpop.xlane.xlu0 %1286
          %v1288 = vadd.f32 %v1279, %v1280
          %v1289 = vadd.f32 %v1288, %v1281
          %v1290 = vadd.f32 %v1289, %v1282
          %1291 = vadd.xlane.f32.xlu0 %v1290
          %v1292 = vpop.xlane.xlu0 %1291
          %v1293 = vmul.f32 %v1287, %v1264
          %v1294 = vmul.f32 %v1292, %v1264
          %v1295 = vadd.f32 %v1293, 1e-06
          %v1296 = vadd.f32 %v1294, 1e-06
          %v1297 = vrsqrt.pop %v1295
          %v1298 = vrsqrt.pop %v1296
          %v1299 = vmul.f32 %v1267, %v1297
          %v1300 = vmul.f32 %v1268, %v1297
          %v1301 = vmul.f32 %v1269, %v1297
          %v1302 = vmul.f32 %v1270, %v1297
          %v1303 = vmul.f32 %v1271, %v1298
          %v1304 = vmul.f32 %v1272, %v1298
          %v1305 = vmul.f32 %v1273, %v1298
          %v1306 = vmul.f32 %v1274, %v1298
          %v1308 = vlaneseq
          %v1309 = vshrl.u32 %v1308, 7
          %v1310 = vsub.s32 0, %v1309
          %v1311 = vrot.slane %v1252, %v1310
          %v1312 = vlaneseq
          %v1313 = vshrl.u32 %v1312, 7
          %v1314 = vsub.s32 1, %v1313
          %v1315 = vrot.slane %v1252, %v1314
          %v1316 = vlaneseq
          %v1317 = vshrl.u32 %v1316, 7
          %v1318 = vsub.s32 2, %v1317
          %v1319 = vrot.slane %v1252, %v1318
          %v1320 = vlaneseq
          %v1321 = vshrl.u32 %v1320, 7
          %v1322 = vsub.s32 3, %v1321
          %v1323 = vrot.slane %v1252, %v1322
          %v1328 = vmul.f32 %v1299, %v1311
          %v1329 = vmul.f32 %v1300, %v1315
          %v1330 = vmul.f32 %v1301, %v1319
          %v1331 = vmul.f32 %v1302, %v1323
          %v1332 = vmul.f32 %v1303, %v1311
          %v1333 = vmul.f32 %v1304, %v1315
          %v1334 = vmul.f32 %v1305, %v1319
          %v1335 = vmul.f32 %v1306, %v1323
          %v1337 = vlaneseq
          %v1338 = vshrl.u32 %v1337, 7
          %v1339 = vsub.s32 0, %v1338
          %v1340 = vrot.slane %v1253, %v1339
          %v1341 = vlaneseq
          %v1342 = vshrl.u32 %v1341, 7
          %v1343 = vsub.s32 1, %v1342
          %v1344 = vrot.slane %v1253, %v1343
          %v1345 = vlaneseq
          %v1346 = vshrl.u32 %v1345, 7
          %v1347 = vsub.s32 2, %v1346
          %v1348 = vrot.slane %v1253, %v1347
          %v1349 = vlaneseq
          %v1350 = vshrl.u32 %v1349, 7
          %v1351 = vsub.s32 3, %v1350
          %v1352 = vrot.slane %v1253, %v1351
          %v1357 = vadd.f32 %v1328, %v1340
          %v1358 = vadd.f32 %v1329, %v1344
          %v1359 = vadd.f32 %v1330, %v1348
          %v1360 = vadd.f32 %v1331, %v1352
          %v1361 = vadd.f32 %v1332, %v1340
          %v1362 = vadd.f32 %v1333, %v1344
          %v1363 = vadd.f32 %v1334, %v1348
          %v1364 = vadd.f32 %v1335, %v1352
          %1365 = vst [vmem:[#allocation2] sm:$0xff] %v1357
          %1366 = vst [vmem:[#allocation2 + $0x8] sm:$0xff] %v1358
          %1367 = vst [vmem:[#allocation2 + $0x10] sm:$0xff] %v1359
          %1368 = vst [vmem:[#allocation2 + $0x18] sm:$0xff] %v1360
          %1369 = vst [vmem:[#allocation2 + $0x20] sm:$0xff] %v1361
          %1370 = vst [vmem:[#allocation2 + $0x28] sm:$0xff] %v1362
          %1371 = vst [vmem:[#allocation2 + $0x30] sm:$0xff] %v1363
          %1372 = vst [vmem:[#allocation2 + $0x38] sm:$0xff] %v1364
        $region168: #{tpu_custom_call.1} parent=91 // pred_fallthru
          _
        %v1373 = vld [vmem:[#allocation2] sm:$0xff]
        %v1374 = vld [vmem:[#allocation2 + $0x8] sm:$0xff]
        %v1375 = vld [vmem:[#allocation2 + $0x10] sm:$0xff]
        %v1376 = vld [vmem:[#allocation2 + $0x18] sm:$0xff]
        %v1377 = vld [vmem:[#allocation2 + $0x20] sm:$0xff]
        %v1378 = vld [vmem:[#allocation2 + $0x28] sm:$0xff]
        %v1379 = vld [vmem:[#allocation2 + $0x30] sm:$0xff]
        %v1380 = vld [vmem:[#allocation2 + $0x38] sm:$0xff]
        %v1381 = vpack.c.bf16 %v1377, %v1373
        %v1382 = vpack.c.bf16 %v1378, %v1374
        %v1383 = vpack.c.bf16 %v1379, %v1375
        %v1384 = vpack.c.bf16 %v1380, %v1376
        %v1385 = vld [vmem:[%s848] sm:$0xff]
        %v1386 = vld [vmem:[%s848 + $0x8] sm:$0xff]
        %v1387 = vld [vmem:[%s848 + $0x10] sm:$0xff]
        %v1388 = vld [vmem:[%s848 + $0x18] sm:$0xff]
        %v1389 = vld [vmem:[%s848 + $0x20] sm:$0xff]
        %v1390 = vld [vmem:[%s848 + $0x28] sm:$0xff]
        %v1391 = vld [vmem:[%s848 + $0x30] sm:$0xff]
        %v1392 = vld [vmem:[%s848 + $0x38] sm:$0xff]
        %v1393 = vld [vmem:[%s848 + $0x40] sm:$0xff]
        %v1394 = vld [vmem:[%s848 + $0x48] sm:$0xff]
        %v1395 = vld [vmem:[%s848 + $0x50] sm:$0xff]
        %v1396 = vld [vmem:[%s848 + $0x58] sm:$0xff]
        %v1397 = vld [vmem:[%s848 + $0x60] sm:$0xff]
        %v1398 = vld [vmem:[%s848 + $0x68] sm:$0xff]
        %v1399 = vld [vmem:[%s848 + $0x70] sm:$0xff]
        %v1400 = vld [vmem:[%s848 + $0x78] sm:$0xff]
        %v1401 = vld [vmem:[%s848 + $0x80] sm:$0xff]
        %v1402 = vld [vmem:[%s848 + $0x88] sm:$0xff]
        %v1403 = vld [vmem:[%s848 + $0x90] sm:$0xff]
        %v1404 = vld [vmem:[%s848 + $0x98] sm:$0xff]
        %v1405 = vld [vmem:[%s848 + $0xa0] sm:$0xff]
        %v1406 = vld [vmem:[%s848 + $0xa8] sm:$0xff]
        %v1407 = vld [vmem:[%s848 + $0xb0] sm:$0xff]
        %v1408 = vld [vmem:[%s848 + $0xb8] sm:$0xff]
        %v1409 = vld [vmem:[%s848 + $0xc0] sm:$0xff]
        %v1410 = vld [vmem:[%s848 + $0xc8] sm:$0xff]
        %v1411 = vld [vmem:[%s848 + $0xd0] sm:$0xff]
        %v1412 = vld [vmem:[%s848 + $0xd8] sm:$0xff]
        %v1413 = vld [vmem:[%s848 + $0xe0] sm:$0xff]
        %v1414 = vld [vmem:[%s848 + $0xe8] sm:$0xff]
        %v1415 = vld [vmem:[%s848 + $0xf0] sm:$0xff]
        %v1416 = vld [vmem:[%s848 + $0xf8] sm:$0xff]
        %v1417 = vld [vmem:[%s848 + $0x100] sm:$0xff]
        %v1418 = vld [vmem:[%s848 + $0x108] sm:$0xff]
        %v1419 = vld [vmem:[%s848 + $0x110] sm:$0xff]
        %v1420 = vld [vmem:[%s848 + $0x118] sm:$0xff]
        %v1421 = vld [vmem:[%s848 + $0x120] sm:$0xff]
        %v1422 = vld [vmem:[%s848 + $0x128] sm:$0xff]
        %v1423 = vld [vmem:[%s848 + $0x130] sm:$0xff]
        %v1424 = vld [vmem:[%s848 + $0x138] sm:$0xff]
        %v1425 = vld [vmem:[%s848 + $0x140] sm:$0xff]
        %v1426 = vld [vmem:[%s848 + $0x148] sm:$0xff]
        %v1427 = vld [vmem:[%s848 + $0x150] sm:$0xff]
        %v1428 = vld [vmem:[%s848 + $0x158] sm:$0xff]
        %v1429 = vld [vmem:[%s848 + $0x160] sm:$0xff]
        %v1430 = vld [vmem:[%s848 + $0x168] sm:$0xff]
        %v1431 = vld [vmem:[%s848 + $0x170] sm:$0xff]
        %v1432 = vld [vmem:[%s848 + $0x178] sm:$0xff]
        %v1433 = vld [vmem:[%s848 + $0x180] sm:$0xff]
        %v1434 = vld [vmem:[%s848 + $0x188] sm:$0xff]
        %v1435 = vld [vmem:[%s848 + $0x190] sm:$0xff]
        %v1436 = vld [vmem:[%s848 + $0x198] sm:$0xff]
        %v1437 = vld [vmem:[%s848 + $0x1a0] sm:$0xff]
        %v1438 = vld [vmem:[%s848 + $0x1a8] sm:$0xff]
        %v1439 = vld [vmem:[%s848 + $0x1b0] sm:$0xff]
        %v1440 = vld [vmem:[%s848 + $0x1b8] sm:$0xff]
        %v1441 = vld [vmem:[%s848 + $0x1c0] sm:$0xff]
        %v1442 = vld [vmem:[%s848 + $0x1c8] sm:$0xff]
        %v1443 = vld [vmem:[%s848 + $0x1d0] sm:$0xff]
        %v1444 = vld [vmem:[%s848 + $0x1d8] sm:$0xff]
        %v1445 = vld [vmem:[%s848 + $0x1e0] sm:$0xff]
        %v1446 = vld [vmem:[%s848 + $0x1e8] sm:$0xff]
        %v1447 = vld [vmem:[%s848 + $0x1f0] sm:$0xff]
        %v1448 = vld [vmem:[%s848 + $0x1f8] sm:$0xff]
        %v1449 = vld [vmem:[%s848 + $0x200] sm:$0xff]
        %v1450 = vld [vmem:[%s848 + $0x208] sm:$0xff]
        %v1451 = vld [vmem:[%s848 + $0x210] sm:$0xff]
        %v1452 = vld [vmem:[%s848 + $0x218] sm:$0xff]
        %v1453 = vld [vmem:[%s848 + $0x220] sm:$0xff]
        %v1454 = vld [vmem:[%s848 + $0x228] sm:$0xff]
        %v1455 = vld [vmem:[%s848 + $0x230] sm:$0xff]
        %v1456 = vld [vmem:[%s848 + $0x238] sm:$0xff]
        %v1457 = vld [vmem:[%s848 + $0x240] sm:$0xff]
        %v1458 = vld [vmem:[%s848 + $0x248] sm:$0xff]
        %v1459 = vld [vmem:[%s848 + $0x250] sm:$0xff]
        %v1460 = vld [vmem:[%s848 + $0x258] sm:$0xff]
        %v1461 = vld [vmem:[%s848 + $0x260] sm:$0xff]
        %v1462 = vld [vmem:[%s848 + $0x268] sm:$0xff]
        %v1463 = vld [vmem:[%s848 + $0x270] sm:$0xff]
        %v1464 = vld [vmem:[%s848 + $0x278] sm:$0xff]
        %v1465 = vld [vmem:[%s848 + $0x280] sm:$0xff]
        %v1466 = vld [vmem:[%s848 + $0x288] sm:$0xff]
        %v1467 = vld [vmem:[%s848 + $0x290] sm:$0xff]
        %v1468 = vld [vmem:[%s848 + $0x298] sm:$0xff]
        %v1469 = vld [vmem:[%s848 + $0x2a0] sm:$0xff]
        %v1470 = vld [vmem:[%s848 + $0x2a8] sm:$0xff]
        %v1471 = vld [vmem:[%s848 + $0x2b0] sm:$0xff]
        %v1472 = vld [vmem:[%s848 + $0x2b8] sm:$0xff]
        %v1473 = vld [vmem:[%s848 + $0x2c0] sm:$0xff]
        %v1474 = vld [vmem:[%s848 + $0x2c8] sm:$0xff]
        %v1475 = vld [vmem:[%s848 + $0x2d0] sm:$0xff]
        %v1476 = vld [vmem:[%s848 + $0x2d8] sm:$0xff]
        %v1477 = vld [vmem:[%s848 + $0x2e0] sm:$0xff]
        %v1478 = vld [vmem:[%s848 + $0x2e8] sm:$0xff]
        %v1479 = vld [vmem:[%s848 + $0x2f0] sm:$0xff]
        %v1480 = vld [vmem:[%s848 + $0x2f8] sm:$0xff]
        %v1481 = vld [vmem:[%s848 + $0x300] sm:$0xff]
        %v1482 = vld [vmem:[%s848 + $0x308] sm:$0xff]
        %v1483 = vld [vmem:[%s848 + $0x310] sm:$0xff]
        %v1484 = vld [vmem:[%s848 + $0x318] sm:$0xff]
        %v1485 = vld [vmem:[%s848 + $0x320] sm:$0xff]
        %v1486 = vld [vmem:[%s848 + $0x328] sm:$0xff]
        %v1487 = vld [vmem:[%s848 + $0x330] sm:$0xff]
        %v1488 = vld [vmem:[%s848 + $0x338] sm:$0xff]
        %v1489 = vld [vmem:[%s848 + $0x340] sm:$0xff]
        %v1490 = vld [vmem:[%s848 + $0x348] sm:$0xff]
        %v1491 = vld [vmem:[%s848 + $0x350] sm:$0xff]
        %v1492 = vld [vmem:[%s848 + $0x358] sm:$0xff]
        %v1493 = vld [vmem:[%s848 + $0x360] sm:$0xff]
        %v1494 = vld [vmem:[%s848 + $0x368] sm:$0xff]
        %v1495 = vld [vmem:[%s848 + $0x370] sm:$0xff]
        %v1496 = vld [vmem:[%s848 + $0x378] sm:$0xff]
        %v1497 = vld [vmem:[%s848 + $0x380] sm:$0xff]
        %v1498 = vld [vmem:[%s848 + $0x388] sm:$0xff]
        %v1499 = vld [vmem:[%s848 + $0x390] sm:$0xff]
        %v1500 = vld [vmem:[%s848 + $0x398] sm:$0xff]
        %v1501 = vld [vmem:[%s848 + $0x3a0] sm:$0xff]
        %v1502 = vld [vmem:[%s848 + $0x3a8] sm:$0xff]
        %v1503 = vld [vmem:[%s848 + $0x3b0] sm:$0xff]
        %v1504 = vld [vmem:[%s848 + $0x3b8] sm:$0xff]
        %v1505 = vld [vmem:[%s848 + $0x3c0] sm:$0xff]
        %v1506 = vld [vmem:[%s848 + $0x3c8] sm:$0xff]
        %v1507 = vld [vmem:[%s848 + $0x3d0] sm:$0xff]
        %v1508 = vld [vmem:[%s848 + $0x3d8] sm:$0xff]
        %v1509 = vld [vmem:[%s848 + $0x3e0] sm:$0xff]
        %v1510 = vld [vmem:[%s848 + $0x3e8] sm:$0xff]
        %v1511 = vld [vmem:[%s848 + $0x3f0] sm:$0xff]
        %v1512 = vld [vmem:[%s848 + $0x3f8] sm:$0xff]
        %v1513 = vld [vmem:[%s848 + $0x400] sm:$0xff]
        %v1514 = vld [vmem:[%s848 + $0x408] sm:$0xff]
        %v1515 = vld [vmem:[%s848 + $0x410] sm:$0xff]
        %v1516 = vld [vmem:[%s848 + $0x418] sm:$0xff]
        %v1517 = vld [vmem:[%s848 + $0x420] sm:$0xff]
        %v1518 = vld [vmem:[%s848 + $0x428] sm:$0xff]
        %v1519 = vld [vmem:[%s848 + $0x430] sm:$0xff]
        %v1520 = vld [vmem:[%s848 + $0x438] sm:$0xff]
        %v1521 = vld [vmem:[%s848 + $0x440] sm:$0xff]
        %v1522 = vld [vmem:[%s848 + $0x448] sm:$0xff]
        %v1523 = vld [vmem:[%s848 + $0x450] sm:$0xff]
        %v1524 = vld [vmem:[%s848 + $0x458] sm:$0xff]
        %v1525 = vld [vmem:[%s848 + $0x460] sm:$0xff]
        %v1526 = vld [vmem:[%s848 + $0x468] sm:$0xff]
        %v1527 = vld [vmem:[%s848 + $0x470] sm:$0xff]
        %v1528 = vld [vmem:[%s848 + $0x478] sm:$0xff]
        %v1529 = vld [vmem:[%s848 + $0x480] sm:$0xff]
        %v1530 = vld [vmem:[%s848 + $0x488] sm:$0xff]
        %v1531 = vld [vmem:[%s848 + $0x490] sm:$0xff]
        %v1532 = vld [vmem:[%s848 + $0x498] sm:$0xff]
        %v1533 = vld [vmem:[%s848 + $0x4a0] sm:$0xff]
        %v1534 = vld [vmem:[%s848 + $0x4a8] sm:$0xff]
        %v1535 = vld [vmem:[%s848 + $0x4b0] sm:$0xff]
        %v1536 = vld [vmem:[%s848 + $0x4b8] sm:$0xff]
        %v1537 = vld [vmem:[%s848 + $0x4c0] sm:$0xff]
        %v1538 = vld [vmem:[%s848 + $0x4c8] sm:$0xff]
        %v1539 = vld [vmem:[%s848 + $0x4d0] sm:$0xff]
        %v1540 = vld [vmem:[%s848 + $0x4d8] sm:$0xff]
        %v1541 = vld [vmem:[%s848 + $0x4e0] sm:$0xff]
        %v1542 = vld [vmem:[%s848 + $0x4e8] sm:$0xff]
        %v1543 = vld [vmem:[%s848 + $0x4f0] sm:$0xff]
        %v1544 = vld [vmem:[%s848 + $0x4f8] sm:$0xff]
        %v1545 = vld [vmem:[%s848 + $0x500] sm:$0xff]
        %v1546 = vld [vmem:[%s848 + $0x508] sm:$0xff]
        %v1547 = vld [vmem:[%s848 + $0x510] sm:$0xff]
        %v1548 = vld [vmem:[%s848 + $0x518] sm:$0xff]
        %v1549 = vld [vmem:[%s848 + $0x520] sm:$0xff]
        %v1550 = vld [vmem:[%s848 + $0x528] sm:$0xff]
        %v1551 = vld [vmem:[%s848 + $0x530] sm:$0xff]
        %v1552 = vld [vmem:[%s848 + $0x538] sm:$0xff]
        %v1553 = vld [vmem:[%s848 + $0x540] sm:$0xff]
        %v1554 = vld [vmem:[%s848 + $0x548] sm:$0xff]
        %v1555 = vld [vmem:[%s848 + $0x550] sm:$0xff]
        %v1556 = vld [vmem:[%s848 + $0x558] sm:$0xff]
        %v1557 = vld [vmem:[%s848 + $0x560] sm:$0xff]
        %v1558 = vld [vmem:[%s848 + $0x568] sm:$0xff]
        %v1559 = vld [vmem:[%s848 + $0x570] sm:$0xff]
        %v1560 = vld [vmem:[%s848 + $0x578] sm:$0xff]
        %v1561 = vld [vmem:[%s848 + $0x580] sm:$0xff]
        %v1562 = vld [vmem:[%s848 + $0x588] sm:$0xff]
        %v1563 = vld [vmem:[%s848 + $0x590] sm:$0xff]
        %v1564 = vld [vmem:[%s848 + $0x598] sm:$0xff]
        %v1565 = vld [vmem:[%s848 + $0x5a0] sm:$0xff]
        %v1566 = vld [vmem:[%s848 + $0x5a8] sm:$0xff]
        %v1567 = vld [vmem:[%s848 + $0x5b0] sm:$0xff]
        %v1568 = vld [vmem:[%s848 + $0x5b8] sm:$0xff]
        %v1569 = vld [vmem:[%s848 + $0x5c0] sm:$0xff]
        %v1570 = vld [vmem:[%s848 + $0x5c8] sm:$0xff]
        %v1571 = vld [vmem:[%s848 + $0x5d0] sm:$0xff]
        %v1572 = vld [vmem:[%s848 + $0x5d8] sm:$0xff]
        %v1573 = vld [vmem:[%s848 + $0x5e0] sm:$0xff]
        %v1574 = vld [vmem:[%s848 + $0x5e8] sm:$0xff]
        %v1575 = vld [vmem:[%s848 + $0x5f0] sm:$0xff]
        %v1576 = vld [vmem:[%s848 + $0x5f8] sm:$0xff]
        %v1577 = vld [vmem:[%s848 + $0x600] sm:$0xff]
        %v1578 = vld [vmem:[%s848 + $0x608] sm:$0xff]
        %v1579 = vld [vmem:[%s848 + $0x610] sm:$0xff]
        %v1580 = vld [vmem:[%s848 + $0x618] sm:$0xff]
        %v1581 = vld [vmem:[%s848 + $0x620] sm:$0xff]
        %v1582 = vld [vmem:[%s848 + $0x628] sm:$0xff]
        %v1583 = vld [vmem:[%s848 + $0x630] sm:$0xff]
        %v1584 = vld [vmem:[%s848 + $0x638] sm:$0xff]
        %v1585 = vld [vmem:[%s848 + $0x640] sm:$0xff]
        %v1586 = vld [vmem:[%s848 + $0x648] sm:$0xff]
        %v1587 = vld [vmem:[%s848 + $0x650] sm:$0xff]
        %v1588 = vld [vmem:[%s848 + $0x658] sm:$0xff]
        %v1589 = vld [vmem:[%s848 + $0x660] sm:$0xff]
        %v1590 = vld [vmem:[%s848 + $0x668] sm:$0xff]
        %v1591 = vld [vmem:[%s848 + $0x670] sm:$0xff]
        %v1592 = vld [vmem:[%s848 + $0x678] sm:$0xff]
        %v1593 = vld [vmem:[%s848 + $0x680] sm:$0xff]
        %v1594 = vld [vmem:[%s848 + $0x688] sm:$0xff]
        %v1595 = vld [vmem:[%s848 + $0x690] sm:$0xff]
        %v1596 = vld [vmem:[%s848 + $0x698] sm:$0xff]
        %v1597 = vld [vmem:[%s848 + $0x6a0] sm:$0xff]
        %v1598 = vld [vmem:[%s848 + $0x6a8] sm:$0xff]
        %v1599 = vld [vmem:[%s848 + $0x6b0] sm:$0xff]
        %v1600 = vld [vmem:[%s848 + $0x6b8] sm:$0xff]
        %v1601 = vld [vmem:[%s848 + $0x6c0] sm:$0xff]
        %v1602 = vld [vmem:[%s848 + $0x6c8] sm:$0xff]
        %v1603 = vld [vmem:[%s848 + $0x6d0] sm:$0xff]
        %v1604 = vld [vmem:[%s848 + $0x6d8] sm:$0xff]
        %v1605 = vld [vmem:[%s848 + $0x6e0] sm:$0xff]
        %v1606 = vld [vmem:[%s848 + $0x6e8] sm:$0xff]
        %v1607 = vld [vmem:[%s848 + $0x6f0] sm:$0xff]
        %v1608 = vld [vmem:[%s848 + $0x6f8] sm:$0xff]
        %v1609 = vld [vmem:[%s848 + $0x700] sm:$0xff]
        %v1610 = vld [vmem:[%s848 + $0x708] sm:$0xff]
        %v1611 = vld [vmem:[%s848 + $0x710] sm:$0xff]
        %v1612 = vld [vmem:[%s848 + $0x718] sm:$0xff]
        %v1613 = vld [vmem:[%s848 + $0x720] sm:$0xff]
        %v1614 = vld [vmem:[%s848 + $0x728] sm:$0xff]
        %v1615 = vld [vmem:[%s848 + $0x730] sm:$0xff]
        %v1616 = vld [vmem:[%s848 + $0x738] sm:$0xff]
        %v1617 = vld [vmem:[%s848 + $0x740] sm:$0xff]
        %v1618 = vld [vmem:[%s848 + $0x748] sm:$0xff]
        %v1619 = vld [vmem:[%s848 + $0x750] sm:$0xff]
        %v1620 = vld [vmem:[%s848 + $0x758] sm:$0xff]
        %v1621 = vld [vmem:[%s848 + $0x760] sm:$0xff]
        %v1622 = vld [vmem:[%s848 + $0x768] sm:$0xff]
        %v1623 = vld [vmem:[%s848 + $0x770] sm:$0xff]
        %v1624 = vld [vmem:[%s848 + $0x778] sm:$0xff]
        %v1625 = vld [vmem:[%s848 + $0x780] sm:$0xff]
        %v1626 = vld [vmem:[%s848 + $0x788] sm:$0xff]
        %v1627 = vld [vmem:[%s848 + $0x790] sm:$0xff]
        %v1628 = vld [vmem:[%s848 + $0x798] sm:$0xff]
        %v1629 = vld [vmem:[%s848 + $0x7a0] sm:$0xff]
        %v1630 = vld [vmem:[%s848 + $0x7a8] sm:$0xff]
        %v1631 = vld [vmem:[%s848 + $0x7b0] sm:$0xff]
        %v1632 = vld [vmem:[%s848 + $0x7b8] sm:$0xff]
        %v1633 = vld [vmem:[%s848 + $0x7c0] sm:$0xff]
        %v1634 = vld [vmem:[%s848 + $0x7c8] sm:$0xff]
        %v1635 = vld [vmem:[%s848 + $0x7d0] sm:$0xff]
        %v1636 = vld [vmem:[%s848 + $0x7d8] sm:$0xff]
        %v1637 = vld [vmem:[%s848 + $0x7e0] sm:$0xff]
        %v1638 = vld [vmem:[%s848 + $0x7e8] sm:$0xff]
        %v1639 = vld [vmem:[%s848 + $0x7f0] sm:$0xff]
        %v1640 = vld [vmem:[%s848 + $0x7f8] sm:$0xff]
        %v1641 = vld [vmem:[%s848 + $0x800] sm:$0xff]
        %v1642 = vld [vmem:[%s848 + $0x808] sm:$0xff]
        %v1643 = vld [vmem:[%s848 + $0x810] sm:$0xff]
        %v1644 = vld [vmem:[%s848 + $0x818] sm:$0xff]
        %v1645 = vld [vmem:[%s848 + $0x820] sm:$0xff]
        %v1646 = vld [vmem:[%s848 + $0x828] sm:$0xff]
        %v1647 = vld [vmem:[%s848 + $0x830] sm:$0xff]
        %v1648 = vld [vmem:[%s848 + $0x838] sm:$0xff]
        %v1649 = vld [vmem:[%s848 + $0x840] sm:$0xff]
        %v1650 = vld [vmem:[%s848 + $0x848] sm:$0xff]
        %v1651 = vld [vmem:[%s848 + $0x850] sm:$0xff]
        %v1652 = vld [vmem:[%s848 + $0x858] sm:$0xff]
        %v1653 = vld [vmem:[%s848 + $0x860] sm:$0xff]
        %v1654 = vld [vmem:[%s848 + $0x868] sm:$0xff]
        %v1655 = vld [vmem:[%s848 + $0x870] sm:$0xff]
        %v1656 = vld [vmem:[%s848 + $0x878] sm:$0xff]
        %v1657 = vld [vmem:[%s848 + $0x880] sm:$0xff]
        %v1658 = vld [vmem:[%s848 + $0x888] sm:$0xff]
        %v1659 = vld [vmem:[%s848 + $0x890] sm:$0xff]
        %v1660 = vld [vmem:[%s848 + $0x898] sm:$0xff]
        %v1661 = vld [vmem:[%s848 + $0x8a0] sm:$0xff]
        %v1662 = vld [vmem:[%s848 + $0x8a8] sm:$0xff]
        %v1663 = vld [vmem:[%s848 + $0x8b0] sm:$0xff]
        %v1664 = vld [vmem:[%s848 + $0x8b8] sm:$0xff]
        %v1665 = vld [vmem:[%s848 + $0x8c0] sm:$0xff]
        %v1666 = vld [vmem:[%s848 + $0x8c8] sm:$0xff]
        %v1667 = vld [vmem:[%s848 + $0x8d0] sm:$0xff]
        %v1668 = vld [vmem:[%s848 + $0x8d8] sm:$0xff]
        %v1669 = vld [vmem:[%s848 + $0x8e0] sm:$0xff]
        %v1670 = vld [vmem:[%s848 + $0x8e8] sm:$0xff]
        %v1671 = vld [vmem:[%s848 + $0x8f0] sm:$0xff]
        %v1672 = vld [vmem:[%s848 + $0x8f8] sm:$0xff]
        %v1673 = vld [vmem:[%s848 + $0x900] sm:$0xff]
        %v1674 = vld [vmem:[%s848 + $0x908] sm:$0xff]
        %v1675 = vld [vmem:[%s848 + $0x910] sm:$0xff]
        %v1676 = vld [vmem:[%s848 + $0x918] sm:$0xff]
        %v1677 = vld [vmem:[%s848 + $0x920] sm:$0xff]
        %v1678 = vld [vmem:[%s848 + $0x928] sm:$0xff]
        %v1679 = vld [vmem:[%s848 + $0x930] sm:$0xff]
        %v1680 = vld [vmem:[%s848 + $0x938] sm:$0xff]
        %v1681 = vld [vmem:[%s848 + $0x940] sm:$0xff]
        %v1682 = vld [vmem:[%s848 + $0x948] sm:$0xff]
        %v1683 = vld [vmem:[%s848 + $0x950] sm:$0xff]
        %v1684 = vld [vmem:[%s848 + $0x958] sm:$0xff]
        %v1685 = vld [vmem:[%s848 + $0x960] sm:$0xff]
        %v1686 = vld [vmem:[%s848 + $0x968] sm:$0xff]
        %v1687 = vld [vmem:[%s848 + $0x970] sm:$0xff]
        %v1688 = vld [vmem:[%s848 + $0x978] sm:$0xff]
        %v1689 = vld [vmem:[%s848 + $0x980] sm:$0xff]
        %v1690 = vld [vmem:[%s848 + $0x988] sm:$0xff]
        %v1691 = vld [vmem:[%s848 + $0x990] sm:$0xff]
        %v1692 = vld [vmem:[%s848 + $0x998] sm:$0xff]
        %v1693 = vld [vmem:[%s848 + $0x9a0] sm:$0xff]
        %v1694 = vld [vmem:[%s848 + $0x9a8] sm:$0xff]
        %v1695 = vld [vmem:[%s848 + $0x9b0] sm:$0xff]
        %v1696 = vld [vmem:[%s848 + $0x9b8] sm:$0xff]
        %v1697 = vld [vmem:[%s848 + $0x9c0] sm:$0xff]
        %v1698 = vld [vmem:[%s848 + $0x9c8] sm:$0xff]
        %v1699 = vld [vmem:[%s848 + $0x9d0] sm:$0xff]
        %v1700 = vld [vmem:[%s848 + $0x9d8] sm:$0xff]
        %v1701 = vld [vmem:[%s848 + $0x9e0] sm:$0xff]
        %v1702 = vld [vmem:[%s848 + $0x9e8] sm:$0xff]
        %v1703 = vld [vmem:[%s848 + $0x9f0] sm:$0xff]
        %v1704 = vld [vmem:[%s848 + $0x9f8] sm:$0xff]
        %v1705 = vld [vmem:[%s848 + $0xa00] sm:$0xff]
        %v1706 = vld [vmem:[%s848 + $0xa08] sm:$0xff]
        %v1707 = vld [vmem:[%s848 + $0xa10] sm:$0xff]
        %v1708 = vld [vmem:[%s848 + $0xa18] sm:$0xff]
        %v1709 = vld [vmem:[%s848 + $0xa20] sm:$0xff]
        %v1710 = vld [vmem:[%s848 + $0xa28] sm:$0xff]
        %v1711 = vld [vmem:[%s848 + $0xa30] sm:$0xff]
        %v1712 = vld [vmem:[%s848 + $0xa38] sm:$0xff]
        %v1713 = vld [vmem:[%s848 + $0xa40] sm:$0xff]
        %v1714 = vld [vmem:[%s848 + $0xa48] sm:$0xff]
        %v1715 = vld [vmem:[%s848 + $0xa50] sm:$0xff]
        %v1716 = vld [vmem:[%s848 + $0xa58] sm:$0xff]
        %v1717 = vld [vmem:[%s848 + $0xa60] sm:$0xff]
        %v1718 = vld [vmem:[%s848 + $0xa68] sm:$0xff]
        %v1719 = vld [vmem:[%s848 + $0xa70] sm:$0xff]
        %v1720 = vld [vmem:[%s848 + $0xa78] sm:$0xff]
        %v1721 = vld [vmem:[%s848 + $0xa80] sm:$0xff]
        %v1722 = vld [vmem:[%s848 + $0xa88] sm:$0xff]
        %v1723 = vld [vmem:[%s848 + $0xa90] sm:$0xff]
        %v1724 = vld [vmem:[%s848 + $0xa98] sm:$0xff]
        %v1725 = vld [vmem:[%s848 + $0xaa0] sm:$0xff]
        %v1726 = vld [vmem:[%s848 + $0xaa8] sm:$0xff]
        %v1727 = vld [vmem:[%s848 + $0xab0] sm:$0xff]
        %v1728 = vld [vmem:[%s848 + $0xab8] sm:$0xff]
        %v1729 = vld [vmem:[%s848 + $0xac0] sm:$0xff]
        %v1730 = vld [vmem:[%s848 + $0xac8] sm:$0xff]
        %v1731 = vld [vmem:[%s848 + $0xad0] sm:$0xff]
        %v1732 = vld [vmem:[%s848 + $0xad8] sm:$0xff]
        %v1733 = vld [vmem:[%s848 + $0xae0] sm:$0xff]
        %v1734 = vld [vmem:[%s848 + $0xae8] sm:$0xff]
        %v1735 = vld [vmem:[%s848 + $0xaf0] sm:$0xff]
        %v1736 = vld [vmem:[%s848 + $0xaf8] sm:$0xff]
        %v1737 = vld [vmem:[%s848 + $0xb00] sm:$0xff]
        %v1738 = vld [vmem:[%s848 + $0xb08] sm:$0xff]
        %v1739 = vld [vmem:[%s848 + $0xb10] sm:$0xff]
        %v1740 = vld [vmem:[%s848 + $0xb18] sm:$0xff]
        %v1741 = vld [vmem:[%s848 + $0xb20] sm:$0xff]
        %v1742 = vld [vmem:[%s848 + $0xb28] sm:$0xff]
        %v1743 = vld [vmem:[%s848 + $0xb30] sm:$0xff]
        %v1744 = vld [vmem:[%s848 + $0xb38] sm:$0xff]
        %v1745 = vld [vmem:[%s848 + $0xb40] sm:$0xff]
        %v1746 = vld [vmem:[%s848 + $0xb48] sm:$0xff]
        %v1747 = vld [vmem:[%s848 + $0xb50] sm:$0xff]
        %v1748 = vld [vmem:[%s848 + $0xb58] sm:$0xff]
        %v1749 = vld [vmem:[%s848 + $0xb60] sm:$0xff]
        %v1750 = vld [vmem:[%s848 + $0xb68] sm:$0xff]
        %v1751 = vld [vmem:[%s848 + $0xb70] sm:$0xff]
        %v1752 = vld [vmem:[%s848 + $0xb78] sm:$0xff]
        %v1753 = vld [vmem:[%s848 + $0xb80] sm:$0xff]
        %v1754 = vld [vmem:[%s848 + $0xb88] sm:$0xff]
        %v1755 = vld [vmem:[%s848 + $0xb90] sm:$0xff]
        %v1756 = vld [vmem:[%s848 + $0xb98] sm:$0xff]
        %v1757 = vld [vmem:[%s848 + $0xba0] sm:$0xff]
        %v1758 = vld [vmem:[%s848 + $0xba8] sm:$0xff]
        %v1759 = vld [vmem:[%s848 + $0xbb0] sm:$0xff]
        %v1760 = vld [vmem:[%s848 + $0xbb8] sm:$0xff]
        %v1761 = vld [vmem:[%s848 + $0xbc0] sm:$0xff]
        %v1762 = vld [vmem:[%s848 + $0xbc8] sm:$0xff]
        %v1763 = vld [vmem:[%s848 + $0xbd0] sm:$0xff]
        %v1764 = vld [vmem:[%s848 + $0xbd8] sm:$0xff]
        %v1765 = vld [vmem:[%s848 + $0xbe0] sm:$0xff]
        %v1766 = vld [vmem:[%s848 + $0xbe8] sm:$0xff]
        %v1767 = vld [vmem:[%s848 + $0xbf0] sm:$0xff]
        %v1768 = vld [vmem:[%s848 + $0xbf8] sm:$0xff]
        %v1769 = vld [vmem:[%s857] sm:$0xff]
        %v1770 = vld [vmem:[%s857 + $0x8] sm:$0xf]
        %v1773 = vlaneseq
        %v1774 = vshrl.u32 %v1773, 7
        %v1775 = vsub.s32 0, %v1774
        %v1776 = vrot.slane %v1769, %v1775
        %v1777 = vlaneseq
        %v1778 = vshrl.u32 %v1777, 7
        %v1779 = vsub.s32 1, %v1778
        %v1780 = vrot.slane %v1769, %v1779
        %v1781 = vlaneseq
        %v1782 = vshrl.u32 %v1781, 7
        %v1783 = vsub.s32 2, %v1782
        %v1784 = vrot.slane %v1769, %v1783
        %v1785 = vlaneseq
        %v1786 = vshrl.u32 %v1785, 7
        %v1787 = vsub.s32 3, %v1786
        %v1788 = vrot.slane %v1769, %v1787
        %v1789 = vlaneseq
        %v1790 = vshrl.u32 %v1789, 7
        %v1791 = vsub.s32 4, %v1790
        %v1792 = vrot.slane %v1769, %v1791
        %v1793 = vlaneseq
        %v1794 = vshrl.u32 %v1793, 7
        %v1795 = vsub.s32 5, %v1794
        %v1796 = vrot.slane %v1769, %v1795
        %v1797 = vlaneseq
        %v1798 = vshrl.u32 %v1797, 7
        %v1799 = vsub.s32 6, %v1798
        %v1800 = vrot.slane %v1769, %v1799
        %v1801 = vlaneseq
        %v1802 = vshrl.u32 %v1801, 7
        %v1803 = vsub.s32 7, %v1802
        %v1804 = vrot.slane %v1769, %v1803
        %v1805 = vlaneseq
        %v1806 = vshrl.u32 %v1805, 7
        %v1807 = vsub.s32 0, %v1806
        %v1808 = vrot.slane %v1770, %v1807
        %v1809 = vlaneseq
        %v1810 = vshrl.u32 %v1809, 7
        %v1811 = vsub.s32 1, %v1810
        %v1812 = vrot.slane %v1770, %v1811
        %v1813 = vlaneseq
        %v1814 = vshrl.u32 %v1813, 7
        %v1815 = vsub.s32 2, %v1814
        %v1816 = vrot.slane %v1770, %v1815
        %v1817 = vlaneseq
        %v1818 = vshrl.u32 %v1817, 7
        %v1819 = vsub.s32 3, %v1818
        %v1820 = vrot.slane %v1770, %v1819
        %v2217 = vunpack.c.l.b16 %v1385
        %v2218 = vunpack.c.h.b16 %v1385
        %v2219 = vunpack.c.l.b16 %v1386
        %v2220 = vunpack.c.h.b16 %v1386
        %v2221 = vunpack.c.l.b16 %v1387
        %v2222 = vunpack.c.h.b16 %v1387
        %v2223 = vunpack.c.l.b16 %v1388
        %v2224 = vunpack.c.h.b16 %v1388
        %v2225 = vunpack.c.l.b16 %v1389
        %v2226 = vunpack.c.h.b16 %v1389
        %v2227 = vunpack.c.l.b16 %v1390
        %v2228 = vunpack.c.h.b16 %v1390
        %v2229 = vunpack.c.l.b16 %v1391
        %v2230 = vunpack.c.h.b16 %v1391
        %v2231 = vunpack.c.l.b16 %v1392
        %v2232 = vunpack.c.h.b16 %v1392
        %v2233 = vunpack.c.l.b16 %v1393
        %v2234 = vunpack.c.h.b16 %v1393
        %v2235 = vunpack.c.l.b16 %v1394
        %v2236 = vunpack.c.h.b16 %v1394
        %v2237 = vunpack.c.l.b16 %v1395
        %v2238 = vunpack.c.h.b16 %v1395
        %v2239 = vunpack.c.l.b16 %v1396
        %v2240 = vunpack.c.h.b16 %v1396
        %v2241 = vunpack.c.l.b16 %v1397
        %v2242 = vunpack.c.h.b16 %v1397
        %v2243 = vunpack.c.l.b16 %v1398
        %v2244 = vunpack.c.h.b16 %v1398
        %v2245 = vunpack.c.l.b16 %v1399
        %v2246 = vunpack.c.h.b16 %v1399
        %v2247 = vunpack.c.l.b16 %v1400
        %v2248 = vunpack.c.h.b16 %v1400
        %v2249 = vunpack.c.l.b16 %v1401
        %v2250 = vunpack.c.h.b16 %v1401
        %v2251 = vunpack.c.l.b16 %v1402
        %v2252 = vunpack.c.h.b16 %v1402
        %v2253 = vunpack.c.l.b16 %v1403
        %v2254 = vunpack.c.h.b16 %v1403
        %v2255 = vunpack.c.l.b16 %v1404
        %v2256 = vunpack.c.h.b16 %v1404
        %v2257 = vunpack.c.l.b16 %v1405
        %v2258 = vunpack.c.h.b16 %v1405
        %v2259 = vunpack.c.l.b16 %v1406
        %v2260 = vunpack.c.h.b16 %v1406
        %v2261 = vunpack.c.l.b16 %v1407
        %v2262 = vunpack.c.h.b16 %v1407
        %v2263 = vunpack.c.l.b16 %v1408
        %v2264 = vunpack.c.h.b16 %v1408
        %v2265 = vunpack.c.l.b16 %v1409
        %v2266 = vunpack.c.h.b16 %v1409
        %v2267 = vunpack.c.l.b16 %v1410
        %v2268 = vunpack.c.h.b16 %v1410
        %v2269 = vunpack.c.l.b16 %v1411
        %v2270 = vunpack.c.h.b16 %v1411
        %v2271 = vunpack.c.l.b16 %v1412
        %v2272 = vunpack.c.h.b16 %v1412
        %v2273 = vunpack.c.l.b16 %v1413
        %v2274 = vunpack.c.h.b16 %v1413
        %v2275 = vunpack.c.l.b16 %v1414
        %v2276 = vunpack.c.h.b16 %v1414
        %v2277 = vunpack.c.l.b16 %v1415
        %v2278 = vunpack.c.h.b16 %v1415
        %v2279 = vunpack.c.l.b16 %v1416
        %v2280 = vunpack.c.h.b16 %v1416
        %v2281 = vunpack.c.l.b16 %v1417
        %v2282 = vunpack.c.h.b16 %v1417
        %v2283 = vunpack.c.l.b16 %v1418
        %v2284 = vunpack.c.h.b16 %v1418
        %v2285 = vunpack.c.l.b16 %v1419
        %v2286 = vunpack.c.h.b16 %v1419
        %v2287 = vunpack.c.l.b16 %v1420
        %v2288 = vunpack.c.h.b16 %v1420
        %v2289 = vunpack.c.l.b16 %v1421
        %v2290 = vunpack.c.h.b16 %v1421
        %v2291 = vunpack.c.l.b16 %v1422
        %v2292 = vunpack.c.h.b16 %v1422
        %v2293 = vunpack.c.l.b16 %v1423
        %v2294 = vunpack.c.h.b16 %v1423
        %v2295 = vunpack.c.l.b16 %v1424
        %v2296 = vunpack.c.h.b16 %v1424
        %v2297 = vunpack.c.l.b16 %v1425
        %v2298 = vunpack.c.h.b16 %v1425
        %v2299 = vunpack.c.l.b16 %v1426
        %v2300 = vunpack.c.h.b16 %v1426
        %v2301 = vunpack.c.l.b16 %v1427
        %v2302 = vunpack.c.h.b16 %v1427
        %v2303 = vunpack.c.l.b16 %v1428
        %v2304 = vunpack.c.h.b16 %v1428
        %v2305 = vunpack.c.l.b16 %v1429
        %v2306 = vunpack.c.h.b16 %v1429
        %v2307 = vunpack.c.l.b16 %v1430
        %v2308 = vunpack.c.h.b16 %v1430
        %v2309 = vunpack.c.l.b16 %v1431
        %v2310 = vunpack.c.h.b16 %v1431
        %v2311 = vunpack.c.l.b16 %v1432
        %v2312 = vunpack.c.h.b16 %v1432
        %v2313 = vunpack.c.l.b16 %v1433
        %v2314 = vunpack.c.h.b16 %v1433
        %v2315 = vunpack.c.l.b16 %v1434
        %v2316 = vunpack.c.h.b16 %v1434
        %v2317 = vunpack.c.l.b16 %v1435
        %v2318 = vunpack.c.h.b16 %v1435
        %v2319 = vunpack.c.l.b16 %v1436
        %v2320 = vunpack.c.h.b16 %v1436
        %v2321 = vunpack.c.l.b16 %v1437
        %v2322 = vunpack.c.h.b16 %v1437
        %v2323 = vunpack.c.l.b16 %v1438
        %v2324 = vunpack.c.h.b16 %v1438
        %v2325 = vunpack.c.l.b16 %v1439
        %v2326 = vunpack.c.h.b16 %v1439
        %v2327 = vunpack.c.l.b16 %v1440
        %v2328 = vunpack.c.h.b16 %v1440
        %v2329 = vunpack.c.l.b16 %v1441
        %v2330 = vunpack.c.h.b16 %v1441
        %v2331 = vunpack.c.l.b16 %v1442
        %v2332 = vunpack.c.h.b16 %v1442
        %v2333 = vunpack.c.l.b16 %v1443
        %v2334 = vunpack.c.h.b16 %v1443
        %v2335 = vunpack.c.l.b16 %v1444
        %v2336 = vunpack.c.h.b16 %v1444
        %v2337 = vunpack.c.l.b16 %v1445
        %v2338 = vunpack.c.h.b16 %v1445
        %v2339 = vunpack.c.l.b16 %v1446
        %v2340 = vunpack.c.h.b16 %v1446
        %v2341 = vunpack.c.l.b16 %v1447
        %v2342 = vunpack.c.h.b16 %v1447
        %v2343 = vunpack.c.l.b16 %v1448
        %v2344 = vunpack.c.h.b16 %v1448
        %v2345 = vunpack.c.l.b16 %v1449
        %v2346 = vunpack.c.h.b16 %v1449
        %v2347 = vunpack.c.l.b16 %v1450
        %v2348 = vunpack.c.h.b16 %v1450
        %v2349 = vunpack.c.l.b16 %v1451
        %v2350 = vunpack.c.h.b16 %v1451
        %v2351 = vunpack.c.l.b16 %v1452
        %v2352 = vunpack.c.h.b16 %v1452
        %v2353 = vunpack.c.l.b16 %v1453
        %v2354 = vunpack.c.h.b16 %v1453
        %v2355 = vunpack.c.l.b16 %v1454
        %v2356 = vunpack.c.h.b16 %v1454
        %v2357 = vunpack.c.l.b16 %v1455
        %v2358 = vunpack.c.h.b16 %v1455
        %v2359 = vunpack.c.l.b16 %v1456
        %v2360 = vunpack.c.h.b16 %v1456
        %v2361 = vunpack.c.l.b16 %v1457
        %v2362 = vunpack.c.h.b16 %v1457
        %v2363 = vunpack.c.l.b16 %v1458
        %v2364 = vunpack.c.h.b16 %v1458
        %v2365 = vunpack.c.l.b16 %v1459
        %v2366 = vunpack.c.h.b16 %v1459
        %v2367 = vunpack.c.l.b16 %v1460
        %v2368 = vunpack.c.h.b16 %v1460
        %v2369 = vunpack.c.l.b16 %v1461
        %v2370 = vunpack.c.h.b16 %v1461
        %v2371 = vunpack.c.l.b16 %v1462
        %v2372 = vunpack.c.h.b16 %v1462
        %v2373 = vunpack.c.l.b16 %v1463
        %v2374 = vunpack.c.h.b16 %v1463
        %v2375 = vunpack.c.l.b16 %v1464
        %v2376 = vunpack.c.h.b16 %v1464
        %v2377 = vunpack.c.l.b16 %v1465
        %v2378 = vunpack.c.h.b16 %v1465
        %v2379 = vunpack.c.l.b16 %v1466
        %v2380 = vunpack.c.h.b16 %v1466
        %v2381 = vunpack.c.l.b16 %v1467
        %v2382 = vunpack.c.h.b16 %v1467
        %v2383 = vunpack.c.l.b16 %v1468
        %v2384 = vunpack.c.h.b16 %v1468
        %v2385 = vunpack.c.l.b16 %v1469
        %v2386 = vunpack.c.h.b16 %v1469
        %v2387 = vunpack.c.l.b16 %v1470
        %v2388 = vunpack.c.h.b16 %v1470
        %v2389 = vunpack.c.l.b16 %v1471
        %v2390 = vunpack.c.h.b16 %v1471
        %v2391 = vunpack.c.l.b16 %v1472
        %v2392 = vunpack.c.h.b16 %v1472
        %v2393 = vunpack.c.l.b16 %v1473
        %v2394 = vunpack.c.h.b16 %v1473
        %v2395 = vunpack.c.l.b16 %v1474
        %v2396 = vunpack.c.h.b16 %v1474
        %v2397 = vunpack.c.l.b16 %v1475
        %v2398 = vunpack.c.h.b16 %v1475
        %v2399 = vunpack.c.l.b16 %v1476
        %v2400 = vunpack.c.h.b16 %v1476
        %v2401 = vunpack.c.l.b16 %v1477
        %v2402 = vunpack.c.h.b16 %v1477
        %v2403 = vunpack.c.l.b16 %v1478
        %v2404 = vunpack.c.h.b16 %v1478
        %v2405 = vunpack.c.l.b16 %v1479
        %v2406 = vunpack.c.h.b16 %v1479
        %v2407 = vunpack.c.l.b16 %v1480
        %v2408 = vunpack.c.h.b16 %v1480
        %v2409 = vunpack.c.l.b16 %v1481
        %v2410 = vunpack.c.h.b16 %v1481
        %v2411 = vunpack.c.l.b16 %v1482
        %v2412 = vunpack.c.h.b16 %v1482
        %v2413 = vunpack.c.l.b16 %v1483
        %v2414 = vunpack.c.h.b16 %v1483
        %v2415 = vunpack.c.l.b16 %v1484
        %v2416 = vunpack.c.h.b16 %v1484
        %v2417 = vunpack.c.l.b16 %v1485
        %v2418 = vunpack.c.h.b16 %v1485
        %v2419 = vunpack.c.l.b16 %v1486
        %v2420 = vunpack.c.h.b16 %v1486
        %v2421 = vunpack.c.l.b16 %v1487
        %v2422 = vunpack.c.h.b16 %v1487
        %v2423 = vunpack.c.l.b16 %v1488
        %v2424 = vunpack.c.h.b16 %v1488
        %v2425 = vunpack.c.l.b16 %v1489
        %v2426 = vunpack.c.h.b16 %v1489
        %v2427 = vunpack.c.l.b16 %v1490
        %v2428 = vunpack.c.h.b16 %v1490
        %v2429 = vunpack.c.l.b16 %v1491
        %v2430 = vunpack.c.h.b16 %v1491
        %v2431 = vunpack.c.l.b16 %v1492
        %v2432 = vunpack.c.h.b16 %v1492
        %v2433 = vunpack.c.l.b16 %v1493
        %v2434 = vunpack.c.h.b16 %v1493
        %v2435 = vunpack.c.l.b16 %v1494
        %v2436 = vunpack.c.h.b16 %v1494
        %v2437 = vunpack.c.l.b16 %v1495
        %v2438 = vunpack.c.h.b16 %v1495
        %v2439 = vunpack.c.l.b16 %v1496
        %v2440 = vunpack.c.h.b16 %v1496
        %v2441 = vunpack.c.l.b16 %v1497
        %v2442 = vunpack.c.h.b16 %v1497
        %v2443 = vunpack.c.l.b16 %v1498
        %v2444 = vunpack.c.h.b16 %v1498
        %v2445 = vunpack.c.l.b16 %v1499
        %v2446 = vunpack.c.h.b16 %v1499
        %v2447 = vunpack.c.l.b16 %v1500
        %v2448 = vunpack.c.h.b16 %v1500
        %v2449 = vunpack.c.l.b16 %v1501
        %v2450 = vunpack.c.h.b16 %v1501
        %v2451 = vunpack.c.l.b16 %v1502
        %v2452 = vunpack.c.h.b16 %v1502
        %v2453 = vunpack.c.l.b16 %v1503
        %v2454 = vunpack.c.h.b16 %v1503
        %v2455 = vunpack.c.l.b16 %v1504
        %v2456 = vunpack.c.h.b16 %v1504
        %v2457 = vunpack.c.l.b16 %v1505
        %v2458 = vunpack.c.h.b16 %v1505
        %v2459 = vunpack.c.l.b16 %v1506
        %v2460 = vunpack.c.h.b16 %v1506
        %v2461 = vunpack.c.l.b16 %v1507
        %v2462 = vunpack.c.h.b16 %v1507
        %v2463 = vunpack.c.l.b16 %v1508
        %v2464 = vunpack.c.h.b16 %v1508
        %v2465 = vunpack.c.l.b16 %v1509
        %v2466 = vunpack.c.h.b16 %v1509
        %v2467 = vunpack.c.l.b16 %v1510
        %v2468 = vunpack.c.h.b16 %v1510
        %v2469 = vunpack.c.l.b16 %v1511
        %v2470 = vunpack.c.h.b16 %v1511
        %v2471 = vunpack.c.l.b16 %v1512
        %v2472 = vunpack.c.h.b16 %v1512
        %v2473 = vunpack.c.l.b16 %v1513
        %v2474 = vunpack.c.h.b16 %v1513
        %v2475 = vunpack.c.l.b16 %v1514
        %v2476 = vunpack.c.h.b16 %v1514
        %v2477 = vunpack.c.l.b16 %v1515
        %v2478 = vunpack.c.h.b16 %v1515
        %v2479 = vunpack.c.l.b16 %v1516
        %v2480 = vunpack.c.h.b16 %v1516
        %v2481 = vunpack.c.l.b16 %v1517
        %v2482 = vunpack.c.h.b16 %v1517
        %v2483 = vunpack.c.l.b16 %v1518
        %v2484 = vunpack.c.h.b16 %v1518
        %v2485 = vunpack.c.l.b16 %v1519
        %v2486 = vunpack.c.h.b16 %v1519
        %v2487 = vunpack.c.l.b16 %v1520
        %v2488 = vunpack.c.h.b16 %v1520
        %v2489 = vunpack.c.l.b16 %v1521
        %v2490 = vunpack.c.h.b16 %v1521
        %v2491 = vunpack.c.l.b16 %v1522
        %v2492 = vunpack.c.h.b16 %v1522
        %v2493 = vunpack.c.l.b16 %v1523
        %v2494 = vunpack.c.h.b16 %v1523
        %v2495 = vunpack.c.l.b16 %v1524
        %v2496 = vunpack.c.h.b16 %v1524
        %v2497 = vunpack.c.l.b16 %v1525
        %v2498 = vunpack.c.h.b16 %v1525
        %v2499 = vunpack.c.l.b16 %v1526
        %v2500 = vunpack.c.h.b16 %v1526
        %v2501 = vunpack.c.l.b16 %v1527
        %v2502 = vunpack.c.h.b16 %v1527
        %v2503 = vunpack.c.l.b16 %v1528
        %v2504 = vunpack.c.h.b16 %v1528
        %v2505 = vunpack.c.l.b16 %v1529
        %v2506 = vunpack.c.h.b16 %v1529
        %v2507 = vunpack.c.l.b16 %v1530
        %v2508 = vunpack.c.h.b16 %v1530
        %v2509 = vunpack.c.l.b16 %v1531
        %v2510 = vunpack.c.h.b16 %v1531
        %v2511 = vunpack.c.l.b16 %v1532
        %v2512 = vunpack.c.h.b16 %v1532
        %v2513 = vunpack.c.l.b16 %v1533
        %v2514 = vunpack.c.h.b16 %v1533
        %v2515 = vunpack.c.l.b16 %v1534
        %v2516 = vunpack.c.h.b16 %v1534
        %v2517 = vunpack.c.l.b16 %v1535
        %v2518 = vunpack.c.h.b16 %v1535
        %v2519 = vunpack.c.l.b16 %v1536
        %v2520 = vunpack.c.h.b16 %v1536
        %v2521 = vunpack.c.l.b16 %v1537
        %v2522 = vunpack.c.h.b16 %v1537
        %v2523 = vunpack.c.l.b16 %v1538
        %v2524 = vunpack.c.h.b16 %v1538
        %v2525 = vunpack.c.l.b16 %v1539
        %v2526 = vunpack.c.h.b16 %v1539
        %v2527 = vunpack.c.l.b16 %v1540
        %v2528 = vunpack.c.h.b16 %v1540
        %v2529 = vunpack.c.l.b16 %v1541
        %v2530 = vunpack.c.h.b16 %v1541
        %v2531 = vunpack.c.l.b16 %v1542
        %v2532 = vunpack.c.h.b16 %v1542
        %v2533 = vunpack.c.l.b16 %v1543
        %v2534 = vunpack.c.h.b16 %v1543
        %v2535 = vunpack.c.l.b16 %v1544
        %v2536 = vunpack.c.h.b16 %v1544
        %v2537 = vunpack.c.l.b16 %v1545
        %v2538 = vunpack.c.h.b16 %v1545
        %v2539 = vunpack.c.l.b16 %v1546
        %v2540 = vunpack.c.h.b16 %v1546
        %v2541 = vunpack.c.l.b16 %v1547
        %v2542 = vunpack.c.h.b16 %v1547
        %v2543 = vunpack.c.l.b16 %v1548
        %v2544 = vunpack.c.h.b16 %v1548
        %v2545 = vunpack.c.l.b16 %v1549
        %v2546 = vunpack.c.h.b16 %v1549
        %v2547 = vunpack.c.l.b16 %v1550
        %v2548 = vunpack.c.h.b16 %v1550
        %v2549 = vunpack.c.l.b16 %v1551
        %v2550 = vunpack.c.h.b16 %v1551
        %v2551 = vunpack.c.l.b16 %v1552
        %v2552 = vunpack.c.h.b16 %v1552
        %v2553 = vunpack.c.l.b16 %v1553
        %v2554 = vunpack.c.h.b16 %v1553
        %v2555 = vunpack.c.l.b16 %v1554
        %v2556 = vunpack.c.h.b16 %v1554
        %v2557 = vunpack.c.l.b16 %v1555
        %v2558 = vunpack.c.h.b16 %v1555
        %v2559 = vunpack.c.l.b16 %v1556
        %v2560 = vunpack.c.h.b16 %v1556
        %v2561 = vunpack.c.l.b16 %v1557
        %v2562 = vunpack.c.h.b16 %v1557
        %v2563 = vunpack.c.l.b16 %v1558
        %v2564 = vunpack.c.h.b16 %v1558
        %v2565 = vunpack.c.l.b16 %v1559
        %v2566 = vunpack.c.h.b16 %v1559
        %v2567 = vunpack.c.l.b16 %v1560
        %v2568 = vunpack.c.h.b16 %v1560
        %v2569 = vunpack.c.l.b16 %v1561
        %v2570 = vunpack.c.h.b16 %v1561
        %v2571 = vunpack.c.l.b16 %v1562
        %v2572 = vunpack.c.h.b16 %v1562
        %v2573 = vunpack.c.l.b16 %v1563
        %v2574 = vunpack.c.h.b16 %v1563
        %v2575 = vunpack.c.l.b16 %v1564
        %v2576 = vunpack.c.h.b16 %v1564
        %v2577 = vunpack.c.l.b16 %v1565
        %v2578 = vunpack.c.h.b16 %v1565
        %v2579 = vunpack.c.l.b16 %v1566
        %v2580 = vunpack.c.h.b16 %v1566
        %v2581 = vunpack.c.l.b16 %v1567
        %v2582 = vunpack.c.h.b16 %v1567
        %v2583 = vunpack.c.l.b16 %v1568
        %v2584 = vunpack.c.h.b16 %v1568
        %v2585 = vunpack.c.l.b16 %v1569
        %v2586 = vunpack.c.h.b16 %v1569
        %v2587 = vunpack.c.l.b16 %v1570
        %v2588 = vunpack.c.h.b16 %v1570
        %v2589 = vunpack.c.l.b16 %v1571
        %v2590 = vunpack.c.h.b16 %v1571
        %v2591 = vunpack.c.l.b16 %v1572
        %v2592 = vunpack.c.h.b16 %v1572
        %v2593 = vunpack.c.l.b16 %v1573
        %v2594 = vunpack.c.h.b16 %v1573
        %v2595 = vunpack.c.l.b16 %v1574
        %v2596 = vunpack.c.h.b16 %v1574
        %v2597 = vunpack.c.l.b16 %v1575
        %v2598 = vunpack.c.h.b16 %v1575
        %v2599 = vunpack.c.l.b16 %v1576
        %v2600 = vunpack.c.h.b16 %v1576
        %v2601 = vunpack.c.l.b16 %v1577
        %v2602 = vunpack.c.h.b16 %v1577
        %v2603 = vunpack.c.l.b16 %v1578
        %v2604 = vunpack.c.h.b16 %v1578
        %v2605 = vunpack.c.l.b16 %v1579
        %v2606 = vunpack.c.h.b16 %v1579
        %v2607 = vunpack.c.l.b16 %v1580
        %v2608 = vunpack.c.h.b16 %v1580
        %v2609 = vunpack.c.l.b16 %v1581
        %v2610 = vunpack.c.h.b16 %v1581
        %v2611 = vunpack.c.l.b16 %v1582
        %v2612 = vunpack.c.h.b16 %v1582
        %v2613 = vunpack.c.l.b16 %v1583
        %v2614 = vunpack.c.h.b16 %v1583
        %v2615 = vunpack.c.l.b16 %v1584
        %v2616 = vunpack.c.h.b16 %v1584
        %v2617 = vunpack.c.l.b16 %v1585
        %v2618 = vunpack.c.h.b16 %v1585
        %v2619 = vunpack.c.l.b16 %v1586
        %v2620 = vunpack.c.h.b16 %v1586
        %v2621 = vunpack.c.l.b16 %v1587
        %v2622 = vunpack.c.h.b16 %v1587
        %v2623 = vunpack.c.l.b16 %v1588
        %v2624 = vunpack.c.h.b16 %v1588
        %v2625 = vunpack.c.l.b16 %v1589
        %v2626 = vunpack.c.h.b16 %v1589
        %v2627 = vunpack.c.l.b16 %v1590
        %v2628 = vunpack.c.h.b16 %v1590
        %v2629 = vunpack.c.l.b16 %v1591
        %v2630 = vunpack.c.h.b16 %v1591
        %v2631 = vunpack.c.l.b16 %v1592
        %v2632 = vunpack.c.h.b16 %v1592
        %v2633 = vunpack.c.l.b16 %v1593
        %v2634 = vunpack.c.h.b16 %v1593
        %v2635 = vunpack.c.l.b16 %v1594
        %v2636 = vunpack.c.h.b16 %v1594
        %v2637 = vunpack.c.l.b16 %v1595
        %v2638 = vunpack.c.h.b16 %v1595
        %v2639 = vunpack.c.l.b16 %v1596
        %v2640 = vunpack.c.h.b16 %v1596
        %v2641 = vunpack.c.l.b16 %v1597
        %v2642 = vunpack.c.h.b16 %v1597
        %v2643 = vunpack.c.l.b16 %v1598
        %v2644 = vunpack.c.h.b16 %v1598
        %v2645 = vunpack.c.l.b16 %v1599
        %v2646 = vunpack.c.h.b16 %v1599
        %v2647 = vunpack.c.l.b16 %v1600
        %v2648 = vunpack.c.h.b16 %v1600
        %v2649 = vunpack.c.l.b16 %v1601
        %v2650 = vunpack.c.h.b16 %v1601
        %v2651 = vunpack.c.l.b16 %v1602
        %v2652 = vunpack.c.h.b16 %v1602
        %v2653 = vunpack.c.l.b16 %v1603
        %v2654 = vunpack.c.h.b16 %v1603
        %v2655 = vunpack.c.l.b16 %v1604
        %v2656 = vunpack.c.h.b16 %v1604
        %v2657 = vunpack.c.l.b16 %v1605
        %v2658 = vunpack.c.h.b16 %v1605
        %v2659 = vunpack.c.l.b16 %v1606
        %v2660 = vunpack.c.h.b16 %v1606
        %v2661 = vunpack.c.l.b16 %v1607
        %v2662 = vunpack.c.h.b16 %v1607
        %v2663 = vunpack.c.l.b16 %v1608
        %v2664 = vunpack.c.h.b16 %v1608
        %v2665 = vunpack.c.l.b16 %v1609
        %v2666 = vunpack.c.h.b16 %v1609
        %v2667 = vunpack.c.l.b16 %v1610
        %v2668 = vunpack.c.h.b16 %v1610
        %v2669 = vunpack.c.l.b16 %v1611
        %v2670 = vunpack.c.h.b16 %v1611
        %v2671 = vunpack.c.l.b16 %v1612
        %v2672 = vunpack.c.h.b16 %v1612
        %v2673 = vunpack.c.l.b16 %v1613
        %v2674 = vunpack.c.h.b16 %v1613
        %v2675 = vunpack.c.l.b16 %v1614
        %v2676 = vunpack.c.h.b16 %v1614
        %v2677 = vunpack.c.l.b16 %v1615
        %v2678 = vunpack.c.h.b16 %v1615
        %v2679 = vunpack.c.l.b16 %v1616
        %v2680 = vunpack.c.h.b16 %v1616
        %v2681 = vunpack.c.l.b16 %v1617
        %v2682 = vunpack.c.h.b16 %v1617
        %v2683 = vunpack.c.l.b16 %v1618
        %v2684 = vunpack.c.h.b16 %v1618
        %v2685 = vunpack.c.l.b16 %v1619
        %v2686 = vunpack.c.h.b16 %v1619
        %v2687 = vunpack.c.l.b16 %v1620
        %v2688 = vunpack.c.h.b16 %v1620
        %v2689 = vunpack.c.l.b16 %v1621
        %v2690 = vunpack.c.h.b16 %v1621
        %v2691 = vunpack.c.l.b16 %v1622
        %v2692 = vunpack.c.h.b16 %v1622
        %v2693 = vunpack.c.l.b16 %v1623
        %v2694 = vunpack.c.h.b16 %v1623
        %v2695 = vunpack.c.l.b16 %v1624
        %v2696 = vunpack.c.h.b16 %v1624
        %v2697 = vunpack.c.l.b16 %v1625
        %v2698 = vunpack.c.h.b16 %v1625
        %v2699 = vunpack.c.l.b16 %v1626
        %v2700 = vunpack.c.h.b16 %v1626
        %v2701 = vunpack.c.l.b16 %v1627
        %v2702 = vunpack.c.h.b16 %v1627
        %v2703 = vunpack.c.l.b16 %v1628
        %v2704 = vunpack.c.h.b16 %v1628
        %v2705 = vunpack.c.l.b16 %v1629
        %v2706 = vunpack.c.h.b16 %v1629
        %v2707 = vunpack.c.l.b16 %v1630
        %v2708 = vunpack.c.h.b16 %v1630
        %v2709 = vunpack.c.l.b16 %v1631
        %v2710 = vunpack.c.h.b16 %v1631
        %v2711 = vunpack.c.l.b16 %v1632
        %v2712 = vunpack.c.h.b16 %v1632
        %v2713 = vunpack.c.l.b16 %v1633
        %v2714 = vunpack.c.h.b16 %v1633
        %v2715 = vunpack.c.l.b16 %v1634
        %v2716 = vunpack.c.h.b16 %v1634
        %v2717 = vunpack.c.l.b16 %v1635
        %v2718 = vunpack.c.h.b16 %v1635
        %v2719 = vunpack.c.l.b16 %v1636
        %v2720 = vunpack.c.h.b16 %v1636
        %v2721 = vunpack.c.l.b16 %v1637
        %v2722 = vunpack.c.h.b16 %v1637
        %v2723 = vunpack.c.l.b16 %v1638
        %v2724 = vunpack.c.h.b16 %v1638
        %v2725 = vunpack.c.l.b16 %v1639
        %v2726 = vunpack.c.h.b16 %v1639
        %v2727 = vunpack.c.l.b16 %v1640
        %v2728 = vunpack.c.h.b16 %v1640
        %v2729 = vunpack.c.l.b16 %v1641
        %v2730 = vunpack.c.h.b16 %v1641
        %v2731 = vunpack.c.l.b16 %v1642
        %v2732 = vunpack.c.h.b16 %v1642
        %v2733 = vunpack.c.l.b16 %v1643
        %v2734 = vunpack.c.h.b16 %v1643
        %v2735 = vunpack.c.l.b16 %v1644
        %v2736 = vunpack.c.h.b16 %v1644
        %v2737 = vunpack.c.l.b16 %v1645
        %v2738 = vunpack.c.h.b16 %v1645
        %v2739 = vunpack.c.l.b16 %v1646
        %v2740 = vunpack.c.h.b16 %v1646
        %v2741 = vunpack.c.l.b16 %v1647
        %v2742 = vunpack.c.h.b16 %v1647
        %v2743 = vunpack.c.l.b16 %v1648
        %v2744 = vunpack.c.h.b16 %v1648
        %v2745 = vunpack.c.l.b16 %v1649
        %v2746 = vunpack.c.h.b16 %v1649
        %v2747 = vunpack.c.l.b16 %v1650
        %v2748 = vunpack.c.h.b16 %v1650
        %v2749 = vunpack.c.l.b16 %v1651
        %v2750 = vunpack.c.h.b16 %v1651
        %v2751 = vunpack.c.l.b16 %v1652
        %v2752 = vunpack.c.h.b16 %v1652
        %v2753 = vunpack.c.l.b16 %v1653
        %v2754 = vunpack.c.h.b16 %v1653
        %v2755 = vunpack.c.l.b16 %v1654
        %v2756 = vunpack.c.h.b16 %v1654
        %v2757 = vunpack.c.l.b16 %v1655
        %v2758 = vunpack.c.h.b16 %v1655
        %v2759 = vunpack.c.l.b16 %v1656
        %v2760 = vunpack.c.h.b16 %v1656
        %v2761 = vunpack.c.l.b16 %v1657
        %v2762 = vunpack.c.h.b16 %v1657
        %v2763 = vunpack.c.l.b16 %v1658
        %v2764 = vunpack.c.h.b16 %v1658
        %v2765 = vunpack.c.l.b16 %v1659
        %v2766 = vunpack.c.h.b16 %v1659
        %v2767 = vunpack.c.l.b16 %v1660
        %v2768 = vunpack.c.h.b16 %v1660
        %v2769 = vunpack.c.l.b16 %v1661
        %v2770 = vunpack.c.h.b16 %v1661
        %v2771 = vunpack.c.l.b16 %v1662
        %v2772 = vunpack.c.h.b16 %v1662
        %v2773 = vunpack.c.l.b16 %v1663
        %v2774 = vunpack.c.h.b16 %v1663
        %v2775 = vunpack.c.l.b16 %v1664
        %v2776 = vunpack.c.h.b16 %v1664
        %v2777 = vunpack.c.l.b16 %v1665
        %v2778 = vunpack.c.h.b16 %v1665
        %v2779 = vunpack.c.l.b16 %v1666
        %v2780 = vunpack.c.h.b16 %v1666
        %v2781 = vunpack.c.l.b16 %v1667
        %v2782 = vunpack.c.h.b16 %v1667
        %v2783 = vunpack.c.l.b16 %v1668
        %v2784 = vunpack.c.h.b16 %v1668
        %v2785 = vunpack.c.l.b16 %v1669
        %v2786 = vunpack.c.h.b16 %v1669
        %v2787 = vunpack.c.l.b16 %v1670
        %v2788 = vunpack.c.h.b16 %v1670
        %v2789 = vunpack.c.l.b16 %v1671
        %v2790 = vunpack.c.h.b16 %v1671
        %v2791 = vunpack.c.l.b16 %v1672
        %v2792 = vunpack.c.h.b16 %v1672
        %v2793 = vunpack.c.l.b16 %v1673
        %v2794 = vunpack.c.h.b16 %v1673
        %v2795 = vunpack.c.l.b16 %v1674
        %v2796 = vunpack.c.h.b16 %v1674
        %v2797 = vunpack.c.l.b16 %v1675
        %v2798 = vunpack.c.h.b16 %v1675
        %v2799 = vunpack.c.l.b16 %v1676
        %v2800 = vunpack.c.h.b16 %v1676
        %v2801 = vunpack.c.l.b16 %v1677
        %v2802 = vunpack.c.h.b16 %v1677
        %v2803 = vunpack.c.l.b16 %v1678
        %v2804 = vunpack.c.h.b16 %v1678
        %v2805 = vunpack.c.l.b16 %v1679
        %v2806 = vunpack.c.h.b16 %v1679
        %v2807 = vunpack.c.l.b16 %v1680
        %v2808 = vunpack.c.h.b16 %v1680
        %v2809 = vunpack.c.l.b16 %v1681
        %v2810 = vunpack.c.h.b16 %v1681
        %v2811 = vunpack.c.l.b16 %v1682
        %v2812 = vunpack.c.h.b16 %v1682
        %v2813 = vunpack.c.l.b16 %v1683
        %v2814 = vunpack.c.h.b16 %v1683
        %v2815 = vunpack.c.l.b16 %v1684
        %v2816 = vunpack.c.h.b16 %v1684
        %v2817 = vunpack.c.l.b16 %v1685
        %v2818 = vunpack.c.h.b16 %v1685
        %v2819 = vunpack.c.l.b16 %v1686
        %v2820 = vunpack.c.h.b16 %v1686
        %v2821 = vunpack.c.l.b16 %v1687
        %v2822 = vunpack.c.h.b16 %v1687
        %v2823 = vunpack.c.l.b16 %v1688
        %v2824 = vunpack.c.h.b16 %v1688
        %v2825 = vunpack.c.l.b16 %v1689
        %v2826 = vunpack.c.h.b16 %v1689
        %v2827 = vunpack.c.l.b16 %v1690
        %v2828 = vunpack.c.h.b16 %v1690
        %v2829 = vunpack.c.l.b16 %v1691
        %v2830 = vunpack.c.h.b16 %v1691
        %v2831 = vunpack.c.l.b16 %v1692
        %v2832 = vunpack.c.h.b16 %v1692
        %v2833 = vunpack.c.l.b16 %v1693
        %v2834 = vunpack.c.h.b16 %v1693
        %v2835 = vunpack.c.l.b16 %v1694
        %v2836 = vunpack.c.h.b16 %v1694
        %v2837 = vunpack.c.l.b16 %v1695
        %v2838 = vunpack.c.h.b16 %v1695
        %v2839 = vunpack.c.l.b16 %v1696
        %v2840 = vunpack.c.h.b16 %v1696
        %v2841 = vunpack.c.l.b16 %v1697
        %v2842 = vunpack.c.h.b16 %v1697
        %v2843 = vunpack.c.l.b16 %v1698
        %v2844 = vunpack.c.h.b16 %v1698
        %v2845 = vunpack.c.l.b16 %v1699
        %v2846 = vunpack.c.h.b16 %v1699
        %v2847 = vunpack.c.l.b16 %v1700
        %v2848 = vunpack.c.h.b16 %v1700
        %v2849 = vunpack.c.l.b16 %v1701
        %v2850 = vunpack.c.h.b16 %v1701
        %v2851 = vunpack.c.l.b16 %v1702
        %v2852 = vunpack.c.h.b16 %v1702
        %v2853 = vunpack.c.l.b16 %v1703
        %v2854 = vunpack.c.h.b16 %v1703
        %v2855 = vunpack.c.l.b16 %v1704
        %v2856 = vunpack.c.h.b16 %v1704
        %v2857 = vunpack.c.l.b16 %v1705
        %v2858 = vunpack.c.h.b16 %v1705
        %v2859 = vunpack.c.l.b16 %v1706
        %v2860 = vunpack.c.h.b16 %v1706
        %v2861 = vunpack.c.l.b16 %v1707
        %v2862 = vunpack.c.h.b16 %v1707
        %v2863 = vunpack.c.l.b16 %v1708
        %v2864 = vunpack.c.h.b16 %v1708
        %v2865 = vunpack.c.l.b16 %v1709
        %v2866 = vunpack.c.h.b16 %v1709
        %v2867 = vunpack.c.l.b16 %v1710
        %v2868 = vunpack.c.h.b16 %v1710
        %v2869 = vunpack.c.l.b16 %v1711
        %v2870 = vunpack.c.h.b16 %v1711
        %v2871 = vunpack.c.l.b16 %v1712
        %v2872 = vunpack.c.h.b16 %v1712
        %v2873 = vunpack.c.l.b16 %v1713
        %v2874 = vunpack.c.h.b16 %v1713
        %v2875 = vunpack.c.l.b16 %v1714
        %v2876 = vunpack.c.h.b16 %v1714
        %v2877 = vunpack.c.l.b16 %v1715
        %v2878 = vunpack.c.h.b16 %v1715
        %v2879 = vunpack.c.l.b16 %v1716
        %v2880 = vunpack.c.h.b16 %v1716
        %v2881 = vunpack.c.l.b16 %v1717
        %v2882 = vunpack.c.h.b16 %v1717
        %v2883 = vunpack.c.l.b16 %v1718
        %v2884 = vunpack.c.h.b16 %v1718
        %v2885 = vunpack.c.l.b16 %v1719
        %v2886 = vunpack.c.h.b16 %v1719
        %v2887 = vunpack.c.l.b16 %v1720
        %v2888 = vunpack.c.h.b16 %v1720
        %v2889 = vunpack.c.l.b16 %v1721
        %v2890 = vunpack.c.h.b16 %v1721
        %v2891 = vunpack.c.l.b16 %v1722
        %v2892 = vunpack.c.h.b16 %v1722
        %v2893 = vunpack.c.l.b16 %v1723
        %v2894 = vunpack.c.h.b16 %v1723
        %v2895 = vunpack.c.l.b16 %v1724
        %v2896 = vunpack.c.h.b16 %v1724
        %v2897 = vunpack.c.l.b16 %v1725
        %v2898 = vunpack.c.h.b16 %v1725
        %v2899 = vunpack.c.l.b16 %v1726
        %v2900 = vunpack.c.h.b16 %v1726
        %v2901 = vunpack.c.l.b16 %v1727
        %v2902 = vunpack.c.h.b16 %v1727
        %v2903 = vunpack.c.l.b16 %v1728
        %v2904 = vunpack.c.h.b16 %v1728
        %v2905 = vunpack.c.l.b16 %v1729
        %v2906 = vunpack.c.h.b16 %v1729
        %v2907 = vunpack.c.l.b16 %v1730
        %v2908 = vunpack.c.h.b16 %v1730
        %v2909 = vunpack.c.l.b16 %v1731
        %v2910 = vunpack.c.h.b16 %v1731
        %v2911 = vunpack.c.l.b16 %v1732
        %v2912 = vunpack.c.h.b16 %v1732
        %v2913 = vunpack.c.l.b16 %v1733
        %v2914 = vunpack.c.h.b16 %v1733
        %v2915 = vunpack.c.l.b16 %v1734
        %v2916 = vunpack.c.h.b16 %v1734
        %v2917 = vunpack.c.l.b16 %v1735
        %v2918 = vunpack.c.h.b16 %v1735
        %v2919 = vunpack.c.l.b16 %v1736
        %v2920 = vunpack.c.h.b16 %v1736
        %v2921 = vunpack.c.l.b16 %v1737
        %v2922 = vunpack.c.h.b16 %v1737
        %v2923 = vunpack.c.l.b16 %v1738
        %v2924 = vunpack.c.h.b16 %v1738
        %v2925 = vunpack.c.l.b16 %v1739
        %v2926 = vunpack.c.h.b16 %v1739
        %v2927 = vunpack.c.l.b16 %v1740
        %v2928 = vunpack.c.h.b16 %v1740
        %v2929 = vunpack.c.l.b16 %v1741
        %v2930 = vunpack.c.h.b16 %v1741
        %v2931 = vunpack.c.l.b16 %v1742
        %v2932 = vunpack.c.h.b16 %v1742
        %v2933 = vunpack.c.l.b16 %v1743
        %v2934 = vunpack.c.h.b16 %v1743
        %v2935 = vunpack.c.l.b16 %v1744
        %v2936 = vunpack.c.h.b16 %v1744
        %v2937 = vunpack.c.l.b16 %v1745
        %v2938 = vunpack.c.h.b16 %v1745
        %v2939 = vunpack.c.l.b16 %v1746
        %v2940 = vunpack.c.h.b16 %v1746
        %v2941 = vunpack.c.l.b16 %v1747
        %v2942 = vunpack.c.h.b16 %v1747
        %v2943 = vunpack.c.l.b16 %v1748
        %v2944 = vunpack.c.h.b16 %v1748
        %v2945 = vunpack.c.l.b16 %v1749
        %v2946 = vunpack.c.h.b16 %v1749
        %v2947 = vunpack.c.l.b16 %v1750
        %v2948 = vunpack.c.h.b16 %v1750
        %v2949 = vunpack.c.l.b16 %v1751
        %v2950 = vunpack.c.h.b16 %v1751
        %v2951 = vunpack.c.l.b16 %v1752
        %v2952 = vunpack.c.h.b16 %v1752
        %v2953 = vunpack.c.l.b16 %v1753
        %v2954 = vunpack.c.h.b16 %v1753
        %v2955 = vunpack.c.l.b16 %v1754
        %v2956 = vunpack.c.h.b16 %v1754
        %v2957 = vunpack.c.l.b16 %v1755
        %v2958 = vunpack.c.h.b16 %v1755
        %v2959 = vunpack.c.l.b16 %v1756
        %v2960 = vunpack.c.h.b16 %v1756
        %v2961 = vunpack.c.l.b16 %v1757
        %v2962 = vunpack.c.h.b16 %v1757
        %v2963 = vunpack.c.l.b16 %v1758
        %v2964 = vunpack.c.h.b16 %v1758
        %v2965 = vunpack.c.l.b16 %v1759
        %v2966 = vunpack.c.h.b16 %v1759
        %v2967 = vunpack.c.l.b16 %v1760
        %v2968 = vunpack.c.h.b16 %v1760
        %v2969 = vunpack.c.l.b16 %v1761
        %v2970 = vunpack.c.h.b16 %v1761
        %v2971 = vunpack.c.l.b16 %v1762
        %v2972 = vunpack.c.h.b16 %v1762
        %v2973 = vunpack.c.l.b16 %v1763
        %v2974 = vunpack.c.h.b16 %v1763
        %v2975 = vunpack.c.l.b16 %v1764
        %v2976 = vunpack.c.h.b16 %v1764
        %v2977 = vunpack.c.l.b16 %v1765
        %v2978 = vunpack.c.h.b16 %v1765
        %v2979 = vunpack.c.l.b16 %v1766
        %v2980 = vunpack.c.h.b16 %v1766
        %v2981 = vunpack.c.l.b16 %v1767
        %v2982 = vunpack.c.h.b16 %v1767
        %v2983 = vunpack.c.l.b16 %v1768
        %v2984 = vunpack.c.h.b16 %v1768
        %v2985 = vpack.c.b16 %v2229, %v2217
        %v2986 = vpack.c.b16 %v2230, %v2218
        %v2987 = vpack.c.b16 %v2231, %v2219
        %v2988 = vpack.c.b16 %v2232, %v2220
        %v2989 = vpack.c.b16 %v2233, %v2221
        %v2990 = vpack.c.b16 %v2234, %v2222
        %v2991 = vpack.c.b16 %v2235, %v2223
        %v2992 = vpack.c.b16 %v2236, %v2224
        %v2993 = vpack.c.b16 %v2237, %v2225
        %v2994 = vpack.c.b16 %v2238, %v2226
        %v2995 = vpack.c.b16 %v2239, %v2227
        %v2996 = vpack.c.b16 %v2240, %v2228
        %v2997 = vpack.c.b16 %v2253, %v2241
        %v2998 = vpack.c.b16 %v2254, %v2242
        %v2999 = vpack.c.b16 %v2255, %v2243
        %v3000 = vpack.c.b16 %v2256, %v2244
        %v3001 = vpack.c.b16 %v2257, %v2245
        %v3002 = vpack.c.b16 %v2258, %v2246
        %v3003 = vpack.c.b16 %v2259, %v2247
        %v3004 = vpack.c.b16 %v2260, %v2248
        %v3005 = vpack.c.b16 %v2261, %v2249
        %v3006 = vpack.c.b16 %v2262, %v2250
        %v3007 = vpack.c.b16 %v2263, %v2251
        %v3008 = vpack.c.b16 %v2264, %v2252
        %v3009 = vpack.c.b16 %v2277, %v2265
        %v3010 = vpack.c.b16 %v2278, %v2266
        %v3011 = vpack.c.b16 %v2279, %v2267
        %v3012 = vpack.c.b16 %v2280, %v2268
        %v3013 = vpack.c.b16 %v2281, %v2269
        %v3014 = vpack.c.b16 %v2282, %v2270
        %v3015 = vpack.c.b16 %v2283, %v2271
        %v3016 = vpack.c.b16 %v2284, %v2272
        %v3017 = vpack.c.b16 %v2285, %v2273
        %v3018 = vpack.c.b16 %v2286, %v2274
        %v3019 = vpack.c.b16 %v2287, %v2275
        %v3020 = vpack.c.b16 %v2288, %v2276
        %v3021 = vpack.c.b16 %v2301, %v2289
        %v3022 = vpack.c.b16 %v2302, %v2290
        %v3023 = vpack.c.b16 %v2303, %v2291
        %v3024 = vpack.c.b16 %v2304, %v2292
        %v3025 = vpack.c.b16 %v2305, %v2293
        %v3026 = vpack.c.b16 %v2306, %v2294
        %v3027 = vpack.c.b16 %v2307, %v2295
        %v3028 = vpack.c.b16 %v2308, %v2296
        %v3029 = vpack.c.b16 %v2309, %v2297
        %v3030 = vpack.c.b16 %v2310, %v2298
        %v3031 = vpack.c.b16 %v2311, %v2299
        %v3032 = vpack.c.b16 %v2312, %v2300
        %v3033 = vpack.c.b16 %v2325, %v2313
        %v3034 = vpack.c.b16 %v2326, %v2314
        %v3035 = vpack.c.b16 %v2327, %v2315
        %v3036 = vpack.c.b16 %v2328, %v2316
        %v3037 = vpack.c.b16 %v2329, %v2317
        %v3038 = vpack.c.b16 %v2330, %v2318
        %v3039 = vpack.c.b16 %v2331, %v2319
        %v3040 = vpack.c.b16 %v2332, %v2320
        %v3041 = vpack.c.b16 %v2333, %v2321
        %v3042 = vpack.c.b16 %v2334, %v2322
        %v3043 = vpack.c.b16 %v2335, %v2323
        %v3044 = vpack.c.b16 %v2336, %v2324
        %v3045 = vpack.c.b16 %v2349, %v2337
        %v3046 = vpack.c.b16 %v2350, %v2338
        %v3047 = vpack.c.b16 %v2351, %v2339
        %v3048 = vpack.c.b16 %v2352, %v2340
        %v3049 = vpack.c.b16 %v2353, %v2341
        %v3050 = vpack.c.b16 %v2354, %v2342
        %v3051 = vpack.c.b16 %v2355, %v2343
        %v3052 = vpack.c.b16 %v2356, %v2344
        %v3053 = vpack.c.b16 %v2357, %v2345
        %v3054 = vpack.c.b16 %v2358, %v2346
        %v3055 = vpack.c.b16 %v2359, %v2347
        %v3056 = vpack.c.b16 %v2360, %v2348
        %v3057 = vpack.c.b16 %v2373, %v2361
        %v3058 = vpack.c.b16 %v2374, %v2362
        %v3059 = vpack.c.b16 %v2375, %v2363
        %v3060 = vpack.c.b16 %v2376, %v2364
        %v3061 = vpack.c.b16 %v2377, %v2365
        %v3062 = vpack.c.b16 %v2378, %v2366
        %v3063 = vpack.c.b16 %v2379, %v2367
        %v3064 = vpack.c.b16 %v2380, %v2368
        %v3065 = vpack.c.b16 %v2381, %v2369
        %v3066 = vpack.c.b16 %v2382, %v2370
        %v3067 = vpack.c.b16 %v2383, %v2371
        %v3068 = vpack.c.b16 %v2384, %v2372
        %v3069 = vpack.c.b16 %v2397, %v2385
        %v3070 = vpack.c.b16 %v2398, %v2386
        %v3071 = vpack.c.b16 %v2399, %v2387
        %v3072 = vpack.c.b16 %v2400, %v2388
        %v3073 = vpack.c.b16 %v2401, %v2389
        %v3074 = vpack.c.b16 %v2402, %v2390
        %v3075 = vpack.c.b16 %v2403, %v2391
        %v3076 = vpack.c.b16 %v2404, %v2392
        %v3077 = vpack.c.b16 %v2405, %v2393
        %v3078 = vpack.c.b16 %v2406, %v2394
        %v3079 = vpack.c.b16 %v2407, %v2395
        %v3080 = vpack.c.b16 %v2408, %v2396
        %v3081 = vpack.c.b16 %v2421, %v2409
        %v3082 = vpack.c.b16 %v2422, %v2410
        %v3083 = vpack.c.b16 %v2423, %v2411
        %v3084 = vpack.c.b16 %v2424, %v2412
        %v3085 = vpack.c.b16 %v2425, %v2413
        %v3086 = vpack.c.b16 %v2426, %v2414
        %v3087 = vpack.c.b16 %v2427, %v2415
        %v3088 = vpack.c.b16 %v2428, %v2416
        %v3089 = vpack.c.b16 %v2429, %v2417
        %v3090 = vpack.c.b16 %v2430, %v2418
        %v3091 = vpack.c.b16 %v2431, %v2419
        %v3092 = vpack.c.b16 %v2432, %v2420
        %v3093 = vpack.c.b16 %v2445, %v2433
        %v3094 = vpack.c.b16 %v2446, %v2434
        %v3095 = vpack.c.b16 %v2447, %v2435
        %v3096 = vpack.c.b16 %v2448, %v2436
        %v3097 = vpack.c.b16 %v2449, %v2437
        %v3098 = vpack.c.b16 %v2450, %v2438
        %v3099 = vpack.c.b16 %v2451, %v2439
        %v3100 = vpack.c.b16 %v2452, %v2440
        %v3101 = vpack.c.b16 %v2453, %v2441
        %v3102 = vpack.c.b16 %v2454, %v2442
        %v3103 = vpack.c.b16 %v2455, %v2443
        %v3104 = vpack.c.b16 %v2456, %v2444
        %v3105 = vpack.c.b16 %v2469, %v2457
        %v3106 = vpack.c.b16 %v2470, %v2458
        %v3107 = vpack.c.b16 %v2471, %v2459
        %v3108 = vpack.c.b16 %v2472, %v2460
        %v3109 = vpack.c.b16 %v2473, %v2461
        %v3110 = vpack.c.b16 %v2474, %v2462
        %v3111 = vpack.c.b16 %v2475, %v2463
        %v3112 = vpack.c.b16 %v2476, %v2464
        %v3113 = vpack.c.b16 %v2477, %v2465
        %v3114 = vpack.c.b16 %v2478, %v2466
        %v3115 = vpack.c.b16 %v2479, %v2467
        %v3116 = vpack.c.b16 %v2480, %v2468
        %v3117 = vpack.c.b16 %v2493, %v2481
        %v3118 = vpack.c.b16 %v2494, %v2482
        %v3119 = vpack.c.b16 %v2495, %v2483
        %v3120 = vpack.c.b16 %v2496, %v2484
        %v3121 = vpack.c.b16 %v2497, %v2485
        %v3122 = vpack.c.b16 %v2498, %v2486
        %v3123 = vpack.c.b16 %v2499, %v2487
        %v3124 = vpack.c.b16 %v2500, %v2488
        %v3125 = vpack.c.b16 %v2501, %v2489
        %v3126 = vpack.c.b16 %v2502, %v2490
        %v3127 = vpack.c.b16 %v2503, %v2491
        %v3128 = vpack.c.b16 %v2504, %v2492
        %v3129 = vpack.c.b16 %v2517, %v2505
        %v3130 = vpack.c.b16 %v2518, %v2506
        %v3131 = vpack.c.b16 %v2519, %v2507
        %v3132 = vpack.c.b16 %v2520, %v2508
        %v3133 = vpack.c.b16 %v2521, %v2509
        %v3134 = vpack.c.b16 %v2522, %v2510
        %v3135 = vpack.c.b16 %v2523, %v2511
        %v3136 = vpack.c.b16 %v2524, %v2512
        %v3137 = vpack.c.b16 %v2525, %v2513
        %v3138 = vpack.c.b16 %v2526, %v2514
        %v3139 = vpack.c.b16 %v2527, %v2515
        %v3140 = vpack.c.b16 %v2528, %v2516
        %v3141 = vpack.c.b16 %v2541, %v2529
        %v3142 = vpack.c.b16 %v2542, %v2530
        %v3143 = vpack.c.b16 %v2543, %v2531
        %v3144 = vpack.c.b16 %v2544, %v2532
        %v3145 = vpack.c.b16 %v2545, %v2533
        %v3146 = vpack.c.b16 %v2546, %v2534
        %v3147 = vpack.c.b16 %v2547, %v2535
        %v3148 = vpack.c.b16 %v2548, %v2536
        %v3149 = vpack.c.b16 %v2549, %v2537
        %v3150 = vpack.c.b16 %v2550, %v2538
        %v3151 = vpack.c.b16 %v2551, %v2539
        %v3152 = vpack.c.b16 %v2552, %v2540
        %v3153 = vpack.c.b16 %v2565, %v2553
        %v3154 = vpack.c.b16 %v2566, %v2554
        %v3155 = vpack.c.b16 %v2567, %v2555
        %v3156 = vpack.c.b16 %v2568, %v2556
        %v3157 = vpack.c.b16 %v2569, %v2557
        %v3158 = vpack.c.b16 %v2570, %v2558
        %v3159 = vpack.c.b16 %v2571, %v2559
        %v3160 = vpack.c.b16 %v2572, %v2560
        %v3161 = vpack.c.b16 %v2573, %v2561
        %v3162 = vpack.c.b16 %v2574, %v2562
        %v3163 = vpack.c.b16 %v2575, %v2563
        %v3164 = vpack.c.b16 %v2576, %v2564
        %v3165 = vpack.c.b16 %v2589, %v2577
        %v3166 = vpack.c.b16 %v2590, %v2578
        %v3167 = vpack.c.b16 %v2591, %v2579
        %v3168 = vpack.c.b16 %v2592, %v2580
        %v3169 = vpack.c.b16 %v2593, %v2581
        %v3170 = vpack.c.b16 %v2594, %v2582
        %v3171 = vpack.c.b16 %v2595, %v2583
        %v3172 = vpack.c.b16 %v2596, %v2584
        %v3173 = vpack.c.b16 %v2597, %v2585
        %v3174 = vpack.c.b16 %v2598, %v2586
        %v3175 = vpack.c.b16 %v2599, %v2587
        %v3176 = vpack.c.b16 %v2600, %v2588
        %v3177 = vpack.c.b16 %v2613, %v2601
        %v3178 = vpack.c.b16 %v2614, %v2602
        %v3179 = vpack.c.b16 %v2615, %v2603
        %v3180 = vpack.c.b16 %v2616, %v2604
        %v3181 = vpack.c.b16 %v2617, %v2605
        %v3182 = vpack.c.b16 %v2618, %v2606
        %v3183 = vpack.c.b16 %v2619, %v2607
        %v3184 = vpack.c.b16 %v2620, %v2608
        %v3185 = vpack.c.b16 %v2621, %v2609
        %v3186 = vpack.c.b16 %v2622, %v2610
        %v3187 = vpack.c.b16 %v2623, %v2611
        %v3188 = vpack.c.b16 %v2624, %v2612
        %v3189 = vpack.c.b16 %v2637, %v2625
        %v3190 = vpack.c.b16 %v2638, %v2626
        %v3191 = vpack.c.b16 %v2639, %v2627
        %v3192 = vpack.c.b16 %v2640, %v2628
        %v3193 = vpack.c.b16 %v2641, %v2629
        %v3194 = vpack.c.b16 %v2642, %v2630
        %v3195 = vpack.c.b16 %v2643, %v2631
        %v3196 = vpack.c.b16 %v2644, %v2632
        %v3197 = vpack.c.b16 %v2645, %v2633
        %v3198 = vpack.c.b16 %v2646, %v2634
        %v3199 = vpack.c.b16 %v2647, %v2635
        %v3200 = vpack.c.b16 %v2648, %v2636
        %v3201 = vpack.c.b16 %v2661, %v2649
        %v3202 = vpack.c.b16 %v2662, %v2650
        %v3203 = vpack.c.b16 %v2663, %v2651
        %v3204 = vpack.c.b16 %v2664, %v2652
        %v3205 = vpack.c.b16 %v2665, %v2653
        %v3206 = vpack.c.b16 %v2666, %v2654
        %v3207 = vpack.c.b16 %v2667, %v2655
        %v3208 = vpack.c.b16 %v2668, %v2656
        %v3209 = vpack.c.b16 %v2669, %v2657
        %v3210 = vpack.c.b16 %v2670, %v2658
        %v3211 = vpack.c.b16 %v2671, %v2659
        %v3212 = vpack.c.b16 %v2672, %v2660
        %v3213 = vpack.c.b16 %v2685, %v2673
        %v3214 = vpack.c.b16 %v2686, %v2674
        %v3215 = vpack.c.b16 %v2687, %v2675
        %v3216 = vpack.c.b16 %v2688, %v2676
        %v3217 = vpack.c.b16 %v2689, %v2677
        %v3218 = vpack.c.b16 %v2690, %v2678
        %v3219 = vpack.c.b16 %v2691, %v2679
        %v3220 = vpack.c.b16 %v2692, %v2680
        %v3221 = vpack.c.b16 %v2693, %v2681
        %v3222 = vpack.c.b16 %v2694, %v2682
        %v3223 = vpack.c.b16 %v2695, %v2683
        %v3224 = vpack.c.b16 %v2696, %v2684
        %v3225 = vpack.c.b16 %v2709, %v2697
        %v3226 = vpack.c.b16 %v2710, %v2698
        %v3227 = vpack.c.b16 %v2711, %v2699
        %v3228 = vpack.c.b16 %v2712, %v2700
        %v3229 = vpack.c.b16 %v2713, %v2701
        %v3230 = vpack.c.b16 %v2714, %v2702
        %v3231 = vpack.c.b16 %v2715, %v2703
        %v3232 = vpack.c.b16 %v2716, %v2704
        %v3233 = vpack.c.b16 %v2717, %v2705
        %v3234 = vpack.c.b16 %v2718, %v2706
        %v3235 = vpack.c.b16 %v2719, %v2707
        %v3236 = vpack.c.b16 %v2720, %v2708
        %v3237 = vpack.c.b16 %v2733, %v2721
        %v3238 = vpack.c.b16 %v2734, %v2722
        %v3239 = vpack.c.b16 %v2735, %v2723
        %v3240 = vpack.c.b16 %v2736, %v2724
        %v3241 = vpack.c.b16 %v2737, %v2725
        %v3242 = vpack.c.b16 %v2738, %v2726
        %v3243 = vpack.c.b16 %v2739, %v2727
        %v3244 = vpack.c.b16 %v2740, %v2728
        %v3245 = vpack.c.b16 %v2741, %v2729
        %v3246 = vpack.c.b16 %v2742, %v2730
        %v3247 = vpack.c.b16 %v2743, %v2731
        %v3248 = vpack.c.b16 %v2744, %v2732
        %v3249 = vpack.c.b16 %v2757, %v2745
        %v3250 = vpack.c.b16 %v2758, %v2746
        %v3251 = vpack.c.b16 %v2759, %v2747
        %v3252 = vpack.c.b16 %v2760, %v2748
        %v3253 = vpack.c.b16 %v2761, %v2749
        %v3254 = vpack.c.b16 %v2762, %v2750
        %v3255 = vpack.c.b16 %v2763, %v2751
        %v3256 = vpack.c.b16 %v2764, %v2752
        %v3257 = vpack.c.b16 %v2765, %v2753
        %v3258 = vpack.c.b16 %v2766, %v2754
        %v3259 = vpack.c.b16 %v2767, %v2755
        %v3260 = vpack.c.b16 %v2768, %v2756
        %v3261 = vpack.c.b16 %v2781, %v2769
        %v3262 = vpack.c.b16 %v2782, %v2770
        %v3263 = vpack.c.b16 %v2783, %v2771
        %v3264 = vpack.c.b16 %v2784, %v2772
        %v3265 = vpack.c.b16 %v2785, %v2773
        %v3266 = vpack.c.b16 %v2786, %v2774
        %v3267 = vpack.c.b16 %v2787, %v2775
        %v3268 = vpack.c.b16 %v2788, %v2776
        %v3269 = vpack.c.b16 %v2789, %v2777
        %v3270 = vpack.c.b16 %v2790, %v2778
        %v3271 = vpack.c.b16 %v2791, %v2779
        %v3272 = vpack.c.b16 %v2792, %v2780
        %v3273 = vpack.c.b16 %v2805, %v2793
        %v3274 = vpack.c.b16 %v2806, %v2794
        %v3275 = vpack.c.b16 %v2807, %v2795
        %v3276 = vpack.c.b16 %v2808, %v2796
        %v3277 = vpack.c.b16 %v2809, %v2797
        %v3278 = vpack.c.b16 %v2810, %v2798
        %v3279 = vpack.c.b16 %v2811, %v2799
        %v3280 = vpack.c.b16 %v2812, %v2800
        %v3281 = vpack.c.b16 %v2813, %v2801
        %v3282 = vpack.c.b16 %v2814, %v2802
        %v3283 = vpack.c.b16 %v2815, %v2803
        %v3284 = vpack.c.b16 %v2816, %v2804
        %v3285 = vpack.c.b16 %v2829, %v2817
        %v3286 = vpack.c.b16 %v2830, %v2818
        %v3287 = vpack.c.b16 %v2831, %v2819
        %v3288 = vpack.c.b16 %v2832, %v2820
        %v3289 = vpack.c.b16 %v2833, %v2821
        %v3290 = vpack.c.b16 %v2834, %v2822
        %v3291 = vpack.c.b16 %v2835, %v2823
        %v3292 = vpack.c.b16 %v2836, %v2824
        %v3293 = vpack.c.b16 %v2837, %v2825
        %v3294 = vpack.c.b16 %v2838, %v2826
        %v3295 = vpack.c.b16 %v2839, %v2827
        %v3296 = vpack.c.b16 %v2840, %v2828
        %v3297 = vpack.c.b16 %v2853, %v2841
        %v3298 = vpack.c.b16 %v2854, %v2842
        %v3299 = vpack.c.b16 %v2855, %v2843
        %v3300 = vpack.c.b16 %v2856, %v2844
        %v3301 = vpack.c.b16 %v2857, %v2845
        %v3302 = vpack.c.b16 %v2858, %v2846
        %v3303 = vpack.c.b16 %v2859, %v2847
        %v3304 = vpack.c.b16 %v2860, %v2848
        %v3305 = vpack.c.b16 %v2861, %v2849
        %v3306 = vpack.c.b16 %v2862, %v2850
        %v3307 = vpack.c.b16 %v2863, %v2851
        %v3308 = vpack.c.b16 %v2864, %v2852
        %v3309 = vpack.c.b16 %v2877, %v2865
        %v3310 = vpack.c.b16 %v2878, %v2866
        %v3311 = vpack.c.b16 %v2879, %v2867
        %v3312 = vpack.c.b16 %v2880, %v2868
        %v3313 = vpack.c.b16 %v2881, %v2869
        %v3314 = vpack.c.b16 %v2882, %v2870
        %v3315 = vpack.c.b16 %v2883, %v2871
        %v3316 = vpack.c.b16 %v2884, %v2872
        %v3317 = vpack.c.b16 %v2885, %v2873
        %v3318 = vpack.c.b16 %v2886, %v2874
        %v3319 = vpack.c.b16 %v2887, %v2875
        %v3320 = vpack.c.b16 %v2888, %v2876
        %v3321 = vpack.c.b16 %v2901, %v2889
        %v3322 = vpack.c.b16 %v2902, %v2890
        %v3323 = vpack.c.b16 %v2903, %v2891
        %v3324 = vpack.c.b16 %v2904, %v2892
        %v3325 = vpack.c.b16 %v2905, %v2893
        %v3326 = vpack.c.b16 %v2906, %v2894
        %v3327 = vpack.c.b16 %v2907, %v2895
        %v3328 = vpack.c.b16 %v2908, %v2896
        %v3329 = vpack.c.b16 %v2909, %v2897
        %v3330 = vpack.c.b16 %v2910, %v2898
        %v3331 = vpack.c.b16 %v2911, %v2899
        %v3332 = vpack.c.b16 %v2912, %v2900
        %v3333 = vpack.c.b16 %v2925, %v2913
        %v3334 = vpack.c.b16 %v2926, %v2914
        %v3335 = vpack.c.b16 %v2927, %v2915
        %v3336 = vpack.c.b16 %v2928, %v2916
        %v3337 = vpack.c.b16 %v2929, %v2917
        %v3338 = vpack.c.b16 %v2930, %v2918
        %v3339 = vpack.c.b16 %v2931, %v2919
        %v3340 = vpack.c.b16 %v2932, %v2920
        %v3341 = vpack.c.b16 %v2933, %v2921
        %v3342 = vpack.c.b16 %v2934, %v2922
        %v3343 = vpack.c.b16 %v2935, %v2923
        %v3344 = vpack.c.b16 %v2936, %v2924
        %v3345 = vpack.c.b16 %v2949, %v2937
        %v3346 = vpack.c.b16 %v2950, %v2938
        %v3347 = vpack.c.b16 %v2951, %v2939
        %v3348 = vpack.c.b16 %v2952, %v2940
        %v3349 = vpack.c.b16 %v2953, %v2941
        %v3350 = vpack.c.b16 %v2954, %v2942
        %v3351 = vpack.c.b16 %v2955, %v2943
        %v3352 = vpack.c.b16 %v2956, %v2944
        %v3353 = vpack.c.b16 %v2957, %v2945
        %v3354 = vpack.c.b16 %v2958, %v2946
        %v3355 = vpack.c.b16 %v2959, %v2947
        %v3356 = vpack.c.b16 %v2960, %v2948
        %v3357 = vpack.c.b16 %v2973, %v2961
        %v3358 = vpack.c.b16 %v2974, %v2962
        %v3359 = vpack.c.b16 %v2975, %v2963
        %v3360 = vpack.c.b16 %v2976, %v2964
        %v3361 = vpack.c.b16 %v2977, %v2965
        %v3362 = vpack.c.b16 %v2978, %v2966
        %v3363 = vpack.c.b16 %v2979, %v2967
        %v3364 = vpack.c.b16 %v2980, %v2968
        %v3365 = vpack.c.b16 %v2981, %v2969
        %v3366 = vpack.c.b16 %v2982, %v2970
        %v3367 = vpack.c.b16 %v2983, %v2971
        %v3368 = vpack.c.b16 %v2984, %v2972
        %3753 = vmatprep.subr.bf16.mxu0 %v2986
        %3754 = vmatpush1.bf16.msra.mxu0 %v2985
        %3755 = vmatprep.subr.bf16.mxu0 %v2998
        %3756 = vmatpush1.bf16.msra.mxu0 %v2997
        %3757 = vmatprep.subr.bf16.mxu0 %v3010
        %3758 = vmatpush1.bf16.msra.mxu0 %v3009
        %3759 = vmatprep.subr.bf16.mxu0 %v3022
        %3760 = vmatpush1.bf16.msra.mxu0 %v3021
        %3761 = vmatprep.subr.bf16.mxu0 %v3034
        %3762 = vmatpush1.bf16.msra.mxu0 %v3033
        %3763 = vmatprep.subr.bf16.mxu0 %v3046
        %3764 = vmatpush1.bf16.msra.mxu0 %v3045
        %3765 = vmatprep.subr.bf16.mxu0 %v3058
        %3766 = vmatpush1.bf16.msra.mxu0 %v3057
        %3767 = vmatprep.subr.bf16.mxu0 %v3070
        %3768 = vmatpush1.bf16.msra.mxu0 %v3069
        %3769 = vmatprep.subr.bf16.mxu0 %v3082
        %3770 = vmatpush1.bf16.msra.mxu0 %v3081
        %3771 = vmatprep.subr.bf16.mxu0 %v3094
        %3772 = vmatpush1.bf16.msra.mxu0 %v3093
        %3773 = vmatprep.subr.bf16.mxu0 %v3106
        %3774 = vmatpush1.bf16.msra.mxu0 %v3105
        %3775 = vmatprep.subr.bf16.mxu0 %v3118
        %3776 = vmatpush1.bf16.msra.mxu0 %v3117
        %3777 = vmatprep.subr.bf16.mxu0 %v3130
        %3778 = vmatpush1.bf16.msra.mxu0 %v3129
        %3779 = vmatprep.subr.bf16.mxu0 %v3142
        %3780 = vmatpush1.bf16.msra.mxu0 %v3141
        %3781 = vmatprep.subr.bf16.mxu0 %v3154
        %3782 = vmatpush1.bf16.msra.mxu0 %v3153
        %3783 = vmatprep.subr.bf16.mxu0 %v3166
        %3784 = vmatpush1.bf16.msra.mxu0 %v3165
        %3785 = vmatprep.mubr.bf16.mxu0 %v1382
        %3786 = vmatmul.mubr.bf16.gmra.mrb[0].mxu0 %v1381
        %v3787 = vpop.f32.mrb[0].mxu0
        %v3788 = vadd.f32 %v1776, %v3787
        %v3789 = vpop.f32.mrb[0].mxu0
        %v3790 = vadd.f32 %v1780, %v3789
        %v3791 = vpop.f32.mrb[0].mxu0
        %v3792 = vadd.f32 %v1776, %v3791
        %v3793 = vpop.f32.mrb[0].mxu0
        %v3794 = vadd.f32 %v1780, %v3793
        %3795 = vdwg.mxu0
        %3796 = vmatprep.subr.bf16.mxu0 %v3178
        %3797 = vmatpush1.bf16.msra.mxu0 %v3177
        %3798 = vmatprep.subr.bf16.mxu0 %v3190
        %3799 = vmatpush1.bf16.msra.mxu0 %v3189
        %3800 = vmatprep.subr.bf16.mxu0 %v3202
        %3801 = vmatpush1.bf16.msra.mxu0 %v3201
        %3802 = vmatprep.subr.bf16.mxu0 %v3214
        %3803 = vmatpush1.bf16.msra.mxu0 %v3213
        %3804 = vmatprep.subr.bf16.mxu0 %v3226
        %3805 = vmatpush1.bf16.msra.mxu0 %v3225
        %3806 = vmatprep.subr.bf16.mxu0 %v3238
        %3807 = vmatpush1.bf16.msra.mxu0 %v3237
        %3808 = vmatprep.subr.bf16.mxu0 %v3250
        %3809 = vmatpush1.bf16.msra.mxu0 %v3249
        %3810 = vmatprep.subr.bf16.mxu0 %v3262
        %3811 = vmatpush1.bf16.msra.mxu0 %v3261
        %3812 = vmatprep.subr.bf16.mxu0 %v3274
        %3813 = vmatpush1.bf16.msra.mxu0 %v3273
        %3814 = vmatprep.subr.bf16.mxu0 %v3286
        %3815 = vmatpush1.bf16.msra.mxu0 %v3285
        %3816 = vmatprep.subr.bf16.mxu0 %v3298
        %3817 = vmatpush1.bf16.msra.mxu0 %v3297
        %3818 = vmatprep.subr.bf16.mxu0 %v3310
        %3819 = vmatpush1.bf16.msra.mxu0 %v3309
        %3820 = vmatprep.subr.bf16.mxu0 %v3322
        %3821 = vmatpush1.bf16.msra.mxu0 %v3321
        %3822 = vmatprep.subr.bf16.mxu0 %v3334
        %3823 = vmatpush1.bf16.msra.mxu0 %v3333
        %3824 = vmatprep.subr.bf16.mxu0 %v3346
        %3825 = vmatpush1.bf16.msra.mxu0 %v3345
        %3826 = vmatprep.subr.bf16.mxu0 %v3358
        %3827 = vmatpush1.bf16.msra.mxu0 %v3357
        %3828 = vmatprep.mubr.bf16.mxu0 %v1384
        %3829 = vmatmul.mubr.bf16.gmra.mrb[0].mxu0 %v1383
        %v3830 = vpop.f32.mrb[0].mxu0
        %v3831 = vadd.f32 %v3788, %v3830
        %v3832 = vpop.f32.mrb[0].mxu0
        %v3833 = vadd.f32 %v3790, %v3832
        %v3834 = vpop.f32.mrb[0].mxu0
        %v3835 = vadd.f32 %v3792, %v3834
        %v3836 = vpop.f32.mrb[0].mxu0
        %v3837 = vadd.f32 %v3794, %v3836
        %3838 = vdwg.mxu0
        %3839 = vmatprep.subr.bf16.mxu0 %v2988
        %3840 = vmatpush1.bf16.msra.mxu0 %v2987
        %3841 = vmatprep.subr.bf16.mxu0 %v3000
        %3842 = vmatpush1.bf16.msra.mxu0 %v2999
        %3843 = vmatprep.subr.bf16.mxu0 %v3012
        %3844 = vmatpush1.bf16.msra.mxu0 %v3011
        %3845 = vmatprep.subr.bf16.mxu0 %v3024
        %3846 = vmatpush1.bf16.msra.mxu0 %v3023
        %3847 = vmatprep.subr.bf16.mxu0 %v3036
        %3848 = vmatpush1.bf16.msra.mxu0 %v3035
        %3849 = vmatprep.subr.bf16.mxu0 %v3048
        %3850 = vmatpush1.bf16.msra.mxu0 %v3047
        %3851 = vmatprep.subr.bf16.mxu0 %v3060
        %3852 = vmatpush1.bf16.msra.mxu0 %v3059
        %3853 = vmatprep.subr.bf16.mxu0 %v3072
        %3854 = vmatpush1.bf16.msra.mxu0 %v3071
        %3855 = vmatprep.subr.bf16.mxu0 %v3084
        %3856 = vmatpush1.bf16.msra.mxu0 %v3083
        %3857 = vmatprep.subr.bf16.mxu0 %v3096
        %3858 = vmatpush1.bf16.msra.mxu0 %v3095
        %3859 = vmatprep.subr.bf16.mxu0 %v3108
        %3860 = vmatpush1.bf16.msra.mxu0 %v3107
        %3861 = vmatprep.subr.bf16.mxu0 %v3120
        %3862 = vmatpush1.bf16.msra.mxu0 %v3119
        %3863 = vmatprep.subr.bf16.mxu0 %v3132
        %3864 = vmatpush1.bf16.msra.mxu0 %v3131
        %3865 = vmatprep.subr.bf16.mxu0 %v3144
        %3866 = vmatpush1.bf16.msra.mxu0 %v3143
        %3867 = vmatprep.subr.bf16.mxu0 %v3156
        %3868 = vmatpush1.bf16.msra.mxu0 %v3155
        %3869 = vmatprep.subr.bf16.mxu0 %v3168
        %3870 = vmatpush1.bf16.msra.mxu0 %v3167
        %3871 = vmatprep.mubr.bf16.mxu0 %v1382
        %3872 = vmatmul.mubr.bf16.gmra.mrb[0].mxu0 %v1381
        %v3873 = vpop.f32.mrb[0].mxu0
        %v3874 = vadd.f32 %v1784, %v3873
        %v3875 = vpop.f32.mrb[0].mxu0
        %v3876 = vadd.f32 %v1788, %v3875
        %v3877 = vpop.f32.mrb[0].mxu0
        %v3878 = vadd.f32 %v1784, %v3877
        %v3879 = vpop.f32.mrb[0].mxu0
        %v3880 = vadd.f32 %v1788, %v3879
        %3881 = vdwg.mxu0
        %3882 = vmatprep.subr.bf16.mxu0 %v3180
        %3883 = vmatpush1.bf16.msra.mxu0 %v3179
        %3884 = vmatprep.subr.bf16.mxu0 %v3192
        %3885 = vmatpush1.bf16.msra.mxu0 %v3191
        %3886 = vmatprep.subr.bf16.mxu0 %v3204
        %3887 = vmatpush1.bf16.msra.mxu0 %v3203
        %3888 = vmatprep.subr.bf16.mxu0 %v3216
        %3889 = vmatpush1.bf16.msra.mxu0 %v3215
        %3890 = vmatprep.subr.bf16.mxu0 %v3228
        %3891 = vmatpush1.bf16.msra.mxu0 %v3227
        %3892 = vmatprep.subr.bf16.mxu0 %v3240
        %3893 = vmatpush1.bf16.msra.mxu0 %v3239
        %3894 = vmatprep.subr.bf16.mxu0 %v3252
        %3895 = vmatpush1.bf16.msra.mxu0 %v3251
        %3896 = vmatprep.subr.bf16.mxu0 %v3264
        %3897 = vmatpush1.bf16.msra.mxu0 %v3263
        %3898 = vmatprep.subr.bf16.mxu0 %v3276
        %3899 = vmatpush1.bf16.msra.mxu0 %v3275
        %3900 = vmatprep.subr.bf16.mxu0 %v3288
        %3901 = vmatpush1.bf16.msra.mxu0 %v3287
        %3902 = vmatprep.subr.bf16.mxu0 %v3300
        %3903 = vmatpush1.bf16.msra.mxu0 %v3299
        %3904 = vmatprep.subr.bf16.mxu0 %v3312
        %3905 = vmatpush1.bf16.msra.mxu0 %v3311
        %3906 = vmatprep.subr.bf16.mxu0 %v3324
        %3907 = vmatpush1.bf16.msra.mxu0 %v3323
        %3908 = vmatprep.subr.bf16.mxu0 %v3336
        %3909 = vmatpush1.bf16.msra.mxu0 %v3335
        %3910 = vmatprep.subr.bf16.mxu0 %v3348
        %3911 = vmatpush1.bf16.msra.mxu0 %v3347
        %3912 = vmatprep.subr.bf16.mxu0 %v3360
        %3913 = vmatpush1.bf16.msra.mxu0 %v3359
        %3914 = vmatprep.mubr.bf16.mxu0 %v1384
        %3915 = vmatmul.mubr.bf16.gmra.mrb[0].mxu0 %v1383
        %v3916 = vpop.f32.mrb[0].mxu0
        %v3917 = vadd.f32 %v3874, %v3916
        %v3918 = vpop.f32.mrb[0].mxu0
        %v3919 = vadd.f32 %v3876, %v3918
        %v3920 = vpop.f32.mrb[0].mxu0
        %v3921 = vadd.f32 %v3878, %v3920
        %v3922 = vpop.f32.mrb[0].mxu0
        %v3923 = vadd.f32 %v3880, %v3922
        %3924 = vdwg.mxu0
        %3925 = vmatprep.subr.bf16.mxu0 %v2990
        %3926 = vmatpush1.bf16.msra.mxu0 %v2989
        %3927 = vmatprep.subr.bf16.mxu0 %v3002
        %3928 = vmatpush1.bf16.msra.mxu0 %v3001
        %3929 = vmatprep.subr.bf16.mxu0 %v3014
        %3930 = vmatpush1.bf16.msra.mxu0 %v3013
        %3931 = vmatprep.subr.bf16.mxu0 %v3026
        %3932 = vmatpush1.bf16.msra.mxu0 %v3025
        %3933 = vmatprep.subr.bf16.mxu0 %v3038
        %3934 = vmatpush1.bf16.msra.mxu0 %v3037
        %3935 = vmatprep.subr.bf16.mxu0 %v3050
        %3936 = vmatpush1.bf16.msra.mxu0 %v3049
        %3937 = vmatprep.subr.bf16.mxu0 %v3062
        %3938 = vmatpush1.bf16.msra.mxu0 %v3061
        %3939 = vmatprep.subr.bf16.mxu0 %v3074
        %3940 = vmatpush1.bf16.msra.mxu0 %v3073
        %3941 = vmatprep.subr.bf16.mxu0 %v3086
        %3942 = vmatpush1.bf16.msra.mxu0 %v3085
        %3943 = vmatprep.subr.bf16.mxu0 %v3098
        %3944 = vmatpush1.bf16.msra.mxu0 %v3097
        %3945 = vmatprep.subr.bf16.mxu0 %v3110
        %3946 = vmatpush1.bf16.msra.mxu0 %v3109
        %3947 = vmatprep.subr.bf16.mxu0 %v3122
        %3948 = vmatpush1.bf16.msra.mxu0 %v3121
        %3949 = vmatprep.subr.bf16.mxu0 %v3134
        %3950 = vmatpush1.bf16.msra.mxu0 %v3133
        %3951 = vmatprep.subr.bf16.mxu0 %v3146
        %3952 = vmatpush1.bf16.msra.mxu0 %v3145
        %3953 = vmatprep.subr.bf16.mxu0 %v3158
        %3954 = vmatpush1.bf16.msra.mxu0 %v3157
        %3955 = vmatprep.subr.bf16.mxu0 %v3170
        %3956 = vmatpush1.bf16.msra.mxu0 %v3169
        %3957 = vmatprep.mubr.bf16.mxu0 %v1382
        %3958 = vmatmul.mubr.bf16.gmra.mrb[0].mxu0 %v1381
        %v3959 = vpop.f32.mrb[0].mxu0
        %v3960 = vadd.f32 %v1792, %v3959
        %v3961 = vpop.f32.mrb[0].mxu0
        %v3962 = vadd.f32 %v1796, %v3961
        %v3963 = vpop.f32.mrb[0].mxu0
        %v3964 = vadd.f32 %v1792, %v3963
        %v3965 = vpop.f32.mrb[0].mxu0
        %v3966 = vadd.f32 %v1796, %v3965
        %3967 = vdwg.mxu0
        %3968 = vmatprep.subr.bf16.mxu0 %v3182
        %3969 = vmatpush1.bf16.msra.mxu0 %v3181
        %3970 = vmatprep.subr.bf16.mxu0 %v3194
        %3971 = vmatpush1.bf16.msra.mxu0 %v3193
        %3972 = vmatprep.subr.bf16.mxu0 %v3206
        %3973 = vmatpush1.bf16.msra.mxu0 %v3205
        %3974 = vmatprep.subr.bf16.mxu0 %v3218
        %3975 = vmatpush1.bf16.msra.mxu0 %v3217
        %3976 = vmatprep.subr.bf16.mxu0 %v3230
        %3977 = vmatpush1.bf16.msra.mxu0 %v3229
        %3978 = vmatprep.subr.bf16.mxu0 %v3242
        %3979 = vmatpush1.bf16.msra.mxu0 %v3241
        %3980 = vmatprep.subr.bf16.mxu0 %v3254
        %3981 = vmatpush1.bf16.msra.mxu0 %v3253
        %3982 = vmatprep.subr.bf16.mxu0 %v3266
        %3983 = vmatpush1.bf16.msra.mxu0 %v3265
        %3984 = vmatprep.subr.bf16.mxu0 %v3278
        %3985 = vmatpush1.bf16.msra.mxu0 %v3277
        %3986 = vmatprep.subr.bf16.mxu0 %v3290
        %3987 = vmatpush1.bf16.msra.mxu0 %v3289
        %3988 = vmatprep.subr.bf16.mxu0 %v3302
        %3989 = vmatpush1.bf16.msra.mxu0 %v3301
        %3990 = vmatprep.subr.bf16.mxu0 %v3314
        %3991 = vmatpush1.bf16.msra.mxu0 %v3313
        %3992 = vmatprep.subr.bf16.mxu0 %v3326
        %3993 = vmatpush1.bf16.msra.mxu0 %v3325
        %3994 = vmatprep.subr.bf16.mxu0 %v3338
        %3995 = vmatpush1.bf16.msra.mxu0 %v3337
        %3996 = vmatprep.subr.bf16.mxu0 %v3350
        %3997 = vmatpush1.bf16.msra.mxu0 %v3349
        %3998 = vmatprep.subr.bf16.mxu0 %v3362
        %3999 = vmatpush1.bf16.msra.mxu0 %v3361
        %4000 = vmatprep.mubr.bf16.mxu0 %v1384
        %4001 = vmatmul.mubr.bf16.gmra.mrb[0].mxu0 %v1383
        %v4002 = vpop.f32.mrb[0].mxu0
        %v4003 = vadd.f32 %v3960, %v4002
        %v4004 = vpop.f32.mrb[0].mxu0
        %v4005 = vadd.f32 %v3962, %v4004
        %v4006 = vpop.f32.mrb[0].mxu0
        %v4007 = vadd.f32 %v3964, %v4006
        %v4008 = vpop.f32.mrb[0].mxu0
        %v4009 = vadd.f32 %v3966, %v4008
        %4010 = vdwg.mxu0
        %4011 = vmatprep.subr.bf16.mxu0 %v2992
        %4012 = vmatpush1.bf16.msra.mxu0 %v2991
        %4013 = vmatprep.subr.bf16.mxu0 %v3004
        %4014 = vmatpush1.bf16.msra.mxu0 %v3003
        %4015 = vmatprep.subr.bf16.mxu0 %v3016
        %4016 = vmatpush1.bf16.msra.mxu0 %v3015
        %4017 = vmatprep.subr.bf16.mxu0 %v3028
        %4018 = vmatpush1.bf16.msra.mxu0 %v3027
        %4019 = vmatprep.subr.bf16.mxu0 %v3040
        %4020 = vmatpush1.bf16.msra.mxu0 %v3039
        %4021 = vmatprep.subr.bf16.mxu0 %v3052
        %4022 = vmatpush1.bf16.msra.mxu0 %v3051
        %4023 = vmatprep.subr.bf16.mxu0 %v3064
        %4024 = vmatpush1.bf16.msra.mxu0 %v3063
        %4025 = vmatprep.subr.bf16.mxu0 %v3076
        %4026 = vmatpush1.bf16.msra.mxu0 %v3075
        %4027 = vmatprep.subr.bf16.mxu0 %v3088
        %4028 = vmatpush1.bf16.msra.mxu0 %v3087
        %4029 = vmatprep.subr.bf16.mxu0 %v3100
        %4030 = vmatpush1.bf16.msra.mxu0 %v3099
        %4031 = vmatprep.subr.bf16.mxu0 %v3112
        %4032 = vmatpush1.bf16.msra.mxu0 %v3111
        %4033 = vmatprep.subr.bf16.mxu0 %v3124
        %4034 = vmatpush1.bf16.msra.mxu0 %v3123
        %4035 = vmatprep.subr.bf16.mxu0 %v3136
        %4036 = vmatpush1.bf16.msra.mxu0 %v3135
        %4037 = vmatprep.subr.bf16.mxu0 %v3148
        %4038 = vmatpush1.bf16.msra.mxu0 %v3147
        %4039 = vmatprep.subr.bf16.mxu0 %v3160
        %4040 = vmatpush1.bf16.msra.mxu0 %v3159
        %4041 = vmatprep.subr.bf16.mxu0 %v3172
        %4042 = vmatpush1.bf16.msra.mxu0 %v3171
        %4043 = vmatprep.mubr.bf16.mxu0 %v1382
        %4044 = vmatmul.mubr.bf16.gmra.mrb[0].mxu0 %v1381
        %v4045 = vpop.f32.mrb[0].mxu0
        %v4046 = vadd.f32 %v1800, %v4045
        %v4047 = vpop.f32.mrb[0].mxu0
        %v4048 = vadd.f32 %v1804, %v4047
        %v4049 = vpop.f32.mrb[0].mxu0
        %v4050 = vadd.f32 %v1800, %v4049
        %v4051 = vpop.f32.mrb[0].mxu0
        %v4052 = vadd.f32 %v1804, %v4051
        %4053 = vdwg.mxu0
        %4054 = vmatprep.subr.bf16.mxu0 %v3184
        %4055 = vmatpush1.bf16.msra.mxu0 %v3183
        %4056 = vmatprep.subr.bf16.mxu0 %v3196
        %4057 = vmatpush1.bf16.msra.mxu0 %v3195
        %4058 = vmatprep.subr.bf16.mxu0 %v3208
        %4059 = vmatpush1.bf16.msra.mxu0 %v3207
        %4060 = vmatprep.subr.bf16.mxu0 %v3220
        %4061 = vmatpush1.bf16.msra.mxu0 %v3219
        %4062 = vmatprep.subr.bf16.mxu0 %v3232
        %4063 = vmatpush1.bf16.msra.mxu0 %v3231
        %4064 = vmatprep.subr.bf16.mxu0 %v3244
        %4065 = vmatpush1.bf16.msra.mxu0 %v3243
        %4066 = vmatprep.subr.bf16.mxu0 %v3256
        %4067 = vmatpush1.bf16.msra.mxu0 %v3255
        %4068 = vmatprep.subr.bf16.mxu0 %v3268
        %4069 = vmatpush1.bf16.msra.mxu0 %v3267
        %4070 = vmatprep.subr.bf16.mxu0 %v3280
        %4071 = vmatpush1.bf16.msra.mxu0 %v3279
        %4072 = vmatprep.subr.bf16.mxu0 %v3292
        %4073 = vmatpush1.bf16.msra.mxu0 %v3291
        %4074 = vmatprep.subr.bf16.mxu0 %v3304
        %4075 = vmatpush1.bf16.msra.mxu0 %v3303
        %4076 = vmatprep.subr.bf16.mxu0 %v3316
        %4077 = vmatpush1.bf16.msra.mxu0 %v3315
        %4078 = vmatprep.subr.bf16.mxu0 %v3328
        %4079 = vmatpush1.bf16.msra.mxu0 %v3327
        %4080 = vmatprep.subr.bf16.mxu0 %v3340
        %4081 = vmatpush1.bf16.msra.mxu0 %v3339
        %4082 = vmatprep.subr.bf16.mxu0 %v3352
        %4083 = vmatpush1.bf16.msra.mxu0 %v3351
        %4084 = vmatprep.subr.bf16.mxu0 %v3364
        %4085 = vmatpush1.bf16.msra.mxu0 %v3363
        %4086 = vmatprep.mubr.bf16.mxu0 %v1384
        %4087 = vmatmul.mubr.bf16.gmra.mrb[0].mxu0 %v1383
        %v4088 = vpop.f32.mrb[0].mxu0
        %v4089 = vadd.f32 %v4046, %v4088
        %v4090 = vpop.f32.mrb[0].mxu0
        %v4091 = vadd.f32 %v4048, %v4090
        %v4092 = vpop.f32.mrb[0].mxu0
        %v4093 = vadd.f32 %v4050, %v4092
        %v4094 = vpop.f32.mrb[0].mxu0
        %v4095 = vadd.f32 %v4052, %v4094
        %4096 = vdwg.mxu0
        %4097 = vmatprep.subr.bf16.mxu0 %v2994
        %4098 = vmatpush1.bf16.msra.mxu0 %v2993
        %4099 = vmatprep.subr.bf16.mxu0 %v3006
        %4100 = vmatpush1.bf16.msra.mxu0 %v3005
        %4101 = vmatprep.subr.bf16.mxu0 %v3018
        %4102 = vmatpush1.bf16.msra.mxu0 %v3017
        %4103 = vmatprep.subr.bf16.mxu0 %v3030
        %4104 = vmatpush1.bf16.msra.mxu0 %v3029
        %4105 = vmatprep.subr.bf16.mxu0 %v3042
        %4106 = vmatpush1.bf16.msra.mxu0 %v3041
        %4107 = vmatprep.subr.bf16.mxu0 %v3054
        %4108 = vmatpush1.bf16.msra.mxu0 %v3053
        %4109 = vmatprep.subr.bf16.mxu0 %v3066
        %4110 = vmatpush1.bf16.msra.mxu0 %v3065
        %4111 = vmatprep.subr.bf16.mxu0 %v3078
        %4112 = vmatpush1.bf16.msra.mxu0 %v3077
        %4113 = vmatprep.subr.bf16.mxu0 %v3090
        %4114 = vmatpush1.bf16.msra.mxu0 %v3089
        %4115 = vmatprep.subr.bf16.mxu0 %v3102
        %4116 = vmatpush1.bf16.msra.mxu0 %v3101
        %4117 = vmatprep.subr.bf16.mxu0 %v3114
        %4118 = vmatpush1.bf16.msra.mxu0 %v3113
        %4119 = vmatprep.subr.bf16.mxu0 %v3126
        %4120 = vmatpush1.bf16.msra.mxu0 %v3125
        %4121 = vmatprep.subr.bf16.mxu0 %v3138
        %4122 = vmatpush1.bf16.msra.mxu0 %v3137
        %4123 = vmatprep.subr.bf16.mxu0 %v3150
        %4124 = vmatpush1.bf16.msra.mxu0 %v3149
        %4125 = vmatprep.subr.bf16.mxu0 %v3162
        %4126 = vmatpush1.bf16.msra.mxu0 %v3161
        %4127 = vmatprep.subr.bf16.mxu0 %v3174
        %4128 = vmatpush1.bf16.msra.mxu0 %v3173
        %4129 = vmatprep.mubr.bf16.mxu0 %v1382
        %4130 = vmatmul.mubr.bf16.gmra.mrb[0].mxu0 %v1381
        %v4131 = vpop.f32.mrb[0].mxu0
        %v4132 = vadd.f32 %v1808, %v4131
        %v4133 = vpop.f32.mrb[0].mxu0
        %v4134 = vadd.f32 %v1812, %v4133
        %v4135 = vpop.f32.mrb[0].mxu0
        %v4136 = vadd.f32 %v1808, %v4135
        %v4137 = vpop.f32.mrb[0].mxu0
        %v4138 = vadd.f32 %v1812, %v4137
        %4139 = vdwg.mxu0
        %4140 = vmatprep.subr.bf16.mxu0 %v3186
        %4141 = vmatpush1.bf16.msra.mxu0 %v3185
        %4142 = vmatprep.subr.bf16.mxu0 %v3198
        %4143 = vmatpush1.bf16.msra.mxu0 %v3197
        %4144 = vmatprep.subr.bf16.mxu0 %v3210
        %4145 = vmatpush1.bf16.msra.mxu0 %v3209
        %4146 = vmatprep.subr.bf16.mxu0 %v3222
        %4147 = vmatpush1.bf16.msra.mxu0 %v3221
        %4148 = vmatprep.subr.bf16.mxu0 %v3234
        %4149 = vmatpush1.bf16.msra.mxu0 %v3233
        %4150 = vmatprep.subr.bf16.mxu0 %v3246
        %4151 = vmatpush1.bf16.msra.mxu0 %v3245
        %4152 = vmatprep.subr.bf16.mxu0 %v3258
        %4153 = vmatpush1.bf16.msra.mxu0 %v3257
        %4154 = vmatprep.subr.bf16.mxu0 %v3270
        %4155 = vmatpush1.bf16.msra.mxu0 %v3269
        %4156 = vmatprep.subr.bf16.mxu0 %v3282
        %4157 = vmatpush1.bf16.msra.mxu0 %v3281
        %4158 = vmatprep.subr.bf16.mxu0 %v3294
        %4159 = vmatpush1.bf16.msra.mxu0 %v3293
        %4160 = vmatprep.subr.bf16.mxu0 %v3306
        %4161 = vmatpush1.bf16.msra.mxu0 %v3305
        %4162 = vmatprep.subr.bf16.mxu0 %v3318
        %4163 = vmatpush1.bf16.msra.mxu0 %v3317
        %4164 = vmatprep.subr.bf16.mxu0 %v3330
        %4165 = vmatpush1.bf16.msra.mxu0 %v3329
        %4166 = vmatprep.subr.bf16.mxu0 %v3342
        %4167 = vmatpush1.bf16.msra.mxu0 %v3341
        %4168 = vmatprep.subr.bf16.mxu0 %v3354
        %4169 = vmatpush1.bf16.msra.mxu0 %v3353
        %4170 = vmatprep.subr.bf16.mxu0 %v3366
        %4171 = vmatpush1.bf16.msra.mxu0 %v3365
        %4172 = vmatprep.mubr.bf16.mxu0 %v1384
        %4173 = vmatmul.mubr.bf16.gmra.mrb[0].mxu0 %v1383
        %v4174 = vpop.f32.mrb[0].mxu0
        %v4175 = vadd.f32 %v4132, %v4174
        %v4176 = vpop.f32.mrb[0].mxu0
        %v4177 = vadd.f32 %v4134, %v4176
        %v4178 = vpop.f32.mrb[0].mxu0
        %v4179 = vadd.f32 %v4136, %v4178
        %v4180 = vpop.f32.mrb[0].mxu0
        %v4181 = vadd.f32 %v4138, %v4180
        %4182 = vdwg.mxu0
        %4183 = vmatprep.subr.bf16.mxu0 %v2996
        %4184 = vmatpush1.bf16.msra.mxu0 %v2995
        %4185 = vmatprep.subr.bf16.mxu0 %v3008
        %4186 = vmatpush1.bf16.msra.mxu0 %v3007
        %4187 = vmatprep.subr.bf16.mxu0 %v3020
        %4188 = vmatpush1.bf16.msra.mxu0 %v3019
        %4189 = vmatprep.subr.bf16.mxu0 %v3032
        %4190 = vmatpush1.bf16.msra.mxu0 %v3031
        %4191 = vmatprep.subr.bf16.mxu0 %v3044
        %4192 = vmatpush1.bf16.msra.mxu0 %v3043
        %4193 = vmatprep.subr.bf16.mxu0 %v3056
        %4194 = vmatpush1.bf16.msra.mxu0 %v3055
        %4195 = vmatprep.subr.bf16.mxu0 %v3068
        %4196 = vmatpush1.bf16.msra.mxu0 %v3067
        %4197 = vmatprep.subr.bf16.mxu0 %v3080
        %4198 = vmatpush1.bf16.msra.mxu0 %v3079
        %4199 = vmatprep.subr.bf16.mxu0 %v3092
        %4200 = vmatpush1.bf16.msra.mxu0 %v3091
        %4201 = vmatprep.subr.bf16.mxu0 %v3104
        %4202 = vmatpush1.bf16.msra.mxu0 %v3103
        %4203 = vmatprep.subr.bf16.mxu0 %v3116
        %4204 = vmatpush1.bf16.msra.mxu0 %v3115
        %4205 = vmatprep.subr.bf16.mxu0 %v3128
        %4206 = vmatpush1.bf16.msra.mxu0 %v3127
        %4207 = vmatprep.subr.bf16.mxu0 %v3140
        %4208 = vmatpush1.bf16.msra.mxu0 %v3139
        %4209 = vmatprep.subr.bf16.mxu0 %v3152
        %4210 = vmatpush1.bf16.msra.mxu0 %v3151
        %4211 = vmatprep.subr.bf16.mxu0 %v3164
        %4212 = vmatpush1.bf16.msra.mxu0 %v3163
        %4213 = vmatprep.subr.bf16.mxu0 %v3176
        %4214 = vmatpush1.bf16.msra.mxu0 %v3175
        %4215 = vmatprep.mubr.bf16.mxu0 %v1382
        %4216 = vmatmul.mubr.bf16.gmra.mrb[0].mxu0 %v1381
        %v4217 = vpop.f32.mrb[0].mxu0
        %v4218 = vadd.f32 %v1816, %v4217
        %v4219 = vpop.f32.mrb[0].mxu0
        %v4220 = vadd.f32 %v1820, %v4219
        %v4221 = vpop.f32.mrb[0].mxu0
        %v4222 = vadd.f32 %v1816, %v4221
        %v4223 = vpop.f32.mrb[0].mxu0
        %v4224 = vadd.f32 %v1820, %v4223
        %4225 = vdwg.mxu0
        %4226 = vmatprep.subr.bf16.mxu0 %v3188
        %4227 = vmatpush1.bf16.msra.mxu0 %v3187
        %4228 = vmatprep.subr.bf16.mxu0 %v3200
        %4229 = vmatpush1.bf16.msra.mxu0 %v3199
        %4230 = vmatprep.subr.bf16.mxu0 %v3212
        %4231 = vmatpush1.bf16.msra.mxu0 %v3211
        %4232 = vmatprep.subr.bf16.mxu0 %v3224
        %4233 = vmatpush1.bf16.msra.mxu0 %v3223
        %4234 = vmatprep.subr.bf16.mxu0 %v3236
        %4235 = vmatpush1.bf16.msra.mxu0 %v3235
        %4236 = vmatprep.subr.bf16.mxu0 %v3248
        %4237 = vmatpush1.bf16.msra.mxu0 %v3247
        %4238 = vmatprep.subr.bf16.mxu0 %v3260
        %4239 = vmatpush1.bf16.msra.mxu0 %v3259
        %4240 = vmatprep.subr.bf16.mxu0 %v3272
        %4241 = vmatpush1.bf16.msra.mxu0 %v3271
        %4242 = vmatprep.subr.bf16.mxu0 %v3284
        %4243 = vmatpush1.bf16.msra.mxu0 %v3283
        %4244 = vmatprep.subr.bf16.mxu0 %v3296
        %4245 = vmatpush1.bf16.msra.mxu0 %v3295
        %4246 = vmatprep.subr.bf16.mxu0 %v3308
        %4247 = vmatpush1.bf16.msra.mxu0 %v3307
        %4248 = vmatprep.subr.bf16.mxu0 %v3320
        %4249 = vmatpush1.bf16.msra.mxu0 %v3319
        %4250 = vmatprep.subr.bf16.mxu0 %v3332
        %4251 = vmatpush1.bf16.msra.mxu0 %v3331
        %4252 = vmatprep.subr.bf16.mxu0 %v3344
        %4253 = vmatpush1.bf16.msra.mxu0 %v3343
        %4254 = vmatprep.subr.bf16.mxu0 %v3356
        %4255 = vmatpush1.bf16.msra.mxu0 %v3355
        %4256 = vmatprep.subr.bf16.mxu0 %v3368
        %4257 = vmatpush1.bf16.msra.mxu0 %v3367
        %4258 = vmatprep.mubr.bf16.mxu0 %v1384
        %4259 = vmatmul.mubr.bf16.gmra.mrb[0].mxu0 %v1383
        %v4260 = vpop.f32.mrb[0].mxu0
        %v4261 = vadd.f32 %v4218, %v4260
        %v4262 = vpop.f32.mrb[0].mxu0
        %v4263 = vadd.f32 %v4220, %v4262
        %v4264 = vpop.f32.mrb[0].mxu0
        %v4265 = vadd.f32 %v4222, %v4264
        %v4266 = vpop.f32.mrb[0].mxu0
        %v4267 = vadd.f32 %v4224, %v4266
        %4268 = vdwg.mxu0
        %4271 = vrot.lane.b32.xlu0 %v3831, 64
        %v4272 = vpop.permute.xlu0 %4271
        %4273 = vrot.lane.b32.xlu0 %v3835, 64
        %v4274 = vpop.permute.xlu0 %4273
        %4277 = vrot.lane.b32.xlu0 %v3833, 64
        %v4278 = vpop.permute.xlu0 %4277
        %4279 = vrot.lane.b32.xlu0 %v3837, 64
        %v4280 = vpop.permute.xlu0 %4279
        %4283 = vrot.lane.b32.xlu0 %v3917, 64
        %v4284 = vpop.permute.xlu0 %4283
        %4285 = vrot.lane.b32.xlu0 %v3921, 64
        %v4286 = vpop.permute.xlu0 %4285
        %4289 = vrot.lane.b32.xlu0 %v3919, 64
        %v4290 = vpop.permute.xlu0 %4289
        %4291 = vrot.lane.b32.xlu0 %v3923, 64
        %v4292 = vpop.permute.xlu0 %4291
        %4295 = vrot.lane.b32.xlu0 %v4003, 64
        %v4296 = vpop.permute.xlu0 %4295
        %4297 = vrot.lane.b32.xlu0 %v4007, 64
        %v4298 = vpop.permute.xlu0 %4297
        %4301 = vrot.lane.b32.xlu0 %v4005, 64
        %v4302 = vpop.permute.xlu0 %4301
        %4303 = vrot.lane.b32.xlu0 %v4009, 64
        %v4304 = vpop.permute.xlu0 %4303
        %4307 = vrot.lane.b32.xlu0 %v4089, 64
        %v4308 = vpop.permute.xlu0 %4307
        %4309 = vrot.lane.b32.xlu0 %v4093, 64
        %v4310 = vpop.permute.xlu0 %4309
        %4313 = vrot.lane.b32.xlu0 %v4091, 64
        %v4314 = vpop.permute.xlu0 %4313
        %4315 = vrot.lane.b32.xlu0 %v4095, 64
        %v4316 = vpop.permute.xlu0 %4315
        %4319 = vrot.lane.b32.xlu0 %v4175, 64
        %v4320 = vpop.permute.xlu0 %4319
        %4321 = vrot.lane.b32.xlu0 %v4179, 64
        %v4322 = vpop.permute.xlu0 %4321
        %4327 = vrot.lane.b32.xlu0 %v4177, 64
        %v4328 = vpop.permute.xlu0 %4327
        %4329 = vrot.lane.b32.xlu0 %v4181, 64
        %v4330 = vpop.permute.xlu0 %4329
        %4335 = vrot.lane.b32.xlu0 %v4261, 64
        %v4336 = vpop.permute.xlu0 %4335
        %4337 = vrot.lane.b32.xlu0 %v4265, 64
        %v4338 = vpop.permute.xlu0 %4337
        %4343 = vrot.lane.b32.xlu0 %v4263, 64
        %v4344 = vpop.permute.xlu0 %4343
        %4345 = vrot.lane.b32.xlu0 %v4267, 64
        %v4346 = vpop.permute.xlu0 %4345
        %vm4349 = vcmask 523264
        %v4350 = vsel %vm4349, %v3831, 0
        %v4352 = vsel %vm4349, %v4003, 0
        %4354 = vmatprep.subr.mxu0 0.0
        %4355 = vmatpush1.xpose.msra.mxu0 %v4352
        %4356 = vmatprep.subr.mxu0 0.0
        %4357 = vmatpush1.xpose.msra.mxu0 0.0
        %4358 = vmatprep.subr.mxu0 0.0
        %4359 = vmatpush1.xpose.msra.mxu0 0.0
        %4360 = vmatprep.subr.mxu0 0.0
        %4361 = vmatpush1.xpose.msra.mxu0 0.0
        %4362 = vmatprep.subr.mxu0 0.0
        %4363 = vmatpush1.xpose.msra.mxu0 0.0
        %4364 = vmatprep.subr.mxu0 0.0
        %4365 = vmatpush1.xpose.msra.mxu0 0.0
        %4366 = vmatprep.subr.mxu0 0.0
        %4367 = vmatpush1.xpose.msra.mxu0 0.0
        %4368 = vmatprep.subr.mxu0 0.0
        %4369 = vmatpush1.xpose.msra.mxu0 0.0
        %4370 = vmatprep.subr.mxu0 0.0
        %4371 = vmatpush1.xpose.msra.mxu0 0.0
        %4372 = vmatprep.subr.mxu0 0.0
        %4373 = vmatpush1.xpose.msra.mxu0 0.0
        %4374 = vmatprep.subr.mxu0 0.0
        %4375 = vmatpush1.xpose.msra.mxu0 0.0
        %4376 = vmatprep.subr.mxu0 0.0
        %4377 = vmatpush1.xpose.msra.mxu0 0.0
        %4378 = vmatprep.subr.mxu0 0.0
        %4379 = vmatpush1.xpose.msra.mxu0 0.0
        %4380 = vmatprep.subr.mxu0 0.0
        %4381 = vmatpush1.xpose.msra.mxu0 0.0
        %4382 = vmatprep.subr.mxu0 0.0
        %4383 = vmatpush1.xpose.msra.mxu0 0.0
        %4384 = vmatprep.subr.mxu0 0.0
        %4385 = vmatpush1.xpose.msra.mxu0 0.0
        %4386 = vmatprep.subr.mxu0 0.0
        %4387 = vmatpush1.xpose.msra.mxu0 0.0
        %4388 = vmatprep.subr.mxu0 0.0
        %4389 = vmatpush1.xpose.msra.mxu0 0.0
        %4390 = vmatprep.subr.mxu0 0.0
        %4391 = vmatpush1.xpose.msra.mxu0 0.0
        %4392 = vmatprep.subr.mxu0 0.0
        %4393 = vmatpush1.xpose.msra.mxu0 0.0
        %4394 = vmatprep.subr.mxu0 0.0
        %4395 = vmatpush1.xpose.msra.mxu0 0.0
        %4396 = vmatprep.subr.mxu0 0.0
        %4397 = vmatpush1.xpose.msra.mxu0 0.0
        %4398 = vmatprep.subr.mxu0 0.0
        %4399 = vmatpush1.xpose.msra.mxu0 0.0
        %4400 = vmatprep.subr.mxu0 0.0
        %4401 = vmatpush1.xpose.msra.mxu0 0.0
        %4402 = vmatprep.subr.mxu0 0.0
        %4403 = vmatpush1.xpose.msra.mxu0 0.0
        %4404 = vmatprep.subr.mxu0 0.0
        %4405 = vmatpush1.xpose.msra.mxu0 0.0
        %4406 = vmatprep.subr.mxu0 0.0
        %4407 = vmatpush1.xpose.msra.mxu0 0.0
        %4408 = vmatprep.subr.mxu0 0.0
        %4409 = vmatpush1.xpose.msra.mxu0 0.0
        %4410 = vmatprep.subr.mxu0 0.0
        %4411 = vmatpush1.xpose.msra.mxu0 0.0
        %4412 = vmatprep.subr.mxu0 0.0
        %4413 = vmatpush1.xpose.msra.mxu0 0.0
        %4414 = vmatprep.subr.mxu0 0.0
        %4415 = vmatpush1.xpose.msra.mxu0 0.0
        %4416 = vmatprep.subr.mxu0 0.0
        %4417 = vmatpush1.xpose.msra.mxu0 0.0
        %4418 = vmatprep.mubr.f32.mxu0 0.0
        %4419 = vmatmul.mubr.f32.gmra.mrb[0].mxu0 %v4350
        %v4420 = vpop.f32.mrb[0].mxu0
        %v4421 = vadd.f32 0.0, %v4420
        %v4422 = vpop.f32.mrb[0].mxu0
        %4423 = vdwg.mxu0
        %v4424 = vsel %vm4349, %v3835, 0
        %v4426 = vsel %vm4349, %v4007, 0
        %4428 = vmatprep.subr.mxu0 0.0
        %4429 = vmatpush1.xpose.msra.mxu0 %v4426
        %4430 = vmatprep.subr.mxu0 0.0
        %4431 = vmatpush1.xpose.msra.mxu0 0.0
        %4432 = vmatprep.subr.mxu0 0.0
        %4433 = vmatpush1.xpose.msra.mxu0 0.0
        %4434 = vmatprep.subr.mxu0 0.0
        %4435 = vmatpush1.xpose.msra.mxu0 0.0
        %4436 = vmatprep.subr.mxu0 0.0
        %4437 = vmatpush1.xpose.msra.mxu0 0.0
        %4438 = vmatprep.subr.mxu0 0.0
        %4439 = vmatpush1.xpose.msra.mxu0 0.0
        %4440 = vmatprep.subr.mxu0 0.0
        %4441 = vmatpush1.xpose.msra.mxu0 0.0
        %4442 = vmatprep.subr.mxu0 0.0
        %4443 = vmatpush1.xpose.msra.mxu0 0.0
        %4444 = vmatprep.subr.mxu0 0.0
        %4445 = vmatpush1.xpose.msra.mxu0 0.0
        %4446 = vmatprep.subr.mxu0 0.0
        %4447 = vmatpush1.xpose.msra.mxu0 0.0
        %4448 = vmatprep.subr.mxu0 0.0
        %4449 = vmatpush1.xpose.msra.mxu0 0.0
        %4450 = vmatprep.subr.mxu0 0.0
        %4451 = vmatpush1.xpose.msra.mxu0 0.0
        %4452 = vmatprep.subr.mxu0 0.0
        %4453 = vmatpush1.xpose.msra.mxu0 0.0
        %4454 = vmatprep.subr.mxu0 0.0
        %4455 = vmatpush1.xpose.msra.mxu0 0.0
        %4456 = vmatprep.subr.mxu0 0.0
        %4457 = vmatpush1.xpose.msra.mxu0 0.0
        %4458 = vmatprep.subr.mxu0 0.0
        %4459 = vmatpush1.xpose.msra.mxu0 0.0
        %4460 = vmatprep.subr.mxu0 0.0
        %4461 = vmatpush1.xpose.msra.mxu0 0.0
        %4462 = vmatprep.subr.mxu0 0.0
        %4463 = vmatpush1.xpose.msra.mxu0 0.0
        %4464 = vmatprep.subr.mxu0 0.0
        %4465 = vmatpush1.xpose.msra.mxu0 0.0
        %4466 = vmatprep.subr.mxu0 0.0
        %4467 = vmatpush1.xpose.msra.mxu0 0.0
        %4468 = vmatprep.subr.mxu0 0.0
        %4469 = vmatpush1.xpose.msra.mxu0 0.0
        %4470 = vmatprep.subr.mxu0 0.0
        %4471 = vmatpush1.xpose.msra.mxu0 0.0
        %4472 = vmatprep.subr.mxu0 0.0
        %4473 = vmatpush1.xpose.msra.mxu0 0.0
        %4474 = vmatprep.subr.mxu0 0.0
        %4475 = vmatpush1.xpose.msra.mxu0 0.0
        %4476 = vmatprep.subr.mxu0 0.0
        %4477 = vmatpush1.xpose.msra.mxu0 0.0
        %4478 = vmatprep.subr.mxu0 0.0
        %4479 = vmatpush1.xpose.msra.mxu0 0.0
        %4480 = vmatprep.subr.mxu0 0.0
        %4481 = vmatpush1.xpose.msra.mxu0 0.0
        %4482 = vmatprep.subr.mxu0 0.0
        %4483 = vmatpush1.xpose.msra.mxu0 0.0
        %4484 = vmatprep.subr.mxu0 0.0
        %4485 = vmatpush1.xpose.msra.mxu0 0.0
        %4486 = vmatprep.subr.mxu0 0.0
        %4487 = vmatpush1.xpose.msra.mxu0 0.0
        %4488 = vmatprep.subr.mxu0 0.0
        %4489 = vmatpush1.xpose.msra.mxu0 0.0
        %4490 = vmatprep.subr.mxu0 0.0
        %4491 = vmatpush1.xpose.msra.mxu0 0.0
        %4492 = vmatprep.mubr.f32.mxu0 0.0
        %4493 = vmatmul.mubr.f32.gmra.mrb[0].mxu0 %v4424
        %v4494 = vpop.f32.mrb[0].mxu0
        %v4495 = vadd.f32 0.0, %v4494
        %v4496 = vpop.f32.mrb[0].mxu0
        %4497 = vdwg.mxu0
        %v4498 = vsel %vm4349, %v4272, 0
        %v4500 = vsel %vm4349, %v4296, 0
        %4502 = vmatprep.subr.mxu0 0.0
        %4503 = vmatpush1.xpose.msra.mxu0 %v4500
        %4504 = vmatprep.subr.mxu0 0.0
        %4505 = vmatpush1.xpose.msra.mxu0 0.0
        %4506 = vmatprep.subr.mxu0 0.0
        %4507 = vmatpush1.xpose.msra.mxu0 0.0
        %4508 = vmatprep.subr.mxu0 0.0
        %4509 = vmatpush1.xpose.msra.mxu0 0.0
        %4510 = vmatprep.subr.mxu0 0.0
        %4511 = vmatpush1.xpose.msra.mxu0 0.0
        %4512 = vmatprep.subr.mxu0 0.0
        %4513 = vmatpush1.xpose.msra.mxu0 0.0
        %4514 = vmatprep.subr.mxu0 0.0
        %4515 = vmatpush1.xpose.msra.mxu0 0.0
        %4516 = vmatprep.subr.mxu0 0.0
        %4517 = vmatpush1.xpose.msra.mxu0 0.0
        %4518 = vmatprep.subr.mxu0 0.0
        %4519 = vmatpush1.xpose.msra.mxu0 0.0
        %4520 = vmatprep.subr.mxu0 0.0
        %4521 = vmatpush1.xpose.msra.mxu0 0.0
        %4522 = vmatprep.subr.mxu0 0.0
        %4523 = vmatpush1.xpose.msra.mxu0 0.0
        %4524 = vmatprep.subr.mxu0 0.0
        %4525 = vmatpush1.xpose.msra.mxu0 0.0
        %4526 = vmatprep.subr.mxu0 0.0
        %4527 = vmatpush1.xpose.msra.mxu0 0.0
        %4528 = vmatprep.subr.mxu0 0.0
        %4529 = vmatpush1.xpose.msra.mxu0 0.0
        %4530 = vmatprep.subr.mxu0 0.0
        %4531 = vmatpush1.xpose.msra.mxu0 0.0
        %4532 = vmatprep.subr.mxu0 0.0
        %4533 = vmatpush1.xpose.msra.mxu0 0.0
        %4534 = vmatprep.subr.mxu0 0.0
        %4535 = vmatpush1.xpose.msra.mxu0 0.0
        %4536 = vmatprep.subr.mxu0 0.0
        %4537 = vmatpush1.xpose.msra.mxu0 0.0
        %4538 = vmatprep.subr.mxu0 0.0
        %4539 = vmatpush1.xpose.msra.mxu0 0.0
        %4540 = vmatprep.subr.mxu0 0.0
        %4541 = vmatpush1.xpose.msra.mxu0 0.0
        %4542 = vmatprep.subr.mxu0 0.0
        %4543 = vmatpush1.xpose.msra.mxu0 0.0
        %4544 = vmatprep.subr.mxu0 0.0
        %4545 = vmatpush1.xpose.msra.mxu0 0.0
        %4546 = vmatprep.subr.mxu0 0.0
        %4547 = vmatpush1.xpose.msra.mxu0 0.0
        %4548 = vmatprep.subr.mxu0 0.0
        %4549 = vmatpush1.xpose.msra.mxu0 0.0
        %4550 = vmatprep.subr.mxu0 0.0
        %4551 = vmatpush1.xpose.msra.mxu0 0.0
        %4552 = vmatprep.subr.mxu0 0.0
        %4553 = vmatpush1.xpose.msra.mxu0 0.0
        %4554 = vmatprep.subr.mxu0 0.0
        %4555 = vmatpush1.xpose.msra.mxu0 0.0
        %4556 = vmatprep.subr.mxu0 0.0
        %4557 = vmatpush1.xpose.msra.mxu0 0.0
        %4558 = vmatprep.subr.mxu0 0.0
        %4559 = vmatpush1.xpose.msra.mxu0 0.0
        %4560 = vmatprep.subr.mxu0 0.0
        %4561 = vmatpush1.xpose.msra.mxu0 0.0
        %4562 = vmatprep.subr.mxu0 0.0
        %4563 = vmatpush1.xpose.msra.mxu0 0.0
        %4564 = vmatprep.subr.mxu0 0.0
        %4565 = vmatpush1.xpose.msra.mxu0 0.0
        %4566 = vmatprep.mubr.f32.mxu0 0.0
        %4567 = vmatmul.mubr.f32.gmra.mrb[0].mxu0 %v4498
        %v4568 = vpop.f32.mrb[0].mxu0
        %v4569 = vadd.f32 0.0, %v4568
        %v4570 = vpop.f32.mrb[0].mxu0
        %4571 = vdwg.mxu0
        %v4572 = vsel %vm4349, %v4274, 0
        %v4574 = vsel %vm4349, %v4298, 0
        %4576 = vmatprep.subr.mxu0 0.0
        %4577 = vmatpush1.xpose.msra.mxu0 %v4574
        %4578 = vmatprep.subr.mxu0 0.0
        %4579 = vmatpush1.xpose.msra.mxu0 0.0
        %4580 = vmatprep.subr.mxu0 0.0
        %4581 = vmatpush1.xpose.msra.mxu0 0.0
        %4582 = vmatprep.subr.mxu0 0.0
        %4583 = vmatpush1.xpose.msra.mxu0 0.0
        %4584 = vmatprep.subr.mxu0 0.0
        %4585 = vmatpush1.xpose.msra.mxu0 0.0
        %4586 = vmatprep.subr.mxu0 0.0
        %4587 = vmatpush1.xpose.msra.mxu0 0.0
        %4588 = vmatprep.subr.mxu0 0.0
        %4589 = vmatpush1.xpose.msra.mxu0 0.0
        %4590 = vmatprep.subr.mxu0 0.0
        %4591 = vmatpush1.xpose.msra.mxu0 0.0
        %4592 = vmatprep.subr.mxu0 0.0
        %4593 = vmatpush1.xpose.msra.mxu0 0.0
        %4594 = vmatprep.subr.mxu0 0.0
        %4595 = vmatpush1.xpose.msra.mxu0 0.0
        %4596 = vmatprep.subr.mxu0 0.0
        %4597 = vmatpush1.xpose.msra.mxu0 0.0
        %4598 = vmatprep.subr.mxu0 0.0
        %4599 = vmatpush1.xpose.msra.mxu0 0.0
        %4600 = vmatprep.subr.mxu0 0.0
        %4601 = vmatpush1.xpose.msra.mxu0 0.0
        %4602 = vmatprep.subr.mxu0 0.0
        %4603 = vmatpush1.xpose.msra.mxu0 0.0
        %4604 = vmatprep.subr.mxu0 0.0
        %4605 = vmatpush1.xpose.msra.mxu0 0.0
        %4606 = vmatprep.subr.mxu0 0.0
        %4607 = vmatpush1.xpose.msra.mxu0 0.0
        %4608 = vmatprep.subr.mxu0 0.0
        %4609 = vmatpush1.xpose.msra.mxu0 0.0
        %4610 = vmatprep.subr.mxu0 0.0
        %4611 = vmatpush1.xpose.msra.mxu0 0.0
        %4612 = vmatprep.subr.mxu0 0.0
        %4613 = vmatpush1.xpose.msra.mxu0 0.0
        %4614 = vmatprep.subr.mxu0 0.0
        %4615 = vmatpush1.xpose.msra.mxu0 0.0
        %4616 = vmatprep.subr.mxu0 0.0
        %4617 = vmatpush1.xpose.msra.mxu0 0.0
        %4618 = vmatprep.subr.mxu0 0.0
        %4619 = vmatpush1.xpose.msra.mxu0 0.0
        %4620 = vmatprep.subr.mxu0 0.0
        %4621 = vmatpush1.xpose.msra.mxu0 0.0
        %4622 = vmatprep.subr.mxu0 0.0
        %4623 = vmatpush1.xpose.msra.mxu0 0.0
        %4624 = vmatprep.subr.mxu0 0.0
        %4625 = vmatpush1.xpose.msra.mxu0 0.0
        %4626 = vmatprep.subr.mxu0 0.0
        %4627 = vmatpush1.xpose.msra.mxu0 0.0
        %4628 = vmatprep.subr.mxu0 0.0
        %4629 = vmatpush1.xpose.msra.mxu0 0.0
        %4630 = vmatprep.subr.mxu0 0.0
        %4631 = vmatpush1.xpose.msra.mxu0 0.0
        %4632 = vmatprep.subr.mxu0 0.0
        %4633 = vmatpush1.xpose.msra.mxu0 0.0
        %4634 = vmatprep.subr.mxu0 0.0
        %4635 = vmatpush1.xpose.msra.mxu0 0.0
        %4636 = vmatprep.subr.mxu0 0.0
        %4637 = vmatpush1.xpose.msra.mxu0 0.0
        %4638 = vmatprep.subr.mxu0 0.0
        %4639 = vmatpush1.xpose.msra.mxu0 0.0
        %4640 = vmatprep.mubr.f32.mxu0 0.0
        %4641 = vmatmul.mubr.f32.gmra.mrb[0].mxu0 %v4572
        %v4642 = vpop.f32.mrb[0].mxu0
        %v4643 = vadd.f32 0.0, %v4642
        %v4644 = vpop.f32.mrb[0].mxu0
        %4645 = vdwg.mxu0
        %v4646 = vsel %vm4349, %v3833, 0
        %v4648 = vsel %vm4349, %v4005, 0
        %4650 = vmatprep.subr.mxu0 0.0
        %4651 = vmatpush1.xpose.msra.mxu0 %v4648
        %4652 = vmatprep.subr.mxu0 0.0
        %4653 = vmatpush1.xpose.msra.mxu0 0.0
        %4654 = vmatprep.subr.mxu0 0.0
        %4655 = vmatpush1.xpose.msra.mxu0 0.0
        %4656 = vmatprep.subr.mxu0 0.0
        %4657 = vmatpush1.xpose.msra.mxu0 0.0
        %4658 = vmatprep.subr.mxu0 0.0
        %4659 = vmatpush1.xpose.msra.mxu0 0.0
        %4660 = vmatprep.subr.mxu0 0.0
        %4661 = vmatpush1.xpose.msra.mxu0 0.0
        %4662 = vmatprep.subr.mxu0 0.0
        %4663 = vmatpush1.xpose.msra.mxu0 0.0
        %4664 = vmatprep.subr.mxu0 0.0
        %4665 = vmatpush1.xpose.msra.mxu0 0.0
        %4666 = vmatprep.subr.mxu0 0.0
        %4667 = vmatpush1.xpose.msra.mxu0 0.0
        %4668 = vmatprep.subr.mxu0 0.0
        %4669 = vmatpush1.xpose.msra.mxu0 0.0
        %4670 = vmatprep.subr.mxu0 0.0
        %4671 = vmatpush1.xpose.msra.mxu0 0.0
        %4672 = vmatprep.subr.mxu0 0.0
        %4673 = vmatpush1.xpose.msra.mxu0 0.0
        %4674 = vmatprep.subr.mxu0 0.0
        %4675 = vmatpush1.xpose.msra.mxu0 0.0
        %4676 = vmatprep.subr.mxu0 0.0
        %4677 = vmatpush1.xpose.msra.mxu0 0.0
        %4678 = vmatprep.subr.mxu0 0.0
        %4679 = vmatpush1.xpose.msra.mxu0 0.0
        %4680 = vmatprep.subr.mxu0 0.0
        %4681 = vmatpush1.xpose.msra.mxu0 0.0
        %4682 = vmatprep.subr.mxu0 0.0
        %4683 = vmatpush1.xpose.msra.mxu0 0.0
        %4684 = vmatprep.subr.mxu0 0.0
        %4685 = vmatpush1.xpose.msra.mxu0 0.0
        %4686 = vmatprep.subr.mxu0 0.0
        %4687 = vmatpush1.xpose.msra.mxu0 0.0
        %4688 = vmatprep.subr.mxu0 0.0
        %4689 = vmatpush1.xpose.msra.mxu0 0.0
        %4690 = vmatprep.subr.mxu0 0.0
        %4691 = vmatpush1.xpose.msra.mxu0 0.0
        %4692 = vmatprep.subr.mxu0 0.0
        %4693 = vmatpush1.xpose.msra.mxu0 0.0
        %4694 = vmatprep.subr.mxu0 0.0
        %4695 = vmatpush1.xpose.msra.mxu0 0.0
        %4696 = vmatprep.subr.mxu0 0.0
        %4697 = vmatpush1.xpose.msra.mxu0 0.0
        %4698 = vmatprep.subr.mxu0 0.0
        %4699 = vmatpush1.xpose.msra.mxu0 0.0
        %4700 = vmatprep.subr.mxu0 0.0
        %4701 = vmatpush1.xpose.msra.mxu0 0.0
        %4702 = vmatprep.subr.mxu0 0.0
        %4703 = vmatpush1.xpose.msra.mxu0 0.0
        %4704 = vmatprep.subr.mxu0 0.0
        %4705 = vmatpush1.xpose.msra.mxu0 0.0
        %4706 = vmatprep.subr.mxu0 0.0
        %4707 = vmatpush1.xpose.msra.mxu0 0.0
        %4708 = vmatprep.subr.mxu0 0.0
        %4709 = vmatpush1.xpose.msra.mxu0 0.0
        %4710 = vmatprep.subr.mxu0 0.0
        %4711 = vmatpush1.xpose.msra.mxu0 0.0
        %4712 = vmatprep.subr.mxu0 0.0
        %4713 = vmatpush1.xpose.msra.mxu0 0.0
        %4714 = vmatprep.mubr.f32.mxu0 0.0
        %4715 = vmatmul.mubr.f32.gmra.mrb[0].mxu0 %v4646
        %v4716 = vpop.f32.mrb[0].mxu0
        %v4717 = vadd.f32 0.0, %v4716
        %v4718 = vpop.f32.mrb[0].mxu0
        %4719 = vdwg.mxu0
        %v4720 = vsel %vm4349, %v3837, 0
        %v4722 = vsel %vm4349, %v4009, 0
        %4724 = vmatprep.subr.mxu0 0.0
        %4725 = vmatpush1.xpose.msra.mxu0 %v4722
        %4726 = vmatprep.subr.mxu0 0.0
        %4727 = vmatpush1.xpose.msra.mxu0 0.0
        %4728 = vmatprep.subr.mxu0 0.0
        %4729 = vmatpush1.xpose.msra.mxu0 0.0
        %4730 = vmatprep.subr.mxu0 0.0
        %4731 = vmatpush1.xpose.msra.mxu0 0.0
        %4732 = vmatprep.subr.mxu0 0.0
        %4733 = vmatpush1.xpose.msra.mxu0 0.0
        %4734 = vmatprep.subr.mxu0 0.0
        %4735 = vmatpush1.xpose.msra.mxu0 0.0
        %4736 = vmatprep.subr.mxu0 0.0
        %4737 = vmatpush1.xpose.msra.mxu0 0.0
        %4738 = vmatprep.subr.mxu0 0.0
        %4739 = vmatpush1.xpose.msra.mxu0 0.0
        %4740 = vmatprep.subr.mxu0 0.0
        %4741 = vmatpush1.xpose.msra.mxu0 0.0
        %4742 = vmatprep.subr.mxu0 0.0
        %4743 = vmatpush1.xpose.msra.mxu0 0.0
        %4744 = vmatprep.subr.mxu0 0.0
        %4745 = vmatpush1.xpose.msra.mxu0 0.0
        %4746 = vmatprep.subr.mxu0 0.0
        %4747 = vmatpush1.xpose.msra.mxu0 0.0
        %4748 = vmatprep.subr.mxu0 0.0
        %4749 = vmatpush1.xpose.msra.mxu0 0.0
        %4750 = vmatprep.subr.mxu0 0.0
        %4751 = vmatpush1.xpose.msra.mxu0 0.0
        %4752 = vmatprep.subr.mxu0 0.0
        %4753 = vmatpush1.xpose.msra.mxu0 0.0
        %4754 = vmatprep.subr.mxu0 0.0
        %4755 = vmatpush1.xpose.msra.mxu0 0.0
        %4756 = vmatprep.subr.mxu0 0.0
        %4757 = vmatpush1.xpose.msra.mxu0 0.0
        %4758 = vmatprep.subr.mxu0 0.0
        %4759 = vmatpush1.xpose.msra.mxu0 0.0
        %4760 = vmatprep.subr.mxu0 0.0
        %4761 = vmatpush1.xpose.msra.mxu0 0.0
        %4762 = vmatprep.subr.mxu0 0.0
        %4763 = vmatpush1.xpose.msra.mxu0 0.0
        %4764 = vmatprep.subr.mxu0 0.0
        %4765 = vmatpush1.xpose.msra.mxu0 0.0
        %4766 = vmatprep.subr.mxu0 0.0
        %4767 = vmatpush1.xpose.msra.mxu0 0.0
        %4768 = vmatprep.subr.mxu0 0.0
        %4769 = vmatpush1.xpose.msra.mxu0 0.0
        %4770 = vmatprep.subr.mxu0 0.0
        %4771 = vmatpush1.xpose.msra.mxu0 0.0
        %4772 = vmatprep.subr.mxu0 0.0
        %4773 = vmatpush1.xpose.msra.mxu0 0.0
        %4774 = vmatprep.subr.mxu0 0.0
        %4775 = vmatpush1.xpose.msra.mxu0 0.0
        %4776 = vmatprep.subr.mxu0 0.0
        %4777 = vmatpush1.xpose.msra.mxu0 0.0
        %4778 = vmatprep.subr.mxu0 0.0
        %4779 = vmatpush1.xpose.msra.mxu0 0.0
        %4780 = vmatprep.subr.mxu0 0.0
        %4781 = vmatpush1.xpose.msra.mxu0 0.0
        %4782 = vmatprep.subr.mxu0 0.0
        %4783 = vmatpush1.xpose.msra.mxu0 0.0
        %4784 = vmatprep.subr.mxu0 0.0
        %4785 = vmatpush1.xpose.msra.mxu0 0.0
        %4786 = vmatprep.subr.mxu0 0.0
        %4787 = vmatpush1.xpose.msra.mxu0 0.0
        %4788 = vmatprep.mubr.f32.mxu0 0.0
        %4789 = vmatmul.mubr.f32.gmra.mrb[0].mxu0 %v4720
        %v4790 = vpop.f32.mrb[0].mxu0
        %v4791 = vadd.f32 0.0, %v4790
        %v4792 = vpop.f32.mrb[0].mxu0
        %4793 = vdwg.mxu0
        %v4794 = vsel %vm4349, %v4278, 0
        %v4796 = vsel %vm4349, %v4302, 0
        %4798 = vmatprep.subr.mxu0 0.0
        %4799 = vmatpush1.xpose.msra.mxu0 %v4796
        %4800 = vmatprep.subr.mxu0 0.0
        %4801 = vmatpush1.xpose.msra.mxu0 0.0
        %4802 = vmatprep.subr.mxu0 0.0
        %4803 = vmatpush1.xpose.msra.mxu0 0.0
        %4804 = vmatprep.subr.mxu0 0.0
        %4805 = vmatpush1.xpose.msra.mxu0 0.0
        %4806 = vmatprep.subr.mxu0 0.0
        %4807 = vmatpush1.xpose.msra.mxu0 0.0
        %4808 = vmatprep.subr.mxu0 0.0
        %4809 = vmatpush1.xpose.msra.mxu0 0.0
        %4810 = vmatprep.subr.mxu0 0.0
        %4811 = vmatpush1.xpose.msra.mxu0 0.0
        %4812 = vmatprep.subr.mxu0 0.0
        %4813 = vmatpush1.xpose.msra.mxu0 0.0
        %4814 = vmatprep.subr.mxu0 0.0
        %4815 = vmatpush1.xpose.msra.mxu0 0.0
        %4816 = vmatprep.subr.mxu0 0.0
        %4817 = vmatpush1.xpose.msra.mxu0 0.0
        %4818 = vmatprep.subr.mxu0 0.0
        %4819 = vmatpush1.xpose.msra.mxu0 0.0
        %4820 = vmatprep.subr.mxu0 0.0
        %4821 = vmatpush1.xpose.msra.mxu0 0.0
        %4822 = vmatprep.subr.mxu0 0.0
        %4823 = vmatpush1.xpose.msra.mxu0 0.0
        %4824 = vmatprep.subr.mxu0 0.0
        %4825 = vmatpush1.xpose.msra.mxu0 0.0
        %4826 = vmatprep.subr.mxu0 0.0
        %4827 = vmatpush1.xpose.msra.mxu0 0.0
        %4828 = vmatprep.subr.mxu0 0.0
        %4829 = vmatpush1.xpose.msra.mxu0 0.0
        %4830 = vmatprep.subr.mxu0 0.0
        %4831 = vmatpush1.xpose.msra.mxu0 0.0
        %4832 = vmatprep.subr.mxu0 0.0
        %4833 = vmatpush1.xpose.msra.mxu0 0.0
        %4834 = vmatprep.subr.mxu0 0.0
        %4835 = vmatpush1.xpose.msra.mxu0 0.0
        %4836 = vmatprep.subr.mxu0 0.0
        %4837 = vmatpush1.xpose.msra.mxu0 0.0
        %4838 = vmatprep.subr.mxu0 0.0
        %4839 = vmatpush1.xpose.msra.mxu0 0.0
        %4840 = vmatprep.subr.mxu0 0.0
        %4841 = vmatpush1.xpose.msra.mxu0 0.0
        %4842 = vmatprep.subr.mxu0 0.0
        %4843 = vmatpush1.xpose.msra.mxu0 0.0
        %4844 = vmatprep.subr.mxu0 0.0
        %4845 = vmatpush1.xpose.msra.mxu0 0.0
        %4846 = vmatprep.subr.mxu0 0.0
        %4847 = vmatpush1.xpose.msra.mxu0 0.0
        %4848 = vmatprep.subr.mxu0 0.0
        %4849 = vmatpush1.xpose.msra.mxu0 0.0
        %4850 = vmatprep.subr.mxu0 0.0
        %4851 = vmatpush1.xpose.msra.mxu0 0.0
        %4852 = vmatprep.subr.mxu0 0.0
        %4853 = vmatpush1.xpose.msra.mxu0 0.0
        %4854 = vmatprep.subr.mxu0 0.0
        %4855 = vmatpush1.xpose.msra.mxu0 0.0
        %4856 = vmatprep.subr.mxu0 0.0
        %4857 = vmatpush1.xpose.msra.mxu0 0.0
        %4858 = vmatprep.subr.mxu0 0.0
        %4859 = vmatpush1.xpose.msra.mxu0 0.0
        %4860 = vmatprep.subr.mxu0 0.0
        %4861 = vmatpush1.xpose.msra.mxu0 0.0
        %4862 = vmatprep.mubr.f32.mxu0 0.0
        %4863 = vmatmul.mubr.f32.gmra.mrb[0].mxu0 %v4794
        %v4864 = vpop.f32.mrb[0].mxu0
        %v4865 = vadd.f32 0.0, %v4864
        %v4866 = vpop.f32.mrb[0].mxu0
        %4867 = vdwg.mxu0
        %v4868 = vsel %vm4349, %v4280, 0
        %v4870 = vsel %vm4349, %v4304, 0
        %4872 = vmatprep.subr.mxu0 0.0
        %4873 = vmatpush1.xpose.msra.mxu0 %v4870
        %4874 = vmatprep.subr.mxu0 0.0
        %4875 = vmatpush1.xpose.msra.mxu0 0.0
        %4876 = vmatprep.subr.mxu0 0.0
        %4877 = vmatpush1.xpose.msra.mxu0 0.0
        %4878 = vmatprep.subr.mxu0 0.0
        %4879 = vmatpush1.xpose.msra.mxu0 0.0
        %4880 = vmatprep.subr.mxu0 0.0
        %4881 = vmatpush1.xpose.msra.mxu0 0.0
        %4882 = vmatprep.subr.mxu0 0.0
        %4883 = vmatpush1.xpose.msra.mxu0 0.0
        %4884 = vmatprep.subr.mxu0 0.0
        %4885 = vmatpush1.xpose.msra.mxu0 0.0
        %4886 = vmatprep.subr.mxu0 0.0
        %4887 = vmatpush1.xpose.msra.mxu0 0.0
        %4888 = vmatprep.subr.mxu0 0.0
        %4889 = vmatpush1.xpose.msra.mxu0 0.0
        %4890 = vmatprep.subr.mxu0 0.0
        %4891 = vmatpush1.xpose.msra.mxu0 0.0
        %4892 = vmatprep.subr.mxu0 0.0
        %4893 = vmatpush1.xpose.msra.mxu0 0.0
        %4894 = vmatprep.subr.mxu0 0.0
        %4895 = vmatpush1.xpose.msra.mxu0 0.0
        %4896 = vmatprep.subr.mxu0 0.0
        %4897 = vmatpush1.xpose.msra.mxu0 0.0
        %4898 = vmatprep.subr.mxu0 0.0
        %4899 = vmatpush1.xpose.msra.mxu0 0.0
        %4900 = vmatprep.subr.mxu0 0.0
        %4901 = vmatpush1.xpose.msra.mxu0 0.0
        %4902 = vmatprep.subr.mxu0 0.0
        %4903 = vmatpush1.xpose.msra.mxu0 0.0
        %4904 = vmatprep.subr.mxu0 0.0
        %4905 = vmatpush1.xpose.msra.mxu0 0.0
        %4906 = vmatprep.subr.mxu0 0.0
        %4907 = vmatpush1.xpose.msra.mxu0 0.0
        %4908 = vmatprep.subr.mxu0 0.0
        %4909 = vmatpush1.xpose.msra.mxu0 0.0
        %4910 = vmatprep.subr.mxu0 0.0
        %4911 = vmatpush1.xpose.msra.mxu0 0.0
        %4912 = vmatprep.subr.mxu0 0.0
        %4913 = vmatpush1.xpose.msra.mxu0 0.0
        %4914 = vmatprep.subr.mxu0 0.0
        %4915 = vmatpush1.xpose.msra.mxu0 0.0
        %4916 = vmatprep.subr.mxu0 0.0
        %4917 = vmatpush1.xpose.msra.mxu0 0.0
        %4918 = vmatprep.subr.mxu0 0.0
        %4919 = vmatpush1.xpose.msra.mxu0 0.0
        %4920 = vmatprep.subr.mxu0 0.0
        %4921 = vmatpush1.xpose.msra.mxu0 0.0
        %4922 = vmatprep.subr.mxu0 0.0
        %4923 = vmatpush1.xpose.msra.mxu0 0.0
        %4924 = vmatprep.subr.mxu0 0.0
        %4925 = vmatpush1.xpose.msra.mxu0 0.0
        %4926 = vmatprep.subr.mxu0 0.0
        %4927 = vmatpush1.xpose.msra.mxu0 0.0
        %4928 = vmatprep.subr.mxu0 0.0
        %4929 = vmatpush1.xpose.msra.mxu0 0.0
        %4930 = vmatprep.subr.mxu0 0.0
        %4931 = vmatpush1.xpose.msra.mxu0 0.0
        %4932 = vmatprep.subr.mxu0 0.0
        %4933 = vmatpush1.xpose.msra.mxu0 0.0
        %4934 = vmatprep.subr.mxu0 0.0
        %4935 = vmatpush1.xpose.msra.mxu0 0.0
        %4936 = vmatprep.mubr.f32.mxu0 0.0
        %4937 = vmatmul.mubr.f32.gmra.mrb[0].mxu0 %v4868
        %v4938 = vpop.f32.mrb[0].mxu0
        %v4939 = vadd.f32 0.0, %v4938
        %v4940 = vpop.f32.mrb[0].mxu0
        %4941 = vdwg.mxu0
        %v4942 = vsel %vm4349, %v3917, 0
        %v4944 = vsel %vm4349, %v4089, 0
        %4946 = vmatprep.subr.mxu0 0.0
        %4947 = vmatpush1.xpose.msra.mxu0 %v4944
        %4948 = vmatprep.subr.mxu0 0.0
        %4949 = vmatpush1.xpose.msra.mxu0 0.0
        %4950 = vmatprep.subr.mxu0 0.0
        %4951 = vmatpush1.xpose.msra.mxu0 0.0
        %4952 = vmatprep.subr.mxu0 0.0
        %4953 = vmatpush1.xpose.msra.mxu0 0.0
        %4954 = vmatprep.subr.mxu0 0.0
        %4955 = vmatpush1.xpose.msra.mxu0 0.0
        %4956 = vmatprep.subr.mxu0 0.0
        %4957 = vmatpush1.xpose.msra.mxu0 0.0
        %4958 = vmatprep.subr.mxu0 0.0
        %4959 = vmatpush1.xpose.msra.mxu0 0.0
        %4960 = vmatprep.subr.mxu0 0.0
        %4961 = vmatpush1.xpose.msra.mxu0 0.0
        %4962 = vmatprep.subr.mxu0 0.0
        %4963 = vmatpush1.xpose.msra.mxu0 0.0
        %4964 = vmatprep.subr.mxu0 0.0
        %4965 = vmatpush1.xpose.msra.mxu0 0.0
        %4966 = vmatprep.subr.mxu0 0.0
        %4967 = vmatpush1.xpose.msra.mxu0 0.0
        %4968 = vmatprep.subr.mxu0 0.0
        %4969 = vmatpush1.xpose.msra.mxu0 0.0
        %4970 = vmatprep.subr.mxu0 0.0
        %4971 = vmatpush1.xpose.msra.mxu0 0.0
        %4972 = vmatprep.subr.mxu0 0.0
        %4973 = vmatpush1.xpose.msra.mxu0 0.0
        %4974 = vmatprep.subr.mxu0 0.0
        %4975 = vmatpush1.xpose.msra.mxu0 0.0
        %4976 = vmatprep.subr.mxu0 0.0
        %4977 = vmatpush1.xpose.msra.mxu0 0.0
        %4978 = vmatprep.subr.mxu0 0.0
        %4979 = vmatpush1.xpose.msra.mxu0 0.0
        %4980 = vmatprep.subr.mxu0 0.0
        %4981 = vmatpush1.xpose.msra.mxu0 0.0
        %4982 = vmatprep.subr.mxu0 0.0
        %4983 = vmatpush1.xpose.msra.mxu0 0.0
        %4984 = vmatprep.subr.mxu0 0.0
        %4985 = vmatpush1.xpose.msra.mxu0 0.0
        %4986 = vmatprep.subr.mxu0 0.0
        %4987 = vmatpush1.xpose.msra.mxu0 0.0
        %4988 = vmatprep.subr.mxu0 0.0
        %4989 = vmatpush1.xpose.msra.mxu0 0.0
        %4990 = vmatprep.subr.mxu0 0.0
        %4991 = vmatpush1.xpose.msra.mxu0 0.0
        %4992 = vmatprep.subr.mxu0 0.0
        %4993 = vmatpush1.xpose.msra.mxu0 0.0
        %4994 = vmatprep.subr.mxu0 0.0
        %4995 = vmatpush1.xpose.msra.mxu0 0.0
        %4996 = vmatprep.subr.mxu0 0.0
        %4997 = vmatpush1.xpose.msra.mxu0 0.0
        %4998 = vmatprep.subr.mxu0 0.0
        %4999 = vmatpush1.xpose.msra.mxu0 0.0
        %5000 = vmatprep.subr.mxu0 0.0
        %5001 = vmatpush1.xpose.msra.mxu0 0.0
        %5002 = vmatprep.subr.mxu0 0.0
        %5003 = vmatpush1.xpose.msra.mxu0 0.0
        %5004 = vmatprep.subr.mxu0 0.0
        %5005 = vmatpush1.xpose.msra.mxu0 0.0
        %5006 = vmatprep.subr.mxu0 0.0
        %5007 = vmatpush1.xpose.msra.mxu0 0.0
        %5008 = vmatprep.subr.mxu0 0.0
        %5009 = vmatpush1.xpose.msra.mxu0 0.0
        %5010 = vmatprep.mubr.f32.mxu0 0.0
        %5011 = vmatmul.mubr.f32.gmra.mrb[0].mxu0 %v4942
        %v5012 = vpop.f32.mrb[0].mxu0
        %v5013 = vadd.f32 0.0, %v5012
        %v5014 = vpop.f32.mrb[0].mxu0
        %5015 = vdwg.mxu0
        %v5016 = vsel %vm4349, %v3921, 0
        %v5018 = vsel %vm4349, %v4093, 0
        %5020 = vmatprep.subr.mxu0 0.0
        %5021 = vmatpush1.xpose.msra.mxu0 %v5018
        %5022 = vmatprep.subr.mxu0 0.0
        %5023 = vmatpush1.xpose.msra.mxu0 0.0
        %5024 = vmatprep.subr.mxu0 0.0
        %5025 = vmatpush1.xpose.msra.mxu0 0.0
        %5026 = vmatprep.subr.mxu0 0.0
        %5027 = vmatpush1.xpose.msra.mxu0 0.0
        %5028 = vmatprep.subr.mxu0 0.0
        %5029 = vmatpush1.xpose.msra.mxu0 0.0
        %5030 = vmatprep.subr.mxu0 0.0
        %5031 = vmatpush1.xpose.msra.mxu0 0.0
        %5032 = vmatprep.subr.mxu0 0.0
        %5033 = vmatpush1.xpose.msra.mxu0 0.0
        %5034 = vmatprep.subr.mxu0 0.0
        %5035 = vmatpush1.xpose.msra.mxu0 0.0
        %5036 = vmatprep.subr.mxu0 0.0
        %5037 = vmatpush1.xpose.msra.mxu0 0.0
        %5038 = vmatprep.subr.mxu0 0.0
        %5039 = vmatpush1.xpose.msra.mxu0 0.0
        %5040 = vmatprep.subr.mxu0 0.0
        %5041 = vmatpush1.xpose.msra.mxu0 0.0
        %5042 = vmatprep.subr.mxu0 0.0
        %5043 = vmatpush1.xpose.msra.mxu0 0.0
        %5044 = vmatprep.subr.mxu0 0.0
        %5045 = vmatpush1.xpose.msra.mxu0 0.0
        %5046 = vmatprep.subr.mxu0 0.0
        %5047 = vmatpush1.xpose.msra.mxu0 0.0
        %5048 = vmatprep.subr.mxu0 0.0
        %5049 = vmatpush1.xpose.msra.mxu0 0.0
        %5050 = vmatprep.subr.mxu0 0.0
        %5051 = vmatpush1.xpose.msra.mxu0 0.0
        %5052 = vmatprep.subr.mxu0 0.0
        %5053 = vmatpush1.xpose.msra.mxu0 0.0
        %5054 = vmatprep.subr.mxu0 0.0
        %5055 = vmatpush1.xpose.msra.mxu0 0.0
        %5056 = vmatprep.subr.mxu0 0.0
        %5057 = vmatpush1.xpose.msra.mxu0 0.0
        %5058 = vmatprep.subr.mxu0 0.0
        %5059 = vmatpush1.xpose.msra.mxu0 0.0
        %5060 = vmatprep.subr.mxu0 0.0
        %5061 = vmatpush1.xpose.msra.mxu0 0.0
        %5062 = vmatprep.subr.mxu0 0.0
        %5063 = vmatpush1.xpose.msra.mxu0 0.0
        %5064 = vmatprep.subr.mxu0 0.0
        %5065 = vmatpush1.xpose.msra.mxu0 0.0
        %5066 = vmatprep.subr.mxu0 0.0
        %5067 = vmatpush1.xpose.msra.mxu0 0.0
        %5068 = vmatprep.subr.mxu0 0.0
        %5069 = vmatpush1.xpose.msra.mxu0 0.0
        %5070 = vmatprep.subr.mxu0 0.0
        %5071 = vmatpush1.xpose.msra.mxu0 0.0
        %5072 = vmatprep.subr.mxu0 0.0
        %5073 = vmatpush1.xpose.msra.mxu0 0.0
        %5074 = vmatprep.subr.mxu0 0.0
        %5075 = vmatpush1.xpose.msra.mxu0 0.0
        %5076 = vmatprep.subr.mxu0 0.0
        %5077 = vmatpush1.xpose.msra.mxu0 0.0
        %5078 = vmatprep.subr.mxu0 0.0
        %5079 = vmatpush1.xpose.msra.mxu0 0.0
        %5080 = vmatprep.subr.mxu0 0.0
        %5081 = vmatpush1.xpose.msra.mxu0 0.0
        %5082 = vmatprep.subr.mxu0 0.0
        %5083 = vmatpush1.xpose.msra.mxu0 0.0
        %5084 = vmatprep.mubr.f32.mxu0 0.0
        %5085 = vmatmul.mubr.f32.gmra.mrb[0].mxu0 %v5016
        %v5086 = vpop.f32.mrb[0].mxu0
        %v5087 = vadd.f32 0.0, %v5086
        %v5088 = vpop.f32.mrb[0].mxu0
        %5089 = vdwg.mxu0
        %v5090 = vsel %vm4349, %v4284, 0
        %v5092 = vsel %vm4349, %v4308, 0
        %5094 = vmatprep.subr.mxu0 0.0
        %5095 = vmatpush1.xpose.msra.mxu0 %v5092
        %5096 = vmatprep.subr.mxu0 0.0
        %5097 = vmatpush1.xpose.msra.mxu0 0.0
        %5098 = vmatprep.subr.mxu0 0.0
        %5099 = vmatpush1.xpose.msra.mxu0 0.0
        %5100 = vmatprep.subr.mxu0 0.0
        %5101 = vmatpush1.xpose.msra.mxu0 0.0
        %5102 = vmatprep.subr.mxu0 0.0
        %5103 = vmatpush1.xpose.msra.mxu0 0.0
        %5104 = vmatprep.subr.mxu0 0.0
        %5105 = vmatpush1.xpose.msra.mxu0 0.0
        %5106 = vmatprep.subr.mxu0 0.0
        %5107 = vmatpush1.xpose.msra.mxu0 0.0
        %5108 = vmatprep.subr.mxu0 0.0
        %5109 = vmatpush1.xpose.msra.mxu0 0.0
        %5110 = vmatprep.subr.mxu0 0.0
        %5111 = vmatpush1.xpose.msra.mxu0 0.0
        %5112 = vmatprep.subr.mxu0 0.0
        %5113 = vmatpush1.xpose.msra.mxu0 0.0
        %5114 = vmatprep.subr.mxu0 0.0
        %5115 = vmatpush1.xpose.msra.mxu0 0.0
        %5116 = vmatprep.subr.mxu0 0.0
        %5117 = vmatpush1.xpose.msra.mxu0 0.0
        %5118 = vmatprep.subr.mxu0 0.0
        %5119 = vmatpush1.xpose.msra.mxu0 0.0
        %5120 = vmatprep.subr.mxu0 0.0
        %5121 = vmatpush1.xpose.msra.mxu0 0.0
        %5122 = vmatprep.subr.mxu0 0.0
        %5123 = vmatpush1.xpose.msra.mxu0 0.0
        %5124 = vmatprep.subr.mxu0 0.0
        %5125 = vmatpush1.xpose.msra.mxu0 0.0
        %5126 = vmatprep.subr.mxu0 0.0
        %5127 = vmatpush1.xpose.msra.mxu0 0.0
        %5128 = vmatprep.subr.mxu0 0.0
        %5129 = vmatpush1.xpose.msra.mxu0 0.0
        %5130 = vmatprep.subr.mxu0 0.0
        %5131 = vmatpush1.xpose.msra.mxu0 0.0
        %5132 = vmatprep.subr.mxu0 0.0
        %5133 = vmatpush1.xpose.msra.mxu0 0.0
        %5134 = vmatprep.subr.mxu0 0.0
        %5135 = vmatpush1.xpose.msra.mxu0 0.0
        %5136 = vmatprep.subr.mxu0 0.0
        %5137 = vmatpush1.xpose.msra.mxu0 0.0
        %5138 = vmatprep.subr.mxu0 0.0
        %5139 = vmatpush1.xpose.msra.mxu0 0.0
        %5140 = vmatprep.subr.mxu0 0.0
        %5141 = vmatpush1.xpose.msra.mxu0 0.0
        %5142 = vmatprep.subr.mxu0 0.0
        %5143 = vmatpush1.xpose.msra.mxu0 0.0
        %5144 = vmatprep.subr.mxu0 0.0
        %5145 = vmatpush1.xpose.msra.mxu0 0.0
        %5146 = vmatprep.subr.mxu0 0.0
        %5147 = vmatpush1.xpose.msra.mxu0 0.0
        %5148 = vmatprep.subr.mxu0 0.0
        %5149 = vmatpush1.xpose.msra.mxu0 0.0
        %5150 = vmatprep.subr.mxu0 0.0
        %5151 = vmatpush1.xpose.msra.mxu0 0.0
        %5152 = vmatprep.subr.mxu0 0.0
        %5153 = vmatpush1.xpose.msra.mxu0 0.0
        %5154 = vmatprep.subr.mxu0 0.0
        %5155 = vmatpush1.xpose.msra.mxu0 0.0
        %5156 = vmatprep.subr.mxu0 0.0
        %5157 = vmatpush1.xpose.msra.mxu0 0.0
        %5158 = vmatprep.mubr.f32.mxu0 0.0
        %5159 = vmatmul.mubr.f32.gmra.mrb[0].mxu0 %v5090
        %v5160 = vpop.f32.mrb[0].mxu0
        %v5161 = vadd.f32 0.0, %v5160
        %v5162 = vpop.f32.mrb[0].mxu0
        %5163 = vdwg.mxu0
        %v5164 = vsel %vm4349, %v4286, 0
        %v5166 = vsel %vm4349, %v4310, 0
        %5168 = vmatprep.subr.mxu0 0.0
        %5169 = vmatpush1.xpose.msra.mxu0 %v5166
        %5170 = vmatprep.subr.mxu0 0.0
        %5171 = vmatpush1.xpose.msra.mxu0 0.0
        %5172 = vmatprep.subr.mxu0 0.0
        %5173 = vmatpush1.xpose.msra.mxu0 0.0
        %5174 = vmatprep.subr.mxu0 0.0
        %5175 = vmatpush1.xpose.msra.mxu0 0.0
        %5176 = vmatprep.subr.mxu0 0.0
        %5177 = vmatpush1.xpose.msra.mxu0 0.0
        %5178 = vmatprep.subr.mxu0 0.0
        %5179 = vmatpush1.xpose.msra.mxu0 0.0
        %5180 = vmatprep.subr.mxu0 0.0
        %5181 = vmatpush1.xpose.msra.mxu0 0.0
        %5182 = vmatprep.subr.mxu0 0.0
        %5183 = vmatpush1.xpose.msra.mxu0 0.0
        %5184 = vmatprep.subr.mxu0 0.0
        %5185 = vmatpush1.xpose.msra.mxu0 0.0
        %5186 = vmatprep.subr.mxu0 0.0
        %5187 = vmatpush1.xpose.msra.mxu0 0.0
        %5188 = vmatprep.subr.mxu0 0.0
        %5189 = vmatpush1.xpose.msra.mxu0 0.0
        %5190 = vmatprep.subr.mxu0 0.0
        %5191 = vmatpush1.xpose.msra.mxu0 0.0
        %5192 = vmatprep.subr.mxu0 0.0
        %5193 = vmatpush1.xpose.msra.mxu0 0.0
        %5194 = vmatprep.subr.mxu0 0.0
        %5195 = vmatpush1.xpose.msra.mxu0 0.0
        %5196 = vmatprep.subr.mxu0 0.0
        %5197 = vmatpush1.xpose.msra.mxu0 0.0
        %5198 = vmatprep.subr.mxu0 0.0
        %5199 = vmatpush1.xpose.msra.mxu0 0.0
        %5200 = vmatprep.subr.mxu0 0.0
        %5201 = vmatpush1.xpose.msra.mxu0 0.0
        %5202 = vmatprep.subr.mxu0 0.0
        %5203 = vmatpush1.xpose.msra.mxu0 0.0
        %5204 = vmatprep.subr.mxu0 0.0
        %5205 = vmatpush1.xpose.msra.mxu0 0.0
        %5206 = vmatprep.subr.mxu0 0.0
        %5207 = vmatpush1.xpose.msra.mxu0 0.0
        %5208 = vmatprep.subr.mxu0 0.0
        %5209 = vmatpush1.xpose.msra.mxu0 0.0
        %5210 = vmatprep.subr.mxu0 0.0
        %5211 = vmatpush1.xpose.msra.mxu0 0.0
        %5212 = vmatprep.subr.mxu0 0.0
        %5213 = vmatpush1.xpose.msra.mxu0 0.0
        %5214 = vmatprep.subr.mxu0 0.0
        %5215 = vmatpush1.xpose.msra.mxu0 0.0
        %5216 = vmatprep.subr.mxu0 0.0
        %5217 = vmatpush1.xpose.msra.mxu0 0.0
        %5218 = vmatprep.subr.mxu0 0.0
        %5219 = vmatpush1.xpose.msra.mxu0 0.0
        %5220 = vmatprep.subr.mxu0 0.0
        %5221 = vmatpush1.xpose.msra.mxu0 0.0
        %5222 = vmatprep.subr.mxu0 0.0
        %5223 = vmatpush1.xpose.msra.mxu0 0.0
        %5224 = vmatprep.subr.mxu0 0.0
        %5225 = vmatpush1.xpose.msra.mxu0 0.0
        %5226 = vmatprep.subr.mxu0 0.0
        %5227 = vmatpush1.xpose.msra.mxu0 0.0
        %5228 = vmatprep.subr.mxu0 0.0
        %5229 = vmatpush1.xpose.msra.mxu0 0.0
        %5230 = vmatprep.subr.mxu0 0.0
        %5231 = vmatpush1.xpose.msra.mxu0 0.0
        %5232 = vmatprep.mubr.f32.mxu0 0.0
        %5233 = vmatmul.mubr.f32.gmra.mrb[0].mxu0 %v5164
        %v5234 = vpop.f32.mrb[0].mxu0
        %v5235 = vadd.f32 0.0, %v5234
        %v5236 = vpop.f32.mrb[0].mxu0
        %5237 = vdwg.mxu0
        %v5238 = vsel %vm4349, %v3919, 0
        %v5240 = vsel %vm4349, %v4091, 0
        %5242 = vmatprep.subr.mxu0 0.0
        %5243 = vmatpush1.xpose.msra.mxu0 %v5240
        %5244 = vmatprep.subr.mxu0 0.0
        %5245 = vmatpush1.xpose.msra.mxu0 0.0
        %5246 = vmatprep.subr.mxu0 0.0
        %5247 = vmatpush1.xpose.msra.mxu0 0.0
        %5248 = vmatprep.subr.mxu0 0.0
        %5249 = vmatpush1.xpose.msra.mxu0 0.0
        %5250 = vmatprep.subr.mxu0 0.0
        %5251 = vmatpush1.xpose.msra.mxu0 0.0
        %5252 = vmatprep.subr.mxu0 0.0
        %5253 = vmatpush1.xpose.msra.mxu0 0.0
        %5254 = vmatprep.subr.mxu0 0.0
        %5255 = vmatpush1.xpose.msra.mxu0 0.0
        %5256 = vmatprep.subr.mxu0 0.0
        %5257 = vmatpush1.xpose.msra.mxu0 0.0
        %5258 = vmatprep.subr.mxu0 0.0
        %5259 = vmatpush1.xpose.msra.mxu0 0.0
        %5260 = vmatprep.subr.mxu0 0.0
        %5261 = vmatpush1.xpose.msra.mxu0 0.0
        %5262 = vmatprep.subr.mxu0 0.0
        %5263 = vmatpush1.xpose.msra.mxu0 0.0
        %5264 = vmatprep.subr.mxu0 0.0
        %5265 = vmatpush1.xpose.msra.mxu0 0.0
        %5266 = vmatprep.subr.mxu0 0.0
        %5267 = vmatpush1.xpose.msra.mxu0 0.0
        %5268 = vmatprep.subr.mxu0 0.0
        %5269 = vmatpush1.xpose.msra.mxu0 0.0
        %5270 = vmatprep.subr.mxu0 0.0
        %5271 = vmatpush1.xpose.msra.mxu0 0.0
        %5272 = vmatprep.subr.mxu0 0.0
        %5273 = vmatpush1.xpose.msra.mxu0 0.0
        %5274 = vmatprep.subr.mxu0 0.0
        %5275 = vmatpush1.xpose.msra.mxu0 0.0
        %5276 = vmatprep.subr.mxu0 0.0
        %5277 = vmatpush1.xpose.msra.mxu0 0.0
        %5278 = vmatprep.subr.mxu0 0.0
        %5279 = vmatpush1.xpose.msra.mxu0 0.0
        %5280 = vmatprep.subr.mxu0 0.0
        %5281 = vmatpush1.xpose.msra.mxu0 0.0
        %5282 = vmatprep.subr.mxu0 0.0
        %5283 = vmatpush1.xpose.msra.mxu0 0.0
        %5284 = vmatprep.subr.mxu0 0.0
        %5285 = vmatpush1.xpose.msra.mxu0 0.0
        %5286 = vmatprep.subr.mxu0 0.0
        %5287 = vmatpush1.xpose.msra.mxu0 0.0
        %5288 = vmatprep.subr.mxu0 0.0
        %5289 = vmatpush1.xpose.msra.mxu0 0.0
        %5290 = vmatprep.subr.mxu0 0.0
        %5291 = vmatpush1.xpose.msra.mxu0 0.0
        %5292 = vmatprep.subr.mxu0 0.0
        %5293 = vmatpush1.xpose.msra.mxu0 0.0
        %5294 = vmatprep.subr.mxu0 0.0
        %5295 = vmatpush1.xpose.msra.mxu0 0.0
        %5296 = vmatprep.subr.mxu0 0.0
        %5297 = vmatpush1.xpose.msra.mxu0 0.0
        %5298 = vmatprep.subr.mxu0 0.0
        %5299 = vmatpush1.xpose.msra.mxu0 0.0
        %5300 = vmatprep.subr.mxu0 0.0
        %5301 = vmatpush1.xpose.msra.mxu0 0.0
        %5302 = vmatprep.subr.mxu0 0.0
        %5303 = vmatpush1.xpose.msra.mxu0 0.0
        %5304 = vmatprep.subr.mxu0 0.0
        %5305 = vmatpush1.xpose.msra.mxu0 0.0
        %5306 = vmatprep.mubr.f32.mxu0 0.0
        %5307 = vmatmul.mubr.f32.gmra.mrb[0].mxu0 %v5238
        %v5308 = vpop.f32.mrb[0].mxu0
        %v5309 = vadd.f32 0.0, %v5308
        %v5310 = vpop.f32.mrb[0].mxu0
        %5311 = vdwg.mxu0
        %v5312 = vsel %vm4349, %v3923, 0
        %v5314 = vsel %vm4349, %v4095, 0
        %5316 = vmatprep.subr.mxu0 0.0
        %5317 = vmatpush1.xpose.msra.mxu0 %v5314
        %5318 = vmatprep.subr.mxu0 0.0
        %5319 = vmatpush1.xpose.msra.mxu0 0.0
        %5320 = vmatprep.subr.mxu0 0.0
        %5321 = vmatpush1.xpose.msra.mxu0 0.0
        %5322 = vmatprep.subr.mxu0 0.0
        %5323 = vmatpush1.xpose.msra.mxu0 0.0
        %5324 = vmatprep.subr.mxu0 0.0
        %5325 = vmatpush1.xpose.msra.mxu0 0.0
        %5326 = vmatprep.subr.mxu0 0.0
        %5327 = vmatpush1.xpose.msra.mxu0 0.0
        %5328 = vmatprep.subr.mxu0 0.0
        %5329 = vmatpush1.xpose.msra.mxu0 0.0
        %5330 = vmatprep.subr.mxu0 0.0
        %5331 = vmatpush1.xpose.msra.mxu0 0.0
        %5332 = vmatprep.subr.mxu0 0.0
        %5333 = vmatpush1.xpose.msra.mxu0 0.0
        %5334 = vmatprep.subr.mxu0 0.0
        %5335 = vmatpush1.xpose.msra.mxu0 0.0
        %5336 = vmatprep.subr.mxu0 0.0
        %5337 = vmatpush1.xpose.msra.mxu0 0.0
        %5338 = vmatprep.subr.mxu0 0.0
        %5339 = vmatpush1.xpose.msra.mxu0 0.0
        %5340 = vmatprep.subr.mxu0 0.0
        %5341 = vmatpush1.xpose.msra.mxu0 0.0
        %5342 = vmatprep.subr.mxu0 0.0
        %5343 = vmatpush1.xpose.msra.mxu0 0.0
        %5344 = vmatprep.subr.mxu0 0.0
        %5345 = vmatpush1.xpose.msra.mxu0 0.0
        %5346 = vmatprep.subr.mxu0 0.0
        %5347 = vmatpush1.xpose.msra.mxu0 0.0
        %5348 = vmatprep.subr.mxu0 0.0
        %5349 = vmatpush1.xpose.msra.mxu0 0.0
        %5350 = vmatprep.subr.mxu0 0.0
        %5351 = vmatpush1.xpose.msra.mxu0 0.0
        %5352 = vmatprep.subr.mxu0 0.0
        %5353 = vmatpush1.xpose.msra.mxu0 0.0
        %5354 = vmatprep.subr.mxu0 0.0
        %5355 = vmatpush1.xpose.msra.mxu0 0.0
        %5356 = vmatprep.subr.mxu0 0.0
        %5357 = vmatpush1.xpose.msra.mxu0 0.0
        %5358 = vmatprep.subr.mxu0 0.0
        %5359 = vmatpush1.xpose.msra.mxu0 0.0
        %5360 = vmatprep.subr.mxu0 0.0
        %5361 = vmatpush1.xpose.msra.mxu0 0.0
        %5362 = vmatprep.subr.mxu0 0.0
        %5363 = vmatpush1.xpose.msra.mxu0 0.0
        %5364 = vmatprep.subr.mxu0 0.0
        %5365 = vmatpush1.xpose.msra.mxu0 0.0
        %5366 = vmatprep.subr.mxu0 0.0
        %5367 = vmatpush1.xpose.msra.mxu0 0.0
        %5368 = vmatprep.subr.mxu0 0.0
        %5369 = vmatpush1.xpose.msra.mxu0 0.0
        %5370 = vmatprep.subr.mxu0 0.0
        %5371 = vmatpush1.xpose.msra.mxu0 0.0
        %5372 = vmatprep.subr.mxu0 0.0
        %5373 = vmatpush1.xpose.msra.mxu0 0.0
        %5374 = vmatprep.subr.mxu0 0.0
        %5375 = vmatpush1.xpose.msra.mxu0 0.0
        %5376 = vmatprep.subr.mxu0 0.0
        %5377 = vmatpush1.xpose.msra.mxu0 0.0
        %5378 = vmatprep.subr.mxu0 0.0
        %5379 = vmatpush1.xpose.msra.mxu0 0.0
        %5380 = vmatprep.mubr.f32.mxu0 0.0
        %5381 = vmatmul.mubr.f32.gmra.mrb[0].mxu0 %v5312
        %v5382 = vpop.f32.mrb[0].mxu0
        %v5383 = vadd.f32 0.0, %v5382
        %v5384 = vpop.f32.mrb[0].mxu0
        %5385 = vdwg.mxu0
        %v5386 = vsel %vm4349, %v4290, 0
        %v5388 = vsel %vm4349, %v4314, 0
        %5390 = vmatprep.subr.mxu0 0.0
        %5391 = vmatpush1.xpose.msra.mxu0 %v5388
        %5392 = vmatprep.subr.mxu0 0.0
        %5393 = vmatpush1.xpose.msra.mxu0 0.0
        %5394 = vmatprep.subr.mxu0 0.0
        %5395 = vmatpush1.xpose.msra.mxu0 0.0
        %5396 = vmatprep.subr.mxu0 0.0
        %5397 = vmatpush1.xpose.msra.mxu0 0.0
        %5398 = vmatprep.subr.mxu0 0.0
        %5399 = vmatpush1.xpose.msra.mxu0 0.0
        %5400 = vmatprep.subr.mxu0 0.0
        %5401 = vmatpush1.xpose.msra.mxu0 0.0
        %5402 = vmatprep.subr.mxu0 0.0
        %5403 = vmatpush1.xpose.msra.mxu0 0.0
        %5404 = vmatprep.subr.mxu0 0.0
        %5405 = vmatpush1.xpose.msra.mxu0 0.0
        %5406 = vmatprep.subr.mxu0 0.0
        %5407 = vmatpush1.xpose.msra.mxu0 0.0
        %5408 = vmatprep.subr.mxu0 0.0
        %5409 = vmatpush1.xpose.msra.mxu0 0.0
        %5410 = vmatprep.subr.mxu0 0.0
        %5411 = vmatpush1.xpose.msra.mxu0 0.0
        %5412 = vmatprep.subr.mxu0 0.0
        %5413 = vmatpush1.xpose.msra.mxu0 0.0
        %5414 = vmatprep.subr.mxu0 0.0
        %5415 = vmatpush1.xpose.msra.mxu0 0.0
        %5416 = vmatprep.subr.mxu0 0.0
        %5417 = vmatpush1.xpose.msra.mxu0 0.0
        %5418 = vmatprep.subr.mxu0 0.0
        %5419 = vmatpush1.xpose.msra.mxu0 0.0
        %5420 = vmatprep.subr.mxu0 0.0
        %5421 = vmatpush1.xpose.msra.mxu0 0.0
        %5422 = vmatprep.subr.mxu0 0.0
        %5423 = vmatpush1.xpose.msra.mxu0 0.0
        %5424 = vmatprep.subr.mxu0 0.0
        %5425 = vmatpush1.xpose.msra.mxu0 0.0
        %5426 = vmatprep.subr.mxu0 0.0
        %5427 = vmatpush1.xpose.msra.mxu0 0.0
        %5428 = vmatprep.subr.mxu0 0.0
        %5429 = vmatpush1.xpose.msra.mxu0 0.0
        %5430 = vmatprep.subr.mxu0 0.0
        %5431 = vmatpush1.xpose.msra.mxu0 0.0
        %5432 = vmatprep.subr.mxu0 0.0
        %5433 = vmatpush1.xpose.msra.mxu0 0.0
        %5434 = vmatprep.subr.mxu0 0.0
        %5435 = vmatpush1.xpose.msra.mxu0 0.0
        %5436 = vmatprep.subr.mxu0 0.0
        %5437 = vmatpush1.xpose.msra.mxu0 0.0
        %5438 = vmatprep.subr.mxu0 0.0
        %5439 = vmatpush1.xpose.msra.mxu0 0.0
        %5440 = vmatprep.subr.mxu0 0.0
        %5441 = vmatpush1.xpose.msra.mxu0 0.0
        %5442 = vmatprep.subr.mxu0 0.0
        %5443 = vmatpush1.xpose.msra.mxu0 0.0
        %5444 = vmatprep.subr.mxu0 0.0
        %5445 = vmatpush1.xpose.msra.mxu0 0.0
        %5446 = vmatprep.subr.mxu0 0.0
        %5447 = vmatpush1.xpose.msra.mxu0 0.0
        %5448 = vmatprep.subr.mxu0 0.0
        %5449 = vmatpush1.xpose.msra.mxu0 0.0
        %5450 = vmatprep.subr.mxu0 0.0
        %5451 = vmatpush1.xpose.msra.mxu0 0.0
        %5452 = vmatprep.subr.mxu0 0.0
        %5453 = vmatpush1.xpose.msra.mxu0 0.0
        %5454 = vmatprep.mubr.f32.mxu0 0.0
        %5455 = vmatmul.mubr.f32.gmra.mrb[0].mxu0 %v5386
        %v5456 = vpop.f32.mrb[0].mxu0
        %v5457 = vadd.f32 0.0, %v5456
        %v5458 = vpop.f32.mrb[0].mxu0
        %5459 = vdwg.mxu0
        %v5460 = vsel %vm4349, %v4292, 0
        %v5462 = vsel %vm4349, %v4316, 0
        %5464 = vmatprep.subr.mxu0 0.0
        %5465 = vmatpush1.xpose.msra.mxu0 %v5462
        %5466 = vmatprep.subr.mxu0 0.0
        %5467 = vmatpush1.xpose.msra.mxu0 0.0
        %5468 = vmatprep.subr.mxu0 0.0
        %5469 = vmatpush1.xpose.msra.mxu0 0.0
        %5470 = vmatprep.subr.mxu0 0.0
        %5471 = vmatpush1.xpose.msra.mxu0 0.0
        %5472 = vmatprep.subr.mxu0 0.0
        %5473 = vmatpush1.xpose.msra.mxu0 0.0
        %5474 = vmatprep.subr.mxu0 0.0
        %5475 = vmatpush1.xpose.msra.mxu0 0.0
        %5476 = vmatprep.subr.mxu0 0.0
        %5477 = vmatpush1.xpose.msra.mxu0 0.0
        %5478 = vmatprep.subr.mxu0 0.0
        %5479 = vmatpush1.xpose.msra.mxu0 0.0
        %5480 = vmatprep.subr.mxu0 0.0
        %5481 = vmatpush1.xpose.msra.mxu0 0.0
        %5482 = vmatprep.subr.mxu0 0.0
        %5483 = vmatpush1.xpose.msra.mxu0 0.0
        %5484 = vmatprep.subr.mxu0 0.0
        %5485 = vmatpush1.xpose.msra.mxu0 0.0
        %5486 = vmatprep.subr.mxu0 0.0
        %5487 = vmatpush1.xpose.msra.mxu0 0.0
        %5488 = vmatprep.subr.mxu0 0.0
        %5489 = vmatpush1.xpose.msra.mxu0 0.0
        %5490 = vmatprep.subr.mxu0 0.0
        %5491 = vmatpush1.xpose.msra.mxu0 0.0
        %5492 = vmatprep.subr.mxu0 0.0
        %5493 = vmatpush1.xpose.msra.mxu0 0.0
        %5494 = vmatprep.subr.mxu0 0.0
        %5495 = vmatpush1.xpose.msra.mxu0 0.0
        %5496 = vmatprep.subr.mxu0 0.0
        %5497 = vmatpush1.xpose.msra.mxu0 0.0
        %5498 = vmatprep.subr.mxu0 0.0
        %5499 = vmatpush1.xpose.msra.mxu0 0.0
        %5500 = vmatprep.subr.mxu0 0.0
        %5501 = vmatpush1.xpose.msra.mxu0 0.0
        %5502 = vmatprep.subr.mxu0 0.0
        %5503 = vmatpush1.xpose.msra.mxu0 0.0
        %5504 = vmatprep.subr.mxu0 0.0
        %5505 = vmatpush1.xpose.msra.mxu0 0.0
        %5506 = vmatprep.subr.mxu0 0.0
        %5507 = vmatpush1.xpose.msra.mxu0 0.0
        %5508 = vmatprep.subr.mxu0 0.0
        %5509 = vmatpush1.xpose.msra.mxu0 0.0
        %5510 = vmatprep.subr.mxu0 0.0
        %5511 = vmatpush1.xpose.msra.mxu0 0.0
        %5512 = vmatprep.subr.mxu0 0.0
        %5513 = vmatpush1.xpose.msra.mxu0 0.0
        %5514 = vmatprep.subr.mxu0 0.0
        %5515 = vmatpush1.xpose.msra.mxu0 0.0
        %5516 = vmatprep.subr.mxu0 0.0
        %5517 = vmatpush1.xpose.msra.mxu0 0.0
        %5518 = vmatprep.subr.mxu0 0.0
        %5519 = vmatpush1.xpose.msra.mxu0 0.0
        %5520 = vmatprep.subr.mxu0 0.0
        %5521 = vmatpush1.xpose.msra.mxu0 0.0
        %5522 = vmatprep.subr.mxu0 0.0
        %5523 = vmatpush1.xpose.msra.mxu0 0.0
        %5524 = vmatprep.subr.mxu0 0.0
        %5525 = vmatpush1.xpose.msra.mxu0 0.0
        %5526 = vmatprep.subr.mxu0 0.0
        %5527 = vmatpush1.xpose.msra.mxu0 0.0
        %5528 = vmatprep.mubr.f32.mxu0 0.0
        %5529 = vmatmul.mubr.f32.gmra.mrb[0].mxu0 %v5460
        %v5530 = vpop.f32.mrb[0].mxu0
        %v5531 = vadd.f32 0.0, %v5530
        %v5532 = vpop.f32.mrb[0].mxu0
        %5533 = vdwg.mxu0
        %v5534 = vmul.f32 %v4421, 0.125
        %v5535 = vmul.f32 %v4495, 0.125
        %v5536 = vmul.f32 %v4569, 0.125
        %v5537 = vmul.f32 %v4643, 0.125
        %v5538 = vmul.f32 %v4717, 0.125
        %v5539 = vmul.f32 %v4791, 0.125
        %v5540 = vmul.f32 %v4865, 0.125
        %v5541 = vmul.f32 %v4939, 0.125
        %v5542 = vmul.f32 %v5013, 0.125
        %v5543 = vmul.f32 %v5087, 0.125
        %v5544 = vmul.f32 %v5161, 0.125
        %v5545 = vmul.f32 %v5235, 0.125
        %v5546 = vmul.f32 %v5309, 0.125
        %v5547 = vmul.f32 %v5383, 0.125
        %v5548 = vmul.f32 %v5457, 0.125
        %v5549 = vmul.f32 %v5531, 0.125
        %vm5550 = vcmask 64512
        %v5551 = vsel %vm5550, %v5534, -inf
        %5552 = vmax.xlane.f32.xlu0 %v5551
        %v5553 = vpop.xlane.xlu0 %5552
        %v5554 = vsel %vm5550, %v5535, -inf
        %5555 = vmax.xlane.f32.xlu0 %v5554
        %v5556 = vpop.xlane.xlu0 %5555
        %v5557 = vsel %vm5550, %v5536, -inf
        %5558 = vmax.xlane.f32.xlu0 %v5557
        %v5559 = vpop.xlane.xlu0 %5558
        %v5560 = vsel %vm5550, %v5537, -inf
        %5561 = vmax.xlane.f32.xlu0 %v5560
        %v5562 = vpop.xlane.xlu0 %5561
        %v5563 = vsel %vm5550, %v5538, -inf
        %5564 = vmax.xlane.f32.xlu0 %v5563
        %v5565 = vpop.xlane.xlu0 %5564
        %v5566 = vsel %vm5550, %v5539, -inf
        %5567 = vmax.xlane.f32.xlu0 %v5566
        %v5568 = vpop.xlane.xlu0 %5567
        %v5569 = vsel %vm5550, %v5540, -inf
        %5570 = vmax.xlane.f32.xlu0 %v5569
        %v5571 = vpop.xlane.xlu0 %5570
        %v5572 = vsel %vm5550, %v5541, -inf
        %5573 = vmax.xlane.f32.xlu0 %v5572
        %v5574 = vpop.xlane.xlu0 %5573
        %v5575 = vsel %vm5550, %v5542, -inf
        %5576 = vmax.xlane.f32.xlu0 %v5575
        %v5577 = vpop.xlane.xlu0 %5576
        %v5578 = vsel %vm5550, %v5543, -inf
        %5579 = vmax.xlane.f32.xlu0 %v5578
        %v5580 = vpop.xlane.xlu0 %5579
        %v5581 = vsel %vm5550, %v5544, -inf
        %5582 = vmax.xlane.f32.xlu0 %v5581
        %v5583 = vpop.xlane.xlu0 %5582
        %v5584 = vsel %vm5550, %v5545, -inf
        %5585 = vmax.xlane.f32.xlu0 %v5584
        %v5586 = vpop.xlane.xlu0 %5585
        %v5587 = vsel %vm5550, %v5546, -inf
        %5588 = vmax.xlane.f32.xlu0 %v5587
        %v5589 = vpop.xlane.xlu0 %5588
        %v5590 = vsel %vm5550, %v5547, -inf
        %5591 = vmax.xlane.f32.xlu0 %v5590
        %v5592 = vpop.xlane.xlu0 %5591
        %v5593 = vsel %vm5550, %v5548, -inf
        %5594 = vmax.xlane.f32.xlu0 %v5593
        %v5595 = vpop.xlane.xlu0 %5594
        %v5596 = vsel %vm5550, %v5549, -inf
        %5597 = vmax.xlane.f32.xlu0 %v5596
        %v5598 = vpop.xlane.xlu0 %5597
        %v5599 = vsub.f32 %v5534, %v5553
        %v5600 = vsub.f32 %v5535, %v5556
        %v5601 = vsub.f32 %v5536, %v5559
        %v5602 = vsub.f32 %v5537, %v5562
        %v5603 = vsub.f32 %v5538, %v5565
        %v5604 = vsub.f32 %v5539, %v5568
        %v5605 = vsub.f32 %v5540, %v5571
        %v5606 = vsub.f32 %v5541, %v5574
        %v5607 = vsub.f32 %v5542, %v5577
        %v5608 = vsub.f32 %v5543, %v5580
        %v5609 = vsub.f32 %v5544, %v5583
        %v5610 = vsub.f32 %v5545, %v5586
        %v5611 = vsub.f32 %v5546, %v5589
        %v5612 = vsub.f32 %v5547, %v5592
        %v5613 = vsub.f32 %v5548, %v5595
        %v5614 = vsub.f32 %v5549, %v5598
        %v5615 = vmul.f32 %v5599, 1.442695
        %v5616 = vpow.pop %v5615
        %v5617 = vmul.f32 %v5600, 1.442695
        %v5618 = vpow.pop %v5617
        %v5619 = vmul.f32 %v5601, 1.442695
        %v5620 = vpow.pop %v5619
        %v5621 = vmul.f32 %v5602, 1.442695
        %v5622 = vpow.pop %v5621
        %v5623 = vmul.f32 %v5603, 1.442695
        %v5624 = vpow.pop %v5623
        %v5625 = vmul.f32 %v5604, 1.442695
        %v5626 = vpow.pop %v5625
        %v5627 = vmul.f32 %v5605, 1.442695
        %v5628 = vpow.pop %v5627
        %v5629 = vmul.f32 %v5606, 1.442695
        %v5630 = vpow.pop %v5629
        %v5631 = vmul.f32 %v5607, 1.442695
        %v5632 = vpow.pop %v5631
        %v5633 = vmul.f32 %v5608, 1.442695
        %v5634 = vpow.pop %v5633
        %v5635 = vmul.f32 %v5609, 1.442695
        %v5636 = vpow.pop %v5635
        %v5637 = vmul.f32 %v5610, 1.442695
        %v5638 = vpow.pop %v5637
        %v5639 = vmul.f32 %v5611, 1.442695
        %v5640 = vpow.pop %v5639
        %v5641 = vmul.f32 %v5612, 1.442695
        %v5642 = vpow.pop %v5641
        %v5643 = vmul.f32 %v5613, 1.442695
        %v5644 = vpow.pop %v5643
        %v5645 = vmul.f32 %v5614, 1.442695
        %v5646 = vpow.pop %v5645
        %v5647 = vsel %vm5550, %v5616, 0.0
        %5648 = vadd.xlane.f32.xlu0 %v5647
        %v5649 = vpop.xlane.xlu0 %5648
        %v5650 = vsel %vm5550, %v5618, 0.0
        %5651 = vadd.xlane.f32.xlu0 %v5650
        %v5652 = vpop.xlane.xlu0 %5651
        %v5653 = vsel %vm5550, %v5620, 0.0
        %5654 = vadd.xlane.f32.xlu0 %v5653
        %v5655 = vpop.xlane.xlu0 %5654
        %v5656 = vsel %vm5550, %v5622, 0.0
        %5657 = vadd.xlane.f32.xlu0 %v5656
        %v5658 = vpop.xlane.xlu0 %5657
        %v5659 = vsel %vm5550, %v5624, 0.0
        %5660 = vadd.xlane.f32.xlu0 %v5659
        %v5661 = vpop.xlane.xlu0 %5660
        %v5662 = vsel %vm5550, %v5626, 0.0
        %5663 = vadd.xlane.f32.xlu0 %v5662
        %v5664 = vpop.xlane.xlu0 %5663
        %v5665 = vsel %vm5550, %v5628, 0.0
        %5666 = vadd.xlane.f32.xlu0 %v5665
        %v5667 = vpop.xlane.xlu0 %5666
        %v5668 = vsel %vm5550, %v5630, 0.0
        %5669 = vadd.xlane.f32.xlu0 %v5668
        %v5670 = vpop.xlane.xlu0 %5669
        %v5671 = vsel %vm5550, %v5632, 0.0
        %5672 = vadd.xlane.f32.xlu0 %v5671
        %v5673 = vpop.xlane.xlu0 %5672
        %v5674 = vsel %vm5550, %v5634, 0.0
        %5675 = vadd.xlane.f32.xlu0 %v5674
        %v5676 = vpop.xlane.xlu0 %5675
        %v5677 = vsel %vm5550, %v5636, 0.0
        %5678 = vadd.xlane.f32.xlu0 %v5677
        %v5679 = vpop.xlane.xlu0 %5678
        %v5680 = vsel %vm5550, %v5638, 0.0
        %5681 = vadd.xlane.f32.xlu0 %v5680
        %v5682 = vpop.xlane.xlu0 %5681
        %v5683 = vsel %vm5550, %v5640, 0.0
        %5684 = vadd.xlane.f32.xlu0 %v5683
        %v5685 = vpop.xlane.xlu0 %5684
        %v5686 = vsel %vm5550, %v5642, 0.0
        %5687 = vadd.xlane.f32.xlu0 %v5686
        %v5688 = vpop.xlane.xlu0 %5687
        %v5689 = vsel %vm5550, %v5644, 0.0
        %5690 = vadd.xlane.f32.xlu0 %v5689
        %v5691 = vpop.xlane.xlu0 %5690
        %v5692 = vsel %vm5550, %v5646, 0.0
        %5693 = vadd.xlane.f32.xlu0 %v5692
        %v5694 = vpop.xlane.xlu0 %5693
        %v5695 = vrcp.pop %v5649
        %v5696 = vrcp.pop %v5652
        %v5697 = vrcp.pop %v5655
        %v5698 = vrcp.pop %v5658
        %v5699 = vrcp.pop %v5661
        %v5700 = vrcp.pop %v5664
        %v5701 = vrcp.pop %v5667
        %v5702 = vrcp.pop %v5670
        %v5703 = vrcp.pop %v5673
        %v5704 = vrcp.pop %v5676
        %v5705 = vrcp.pop %v5679
        %v5706 = vrcp.pop %v5682
        %v5707 = vrcp.pop %v5685
        %v5708 = vrcp.pop %v5688
        %v5709 = vrcp.pop %v5691
        %v5710 = vrcp.pop %v5694
        %v5711 = vmul.f32 %v5616, %v5695
        %v5712 = vmul.f32 %v5618, %v5696
        %v5713 = vmul.f32 %v5620, %v5697
        %v5714 = vmul.f32 %v5622, %v5698
        %v5715 = vmul.f32 %v5624, %v5699
        %v5716 = vmul.f32 %v5626, %v5700
        %v5717 = vmul.f32 %v5628, %v5701
        %v5718 = vmul.f32 %v5630, %v5702
        %v5719 = vmul.f32 %v5632, %v5703
        %v5720 = vmul.f32 %v5634, %v5704
        %v5721 = vmul.f32 %v5636, %v5705
        %v5722 = vmul.f32 %v5638, %v5706
        %v5723 = vmul.f32 %v5640, %v5707
        %v5724 = vmul.f32 %v5642, %v5708
        %v5725 = vmul.f32 %v5644, %v5709
        %v5726 = vmul.f32 %v5646, %v5710
        %v5728 = vsel %vm5550, %v5711, 0
        %5730 = vmatprep.subr.mxu0 0.0
        %5731 = vmatpush1.msra.mxu0 %v4175
        %5732 = vmatprep.subr.mxu0 0.0
        %5733 = vmatpush1.msra.mxu0 0.0
        %5734 = vmatprep.subr.mxu0 0.0
        %5735 = vmatpush1.msra.mxu0 0.0
        %5736 = vmatprep.subr.mxu0 0.0
        %5737 = vmatpush1.msra.mxu0 0.0
        %5738 = vmatprep.subr.mxu0 0.0
        %5739 = vmatpush1.msra.mxu0 0.0
        %5740 = vmatprep.subr.mxu0 0.0
        %5741 = vmatpush1.msra.mxu0 0.0
        %5742 = vmatprep.subr.mxu0 0.0
        %5743 = vmatpush1.msra.mxu0 0.0
        %5744 = vmatprep.subr.mxu0 0.0
        %5745 = vmatpush1.msra.mxu0 0.0
        %5746 = vmatprep.subr.mxu0 0.0
        %5747 = vmatpush1.msra.mxu0 0.0
        %5748 = vmatprep.subr.mxu0 0.0
        %5749 = vmatpush1.msra.mxu0 0.0
        %5750 = vmatprep.subr.mxu0 0.0
        %5751 = vmatpush1.msra.mxu0 0.0
        %5752 = vmatprep.subr.mxu0 0.0
        %5753 = vmatpush1.msra.mxu0 0.0
        %5754 = vmatprep.subr.mxu0 0.0
        %5755 = vmatpush1.msra.mxu0 0.0
        %5756 = vmatprep.subr.mxu0 0.0
        %5757 = vmatpush1.msra.mxu0 0.0
        %5758 = vmatprep.subr.mxu0 0.0
        %5759 = vmatpush1.msra.mxu0 0.0
        %5760 = vmatprep.subr.mxu0 0.0
        %5761 = vmatpush1.msra.mxu0 0.0
        %5762 = vmatprep.subr.mxu0 0.0
        %5763 = vmatpush1.msra.mxu0 0.0
        %5764 = vmatprep.subr.mxu0 0.0
        %5765 = vmatpush1.msra.mxu0 0.0
        %5766 = vmatprep.subr.mxu0 0.0
        %5767 = vmatpush1.msra.mxu0 0.0
        %5768 = vmatprep.subr.mxu0 0.0
        %5769 = vmatpush1.msra.mxu0 0.0
        %5770 = vmatprep.subr.mxu0 0.0
        %5771 = vmatpush1.msra.mxu0 0.0
        %5772 = vmatprep.subr.mxu0 0.0
        %5773 = vmatpush1.msra.mxu0 0.0
        %5774 = vmatprep.subr.mxu0 0.0
        %5775 = vmatpush1.msra.mxu0 0.0
        %5776 = vmatprep.subr.mxu0 0.0
        %5777 = vmatpush1.msra.mxu0 0.0
        %5778 = vmatprep.subr.mxu0 0.0
        %5779 = vmatpush1.msra.mxu0 0.0
        %5780 = vmatprep.subr.mxu0 0.0
        %5781 = vmatpush1.msra.mxu0 0.0
        %5782 = vmatprep.subr.mxu0 0.0
        %5783 = vmatpush1.msra.mxu0 0.0
        %5784 = vmatprep.subr.mxu0 0.0
        %5785 = vmatpush1.msra.mxu0 0.0
        %5786 = vmatprep.subr.mxu0 0.0
        %5787 = vmatpush1.msra.mxu0 0.0
        %5788 = vmatprep.subr.mxu0 0.0
        %5789 = vmatpush1.msra.mxu0 0.0
        %5790 = vmatprep.subr.mxu0 0.0
        %5791 = vmatpush1.msra.mxu0 0.0
        %5792 = vmatprep.subr.mxu0 0.0
        %5793 = vmatpush1.msra.mxu0 0.0
        %5794 = vmatprep.mubr.f32.mxu0 0.0
        %5795 = vmatmul.mubr.f32.gmra.mrb[0].mxu0 %v5728
        %v5796 = vpop.f32.mrb[0].mxu0
        %v5797 = vadd.f32 0.0, %v5796
        %v5798 = vpop.f32.mrb[0].mxu0
        %5799 = vdwg.mxu0
        %v5801 = vsel %vm5550, %v5712, 0
        %5803 = vmatprep.subr.mxu0 0.0
        %5804 = vmatpush1.msra.mxu0 %v4179
        %5805 = vmatprep.subr.mxu0 0.0
        %5806 = vmatpush1.msra.mxu0 0.0
        %5807 = vmatprep.subr.mxu0 0.0
        %5808 = vmatpush1.msra.mxu0 0.0
        %5809 = vmatprep.subr.mxu0 0.0
        %5810 = vmatpush1.msra.mxu0 0.0
        %5811 = vmatprep.subr.mxu0 0.0
        %5812 = vmatpush1.msra.mxu0 0.0
        %5813 = vmatprep.subr.mxu0 0.0
        %5814 = vmatpush1.msra.mxu0 0.0
        %5815 = vmatprep.subr.mxu0 0.0
        %5816 = vmatpush1.msra.mxu0 0.0
        %5817 = vmatprep.subr.mxu0 0.0
        %5818 = vmatpush1.msra.mxu0 0.0
        %5819 = vmatprep.subr.mxu0 0.0
        %5820 = vmatpush1.msra.mxu0 0.0
        %5821 = vmatprep.subr.mxu0 0.0
        %5822 = vmatpush1.msra.mxu0 0.0
        %5823 = vmatprep.subr.mxu0 0.0
        %5824 = vmatpush1.msra.mxu0 0.0
        %5825 = vmatprep.subr.mxu0 0.0
        %5826 = vmatpush1.msra.mxu0 0.0
        %5827 = vmatprep.subr.mxu0 0.0
        %5828 = vmatpush1.msra.mxu0 0.0
        %5829 = vmatprep.subr.mxu0 0.0
        %5830 = vmatpush1.msra.mxu0 0.0
        %5831 = vmatprep.subr.mxu0 0.0
        %5832 = vmatpush1.msra.mxu0 0.0
        %5833 = vmatprep.subr.mxu0 0.0
        %5834 = vmatpush1.msra.mxu0 0.0
        %5835 = vmatprep.subr.mxu0 0.0
        %5836 = vmatpush1.msra.mxu0 0.0
        %5837 = vmatprep.subr.mxu0 0.0
        %5838 = vmatpush1.msra.mxu0 0.0
        %5839 = vmatprep.subr.mxu0 0.0
        %5840 = vmatpush1.msra.mxu0 0.0
        %5841 = vmatprep.subr.mxu0 0.0
        %5842 = vmatpush1.msra.mxu0 0.0
        %5843 = vmatprep.subr.mxu0 0.0
        %5844 = vmatpush1.msra.mxu0 0.0
        %5845 = vmatprep.subr.mxu0 0.0
        %5846 = vmatpush1.msra.mxu0 0.0
        %5847 = vmatprep.subr.mxu0 0.0
        %5848 = vmatpush1.msra.mxu0 0.0
        %5849 = vmatprep.subr.mxu0 0.0
        %5850 = vmatpush1.msra.mxu0 0.0
        %5851 = vmatprep.subr.mxu0 0.0
        %5852 = vmatpush1.msra.mxu0 0.0
        %5853 = vmatprep.subr.mxu0 0.0
        %5854 = vmatpush1.msra.mxu0 0.0
        %5855 = vmatprep.subr.mxu0 0.0
        %5856 = vmatpush1.msra.mxu0 0.0
        %5857 = vmatprep.subr.mxu0 0.0
        %5858 = vmatpush1.msra.mxu0 0.0
        %5859 = vmatprep.subr.mxu0 0.0
        %5860 = vmatpush1.msra.mxu0 0.0
        %5861 = vmatprep.subr.mxu0 0.0
        %5862 = vmatpush1.msra.mxu0 0.0
        %5863 = vmatprep.subr.mxu0 0.0
        %5864 = vmatpush1.msra.mxu0 0.0
        %5865 = vmatprep.subr.mxu0 0.0
        %5866 = vmatpush1.msra.mxu0 0.0
        %5867 = vmatprep.mubr.f32.mxu0 0.0
        %5868 = vmatmul.mubr.f32.gmra.mrb[0].mxu0 %v5801
        %v5869 = vpop.f32.mrb[0].mxu0
        %v5870 = vadd.f32 0.0, %v5869
        %v5871 = vpop.f32.mrb[0].mxu0
        %5872 = vdwg.mxu0
        %v5874 = vsel %vm5550, %v5713, 0
        %5876 = vmatprep.subr.mxu0 0.0
        %5877 = vmatpush1.msra.mxu0 %v4320
        %5878 = vmatprep.subr.mxu0 0.0
        %5879 = vmatpush1.msra.mxu0 0.0
        %5880 = vmatprep.subr.mxu0 0.0
        %5881 = vmatpush1.msra.mxu0 0.0
        %5882 = vmatprep.subr.mxu0 0.0
        %5883 = vmatpush1.msra.mxu0 0.0
        %5884 = vmatprep.subr.mxu0 0.0
        %5885 = vmatpush1.msra.mxu0 0.0
        %5886 = vmatprep.subr.mxu0 0.0
        %5887 = vmatpush1.msra.mxu0 0.0
        %5888 = vmatprep.subr.mxu0 0.0
        %5889 = vmatpush1.msra.mxu0 0.0
        %5890 = vmatprep.subr.mxu0 0.0
        %5891 = vmatpush1.msra.mxu0 0.0
        %5892 = vmatprep.subr.mxu0 0.0
        %5893 = vmatpush1.msra.mxu0 0.0
        %5894 = vmatprep.subr.mxu0 0.0
        %5895 = vmatpush1.msra.mxu0 0.0
        %5896 = vmatprep.subr.mxu0 0.0
        %5897 = vmatpush1.msra.mxu0 0.0
        %5898 = vmatprep.subr.mxu0 0.0
        %5899 = vmatpush1.msra.mxu0 0.0
        %5900 = vmatprep.subr.mxu0 0.0
        %5901 = vmatpush1.msra.mxu0 0.0
        %5902 = vmatprep.subr.mxu0 0.0
        %5903 = vmatpush1.msra.mxu0 0.0
        %5904 = vmatprep.subr.mxu0 0.0
        %5905 = vmatpush1.msra.mxu0 0.0
        %5906 = vmatprep.subr.mxu0 0.0
        %5907 = vmatpush1.msra.mxu0 0.0
        %5908 = vmatprep.subr.mxu0 0.0
        %5909 = vmatpush1.msra.mxu0 0.0
        %5910 = vmatprep.subr.mxu0 0.0
        %5911 = vmatpush1.msra.mxu0 0.0
        %5912 = vmatprep.subr.mxu0 0.0
        %5913 = vmatpush1.msra.mxu0 0.0
        %5914 = vmatprep.subr.mxu0 0.0
        %5915 = vmatpush1.msra.mxu0 0.0
        %5916 = vmatprep.subr.mxu0 0.0
        %5917 = vmatpush1.msra.mxu0 0.0
        %5918 = vmatprep.subr.mxu0 0.0
        %5919 = vmatpush1.msra.mxu0 0.0
        %5920 = vmatprep.subr.mxu0 0.0
        %5921 = vmatpush1.msra.mxu0 0.0
        %5922 = vmatprep.subr.mxu0 0.0
        %5923 = vmatpush1.msra.mxu0 0.0
        %5924 = vmatprep.subr.mxu0 0.0
        %5925 = vmatpush1.msra.mxu0 0.0
        %5926 = vmatprep.subr.mxu0 0.0
        %5927 = vmatpush1.msra.mxu0 0.0
        %5928 = vmatprep.subr.mxu0 0.0
        %5929 = vmatpush1.msra.mxu0 0.0
        %5930 = vmatprep.subr.mxu0 0.0
        %5931 = vmatpush1.msra.mxu0 0.0
        %5932 = vmatprep.subr.mxu0 0.0
        %5933 = vmatpush1.msra.mxu0 0.0
        %5934 = vmatprep.subr.mxu0 0.0
        %5935 = vmatpush1.msra.mxu0 0.0
        %5936 = vmatprep.subr.mxu0 0.0
        %5937 = vmatpush1.msra.mxu0 0.0
        %5938 = vmatprep.subr.mxu0 0.0
        %5939 = vmatpush1.msra.mxu0 0.0
        %5940 = vmatprep.mubr.f32.mxu0 0.0
        %5941 = vmatmul.mubr.f32.gmra.mrb[0].mxu0 %v5874
        %v5942 = vpop.f32.mrb[0].mxu0
        %v5943 = vadd.f32 0.0, %v5942
        %v5944 = vpop.f32.mrb[0].mxu0
        %5945 = vdwg.mxu0
        %v5947 = vsel %vm5550, %v5714, 0
        %5949 = vmatprep.subr.mxu0 0.0
        %5950 = vmatpush1.msra.mxu0 %v4322
        %5951 = vmatprep.subr.mxu0 0.0
        %5952 = vmatpush1.msra.mxu0 0.0
        %5953 = vmatprep.subr.mxu0 0.0
        %5954 = vmatpush1.msra.mxu0 0.0
        %5955 = vmatprep.subr.mxu0 0.0
        %5956 = vmatpush1.msra.mxu0 0.0
        %5957 = vmatprep.subr.mxu0 0.0
        %5958 = vmatpush1.msra.mxu0 0.0
        %5959 = vmatprep.subr.mxu0 0.0
        %5960 = vmatpush1.msra.mxu0 0.0
        %5961 = vmatprep.subr.mxu0 0.0
        %5962 = vmatpush1.msra.mxu0 0.0
        %5963 = vmatprep.subr.mxu0 0.0
        %5964 = vmatpush1.msra.mxu0 0.0
        %5965 = vmatprep.subr.mxu0 0.0
        %5966 = vmatpush1.msra.mxu0 0.0
        %5967 = vmatprep.subr.mxu0 0.0
        %5968 = vmatpush1.msra.mxu0 0.0
        %5969 = vmatprep.subr.mxu0 0.0
        %5970 = vmatpush1.msra.mxu0 0.0
        %5971 = vmatprep.subr.mxu0 0.0
        %5972 = vmatpush1.msra.mxu0 0.0
        %5973 = vmatprep.subr.mxu0 0.0
        %5974 = vmatpush1.msra.mxu0 0.0
        %5975 = vmatprep.subr.mxu0 0.0
        %5976 = vmatpush1.msra.mxu0 0.0
        %5977 = vmatprep.subr.mxu0 0.0
        %5978 = vmatpush1.msra.mxu0 0.0
        %5979 = vmatprep.subr.mxu0 0.0
        %5980 = vmatpush1.msra.mxu0 0.0
        %5981 = vmatprep.subr.mxu0 0.0
        %5982 = vmatpush1.msra.mxu0 0.0
        %5983 = vmatprep.subr.mxu0 0.0
        %5984 = vmatpush1.msra.mxu0 0.0
        %5985 = vmatprep.subr.mxu0 0.0
        %5986 = vmatpush1.msra.mxu0 0.0
        %5987 = vmatprep.subr.mxu0 0.0
        %5988 = vmatpush1.msra.mxu0 0.0
        %5989 = vmatprep.subr.mxu0 0.0
        %5990 = vmatpush1.msra.mxu0 0.0
        %5991 = vmatprep.subr.mxu0 0.0
        %5992 = vmatpush1.msra.mxu0 0.0
        %5993 = vmatprep.subr.mxu0 0.0
        %5994 = vmatpush1.msra.mxu0 0.0
        %5995 = vmatprep.subr.mxu0 0.0
        %5996 = vmatpush1.msra.mxu0 0.0
        %5997 = vmatprep.subr.mxu0 0.0
        %5998 = vmatpush1.msra.mxu0 0.0
        %5999 = vmatprep.subr.mxu0 0.0
        %6000 = vmatpush1.msra.mxu0 0.0
        %6001 = vmatprep.subr.mxu0 0.0
        %6002 = vmatpush1.msra.mxu0 0.0
        %6003 = vmatprep.subr.mxu0 0.0
        %6004 = vmatpush1.msra.mxu0 0.0
        %6005 = vmatprep.subr.mxu0 0.0
        %6006 = vmatpush1.msra.mxu0 0.0
        %6007 = vmatprep.subr.mxu0 0.0
        %6008 = vmatpush1.msra.mxu0 0.0
        %6009 = vmatprep.subr.mxu0 0.0
        %6010 = vmatpush1.msra.mxu0 0.0
        %6011 = vmatprep.subr.mxu0 0.0
        %6012 = vmatpush1.msra.mxu0 0.0
        %6013 = vmatprep.mubr.f32.mxu0 0.0
        %6014 = vmatmul.mubr.f32.gmra.mrb[0].mxu0 %v5947
        %v6015 = vpop.f32.mrb[0].mxu0
        %v6016 = vadd.f32 0.0, %v6015
        %v6017 = vpop.f32.mrb[0].mxu0
        %6018 = vdwg.mxu0
        %v6020 = vsel %vm5550, %v5715, 0
        %6022 = vmatprep.subr.mxu0 0.0
        %6023 = vmatpush1.msra.mxu0 %v4177
        %6024 = vmatprep.subr.mxu0 0.0
        %6025 = vmatpush1.msra.mxu0 0.0
        %6026 = vmatprep.subr.mxu0 0.0
        %6027 = vmatpush1.msra.mxu0 0.0
        %6028 = vmatprep.subr.mxu0 0.0
        %6029 = vmatpush1.msra.mxu0 0.0
        %6030 = vmatprep.subr.mxu0 0.0
        %6031 = vmatpush1.msra.mxu0 0.0
        %6032 = vmatprep.subr.mxu0 0.0
        %6033 = vmatpush1.msra.mxu0 0.0
        %6034 = vmatprep.subr.mxu0 0.0
        %6035 = vmatpush1.msra.mxu0 0.0
        %6036 = vmatprep.subr.mxu0 0.0
        %6037 = vmatpush1.msra.mxu0 0.0
        %6038 = vmatprep.subr.mxu0 0.0
        %6039 = vmatpush1.msra.mxu0 0.0
        %6040 = vmatprep.subr.mxu0 0.0
        %6041 = vmatpush1.msra.mxu0 0.0
        %6042 = vmatprep.subr.mxu0 0.0
        %6043 = vmatpush1.msra.mxu0 0.0
        %6044 = vmatprep.subr.mxu0 0.0
        %6045 = vmatpush1.msra.mxu0 0.0
        %6046 = vmatprep.subr.mxu0 0.0
        %6047 = vmatpush1.msra.mxu0 0.0
        %6048 = vmatprep.subr.mxu0 0.0
        %6049 = vmatpush1.msra.mxu0 0.0
        %6050 = vmatprep.subr.mxu0 0.0
        %6051 = vmatpush1.msra.mxu0 0.0
        %6052 = vmatprep.subr.mxu0 0.0
        %6053 = vmatpush1.msra.mxu0 0.0
        %6054 = vmatprep.subr.mxu0 0.0
        %6055 = vmatpush1.msra.mxu0 0.0
        %6056 = vmatprep.subr.mxu0 0.0
        %6057 = vmatpush1.msra.mxu0 0.0
        %6058 = vmatprep.subr.mxu0 0.0
        %6059 = vmatpush1.msra.mxu0 0.0
        %6060 = vmatprep.subr.mxu0 0.0
        %6061 = vmatpush1.msra.mxu0 0.0
        %6062 = vmatprep.subr.mxu0 0.0
        %6063 = vmatpush1.msra.mxu0 0.0
        %6064 = vmatprep.subr.mxu0 0.0
        %6065 = vmatpush1.msra.mxu0 0.0
        %6066 = vmatprep.subr.mxu0 0.0
        %6067 = vmatpush1.msra.mxu0 0.0
        %6068 = vmatprep.subr.mxu0 0.0
        %6069 = vmatpush1.msra.mxu0 0.0
        %6070 = vmatprep.subr.mxu0 0.0
        %6071 = vmatpush1.msra.mxu0 0.0
        %6072 = vmatprep.subr.mxu0 0.0
        %6073 = vmatpush1.msra.mxu0 0.0
        %6074 = vmatprep.subr.mxu0 0.0
        %6075 = vmatpush1.msra.mxu0 0.0
        %6076 = vmatprep.subr.mxu0 0.0
        %6077 = vmatpush1.msra.mxu0 0.0
        %6078 = vmatprep.subr.mxu0 0.0
        %6079 = vmatpush1.msra.mxu0 0.0
        %6080 = vmatprep.subr.mxu0 0.0
        %6081 = vmatpush1.msra.mxu0 0.0
        %6082 = vmatprep.subr.mxu0 0.0
        %6083 = vmatpush1.msra.mxu0 0.0
        %6084 = vmatprep.subr.mxu0 0.0
        %6085 = vmatpush1.msra.mxu0 0.0
        %6086 = vmatprep.mubr.f32.mxu0 0.0
        %6087 = vmatmul.mubr.f32.gmra.mrb[0].mxu0 %v6020
        %v6088 = vpop.f32.mrb[0].mxu0
        %v6089 = vadd.f32 0.0, %v6088
        %v6090 = vpop.f32.mrb[0].mxu0
        %6091 = vdwg.mxu0
        %v6093 = vsel %vm5550, %v5716, 0
        %6095 = vmatprep.subr.mxu0 0.0
        %6096 = vmatpush1.msra.mxu0 %v4181
        %6097 = vmatprep.subr.mxu0 0.0
        %6098 = vmatpush1.msra.mxu0 0.0
        %6099 = vmatprep.subr.mxu0 0.0
        %6100 = vmatpush1.msra.mxu0 0.0
        %6101 = vmatprep.subr.mxu0 0.0
        %6102 = vmatpush1.msra.mxu0 0.0
        %6103 = vmatprep.subr.mxu0 0.0
        %6104 = vmatpush1.msra.mxu0 0.0
        %6105 = vmatprep.subr.mxu0 0.0
        %6106 = vmatpush1.msra.mxu0 0.0
        %6107 = vmatprep.subr.mxu0 0.0
        %6108 = vmatpush1.msra.mxu0 0.0
        %6109 = vmatprep.subr.mxu0 0.0
        %6110 = vmatpush1.msra.mxu0 0.0
        %6111 = vmatprep.subr.mxu0 0.0
        %6112 = vmatpush1.msra.mxu0 0.0
        %6113 = vmatprep.subr.mxu0 0.0
        %6114 = vmatpush1.msra.mxu0 0.0
        %6115 = vmatprep.subr.mxu0 0.0
        %6116 = vmatpush1.msra.mxu0 0.0
        %6117 = vmatprep.subr.mxu0 0.0
        %6118 = vmatpush1.msra.mxu0 0.0
        %6119 = vmatprep.subr.mxu0 0.0
        %6120 = vmatpush1.msra.mxu0 0.0
        %6121 = vmatprep.subr.mxu0 0.0
        %6122 = vmatpush1.msra.mxu0 0.0
        %6123 = vmatprep.subr.mxu0 0.0
        %6124 = vmatpush1.msra.mxu0 0.0
        %6125 = vmatprep.subr.mxu0 0.0
        %6126 = vmatpush1.msra.mxu0 0.0
        %6127 = vmatprep.subr.mxu0 0.0
        %6128 = vmatpush1.msra.mxu0 0.0
        %6129 = vmatprep.subr.mxu0 0.0
        %6130 = vmatpush1.msra.mxu0 0.0
        %6131 = vmatprep.subr.mxu0 0.0
        %6132 = vmatpush1.msra.mxu0 0.0
        %6133 = vmatprep.subr.mxu0 0.0
        %6134 = vmatpush1.msra.mxu0 0.0
        %6135 = vmatprep.subr.mxu0 0.0
        %6136 = vmatpush1.msra.mxu0 0.0
        %6137 = vmatprep.subr.mxu0 0.0
        %6138 = vmatpush1.msra.mxu0 0.0
        %6139 = vmatprep.subr.mxu0 0.0
        %6140 = vmatpush1.msra.mxu0 0.0
        %6141 = vmatprep.subr.mxu0 0.0
        %6142 = vmatpush1.msra.mxu0 0.0
        %6143 = vmatprep.subr.mxu0 0.0
        %6144 = vmatpush1.msra.mxu0 0.0
        %6145 = vmatprep.subr.mxu0 0.0
        %6146 = vmatpush1.msra.mxu0 0.0
        %6147 = vmatprep.subr.mxu0 0.0
        %6148 = vmatpush1.msra.mxu0 0.0
        %6149 = vmatprep.subr.mxu0 0.0
        %6150 = vmatpush1.msra.mxu0 0.0
        %6151 = vmatprep.subr.mxu0 0.0
        %6152 = vmatpush1.msra.mxu0 0.0
        %6153 = vmatprep.subr.mxu0 0.0
        %6154 = vmatpush1.msra.mxu0 0.0
        %6155 = vmatprep.subr.mxu0 0.0
        %6156 = vmatpush1.msra.mxu0 0.0
        %6157 = vmatprep.subr.mxu0 0.0
        %6158 = vmatpush1.msra.mxu0 0.0
        %6159 = vmatprep.mubr.f32.mxu0 0.0
        %6160 = vmatmul.mubr.f32.gmra.mrb[0].mxu0 %v6093
        %v6161 = vpop.f32.mrb[0].mxu0
        %v6162 = vadd.f32 0.0, %v6161
        %v6163 = vpop.f32.mrb[0].mxu0
        %6164 = vdwg.mxu0
        %v6166 = vsel %vm5550, %v5717, 0
        %6168 = vmatprep.subr.mxu0 0.0
        %6169 = vmatpush1.msra.mxu0 %v4328
        %6170 = vmatprep.subr.mxu0 0.0
        %6171 = vmatpush1.msra.mxu0 0.0
        %6172 = vmatprep.subr.mxu0 0.0
        %6173 = vmatpush1.msra.mxu0 0.0
        %6174 = vmatprep.subr.mxu0 0.0
        %6175 = vmatpush1.msra.mxu0 0.0
        %6176 = vmatprep.subr.mxu0 0.0
        %6177 = vmatpush1.msra.mxu0 0.0
        %6178 = vmatprep.subr.mxu0 0.0
        %6179 = vmatpush1.msra.mxu0 0.0
        %6180 = vmatprep.subr.mxu0 0.0
        %6181 = vmatpush1.msra.mxu0 0.0
        %6182 = vmatprep.subr.mxu0 0.0
        %6183 = vmatpush1.msra.mxu0 0.0
        %6184 = vmatprep.subr.mxu0 0.0
        %6185 = vmatpush1.msra.mxu0 0.0
        %6186 = vmatprep.subr.mxu0 0.0
        %6187 = vmatpush1.msra.mxu0 0.0
        %6188 = vmatprep.subr.mxu0 0.0
        %6189 = vmatpush1.msra.mxu0 0.0
        %6190 = vmatprep.subr.mxu0 0.0
        %6191 = vmatpush1.msra.mxu0 0.0
        %6192 = vmatprep.subr.mxu0 0.0
        %6193 = vmatpush1.msra.mxu0 0.0
        %6194 = vmatprep.subr.mxu0 0.0
        %6195 = vmatpush1.msra.mxu0 0.0
        %6196 = vmatprep.subr.mxu0 0.0
        %6197 = vmatpush1.msra.mxu0 0.0
        %6198 = vmatprep.subr.mxu0 0.0
        %6199 = vmatpush1.msra.mxu0 0.0
        %6200 = vmatprep.subr.mxu0 0.0
        %6201 = vmatpush1.msra.mxu0 0.0
        %6202 = vmatprep.subr.mxu0 0.0
        %6203 = vmatpush1.msra.mxu0 0.0
        %6204 = vmatprep.subr.mxu0 0.0
        %6205 = vmatpush1.msra.mxu0 0.0
        %6206 = vmatprep.subr.mxu0 0.0
        %6207 = vmatpush1.msra.mxu0 0.0
        %6208 = vmatprep.subr.mxu0 0.0
        %6209 = vmatpush1.msra.mxu0 0.0
        %6210 = vmatprep.subr.mxu0 0.0
        %6211 = vmatpush1.msra.mxu0 0.0
        %6212 = vmatprep.subr.mxu0 0.0
        %6213 = vmatpush1.msra.mxu0 0.0
        %6214 = vmatprep.subr.mxu0 0.0
        %6215 = vmatpush1.msra.mxu0 0.0
        %6216 = vmatprep.subr.mxu0 0.0
        %6217 = vmatpush1.msra.mxu0 0.0
        %6218 = vmatprep.subr.mxu0 0.0
        %6219 = vmatpush1.msra.mxu0 0.0
        %6220 = vmatprep.subr.mxu0 0.0
        %6221 = vmatpush1.msra.mxu0 0.0
        %6222 = vmatprep.subr.mxu0 0.0
        %6223 = vmatpush1.msra.mxu0 0.0
        %6224 = vmatprep.subr.mxu0 0.0
        %6225 = vmatpush1.msra.mxu0 0.0
        %6226 = vmatprep.subr.mxu0 0.0
        %6227 = vmatpush1.msra.mxu0 0.0
        %6228 = vmatprep.subr.mxu0 0.0
        %6229 = vmatpush1.msra.mxu0 0.0
        %6230 = vmatprep.subr.mxu0 0.0
        %6231 = vmatpush1.msra.mxu0 0.0
        %6232 = vmatprep.mubr.f32.mxu0 0.0
        %6233 = vmatmul.mubr.f32.gmra.mrb[0].mxu0 %v6166
        %v6234 = vpop.f32.mrb[0].mxu0
        %v6235 = vadd.f32 0.0, %v6234
        %v6236 = vpop.f32.mrb[0].mxu0
        %6237 = vdwg.mxu0
        %v6239 = vsel %vm5550, %v5718, 0
        %6241 = vmatprep.subr.mxu0 0.0
        %6242 = vmatpush1.msra.mxu0 %v4330
        %6243 = vmatprep.subr.mxu0 0.0
        %6244 = vmatpush1.msra.mxu0 0.0
        %6245 = vmatprep.subr.mxu0 0.0
        %6246 = vmatpush1.msra.mxu0 0.0
        %6247 = vmatprep.subr.mxu0 0.0
        %6248 = vmatpush1.msra.mxu0 0.0
        %6249 = vmatprep.subr.mxu0 0.0
        %6250 = vmatpush1.msra.mxu0 0.0
        %6251 = vmatprep.subr.mxu0 0.0
        %6252 = vmatpush1.msra.mxu0 0.0
        %6253 = vmatprep.subr.mxu0 0.0
        %6254 = vmatpush1.msra.mxu0 0.0
        %6255 = vmatprep.subr.mxu0 0.0
        %6256 = vmatpush1.msra.mxu0 0.0
        %6257 = vmatprep.subr.mxu0 0.0
        %6258 = vmatpush1.msra.mxu0 0.0
        %6259 = vmatprep.subr.mxu0 0.0
        %6260 = vmatpush1.msra.mxu0 0.0
        %6261 = vmatprep.subr.mxu0 0.0
        %6262 = vmatpush1.msra.mxu0 0.0
        %6263 = vmatprep.subr.mxu0 0.0
        %6264 = vmatpush1.msra.mxu0 0.0
        %6265 = vmatprep.subr.mxu0 0.0
        %6266 = vmatpush1.msra.mxu0 0.0
        %6267 = vmatprep.subr.mxu0 0.0
        %6268 = vmatpush1.msra.mxu0 0.0
        %6269 = vmatprep.subr.mxu0 0.0
        %6270 = vmatpush1.msra.mxu0 0.0
        %6271 = vmatprep.subr.mxu0 0.0
        %6272 = vmatpush1.msra.mxu0 0.0
        %6273 = vmatprep.subr.mxu0 0.0
        %6274 = vmatpush1.msra.mxu0 0.0
        %6275 = vmatprep.subr.mxu0 0.0
        %6276 = vmatpush1.msra.mxu0 0.0
        %6277 = vmatprep.subr.mxu0 0.0
        %6278 = vmatpush1.msra.mxu0 0.0
        %6279 = vmatprep.subr.mxu0 0.0
        %6280 = vmatpush1.msra.mxu0 0.0
        %6281 = vmatprep.subr.mxu0 0.0
        %6282 = vmatpush1.msra.mxu0 0.0
        %6283 = vmatprep.subr.mxu0 0.0
        %6284 = vmatpush1.msra.mxu0 0.0
        %6285 = vmatprep.subr.mxu0 0.0
        %6286 = vmatpush1.msra.mxu0 0.0
        %6287 = vmatprep.subr.mxu0 0.0
        %6288 = vmatpush1.msra.mxu0 0.0
        %6289 = vmatprep.subr.mxu0 0.0
        %6290 = vmatpush1.msra.mxu0 0.0
        %6291 = vmatprep.subr.mxu0 0.0
        %6292 = vmatpush1.msra.mxu0 0.0
        %6293 = vmatprep.subr.mxu0 0.0
        %6294 = vmatpush1.msra.mxu0 0.0
        %6295 = vmatprep.subr.mxu0 0.0
        %6296 = vmatpush1.msra.mxu0 0.0
        %6297 = vmatprep.subr.mxu0 0.0
        %6298 = vmatpush1.msra.mxu0 0.0
        %6299 = vmatprep.subr.mxu0 0.0
        %6300 = vmatpush1.msra.mxu0 0.0
        %6301 = vmatprep.subr.mxu0 0.0
        %6302 = vmatpush1.msra.mxu0 0.0
        %6303 = vmatprep.subr.mxu0 0.0
        %6304 = vmatpush1.msra.mxu0 0.0
        %6305 = vmatprep.mubr.f32.mxu0 0.0
        %6306 = vmatmul.mubr.f32.gmra.mrb[0].mxu0 %v6239
        %v6307 = vpop.f32.mrb[0].mxu0
        %v6308 = vadd.f32 0.0, %v6307
        %v6309 = vpop.f32.mrb[0].mxu0
        %6310 = vdwg.mxu0
        %v6312 = vsel %vm5550, %v5719, 0
        %6314 = vmatprep.subr.mxu0 0.0
        %6315 = vmatpush1.msra.mxu0 %v4261
        %6316 = vmatprep.subr.mxu0 0.0
        %6317 = vmatpush1.msra.mxu0 0.0
        %6318 = vmatprep.subr.mxu0 0.0
        %6319 = vmatpush1.msra.mxu0 0.0
        %6320 = vmatprep.subr.mxu0 0.0
        %6321 = vmatpush1.msra.mxu0 0.0
        %6322 = vmatprep.subr.mxu0 0.0
        %6323 = vmatpush1.msra.mxu0 0.0
        %6324 = vmatprep.subr.mxu0 0.0
        %6325 = vmatpush1.msra.mxu0 0.0
        %6326 = vmatprep.subr.mxu0 0.0
        %6327 = vmatpush1.msra.mxu0 0.0
        %6328 = vmatprep.subr.mxu0 0.0
        %6329 = vmatpush1.msra.mxu0 0.0
        %6330 = vmatprep.subr.mxu0 0.0
        %6331 = vmatpush1.msra.mxu0 0.0
        %6332 = vmatprep.subr.mxu0 0.0
        %6333 = vmatpush1.msra.mxu0 0.0
        %6334 = vmatprep.subr.mxu0 0.0
        %6335 = vmatpush1.msra.mxu0 0.0
        %6336 = vmatprep.subr.mxu0 0.0
        %6337 = vmatpush1.msra.mxu0 0.0
        %6338 = vmatprep.subr.mxu0 0.0
        %6339 = vmatpush1.msra.mxu0 0.0
        %6340 = vmatprep.subr.mxu0 0.0
        %6341 = vmatpush1.msra.mxu0 0.0
        %6342 = vmatprep.subr.mxu0 0.0
        %6343 = vmatpush1.msra.mxu0 0.0
        %6344 = vmatprep.subr.mxu0 0.0
        %6345 = vmatpush1.msra.mxu0 0.0
        %6346 = vmatprep.subr.mxu0 0.0
        %6347 = vmatpush1.msra.mxu0 0.0
        %6348 = vmatprep.subr.mxu0 0.0
        %6349 = vmatpush1.msra.mxu0 0.0
        %6350 = vmatprep.subr.mxu0 0.0
        %6351 = vmatpush1.msra.mxu0 0.0
        %6352 = vmatprep.subr.mxu0 0.0
        %6353 = vmatpush1.msra.mxu0 0.0
        %6354 = vmatprep.subr.mxu0 0.0
        %6355 = vmatpush1.msra.mxu0 0.0
        %6356 = vmatprep.subr.mxu0 0.0
        %6357 = vmatpush1.msra.mxu0 0.0
        %6358 = vmatprep.subr.mxu0 0.0
        %6359 = vmatpush1.msra.mxu0 0.0
        %6360 = vmatprep.subr.mxu0 0.0
        %6361 = vmatpush1.msra.mxu0 0.0
        %6362 = vmatprep.subr.mxu0 0.0
        %6363 = vmatpush1.msra.mxu0 0.0
        %6364 = vmatprep.subr.mxu0 0.0
        %6365 = vmatpush1.msra.mxu0 0.0
        %6366 = vmatprep.subr.mxu0 0.0
        %6367 = vmatpush1.msra.mxu0 0.0
        %6368 = vmatprep.subr.mxu0 0.0
        %6369 = vmatpush1.msra.mxu0 0.0
        %6370 = vmatprep.subr.mxu0 0.0
        %6371 = vmatpush1.msra.mxu0 0.0
        %6372 = vmatprep.subr.mxu0 0.0
        %6373 = vmatpush1.msra.mxu0 0.0
        %6374 = vmatprep.subr.mxu0 0.0
        %6375 = vmatpush1.msra.mxu0 0.0
        %6376 = vmatprep.subr.mxu0 0.0
        %6377 = vmatpush1.msra.mxu0 0.0
        %6378 = vmatprep.mubr.f32.mxu0 0.0
        %6379 = vmatmul.mubr.f32.gmra.mrb[0].mxu0 %v6312
        %v6380 = vpop.f32.mrb[0].mxu0
        %v6381 = vadd.f32 0.0, %v6380
        %v6382 = vpop.f32.mrb[0].mxu0
        %6383 = vdwg.mxu0
        %v6385 = vsel %vm5550, %v5720, 0
        %6387 = vmatprep.subr.mxu0 0.0
        %6388 = vmatpush1.msra.mxu0 %v4265
        %6389 = vmatprep.subr.mxu0 0.0
        %6390 = vmatpush1.msra.mxu0 0.0
        %6391 = vmatprep.subr.mxu0 0.0
        %6392 = vmatpush1.msra.mxu0 0.0
        %6393 = vmatprep.subr.mxu0 0.0
        %6394 = vmatpush1.msra.mxu0 0.0
        %6395 = vmatprep.subr.mxu0 0.0
        %6396 = vmatpush1.msra.mxu0 0.0
        %6397 = vmatprep.subr.mxu0 0.0
        %6398 = vmatpush1.msra.mxu0 0.0
        %6399 = vmatprep.subr.mxu0 0.0
        %6400 = vmatpush1.msra.mxu0 0.0
        %6401 = vmatprep.subr.mxu0 0.0
        %6402 = vmatpush1.msra.mxu0 0.0
        %6403 = vmatprep.subr.mxu0 0.0
        %6404 = vmatpush1.msra.mxu0 0.0
        %6405 = vmatprep.subr.mxu0 0.0
        %6406 = vmatpush1.msra.mxu0 0.0
        %6407 = vmatprep.subr.mxu0 0.0
        %6408 = vmatpush1.msra.mxu0 0.0
        %6409 = vmatprep.subr.mxu0 0.0
        %6410 = vmatpush1.msra.mxu0 0.0
        %6411 = vmatprep.subr.mxu0 0.0
        %6412 = vmatpush1.msra.mxu0 0.0
        %6413 = vmatprep.subr.mxu0 0.0
        %6414 = vmatpush1.msra.mxu0 0.0
        %6415 = vmatprep.subr.mxu0 0.0
        %6416 = vmatpush1.msra.mxu0 0.0
        %6417 = vmatprep.subr.mxu0 0.0
        %6418 = vmatpush1.msra.mxu0 0.0
        %6419 = vmatprep.subr.mxu0 0.0
        %6420 = vmatpush1.msra.mxu0 0.0
        %6421 = vmatprep.subr.mxu0 0.0
        %6422 = vmatpush1.msra.mxu0 0.0
        %6423 = vmatprep.subr.mxu0 0.0
        %6424 = vmatpush1.msra.mxu0 0.0
        %6425 = vmatprep.subr.mxu0 0.0
        %6426 = vmatpush1.msra.mxu0 0.0
        %6427 = vmatprep.subr.mxu0 0.0
        %6428 = vmatpush1.msra.mxu0 0.0
        %6429 = vmatprep.subr.mxu0 0.0
        %6430 = vmatpush1.msra.mxu0 0.0
        %6431 = vmatprep.subr.mxu0 0.0
        %6432 = vmatpush1.msra.mxu0 0.0
        %6433 = vmatprep.subr.mxu0 0.0
        %6434 = vmatpush1.msra.mxu0 0.0
        %6435 = vmatprep.subr.mxu0 0.0
        %6436 = vmatpush1.msra.mxu0 0.0
        %6437 = vmatprep.subr.mxu0 0.0
        %6438 = vmatpush1.msra.mxu0 0.0
        %6439 = vmatprep.subr.mxu0 0.0
        %6440 = vmatpush1.msra.mxu0 0.0
        %6441 = vmatprep.subr.mxu0 0.0
        %6442 = vmatpush1.msra.mxu0 0.0
        %6443 = vmatprep.subr.mxu0 0.0
        %6444 = vmatpush1.msra.mxu0 0.0
        %6445 = vmatprep.subr.mxu0 0.0
        %6446 = vmatpush1.msra.mxu0 0.0
        %6447 = vmatprep.subr.mxu0 0.0
        %6448 = vmatpush1.msra.mxu0 0.0
        %6449 = vmatprep.subr.mxu0 0.0
        %6450 = vmatpush1.msra.mxu0 0.0
        %6451 = vmatprep.mubr.f32.mxu0 0.0
        %6452 = vmatmul.mubr.f32.gmra.mrb[0].mxu0 %v6385
        %v6453 = vpop.f32.mrb[0].mxu0
        %v6454 = vadd.f32 0.0, %v6453
        %v6455 = vpop.f32.mrb[0].mxu0
        %6456 = vdwg.mxu0
        %v6458 = vsel %vm5550, %v5721, 0
        %6460 = vmatprep.subr.mxu0 0.0
        %6461 = vmatpush1.msra.mxu0 %v4336
        %6462 = vmatprep.subr.mxu0 0.0
        %6463 = vmatpush1.msra.mxu0 0.0
        %6464 = vmatprep.subr.mxu0 0.0
        %6465 = vmatpush1.msra.mxu0 0.0
        %6466 = vmatprep.subr.mxu0 0.0
        %6467 = vmatpush1.msra.mxu0 0.0
        %6468 = vmatprep.subr.mxu0 0.0
        %6469 = vmatpush1.msra.mxu0 0.0
        %6470 = vmatprep.subr.mxu0 0.0
        %6471 = vmatpush1.msra.mxu0 0.0
        %6472 = vmatprep.subr.mxu0 0.0
        %6473 = vmatpush1.msra.mxu0 0.0
        %6474 = vmatprep.subr.mxu0 0.0
        %6475 = vmatpush1.msra.mxu0 0.0
        %6476 = vmatprep.subr.mxu0 0.0
        %6477 = vmatpush1.msra.mxu0 0.0
        %6478 = vmatprep.subr.mxu0 0.0
        %6479 = vmatpush1.msra.mxu0 0.0
        %6480 = vmatprep.subr.mxu0 0.0
        %6481 = vmatpush1.msra.mxu0 0.0
        %6482 = vmatprep.subr.mxu0 0.0
        %6483 = vmatpush1.msra.mxu0 0.0
        %6484 = vmatprep.subr.mxu0 0.0
        %6485 = vmatpush1.msra.mxu0 0.0
        %6486 = vmatprep.subr.mxu0 0.0
        %6487 = vmatpush1.msra.mxu0 0.0
        %6488 = vmatprep.subr.mxu0 0.0
        %6489 = vmatpush1.msra.mxu0 0.0
        %6490 = vmatprep.subr.mxu0 0.0
        %6491 = vmatpush1.msra.mxu0 0.0
        %6492 = vmatprep.subr.mxu0 0.0
        %6493 = vmatpush1.msra.mxu0 0.0
        %6494 = vmatprep.subr.mxu0 0.0
        %6495 = vmatpush1.msra.mxu0 0.0
        %6496 = vmatprep.subr.mxu0 0.0
        %6497 = vmatpush1.msra.mxu0 0.0
        %6498 = vmatprep.subr.mxu0 0.0
        %6499 = vmatpush1.msra.mxu0 0.0
        %6500 = vmatprep.subr.mxu0 0.0
        %6501 = vmatpush1.msra.mxu0 0.0
        %6502 = vmatprep.subr.mxu0 0.0
        %6503 = vmatpush1.msra.mxu0 0.0
        %6504 = vmatprep.subr.mxu0 0.0
        %6505 = vmatpush1.msra.mxu0 0.0
        %6506 = vmatprep.subr.mxu0 0.0
        %6507 = vmatpush1.msra.mxu0 0.0
        %6508 = vmatprep.subr.mxu0 0.0
        %6509 = vmatpush1.msra.mxu0 0.0
        %6510 = vmatprep.subr.mxu0 0.0
        %6511 = vmatpush1.msra.mxu0 0.0
        %6512 = vmatprep.subr.mxu0 0.0
        %6513 = vmatpush1.msra.mxu0 0.0
        %6514 = vmatprep.subr.mxu0 0.0
        %6515 = vmatpush1.msra.mxu0 0.0
        %6516 = vmatprep.subr.mxu0 0.0
        %6517 = vmatpush1.msra.mxu0 0.0
        %6518 = vmatprep.subr.mxu0 0.0
        %6519 = vmatpush1.msra.mxu0 0.0
        %6520 = vmatprep.subr.mxu0 0.0
        %6521 = vmatpush1.msra.mxu0 0.0
        %6522 = vmatprep.subr.mxu0 0.0
        %6523 = vmatpush1.msra.mxu0 0.0
        %6524 = vmatprep.mubr.f32.mxu0 0.0
        %6525 = vmatmul.mubr.f32.gmra.mrb[0].mxu0 %v6458
        %v6526 = vpop.f32.mrb[0].mxu0
        %v6527 = vadd.f32 0.0, %v6526
        %v6528 = vpop.f32.mrb[0].mxu0
        %6529 = vdwg.mxu0
        %v6531 = vsel %vm5550, %v5722, 0
        %6533 = vmatprep.subr.mxu0 0.0
        %6534 = vmatpush1.msra.mxu0 %v4338
        %6535 = vmatprep.subr.mxu0 0.0
        %6536 = vmatpush1.msra.mxu0 0.0
        %6537 = vmatprep.subr.mxu0 0.0
        %6538 = vmatpush1.msra.mxu0 0.0
        %6539 = vmatprep.subr.mxu0 0.0
        %6540 = vmatpush1.msra.mxu0 0.0
        %6541 = vmatprep.subr.mxu0 0.0
        %6542 = vmatpush1.msra.mxu0 0.0
        %6543 = vmatprep.subr.mxu0 0.0
        %6544 = vmatpush1.msra.mxu0 0.0
        %6545 = vmatprep.subr.mxu0 0.0
        %6546 = vmatpush1.msra.mxu0 0.0
        %6547 = vmatprep.subr.mxu0 0.0
        %6548 = vmatpush1.msra.mxu0 0.0
        %6549 = vmatprep.subr.mxu0 0.0
        %6550 = vmatpush1.msra.mxu0 0.0
        %6551 = vmatprep.subr.mxu0 0.0
        %6552 = vmatpush1.msra.mxu0 0.0
        %6553 = vmatprep.subr.mxu0 0.0
        %6554 = vmatpush1.msra.mxu0 0.0
        %6555 = vmatprep.subr.mxu0 0.0
        %6556 = vmatpush1.msra.mxu0 0.0
        %6557 = vmatprep.subr.mxu0 0.0
        %6558 = vmatpush1.msra.mxu0 0.0
        %6559 = vmatprep.subr.mxu0 0.0
        %6560 = vmatpush1.msra.mxu0 0.0
        %6561 = vmatprep.subr.mxu0 0.0
        %6562 = vmatpush1.msra.mxu0 0.0
        %6563 = vmatprep.subr.mxu0 0.0
        %6564 = vmatpush1.msra.mxu0 0.0
        %6565 = vmatprep.subr.mxu0 0.0
        %6566 = vmatpush1.msra.mxu0 0.0
        %6567 = vmatprep.subr.mxu0 0.0
        %6568 = vmatpush1.msra.mxu0 0.0
        %6569 = vmatprep.subr.mxu0 0.0
        %6570 = vmatpush1.msra.mxu0 0.0
        %6571 = vmatprep.subr.mxu0 0.0
        %6572 = vmatpush1.msra.mxu0 0.0
        %6573 = vmatprep.subr.mxu0 0.0
        %6574 = vmatpush1.msra.mxu0 0.0
        %6575 = vmatprep.subr.mxu0 0.0
        %6576 = vmatpush1.msra.mxu0 0.0
        %6577 = vmatprep.subr.mxu0 0.0
        %6578 = vmatpush1.msra.mxu0 0.0
        %6579 = vmatprep.subr.mxu0 0.0
        %6580 = vmatpush1.msra.mxu0 0.0
        %6581 = vmatprep.subr.mxu0 0.0
        %6582 = vmatpush1.msra.mxu0 0.0
        %6583 = vmatprep.subr.mxu0 0.0
        %6584 = vmatpush1.msra.mxu0 0.0
        %6585 = vmatprep.subr.mxu0 0.0
        %6586 = vmatpush1.msra.mxu0 0.0
        %6587 = vmatprep.subr.mxu0 0.0
        %6588 = vmatpush1.msra.mxu0 0.0
        %6589 = vmatprep.subr.mxu0 0.0
        %6590 = vmatpush1.msra.mxu0 0.0
        %6591 = vmatprep.subr.mxu0 0.0
        %6592 = vmatpush1.msra.mxu0 0.0
        %6593 = vmatprep.subr.mxu0 0.0
        %6594 = vmatpush1.msra.mxu0 0.0
        %6595 = vmatprep.subr.mxu0 0.0
        %6596 = vmatpush1.msra.mxu0 0.0
        %6597 = vmatprep.mubr.f32.mxu0 0.0
        %6598 = vmatmul.mubr.f32.gmra.mrb[0].mxu0 %v6531
        %v6599 = vpop.f32.mrb[0].mxu0
        %v6600 = vadd.f32 0.0, %v6599
        %v6601 = vpop.f32.mrb[0].mxu0
        %6602 = vdwg.mxu0
        %v6604 = vsel %vm5550, %v5723, 0
        %6606 = vmatprep.subr.mxu0 0.0
        %6607 = vmatpush1.msra.mxu0 %v4263
        %6608 = vmatprep.subr.mxu0 0.0
        %6609 = vmatpush1.msra.mxu0 0.0
        %6610 = vmatprep.subr.mxu0 0.0
        %6611 = vmatpush1.msra.mxu0 0.0
        %6612 = vmatprep.subr.mxu0 0.0
        %6613 = vmatpush1.msra.mxu0 0.0
        %6614 = vmatprep.subr.mxu0 0.0
        %6615 = vmatpush1.msra.mxu0 0.0
        %6616 = vmatprep.subr.mxu0 0.0
        %6617 = vmatpush1.msra.mxu0 0.0
        %6618 = vmatprep.subr.mxu0 0.0
        %6619 = vmatpush1.msra.mxu0 0.0
        %6620 = vmatprep.subr.mxu0 0.0
        %6621 = vmatpush1.msra.mxu0 0.0
        %6622 = vmatprep.subr.mxu0 0.0
        %6623 = vmatpush1.msra.mxu0 0.0
        %6624 = vmatprep.subr.mxu0 0.0
        %6625 = vmatpush1.msra.mxu0 0.0
        %6626 = vmatprep.subr.mxu0 0.0
        %6627 = vmatpush1.msra.mxu0 0.0
        %6628 = vmatprep.subr.mxu0 0.0
        %6629 = vmatpush1.msra.mxu0 0.0
        %6630 = vmatprep.subr.mxu0 0.0
        %6631 = vmatpush1.msra.mxu0 0.0
        %6632 = vmatprep.subr.mxu0 0.0
        %6633 = vmatpush1.msra.mxu0 0.0
        %6634 = vmatprep.subr.mxu0 0.0
        %6635 = vmatpush1.msra.mxu0 0.0
        %6636 = vmatprep.subr.mxu0 0.0
        %6637 = vmatpush1.msra.mxu0 0.0
        %6638 = vmatprep.subr.mxu0 0.0
        %6639 = vmatpush1.msra.mxu0 0.0
        %6640 = vmatprep.subr.mxu0 0.0
        %6641 = vmatpush1.msra.mxu0 0.0
        %6642 = vmatprep.subr.mxu0 0.0
        %6643 = vmatpush1.msra.mxu0 0.0
        %6644 = vmatprep.subr.mxu0 0.0
        %6645 = vmatpush1.msra.mxu0 0.0
        %6646 = vmatprep.subr.mxu0 0.0
        %6647 = vmatpush1.msra.mxu0 0.0
        %6648 = vmatprep.subr.mxu0 0.0
        %6649 = vmatpush1.msra.mxu0 0.0
        %6650 = vmatprep.subr.mxu0 0.0
        %6651 = vmatpush1.msra.mxu0 0.0
        %6652 = vmatprep.subr.mxu0 0.0
        %6653 = vmatpush1.msra.mxu0 0.0
        %6654 = vmatprep.subr.mxu0 0.0
        %6655 = vmatpush1.msra.mxu0 0.0
        %6656 = vmatprep.subr.mxu0 0.0
        %6657 = vmatpush1.msra.mxu0 0.0
        %6658 = vmatprep.subr.mxu0 0.0
        %6659 = vmatpush1.msra.mxu0 0.0
        %6660 = vmatprep.subr.mxu0 0.0
        %6661 = vmatpush1.msra.mxu0 0.0
        %6662 = vmatprep.subr.mxu0 0.0
        %6663 = vmatpush1.msra.mxu0 0.0
        %6664 = vmatprep.subr.mxu0 0.0
        %6665 = vmatpush1.msra.mxu0 0.0
        %6666 = vmatprep.subr.mxu0 0.0
        %6667 = vmatpush1.msra.mxu0 0.0
        %6668 = vmatprep.subr.mxu0 0.0
        %6669 = vmatpush1.msra.mxu0 0.0
        %6670 = vmatprep.mubr.f32.mxu0 0.0
        %6671 = vmatmul.mubr.f32.gmra.mrb[0].mxu0 %v6604
        %v6672 = vpop.f32.mrb[0].mxu0
        %v6673 = vadd.f32 0.0, %v6672
        %v6674 = vpop.f32.mrb[0].mxu0
        %6675 = vdwg.mxu0
        %v6677 = vsel %vm5550, %v5724, 0
        %6679 = vmatprep.subr.mxu0 0.0
        %6680 = vmatpush1.msra.mxu0 %v4267
        %6681 = vmatprep.subr.mxu0 0.0
        %6682 = vmatpush1.msra.mxu0 0.0
        %6683 = vmatprep.subr.mxu0 0.0
        %6684 = vmatpush1.msra.mxu0 0.0
        %6685 = vmatprep.subr.mxu0 0.0
        %6686 = vmatpush1.msra.mxu0 0.0
        %6687 = vmatprep.subr.mxu0 0.0
        %6688 = vmatpush1.msra.mxu0 0.0
        %6689 = vmatprep.subr.mxu0 0.0
        %6690 = vmatpush1.msra.mxu0 0.0
        %6691 = vmatprep.subr.mxu0 0.0
        %6692 = vmatpush1.msra.mxu0 0.0
        %6693 = vmatprep.subr.mxu0 0.0
        %6694 = vmatpush1.msra.mxu0 0.0
        %6695 = vmatprep.subr.mxu0 0.0
        %6696 = vmatpush1.msra.mxu0 0.0
        %6697 = vmatprep.subr.mxu0 0.0
        %6698 = vmatpush1.msra.mxu0 0.0
        %6699 = vmatprep.subr.mxu0 0.0
        %6700 = vmatpush1.msra.mxu0 0.0
        %6701 = vmatprep.subr.mxu0 0.0
        %6702 = vmatpush1.msra.mxu0 0.0
        %6703 = vmatprep.subr.mxu0 0.0
        %6704 = vmatpush1.msra.mxu0 0.0
        %6705 = vmatprep.subr.mxu0 0.0
        %6706 = vmatpush1.msra.mxu0 0.0
        %6707 = vmatprep.subr.mxu0 0.0
        %6708 = vmatpush1.msra.mxu0 0.0
        %6709 = vmatprep.subr.mxu0 0.0
        %6710 = vmatpush1.msra.mxu0 0.0
        %6711 = vmatprep.subr.mxu0 0.0
        %6712 = vmatpush1.msra.mxu0 0.0
        %6713 = vmatprep.subr.mxu0 0.0
        %6714 = vmatpush1.msra.mxu0 0.0
        %6715 = vmatprep.subr.mxu0 0.0
        %6716 = vmatpush1.msra.mxu0 0.0
        %6717 = vmatprep.subr.mxu0 0.0
        %6718 = vmatpush1.msra.mxu0 0.0
        %6719 = vmatprep.subr.mxu0 0.0
        %6720 = vmatpush1.msra.mxu0 0.0
        %6721 = vmatprep.subr.mxu0 0.0
        %6722 = vmatpush1.msra.mxu0 0.0
        %6723 = vmatprep.subr.mxu0 0.0
        %6724 = vmatpush1.msra.mxu0 0.0
        %6725 = vmatprep.subr.mxu0 0.0
        %6726 = vmatpush1.msra.mxu0 0.0
        %6727 = vmatprep.subr.mxu0 0.0
        %6728 = vmatpush1.msra.mxu0 0.0
        %6729 = vmatprep.subr.mxu0 0.0
        %6730 = vmatpush1.msra.mxu0 0.0
        %6731 = vmatprep.subr.mxu0 0.0
        %6732 = vmatpush1.msra.mxu0 0.0
        %6733 = vmatprep.subr.mxu0 0.0
        %6734 = vmatpush1.msra.mxu0 0.0
        %6735 = vmatprep.subr.mxu0 0.0
        %6736 = vmatpush1.msra.mxu0 0.0
        %6737 = vmatprep.subr.mxu0 0.0
        %6738 = vmatpush1.msra.mxu0 0.0
        %6739 = vmatprep.subr.mxu0 0.0
        %6740 = vmatpush1.msra.mxu0 0.0
        %6741 = vmatprep.subr.mxu0 0.0
        %6742 = vmatpush1.msra.mxu0 0.0
        %6743 = vmatprep.mubr.f32.mxu0 0.0
        %6744 = vmatmul.mubr.f32.gmra.mrb[0].mxu0 %v6677
        %v6745 = vpop.f32.mrb[0].mxu0
        %v6746 = vadd.f32 0.0, %v6745
        %v6747 = vpop.f32.mrb[0].mxu0
        %6748 = vdwg.mxu0
        %v6750 = vsel %vm5550, %v5725, 0
        %6752 = vmatprep.subr.mxu0 0.0
        %6753 = vmatpush1.msra.mxu0 %v4344
        %6754 = vmatprep.subr.mxu0 0.0
        %6755 = vmatpush1.msra.mxu0 0.0
        %6756 = vmatprep.subr.mxu0 0.0
        %6757 = vmatpush1.msra.mxu0 0.0
        %6758 = vmatprep.subr.mxu0 0.0
        %6759 = vmatpush1.msra.mxu0 0.0
        %6760 = vmatprep.subr.mxu0 0.0
        %6761 = vmatpush1.msra.mxu0 0.0
        %6762 = vmatprep.subr.mxu0 0.0
        %6763 = vmatpush1.msra.mxu0 0.0
        %6764 = vmatprep.subr.mxu0 0.0
        %6765 = vmatpush1.msra.mxu0 0.0
        %6766 = vmatprep.subr.mxu0 0.0
        %6767 = vmatpush1.msra.mxu0 0.0
        %6768 = vmatprep.subr.mxu0 0.0
        %6769 = vmatpush1.msra.mxu0 0.0
        %6770 = vmatprep.subr.mxu0 0.0
        %6771 = vmatpush1.msra.mxu0 0.0
        %6772 = vmatprep.subr.mxu0 0.0
        %6773 = vmatpush1.msra.mxu0 0.0
        %6774 = vmatprep.subr.mxu0 0.0
        %6775 = vmatpush1.msra.mxu0 0.0
        %6776 = vmatprep.subr.mxu0 0.0
        %6777 = vmatpush1.msra.mxu0 0.0
        %6778 = vmatprep.subr.mxu0 0.0
        %6779 = vmatpush1.msra.mxu0 0.0
        %6780 = vmatprep.subr.mxu0 0.0
        %6781 = vmatpush1.msra.mxu0 0.0
        %6782 = vmatprep.subr.mxu0 0.0
        %6783 = vmatpush1.msra.mxu0 0.0
        %6784 = vmatprep.subr.mxu0 0.0
        %6785 = vmatpush1.msra.mxu0 0.0
        %6786 = vmatprep.subr.mxu0 0.0
        %6787 = vmatpush1.msra.mxu0 0.0
        %6788 = vmatprep.subr.mxu0 0.0
        %6789 = vmatpush1.msra.mxu0 0.0
        %6790 = vmatprep.subr.mxu0 0.0
        %6791 = vmatpush1.msra.mxu0 0.0
        %6792 = vmatprep.subr.mxu0 0.0
        %6793 = vmatpush1.msra.mxu0 0.0
        %6794 = vmatprep.subr.mxu0 0.0
        %6795 = vmatpush1.msra.mxu0 0.0
        %6796 = vmatprep.subr.mxu0 0.0
        %6797 = vmatpush1.msra.mxu0 0.0
        %6798 = vmatprep.subr.mxu0 0.0
        %6799 = vmatpush1.msra.mxu0 0.0
        %6800 = vmatprep.subr.mxu0 0.0
        %6801 = vmatpush1.msra.mxu0 0.0
        %6802 = vmatprep.subr.mxu0 0.0
        %6803 = vmatpush1.msra.mxu0 0.0
        %6804 = vmatprep.subr.mxu0 0.0
        %6805 = vmatpush1.msra.mxu0 0.0
        %6806 = vmatprep.subr.mxu0 0.0
        %6807 = vmatpush1.msra.mxu0 0.0
        %6808 = vmatprep.subr.mxu0 0.0
        %6809 = vmatpush1.msra.mxu0 0.0
        %6810 = vmatprep.subr.mxu0 0.0
        %6811 = vmatpush1.msra.mxu0 0.0
        %6812 = vmatprep.subr.mxu0 0.0
        %6813 = vmatpush1.msra.mxu0 0.0
        %6814 = vmatprep.subr.mxu0 0.0
        %6815 = vmatpush1.msra.mxu0 0.0
        %6816 = vmatprep.mubr.f32.mxu0 0.0
        %6817 = vmatmul.mubr.f32.gmra.mrb[0].mxu0 %v6750
        %v6818 = vpop.f32.mrb[0].mxu0
        %v6819 = vadd.f32 0.0, %v6818
        %v6820 = vpop.f32.mrb[0].mxu0
        %6821 = vdwg.mxu0
        %v6823 = vsel %vm5550, %v5726, 0
        %6825 = vmatprep.subr.mxu0 0.0
        %6826 = vmatpush1.msra.mxu0 %v4346
        %6827 = vmatprep.subr.mxu0 0.0
        %6828 = vmatpush1.msra.mxu0 0.0
        %6829 = vmatprep.subr.mxu0 0.0
        %6830 = vmatpush1.msra.mxu0 0.0
        %6831 = vmatprep.subr.mxu0 0.0
        %6832 = vmatpush1.msra.mxu0 0.0
        %6833 = vmatprep.subr.mxu0 0.0
        %6834 = vmatpush1.msra.mxu0 0.0
        %6835 = vmatprep.subr.mxu0 0.0
        %6836 = vmatpush1.msra.mxu0 0.0
        %6837 = vmatprep.subr.mxu0 0.0
        %6838 = vmatpush1.msra.mxu0 0.0
        %6839 = vmatprep.subr.mxu0 0.0
        %6840 = vmatpush1.msra.mxu0 0.0
        %6841 = vmatprep.subr.mxu0 0.0
        %6842 = vmatpush1.msra.mxu0 0.0
        %6843 = vmatprep.subr.mxu0 0.0
        %6844 = vmatpush1.msra.mxu0 0.0
        %6845 = vmatprep.subr.mxu0 0.0
        %6846 = vmatpush1.msra.mxu0 0.0
        %6847 = vmatprep.subr.mxu0 0.0
        %6848 = vmatpush1.msra.mxu0 0.0
        %6849 = vmatprep.subr.mxu0 0.0
        %6850 = vmatpush1.msra.mxu0 0.0
        %6851 = vmatprep.subr.mxu0 0.0
        %6852 = vmatpush1.msra.mxu0 0.0
        %6853 = vmatprep.subr.mxu0 0.0
        %6854 = vmatpush1.msra.mxu0 0.0
        %6855 = vmatprep.subr.mxu0 0.0
        %6856 = vmatpush1.msra.mxu0 0.0
        %6857 = vmatprep.subr.mxu0 0.0
        %6858 = vmatpush1.msra.mxu0 0.0
        %6859 = vmatprep.subr.mxu0 0.0
        %6860 = vmatpush1.msra.mxu0 0.0
        %6861 = vmatprep.subr.mxu0 0.0
        %6862 = vmatpush1.msra.mxu0 0.0
        %6863 = vmatprep.subr.mxu0 0.0
        %6864 = vmatpush1.msra.mxu0 0.0
        %6865 = vmatprep.subr.mxu0 0.0
        %6866 = vmatpush1.msra.mxu0 0.0
        %6867 = vmatprep.subr.mxu0 0.0
        %6868 = vmatpush1.msra.mxu0 0.0
        %6869 = vmatprep.subr.mxu0 0.0
        %6870 = vmatpush1.msra.mxu0 0.0
        %6871 = vmatprep.subr.mxu0 0.0
        %6872 = vmatpush1.msra.mxu0 0.0
        %6873 = vmatprep.subr.mxu0 0.0
        %6874 = vmatpush1.msra.mxu0 0.0
        %6875 = vmatprep.subr.mxu0 0.0
        %6876 = vmatpush1.msra.mxu0 0.0
        %6877 = vmatprep.subr.mxu0 0.0
        %6878 = vmatpush1.msra.mxu0 0.0
        %6879 = vmatprep.subr.mxu0 0.0
        %6880 = vmatpush1.msra.mxu0 0.0
        %6881 = vmatprep.subr.mxu0 0.0
        %6882 = vmatpush1.msra.mxu0 0.0
        %6883 = vmatprep.subr.mxu0 0.0
        %6884 = vmatpush1.msra.mxu0 0.0
        %6885 = vmatprep.subr.mxu0 0.0
        %6886 = vmatpush1.msra.mxu0 0.0
        %6887 = vmatprep.subr.mxu0 0.0
        %6888 = vmatpush1.msra.mxu0 0.0
        %6889 = vmatprep.mubr.f32.mxu0 0.0
        %6890 = vmatmul.mubr.f32.gmra.mrb[0].mxu0 %v6823
        %v6891 = vpop.f32.mrb[0].mxu0
        %v6892 = vadd.f32 0.0, %v6891
        %v6893 = vpop.f32.mrb[0].mxu0
        %6894 = vdwg.mxu0
        %6897 = vrot.lane.b32.xlu0 %v5943, 64
        %v6898 = vpop.permute.xlu0 %6897
        %6899 = vrot.lane.b32.xlu0 %v6016, 64
        %v6900 = vpop.permute.xlu0 %6899
        %6905 = vrot.lane.b32.xlu0 %v6235, 64
        %v6906 = vpop.permute.xlu0 %6905
        %6907 = vrot.lane.b32.xlu0 %v6308, 64
        %v6908 = vpop.permute.xlu0 %6907
        %6913 = vrot.lane.b32.xlu0 %v6527, 64
        %v6914 = vpop.permute.xlu0 %6913
        %6915 = vrot.lane.b32.xlu0 %v6600, 64
        %v6916 = vpop.permute.xlu0 %6915
        %6921 = vrot.lane.b32.xlu0 %v6819, 64
        %v6922 = vpop.permute.xlu0 %6921
        %6923 = vrot.lane.b32.xlu0 %v6892, 64
        %v6924 = vpop.permute.xlu0 %6923
        %v6927 = vsel %vm4349, %v5797, %v6898
        %v6928 = vsel %vm4349, %v5870, %v6900
        %v6929 = vsel %vm4349, %v6089, %v6906
        %v6930 = vsel %vm4349, %v6162, %v6908
        %v6931 = vsel %vm4349, %v6381, %v6914
        %v6932 = vsel %vm4349, %v6454, %v6916
        %v6933 = vsel %vm4349, %v6673, %v6922
        %v6934 = vsel %vm4349, %v6746, %v6924
        %v6935 = vpack.c.bf16 %v6928, %v6927
        %v6936 = vpack.c.bf16 %v6930, %v6929
        %v6937 = vpack.c.bf16 %v6932, %v6931
        %v6938 = vpack.c.bf16 %v6934, %v6933
        %v6939 = vld [vmem:[%s866] sm:$0xff]
        %v6940 = vld [vmem:[%s866 + $0x8] sm:$0xff]
        %v6941 = vld [vmem:[%s866 + $0x10] sm:$0xff]
        %v6942 = vld [vmem:[%s866 + $0x18] sm:$0xff]
        %v6943 = vld [vmem:[%s866 + $0x20] sm:$0xff]
        %v6944 = vld [vmem:[%s866 + $0x28] sm:$0xff]
        %v6945 = vld [vmem:[%s866 + $0x30] sm:$0xff]
        %v6946 = vld [vmem:[%s866 + $0x38] sm:$0xff]
        %v6947 = vld [vmem:[%s866 + $0x40] sm:$0xff]
        %v6948 = vld [vmem:[%s866 + $0x48] sm:$0xff]
        %v6949 = vld [vmem:[%s866 + $0x50] sm:$0xff]
        %v6950 = vld [vmem:[%s866 + $0x58] sm:$0xff]
        %v6951 = vld [vmem:[%s866 + $0x60] sm:$0xff]
        %v6952 = vld [vmem:[%s866 + $0x68] sm:$0xff]
        %v6953 = vld [vmem:[%s866 + $0x70] sm:$0xff]
        %v6954 = vld [vmem:[%s866 + $0x78] sm:$0xff]
        %v6955 = vld [vmem:[%s866 + $0x80] sm:$0xff]
        %v6956 = vld [vmem:[%s866 + $0x88] sm:$0xff]
        %v6957 = vld [vmem:[%s866 + $0x90] sm:$0xff]
        %v6958 = vld [vmem:[%s866 + $0x98] sm:$0xff]
        %v6959 = vld [vmem:[%s866 + $0xa0] sm:$0xff]
        %v6960 = vld [vmem:[%s866 + $0xa8] sm:$0xff]
        %v6961 = vld [vmem:[%s866 + $0xb0] sm:$0xff]
        %v6962 = vld [vmem:[%s866 + $0xb8] sm:$0xff]
        %v6963 = vld [vmem:[%s866 + $0xc0] sm:$0xff]
        %v6964 = vld [vmem:[%s866 + $0xc8] sm:$0xff]
        %v6965 = vld [vmem:[%s866 + $0xd0] sm:$0xff]
        %v6966 = vld [vmem:[%s866 + $0xd8] sm:$0xff]
        %v6967 = vld [vmem:[%s866 + $0xe0] sm:$0xff]
        %v6968 = vld [vmem:[%s866 + $0xe8] sm:$0xff]
        %v6969 = vld [vmem:[%s866 + $0xf0] sm:$0xff]
        %v6970 = vld [vmem:[%s866 + $0xf8] sm:$0xff]
        %v6971 = vld [vmem:[%s866 + $0x100] sm:$0xff]
        %v6972 = vld [vmem:[%s866 + $0x108] sm:$0xff]
        %v6973 = vld [vmem:[%s866 + $0x110] sm:$0xff]
        %v6974 = vld [vmem:[%s866 + $0x118] sm:$0xff]
        %v6975 = vld [vmem:[%s866 + $0x120] sm:$0xff]
        %v6976 = vld [vmem:[%s866 + $0x128] sm:$0xff]
        %v6977 = vld [vmem:[%s866 + $0x130] sm:$0xff]
        %v6978 = vld [vmem:[%s866 + $0x138] sm:$0xff]
        %v6979 = vld [vmem:[%s866 + $0x140] sm:$0xff]
        %v6980 = vld [vmem:[%s866 + $0x148] sm:$0xff]
        %v6981 = vld [vmem:[%s866 + $0x150] sm:$0xff]
        %v6982 = vld [vmem:[%s866 + $0x158] sm:$0xff]
        %v6983 = vld [vmem:[%s866 + $0x160] sm:$0xff]
        %v6984 = vld [vmem:[%s866 + $0x168] sm:$0xff]
        %v6985 = vld [vmem:[%s866 + $0x170] sm:$0xff]
        %v6986 = vld [vmem:[%s866 + $0x178] sm:$0xff]
        %v6987 = vld [vmem:[%s866 + $0x180] sm:$0xff]
        %v6988 = vld [vmem:[%s866 + $0x188] sm:$0xff]
        %v6989 = vld [vmem:[%s866 + $0x190] sm:$0xff]
        %v6990 = vld [vmem:[%s866 + $0x198] sm:$0xff]
        %v6991 = vld [vmem:[%s866 + $0x1a0] sm:$0xff]
        %v6992 = vld [vmem:[%s866 + $0x1a8] sm:$0xff]
        %v6993 = vld [vmem:[%s866 + $0x1b0] sm:$0xff]
        %v6994 = vld [vmem:[%s866 + $0x1b8] sm:$0xff]
        %v6995 = vld [vmem:[%s866 + $0x1c0] sm:$0xff]
        %v6996 = vld [vmem:[%s866 + $0x1c8] sm:$0xff]
        %v6997 = vld [vmem:[%s866 + $0x1d0] sm:$0xff]
        %v6998 = vld [vmem:[%s866 + $0x1d8] sm:$0xff]
        %v6999 = vld [vmem:[%s866 + $0x1e0] sm:$0xff]
        %v7000 = vld [vmem:[%s866 + $0x1e8] sm:$0xff]
        %v7001 = vld [vmem:[%s866 + $0x1f0] sm:$0xff]
        %v7002 = vld [vmem:[%s866 + $0x1f8] sm:$0xff]
        %v7003 = vld [vmem:[%s866 + $0x200] sm:$0xff]
        %v7004 = vld [vmem:[%s866 + $0x208] sm:$0xff]
        %v7005 = vld [vmem:[%s866 + $0x210] sm:$0xff]
        %v7006 = vld [vmem:[%s866 + $0x218] sm:$0xff]
        %v7007 = vld [vmem:[%s866 + $0x220] sm:$0xff]
        %v7008 = vld [vmem:[%s866 + $0x228] sm:$0xff]
        %v7009 = vld [vmem:[%s866 + $0x230] sm:$0xff]
        %v7010 = vld [vmem:[%s866 + $0x238] sm:$0xff]
        %v7011 = vld [vmem:[%s866 + $0x240] sm:$0xff]
        %v7012 = vld [vmem:[%s866 + $0x248] sm:$0xff]
        %v7013 = vld [vmem:[%s866 + $0x250] sm:$0xff]
        %v7014 = vld [vmem:[%s866 + $0x258] sm:$0xff]
        %v7015 = vld [vmem:[%s866 + $0x260] sm:$0xff]
        %v7016 = vld [vmem:[%s866 + $0x268] sm:$0xff]
        %v7017 = vld [vmem:[%s866 + $0x270] sm:$0xff]
        %v7018 = vld [vmem:[%s866 + $0x278] sm:$0xff]
        %v7019 = vld [vmem:[%s866 + $0x280] sm:$0xff]
        %v7020 = vld [vmem:[%s866 + $0x288] sm:$0xff]
        %v7021 = vld [vmem:[%s866 + $0x290] sm:$0xff]
        %v7022 = vld [vmem:[%s866 + $0x298] sm:$0xff]
        %v7023 = vld [vmem:[%s866 + $0x2a0] sm:$0xff]
        %v7024 = vld [vmem:[%s866 + $0x2a8] sm:$0xff]
        %v7025 = vld [vmem:[%s866 + $0x2b0] sm:$0xff]
        %v7026 = vld [vmem:[%s866 + $0x2b8] sm:$0xff]
        %v7027 = vld [vmem:[%s866 + $0x2c0] sm:$0xff]
        %v7028 = vld [vmem:[%s866 + $0x2c8] sm:$0xff]
        %v7029 = vld [vmem:[%s866 + $0x2d0] sm:$0xff]
        %v7030 = vld [vmem:[%s866 + $0x2d8] sm:$0xff]
        %v7031 = vld [vmem:[%s866 + $0x2e0] sm:$0xff]
        %v7032 = vld [vmem:[%s866 + $0x2e8] sm:$0xff]
        %v7033 = vld [vmem:[%s866 + $0x2f0] sm:$0xff]
        %v7034 = vld [vmem:[%s866 + $0x2f8] sm:$0xff]
        %v7035 = vld [vmem:[%s866 + $0x300] sm:$0xff]
        %v7036 = vld [vmem:[%s866 + $0x308] sm:$0xff]
        %v7037 = vld [vmem:[%s866 + $0x310] sm:$0xff]
        %v7038 = vld [vmem:[%s866 + $0x318] sm:$0xff]
        %v7039 = vld [vmem:[%s866 + $0x320] sm:$0xff]
        %v7040 = vld [vmem:[%s866 + $0x328] sm:$0xff]
        %v7041 = vld [vmem:[%s866 + $0x330] sm:$0xff]
        %v7042 = vld [vmem:[%s866 + $0x338] sm:$0xff]
        %v7043 = vld [vmem:[%s866 + $0x340] sm:$0xff]
        %v7044 = vld [vmem:[%s866 + $0x348] sm:$0xff]
        %v7045 = vld [vmem:[%s866 + $0x350] sm:$0xff]
        %v7046 = vld [vmem:[%s866 + $0x358] sm:$0xff]
        %v7047 = vld [vmem:[%s866 + $0x360] sm:$0xff]
        %v7048 = vld [vmem:[%s866 + $0x368] sm:$0xff]
        %v7049 = vld [vmem:[%s866 + $0x370] sm:$0xff]
        %v7050 = vld [vmem:[%s866 + $0x378] sm:$0xff]
        %v7051 = vld [vmem:[%s866 + $0x380] sm:$0xff]
        %v7052 = vld [vmem:[%s866 + $0x388] sm:$0xff]
        %v7053 = vld [vmem:[%s866 + $0x390] sm:$0xff]
        %v7054 = vld [vmem:[%s866 + $0x398] sm:$0xff]
        %v7055 = vld [vmem:[%s866 + $0x3a0] sm:$0xff]
        %v7056 = vld [vmem:[%s866 + $0x3a8] sm:$0xff]
        %v7057 = vld [vmem:[%s866 + $0x3b0] sm:$0xff]
        %v7058 = vld [vmem:[%s866 + $0x3b8] sm:$0xff]
        %v7059 = vld [vmem:[%s866 + $0x3c0] sm:$0xff]
        %v7060 = vld [vmem:[%s866 + $0x3c8] sm:$0xff]
        %v7061 = vld [vmem:[%s866 + $0x3d0] sm:$0xff]
        %v7062 = vld [vmem:[%s866 + $0x3d8] sm:$0xff]
        %v7063 = vld [vmem:[%s866 + $0x3e0] sm:$0xff]
        %v7064 = vld [vmem:[%s866 + $0x3e8] sm:$0xff]
        %v7065 = vld [vmem:[%s866 + $0x3f0] sm:$0xff]
        %v7066 = vld [vmem:[%s866 + $0x3f8] sm:$0xff]
        %v7067 = vld [vmem:[%s875] sm:$0xf]
        %v7069 = vlaneseq
        %v7070 = vshrl.u32 %v7069, 7
        %v7071 = vsub.s32 0, %v7070
        %v7072 = vrot.slane %v7067, %v7071
        %v7073 = vlaneseq
        %v7074 = vshrl.u32 %v7073, 7
        %v7075 = vsub.s32 1, %v7074
        %v7076 = vrot.slane %v7067, %v7075
        %v7077 = vlaneseq
        %v7078 = vshrl.u32 %v7077, 7
        %v7079 = vsub.s32 2, %v7078
        %v7080 = vrot.slane %v7067, %v7079
        %v7081 = vlaneseq
        %v7082 = vshrl.u32 %v7081, 7
        %v7083 = vsub.s32 3, %v7082
        %v7084 = vrot.slane %v7067, %v7083
        %v7217 = vunpack.c.l.b16 %v6939
        %v7218 = vunpack.c.h.b16 %v6939
        %v7219 = vunpack.c.l.b16 %v6940
        %v7220 = vunpack.c.h.b16 %v6940
        %v7221 = vunpack.c.l.b16 %v6941
        %v7222 = vunpack.c.h.b16 %v6941
        %v7223 = vunpack.c.l.b16 %v6942
        %v7224 = vunpack.c.h.b16 %v6942
        %v7225 = vunpack.c.l.b16 %v6943
        %v7226 = vunpack.c.h.b16 %v6943
        %v7227 = vunpack.c.l.b16 %v6944
        %v7228 = vunpack.c.h.b16 %v6944
        %v7229 = vunpack.c.l.b16 %v6945
        %v7230 = vunpack.c.h.b16 %v6945
        %v7231 = vunpack.c.l.b16 %v6946
        %v7232 = vunpack.c.h.b16 %v6946
        %v7233 = vunpack.c.l.b16 %v6947
        %v7234 = vunpack.c.h.b16 %v6947
        %v7235 = vunpack.c.l.b16 %v6948
        %v7236 = vunpack.c.h.b16 %v6948
        %v7237 = vunpack.c.l.b16 %v6949
        %v7238 = vunpack.c.h.b16 %v6949
        %v7239 = vunpack.c.l.b16 %v6950
        %v7240 = vunpack.c.h.b16 %v6950
        %v7241 = vunpack.c.l.b16 %v6951
        %v7242 = vunpack.c.h.b16 %v6951
        %v7243 = vunpack.c.l.b16 %v6952
        %v7244 = vunpack.c.h.b16 %v6952
        %v7245 = vunpack.c.l.b16 %v6953
        %v7246 = vunpack.c.h.b16 %v6953
        %v7247 = vunpack.c.l.b16 %v6954
        %v7248 = vunpack.c.h.b16 %v6954
        %v7249 = vunpack.c.l.b16 %v6955
        %v7250 = vunpack.c.h.b16 %v6955
        %v7251 = vunpack.c.l.b16 %v6956
        %v7252 = vunpack.c.h.b16 %v6956
        %v7253 = vunpack.c.l.b16 %v6957
        %v7254 = vunpack.c.h.b16 %v6957
        %v7255 = vunpack.c.l.b16 %v6958
        %v7256 = vunpack.c.h.b16 %v6958
        %v7257 = vunpack.c.l.b16 %v6959
        %v7258 = vunpack.c.h.b16 %v6959
        %v7259 = vunpack.c.l.b16 %v6960
        %v7260 = vunpack.c.h.b16 %v6960
        %v7261 = vunpack.c.l.b16 %v6961
        %v7262 = vunpack.c.h.b16 %v6961
        %v7263 = vunpack.c.l.b16 %v6962
        %v7264 = vunpack.c.h.b16 %v6962
        %v7265 = vunpack.c.l.b16 %v6963
        %v7266 = vunpack.c.h.b16 %v6963
        %v7267 = vunpack.c.l.b16 %v6964
        %v7268 = vunpack.c.h.b16 %v6964
        %v7269 = vunpack.c.l.b16 %v6965
        %v7270 = vunpack.c.h.b16 %v6965
        %v7271 = vunpack.c.l.b16 %v6966
        %v7272 = vunpack.c.h.b16 %v6966
        %v7273 = vunpack.c.l.b16 %v6967
        %v7274 = vunpack.c.h.b16 %v6967
        %v7275 = vunpack.c.l.b16 %v6968
        %v7276 = vunpack.c.h.b16 %v6968
        %v7277 = vunpack.c.l.b16 %v6969
        %v7278 = vunpack.c.h.b16 %v6969
        %v7279 = vunpack.c.l.b16 %v6970
        %v7280 = vunpack.c.h.b16 %v6970
        %v7281 = vunpack.c.l.b16 %v6971
        %v7282 = vunpack.c.h.b16 %v6971
        %v7283 = vunpack.c.l.b16 %v6972
        %v7284 = vunpack.c.h.b16 %v6972
        %v7285 = vunpack.c.l.b16 %v6973
        %v7286 = vunpack.c.h.b16 %v6973
        %v7287 = vunpack.c.l.b16 %v6974
        %v7288 = vunpack.c.h.b16 %v6974
        %v7289 = vunpack.c.l.b16 %v6975
        %v7290 = vunpack.c.h.b16 %v6975
        %v7291 = vunpack.c.l.b16 %v6976
        %v7292 = vunpack.c.h.b16 %v6976
        %v7293 = vunpack.c.l.b16 %v6977
        %v7294 = vunpack.c.h.b16 %v6977
        %v7295 = vunpack.c.l.b16 %v6978
        %v7296 = vunpack.c.h.b16 %v6978
        %v7297 = vunpack.c.l.b16 %v6979
        %v7298 = vunpack.c.h.b16 %v6979
        %v7299 = vunpack.c.l.b16 %v6980
        %v7300 = vunpack.c.h.b16 %v6980
        %v7301 = vunpack.c.l.b16 %v6981
        %v7302 = vunpack.c.h.b16 %v6981
        %v7303 = vunpack.c.l.b16 %v6982
        %v7304 = vunpack.c.h.b16 %v6982
        %v7305 = vunpack.c.l.b16 %v6983
        %v7306 = vunpack.c.h.b16 %v6983
        %v7307 = vunpack.c.l.b16 %v6984
        %v7308 = vunpack.c.h.b16 %v6984
        %v7309 = vunpack.c.l.b16 %v6985
        %v7310 = vunpack.c.h.b16 %v6985
        %v7311 = vunpack.c.l.b16 %v6986
        %v7312 = vunpack.c.h.b16 %v6986
        %v7313 = vunpack.c.l.b16 %v6987
        %v7314 = vunpack.c.h.b16 %v6987
        %v7315 = vunpack.c.l.b16 %v6988
        %v7316 = vunpack.c.h.b16 %v6988
        %v7317 = vunpack.c.l.b16 %v6989
        %v7318 = vunpack.c.h.b16 %v6989
        %v7319 = vunpack.c.l.b16 %v6990
        %v7320 = vunpack.c.h.b16 %v6990
        %v7321 = vunpack.c.l.b16 %v6991
        %v7322 = vunpack.c.h.b16 %v6991
        %v7323 = vunpack.c.l.b16 %v6992
        %v7324 = vunpack.c.h.b16 %v6992
        %v7325 = vunpack.c.l.b16 %v6993
        %v7326 = vunpack.c.h.b16 %v6993
        %v7327 = vunpack.c.l.b16 %v6994
        %v7328 = vunpack.c.h.b16 %v6994
        %v7329 = vunpack.c.l.b16 %v6995
        %v7330 = vunpack.c.h.b16 %v6995
        %v7331 = vunpack.c.l.b16 %v6996
        %v7332 = vunpack.c.h.b16 %v6996
        %v7333 = vunpack.c.l.b16 %v6997
        %v7334 = vunpack.c.h.b16 %v6997
        %v7335 = vunpack.c.l.b16 %v6998
        %v7336 = vunpack.c.h.b16 %v6998
        %v7337 = vunpack.c.l.b16 %v6999
        %v7338 = vunpack.c.h.b16 %v6999
        %v7339 = vunpack.c.l.b16 %v7000
        %v7340 = vunpack.c.h.b16 %v7000
        %v7341 = vunpack.c.l.b16 %v7001
        %v7342 = vunpack.c.h.b16 %v7001
        %v7343 = vunpack.c.l.b16 %v7002
        %v7344 = vunpack.c.h.b16 %v7002
        %v7345 = vunpack.c.l.b16 %v7003
        %v7346 = vunpack.c.h.b16 %v7003
        %v7347 = vunpack.c.l.b16 %v7004
        %v7348 = vunpack.c.h.b16 %v7004
        %v7349 = vunpack.c.l.b16 %v7005
        %v7350 = vunpack.c.h.b16 %v7005
        %v7351 = vunpack.c.l.b16 %v7006
        %v7352 = vunpack.c.h.b16 %v7006
        %v7353 = vunpack.c.l.b16 %v7007
        %v7354 = vunpack.c.h.b16 %v7007
        %v7355 = vunpack.c.l.b16 %v7008
        %v7356 = vunpack.c.h.b16 %v7008
        %v7357 = vunpack.c.l.b16 %v7009
        %v7358 = vunpack.c.h.b16 %v7009
        %v7359 = vunpack.c.l.b16 %v7010
        %v7360 = vunpack.c.h.b16 %v7010
        %v7361 = vunpack.c.l.b16 %v7011
        %v7362 = vunpack.c.h.b16 %v7011
        %v7363 = vunpack.c.l.b16 %v7012
        %v7364 = vunpack.c.h.b16 %v7012
        %v7365 = vunpack.c.l.b16 %v7013
        %v7366 = vunpack.c.h.b16 %v7013
        %v7367 = vunpack.c.l.b16 %v7014
        %v7368 = vunpack.c.h.b16 %v7014
        %v7369 = vunpack.c.l.b16 %v7015
        %v7370 = vunpack.c.h.b16 %v7015
        %v7371 = vunpack.c.l.b16 %v7016
        %v7372 = vunpack.c.h.b16 %v7016
        %v7373 = vunpack.c.l.b16 %v7017
        %v7374 = vunpack.c.h.b16 %v7017
        %v7375 = vunpack.c.l.b16 %v7018
        %v7376 = vunpack.c.h.b16 %v7018
        %v7377 = vunpack.c.l.b16 %v7019
        %v7378 = vunpack.c.h.b16 %v7019
        %v7379 = vunpack.c.l.b16 %v7020
        %v7380 = vunpack.c.h.b16 %v7020
        %v7381 = vunpack.c.l.b16 %v7021
        %v7382 = vunpack.c.h.b16 %v7021
        %v7383 = vunpack.c.l.b16 %v7022
        %v7384 = vunpack.c.h.b16 %v7022
        %v7385 = vunpack.c.l.b16 %v7023
        %v7386 = vunpack.c.h.b16 %v7023
        %v7387 = vunpack.c.l.b16 %v7024
        %v7388 = vunpack.c.h.b16 %v7024
        %v7389 = vunpack.c.l.b16 %v7025
        %v7390 = vunpack.c.h.b16 %v7025
        %v7391 = vunpack.c.l.b16 %v7026
        %v7392 = vunpack.c.h.b16 %v7026
        %v7393 = vunpack.c.l.b16 %v7027
        %v7394 = vunpack.c.h.b16 %v7027
        %v7395 = vunpack.c.l.b16 %v7028
        %v7396 = vunpack.c.h.b16 %v7028
        %v7397 = vunpack.c.l.b16 %v7029
        %v7398 = vunpack.c.h.b16 %v7029
        %v7399 = vunpack.c.l.b16 %v7030
        %v7400 = vunpack.c.h.b16 %v7030
        %v7401 = vunpack.c.l.b16 %v7031
        %v7402 = vunpack.c.h.b16 %v7031
        %v7403 = vunpack.c.l.b16 %v7032
        %v7404 = vunpack.c.h.b16 %v7032
        %v7405 = vunpack.c.l.b16 %v7033
        %v7406 = vunpack.c.h.b16 %v7033
        %v7407 = vunpack.c.l.b16 %v7034
        %v7408 = vunpack.c.h.b16 %v7034
        %v7409 = vunpack.c.l.b16 %v7035
        %v7410 = vunpack.c.h.b16 %v7035
        %v7411 = vunpack.c.l.b16 %v7036
        %v7412 = vunpack.c.h.b16 %v7036
        %v7413 = vunpack.c.l.b16 %v7037
        %v7414 = vunpack.c.h.b16 %v7037
        %v7415 = vunpack.c.l.b16 %v7038
        %v7416 = vunpack.c.h.b16 %v7038
        %v7417 = vunpack.c.l.b16 %v7039
        %v7418 = vunpack.c.h.b16 %v7039
        %v7419 = vunpack.c.l.b16 %v7040
        %v7420 = vunpack.c.h.b16 %v7040
        %v7421 = vunpack.c.l.b16 %v7041
        %v7422 = vunpack.c.h.b16 %v7041
        %v7423 = vunpack.c.l.b16 %v7042
        %v7424 = vunpack.c.h.b16 %v7042
        %v7425 = vunpack.c.l.b16 %v7043
        %v7426 = vunpack.c.h.b16 %v7043
        %v7427 = vunpack.c.l.b16 %v7044
        %v7428 = vunpack.c.h.b16 %v7044
        %v7429 = vunpack.c.l.b16 %v7045
        %v7430 = vunpack.c.h.b16 %v7045
        %v7431 = vunpack.c.l.b16 %v7046
        %v7432 = vunpack.c.h.b16 %v7046
        %v7433 = vunpack.c.l.b16 %v7047
        %v7434 = vunpack.c.h.b16 %v7047
        %v7435 = vunpack.c.l.b16 %v7048
        %v7436 = vunpack.c.h.b16 %v7048
        %v7437 = vunpack.c.l.b16 %v7049
        %v7438 = vunpack.c.h.b16 %v7049
        %v7439 = vunpack.c.l.b16 %v7050
        %v7440 = vunpack.c.h.b16 %v7050
        %v7441 = vunpack.c.l.b16 %v7051
        %v7442 = vunpack.c.h.b16 %v7051
        %v7443 = vunpack.c.l.b16 %v7052
        %v7444 = vunpack.c.h.b16 %v7052
        %v7445 = vunpack.c.l.b16 %v7053
        %v7446 = vunpack.c.h.b16 %v7053
        %v7447 = vunpack.c.l.b16 %v7054
        %v7448 = vunpack.c.h.b16 %v7054
        %v7449 = vunpack.c.l.b16 %v7055
        %v7450 = vunpack.c.h.b16 %v7055
        %v7451 = vunpack.c.l.b16 %v7056
        %v7452 = vunpack.c.h.b16 %v7056
        %v7453 = vunpack.c.l.b16 %v7057
        %v7454 = vunpack.c.h.b16 %v7057
        %v7455 = vunpack.c.l.b16 %v7058
        %v7456 = vunpack.c.h.b16 %v7058
        %v7457 = vunpack.c.l.b16 %v7059
        %v7458 = vunpack.c.h.b16 %v7059
        %v7459 = vunpack.c.l.b16 %v7060
        %v7460 = vunpack.c.h.b16 %v7060
        %v7461 = vunpack.c.l.b16 %v7061
        %v7462 = vunpack.c.h.b16 %v7061
        %v7463 = vunpack.c.l.b16 %v7062
        %v7464 = vunpack.c.h.b16 %v7062
        %v7465 = vunpack.c.l.b16 %v7063
        %v7466 = vunpack.c.h.b16 %v7063
        %v7467 = vunpack.c.l.b16 %v7064
        %v7468 = vunpack.c.h.b16 %v7064
        %v7469 = vunpack.c.l.b16 %v7065
        %v7470 = vunpack.c.h.b16 %v7065
        %v7471 = vunpack.c.l.b16 %v7066
        %v7472 = vunpack.c.h.b16 %v7066
        %v7473 = vpack.c.b16 %v7221, %v7217
        %v7474 = vpack.c.b16 %v7222, %v7218
        %v7475 = vpack.c.b16 %v7223, %v7219
        %v7476 = vpack.c.b16 %v7224, %v7220
        %v7477 = vpack.c.b16 %v7229, %v7225
        %v7478 = vpack.c.b16 %v7230, %v7226
        %v7479 = vpack.c.b16 %v7231, %v7227
        %v7480 = vpack.c.b16 %v7232, %v7228
        %v7481 = vpack.c.b16 %v7237, %v7233
        %v7482 = vpack.c.b16 %v7238, %v7234
        %v7483 = vpack.c.b16 %v7239, %v7235
        %v7484 = vpack.c.b16 %v7240, %v7236
        %v7485 = vpack.c.b16 %v7245, %v7241
        %v7486 = vpack.c.b16 %v7246, %v7242
        %v7487 = vpack.c.b16 %v7247, %v7243
        %v7488 = vpack.c.b16 %v7248, %v7244
        %v7489 = vpack.c.b16 %v7253, %v7249
        %v7490 = vpack.c.b16 %v7254, %v7250
        %v7491 = vpack.c.b16 %v7255, %v7251
        %v7492 = vpack.c.b16 %v7256, %v7252
        %v7493 = vpack.c.b16 %v7261, %v7257
        %v7494 = vpack.c.b16 %v7262, %v7258
        %v7495 = vpack.c.b16 %v7263, %v7259
        %v7496 = vpack.c.b16 %v7264, %v7260
        %v7497 = vpack.c.b16 %v7269, %v7265
        %v7498 = vpack.c.b16 %v7270, %v7266
        %v7499 = vpack.c.b16 %v7271, %v7267
        %v7500 = vpack.c.b16 %v7272, %v7268
        %v7501 = vpack.c.b16 %v7277, %v7273
        %v7502 = vpack.c.b16 %v7278, %v7274
        %v7503 = vpack.c.b16 %v7279, %v7275
        %v7504 = vpack.c.b16 %v7280, %v7276
        %v7505 = vpack.c.b16 %v7285, %v7281
        %v7506 = vpack.c.b16 %v7286, %v7282
        %v7507 = vpack.c.b16 %v7287, %v7283
        %v7508 = vpack.c.b16 %v7288, %v7284
        %v7509 = vpack.c.b16 %v7293, %v7289
        %v7510 = vpack.c.b16 %v7294, %v7290
        %v7511 = vpack.c.b16 %v7295, %v7291
        %v7512 = vpack.c.b16 %v7296, %v7292
        %v7513 = vpack.c.b16 %v7301, %v7297
        %v7514 = vpack.c.b16 %v7302, %v7298
        %v7515 = vpack.c.b16 %v7303, %v7299
        %v7516 = vpack.c.b16 %v7304, %v7300
        %v7517 = vpack.c.b16 %v7309, %v7305
        %v7518 = vpack.c.b16 %v7310, %v7306
        %v7519 = vpack.c.b16 %v7311, %v7307
        %v7520 = vpack.c.b16 %v7312, %v7308
        %v7521 = vpack.c.b16 %v7317, %v7313
        %v7522 = vpack.c.b16 %v7318, %v7314
        %v7523 = vpack.c.b16 %v7319, %v7315
        %v7524 = vpack.c.b16 %v7320, %v7316
        %v7525 = vpack.c.b16 %v7325, %v7321
        %v7526 = vpack.c.b16 %v7326, %v7322
        %v7527 = vpack.c.b16 %v7327, %v7323
        %v7528 = vpack.c.b16 %v7328, %v7324
        %v7529 = vpack.c.b16 %v7333, %v7329
        %v7530 = vpack.c.b16 %v7334, %v7330
        %v7531 = vpack.c.b16 %v7335, %v7331
        %v7532 = vpack.c.b16 %v7336, %v7332
        %v7533 = vpack.c.b16 %v7341, %v7337
        %v7534 = vpack.c.b16 %v7342, %v7338
        %v7535 = vpack.c.b16 %v7343, %v7339
        %v7536 = vpack.c.b16 %v7344, %v7340
        %v7537 = vpack.c.b16 %v7349, %v7345
        %v7538 = vpack.c.b16 %v7350, %v7346
        %v7539 = vpack.c.b16 %v7351, %v7347
        %v7540 = vpack.c.b16 %v7352, %v7348
        %v7541 = vpack.c.b16 %v7357, %v7353
        %v7542 = vpack.c.b16 %v7358, %v7354
        %v7543 = vpack.c.b16 %v7359, %v7355
        %v7544 = vpack.c.b16 %v7360, %v7356
        %v7545 = vpack.c.b16 %v7365, %v7361
        %v7546 = vpack.c.b16 %v7366, %v7362
        %v7547 = vpack.c.b16 %v7367, %v7363
        %v7548 = vpack.c.b16 %v7368, %v7364
        %v7549 = vpack.c.b16 %v7373, %v7369
        %v7550 = vpack.c.b16 %v7374, %v7370
        %v7551 = vpack.c.b16 %v7375, %v7371
        %v7552 = vpack.c.b16 %v7376, %v7372
        %v7553 = vpack.c.b16 %v7381, %v7377
        %v7554 = vpack.c.b16 %v7382, %v7378
        %v7555 = vpack.c.b16 %v7383, %v7379
        %v7556 = vpack.c.b16 %v7384, %v7380
        %v7557 = vpack.c.b16 %v7389, %v7385
        %v7558 = vpack.c.b16 %v7390, %v7386
        %v7559 = vpack.c.b16 %v7391, %v7387
        %v7560 = vpack.c.b16 %v7392, %v7388
        %v7561 = vpack.c.b16 %v7397, %v7393
        %v7562 = vpack.c.b16 %v7398, %v7394
        %v7563 = vpack.c.b16 %v7399, %v7395
        %v7564 = vpack.c.b16 %v7400, %v7396
        %v7565 = vpack.c.b16 %v7405, %v7401
        %v7566 = vpack.c.b16 %v7406, %v7402
        %v7567 = vpack.c.b16 %v7407, %v7403
        %v7568 = vpack.c.b16 %v7408, %v7404
        %v7569 = vpack.c.b16 %v7413, %v7409
        %v7570 = vpack.c.b16 %v7414, %v7410
        %v7571 = vpack.c.b16 %v7415, %v7411
        %v7572 = vpack.c.b16 %v7416, %v7412
        %v7573 = vpack.c.b16 %v7421, %v7417
        %v7574 = vpack.c.b16 %v7422, %v7418
        %v7575 = vpack.c.b16 %v7423, %v7419
        %v7576 = vpack.c.b16 %v7424, %v7420
        %v7577 = vpack.c.b16 %v7429, %v7425
        %v7578 = vpack.c.b16 %v7430, %v7426
        %v7579 = vpack.c.b16 %v7431, %v7427
        %v7580 = vpack.c.b16 %v7432, %v7428
        %v7581 = vpack.c.b16 %v7437, %v7433
        %v7582 = vpack.c.b16 %v7438, %v7434
        %v7583 = vpack.c.b16 %v7439, %v7435
        %v7584 = vpack.c.b16 %v7440, %v7436
        %v7585 = vpack.c.b16 %v7445, %v7441
        %v7586 = vpack.c.b16 %v7446, %v7442
        %v7587 = vpack.c.b16 %v7447, %v7443
        %v7588 = vpack.c.b16 %v7448, %v7444
        %v7589 = vpack.c.b16 %v7453, %v7449
        %v7590 = vpack.c.b16 %v7454, %v7450
        %v7591 = vpack.c.b16 %v7455, %v7451
        %v7592 = vpack.c.b16 %v7456, %v7452
        %v7593 = vpack.c.b16 %v7461, %v7457
        %v7594 = vpack.c.b16 %v7462, %v7458
        %v7595 = vpack.c.b16 %v7463, %v7459
        %v7596 = vpack.c.b16 %v7464, %v7460
        %v7597 = vpack.c.b16 %v7469, %v7465
        %v7598 = vpack.c.b16 %v7470, %v7466
        %v7599 = vpack.c.b16 %v7471, %v7467
        %v7600 = vpack.c.b16 %v7472, %v7468
        %7729 = vmatprep.subr.bf16.mxu0 %v7474
        %7730 = vmatpush1.bf16.msra.mxu0 %v7473
        %7731 = vmatprep.subr.bf16.mxu0 %v7478
        %7732 = vmatpush1.bf16.msra.mxu0 %v7477
        %7733 = vmatprep.subr.bf16.mxu0 %v7482
        %7734 = vmatpush1.bf16.msra.mxu0 %v7481
        %7735 = vmatprep.subr.bf16.mxu0 %v7486
        %7736 = vmatpush1.bf16.msra.mxu0 %v7485
        %7737 = vmatprep.subr.bf16.mxu0 %v7490
        %7738 = vmatpush1.bf16.msra.mxu0 %v7489
        %7739 = vmatprep.subr.bf16.mxu0 %v7494
        %7740 = vmatpush1.bf16.msra.mxu0 %v7493
        %7741 = vmatprep.subr.bf16.mxu0 %v7498
        %7742 = vmatpush1.bf16.msra.mxu0 %v7497
        %7743 = vmatprep.subr.bf16.mxu0 %v7502
        %7744 = vmatpush1.bf16.msra.mxu0 %v7501
        %7745 = vmatprep.subr.bf16.mxu0 %v7506
        %7746 = vmatpush1.bf16.msra.mxu0 %v7505
        %7747 = vmatprep.subr.bf16.mxu0 %v7510
        %7748 = vmatpush1.bf16.msra.mxu0 %v7509
        %7749 = vmatprep.subr.bf16.mxu0 %v7514
        %7750 = vmatpush1.bf16.msra.mxu0 %v7513
        %7751 = vmatprep.subr.bf16.mxu0 %v7518
        %7752 = vmatpush1.bf16.msra.mxu0 %v7517
        %7753 = vmatprep.subr.bf16.mxu0 %v7522
        %7754 = vmatpush1.bf16.msra.mxu0 %v7521
        %7755 = vmatprep.subr.bf16.mxu0 %v7526
        %7756 = vmatpush1.bf16.msra.mxu0 %v7525
        %7757 = vmatprep.subr.bf16.mxu0 %v7530
        %7758 = vmatpush1.bf16.msra.mxu0 %v7529
        %7759 = vmatprep.subr.bf16.mxu0 %v7534
        %7760 = vmatpush1.bf16.msra.mxu0 %v7533
        %7761 = vmatprep.mubr.bf16.mxu0 %v6936
        %7762 = vmatmul.mubr.bf16.gmra.mrb[0].mxu0 %v6935
        %v7763 = vpop.f32.mrb[0].mxu0
        %v7764 = vadd.f32 %v7072, %v7763
        %v7765 = vpop.f32.mrb[0].mxu0
        %v7766 = vadd.f32 %v7076, %v7765
        %v7767 = vpop.f32.mrb[0].mxu0
        %v7768 = vadd.f32 %v7072, %v7767
        %v7769 = vpop.f32.mrb[0].mxu0
        %v7770 = vadd.f32 %v7076, %v7769
        %7771 = vdwg.mxu0
        %7772 = vmatprep.subr.bf16.mxu0 %v7538
        %7773 = vmatpush1.bf16.msra.mxu0 %v7537
        %7774 = vmatprep.subr.bf16.mxu0 %v7542
        %7775 = vmatpush1.bf16.msra.mxu0 %v7541
        %7776 = vmatprep.subr.bf16.mxu0 %v7546
        %7777 = vmatpush1.bf16.msra.mxu0 %v7545
        %7778 = vmatprep.subr.bf16.mxu0 %v7550
        %7779 = vmatpush1.bf16.msra.mxu0 %v7549
        %7780 = vmatprep.subr.bf16.mxu0 %v7554
        %7781 = vmatpush1.bf16.msra.mxu0 %v7553
        %7782 = vmatprep.subr.bf16.mxu0 %v7558
        %7783 = vmatpush1.bf16.msra.mxu0 %v7557
        %7784 = vmatprep.subr.bf16.mxu0 %v7562
        %7785 = vmatpush1.bf16.msra.mxu0 %v7561
        %7786 = vmatprep.subr.bf16.mxu0 %v7566
        %7787 = vmatpush1.bf16.msra.mxu0 %v7565
        %7788 = vmatprep.subr.bf16.mxu0 %v7570
        %7789 = vmatpush1.bf16.msra.mxu0 %v7569
        %7790 = vmatprep.subr.bf16.mxu0 %v7574
        %7791 = vmatpush1.bf16.msra.mxu0 %v7573
        %7792 = vmatprep.subr.bf16.mxu0 %v7578
        %7793 = vmatpush1.bf16.msra.mxu0 %v7577
        %7794 = vmatprep.subr.bf16.mxu0 %v7582
        %7795 = vmatpush1.bf16.msra.mxu0 %v7581
        %7796 = vmatprep.subr.bf16.mxu0 %v7586
        %7797 = vmatpush1.bf16.msra.mxu0 %v7585
        %7798 = vmatprep.subr.bf16.mxu0 %v7590
        %7799 = vmatpush1.bf16.msra.mxu0 %v7589
        %7800 = vmatprep.subr.bf16.mxu0 %v7594
        %7801 = vmatpush1.bf16.msra.mxu0 %v7593
        %7802 = vmatprep.subr.bf16.mxu0 %v7598
        %7803 = vmatpush1.bf16.msra.mxu0 %v7597
        %7804 = vmatprep.mubr.bf16.mxu0 %v6938
        %7805 = vmatmul.mubr.bf16.gmra.mrb[0].mxu0 %v6937
        %v7806 = vpop.f32.mrb[0].mxu0
        %v7807 = vadd.f32 %v7764, %v7806
        %v7808 = vpop.f32.mrb[0].mxu0
        %v7809 = vadd.f32 %v7766, %v7808
        %v7810 = vpop.f32.mrb[0].mxu0
        %v7811 = vadd.f32 %v7768, %v7810
        %v7812 = vpop.f32.mrb[0].mxu0
        %v7813 = vadd.f32 %v7770, %v7812
        %7814 = vdwg.mxu0
        %7815 = vmatprep.subr.bf16.mxu0 %v7476
        %7816 = vmatpush1.bf16.msra.mxu0 %v7475
        %7817 = vmatprep.subr.bf16.mxu0 %v7480
        %7818 = vmatpush1.bf16.msra.mxu0 %v7479
        %7819 = vmatprep.subr.bf16.mxu0 %v7484
        %7820 = vmatpush1.bf16.msra.mxu0 %v7483
        %7821 = vmatprep.subr.bf16.mxu0 %v7488
        %7822 = vmatpush1.bf16.msra.mxu0 %v7487
        %7823 = vmatprep.subr.bf16.mxu0 %v7492
        %7824 = vmatpush1.bf16.msra.mxu0 %v7491
        %7825 = vmatprep.subr.bf16.mxu0 %v7496
        %7826 = vmatpush1.bf16.msra.mxu0 %v7495
        %7827 = vmatprep.subr.bf16.mxu0 %v7500
        %7828 = vmatpush1.bf16.msra.mxu0 %v7499
        %7829 = vmatprep.subr.bf16.mxu0 %v7504
        %7830 = vmatpush1.bf16.msra.mxu0 %v7503
        %7831 = vmatprep.subr.bf16.mxu0 %v7508
        %7832 = vmatpush1.bf16.msra.mxu0 %v7507
        %7833 = vmatprep.subr.bf16.mxu0 %v7512
        %7834 = vmatpush1.bf16.msra.mxu0 %v7511
        %7835 = vmatprep.subr.bf16.mxu0 %v7516
        %7836 = vmatpush1.bf16.msra.mxu0 %v7515
        %7837 = vmatprep.subr.bf16.mxu0 %v7520
        %7838 = vmatpush1.bf16.msra.mxu0 %v7519
        %7839 = vmatprep.subr.bf16.mxu0 %v7524
        %7840 = vmatpush1.bf16.msra.mxu0 %v7523
        %7841 = vmatprep.subr.bf16.mxu0 %v7528
        %7842 = vmatpush1.bf16.msra.mxu0 %v7527
        %7843 = vmatprep.subr.bf16.mxu0 %v7532
        %7844 = vmatpush1.bf16.msra.mxu0 %v7531
        %7845 = vmatprep.subr.bf16.mxu0 %v7536
        %7846 = vmatpush1.bf16.msra.mxu0 %v7535
        %7847 = vmatprep.mubr.bf16.mxu0 %v6936
        %7848 = vmatmul.mubr.bf16.gmra.mrb[0].mxu0 %v6935
        %v7849 = vpop.f32.mrb[0].mxu0
        %v7850 = vadd.f32 %v7080, %v7849
        %v7851 = vpop.f32.mrb[0].mxu0
        %v7852 = vadd.f32 %v7084, %v7851
        %v7853 = vpop.f32.mrb[0].mxu0
        %v7854 = vadd.f32 %v7080, %v7853
        %v7855 = vpop.f32.mrb[0].mxu0
        %v7856 = vadd.f32 %v7084, %v7855
        %7857 = vdwg.mxu0
        %7858 = vmatprep.subr.bf16.mxu0 %v7540
        %7859 = vmatpush1.bf16.msra.mxu0 %v7539
        %7860 = vmatprep.subr.bf16.mxu0 %v7544
        %7861 = vmatpush1.bf16.msra.mxu0 %v7543
        %7862 = vmatprep.subr.bf16.mxu0 %v7548
        %7863 = vmatpush1.bf16.msra.mxu0 %v7547
        %7864 = vmatprep.subr.bf16.mxu0 %v7552
        %7865 = vmatpush1.bf16.msra.mxu0 %v7551
        %7866 = vmatprep.subr.bf16.mxu0 %v7556
        %7867 = vmatpush1.bf16.msra.mxu0 %v7555
        %7868 = vmatprep.subr.bf16.mxu0 %v7560
        %7869 = vmatpush1.bf16.msra.mxu0 %v7559
        %7870 = vmatprep.subr.bf16.mxu0 %v7564
        %7871 = vmatpush1.bf16.msra.mxu0 %v7563
        %7872 = vmatprep.subr.bf16.mxu0 %v7568
        %7873 = vmatpush1.bf16.msra.mxu0 %v7567
        %7874 = vmatprep.subr.bf16.mxu0 %v7572
        %7875 = vmatpush1.bf16.msra.mxu0 %v7571
        %7876 = vmatprep.subr.bf16.mxu0 %v7576
        %7877 = vmatpush1.bf16.msra.mxu0 %v7575
        %7878 = vmatprep.subr.bf16.mxu0 %v7580
        %7879 = vmatpush1.bf16.msra.mxu0 %v7579
        %7880 = vmatprep.subr.bf16.mxu0 %v7584
        %7881 = vmatpush1.bf16.msra.mxu0 %v7583
        %7882 = vmatprep.subr.bf16.mxu0 %v7588
        %7883 = vmatpush1.bf16.msra.mxu0 %v7587
        %7884 = vmatprep.subr.bf16.mxu0 %v7592
        %7885 = vmatpush1.bf16.msra.mxu0 %v7591
        %7886 = vmatprep.subr.bf16.mxu0 %v7596
        %7887 = vmatpush1.bf16.msra.mxu0 %v7595
        %7888 = vmatprep.subr.bf16.mxu0 %v7600
        %7889 = vmatpush1.bf16.msra.mxu0 %v7599
        %7890 = vmatprep.mubr.bf16.mxu0 %v6938
        %7891 = vmatmul.mubr.bf16.gmra.mrb[0].mxu0 %v6937
        %v7892 = vpop.f32.mrb[0].mxu0
        %v7893 = vadd.f32 %v7850, %v7892
        %v7894 = vpop.f32.mrb[0].mxu0
        %v7895 = vadd.f32 %v7852, %v7894
        %v7896 = vpop.f32.mrb[0].mxu0
        %v7897 = vadd.f32 %v7854, %v7896
        %v7898 = vpop.f32.mrb[0].mxu0
        %v7899 = vadd.f32 %v7856, %v7898
        %7900 = vdwg.mxu0
        %v7901 = vadd.f32 %v1373, %v7807
        %v7902 = vadd.f32 %v1374, %v7809
        %v7903 = vadd.f32 %v1375, %v7893
        %v7904 = vadd.f32 %v1376, %v7895
        %v7905 = vadd.f32 %v1377, %v7811
        %v7906 = vadd.f32 %v1378, %v7813
        %v7907 = vadd.f32 %v1379, %v7897
        %v7908 = vadd.f32 %v1380, %v7899
        %v7909 = vld [vmem:[%s884] sm:$0xf]
        %v7910 = vld [vmem:[%s893] sm:$0xf]
        %v7911 = vadd.f32 %v7901, %v7902
        %v7912 = vadd.f32 %v7911, %v7903
        %v7913 = vadd.f32 %v7912, %v7904
        %7914 = vadd.xlane.f32.xlu0 %v7913
        %v7915 = vpop.xlane.xlu0 %7914
        %v7916 = vadd.f32 %v7905, %v7906
        %v7917 = vadd.f32 %v7916, %v7907
        %v7918 = vadd.f32 %v7917, %v7908
        %7919 = vadd.xlane.f32.xlu0 %v7918
        %v7920 = vpop.xlane.xlu0 %7919
        %v7921 = vrcp.pop 512.0
        %v7922 = vmul.f32 %v7915, %v7921
        %v7923 = vmul.f32 %v7920, %v7921
        %v7924 = vsub.f32 %v7901, %v7922
        %v7925 = vsub.f32 %v7902, %v7922
        %v7926 = vsub.f32 %v7903, %v7922
        %v7927 = vsub.f32 %v7904, %v7922
        %v7928 = vsub.f32 %v7905, %v7923
        %v7929 = vsub.f32 %v7906, %v7923
        %v7930 = vsub.f32 %v7907, %v7923
        %v7931 = vsub.f32 %v7908, %v7923
        %v7932 = vmul.f32 %v7924, %v7924
        %v7933 = vmul.f32 %v7925, %v7925
        %v7934 = vmul.f32 %v7926, %v7926
        %v7935 = vmul.f32 %v7927, %v7927
        %v7936 = vmul.f32 %v7928, %v7928
        %v7937 = vmul.f32 %v7929, %v7929
        %v7938 = vmul.f32 %v7930, %v7930
        %v7939 = vmul.f32 %v7931, %v7931
        %v7940 = vadd.f32 %v7932, %v7933
        %v7941 = vadd.f32 %v7940, %v7934
        %v7942 = vadd.f32 %v7941, %v7935
        %7943 = vadd.xlane.f32.xlu0 %v7942
        %v7944 = vpop.xlane.xlu0 %7943
        %v7945 = vadd.f32 %v7936, %v7937
        %v7946 = vadd.f32 %v7945, %v7938
        %v7947 = vadd.f32 %v7946, %v7939
        %7948 = vadd.xlane.f32.xlu0 %v7947
        %v7949 = vpop.xlane.xlu0 %7948
        %v7950 = vmul.f32 %v7944, %v7921
        %v7951 = vmul.f32 %v7949, %v7921
        %v7952 = vadd.f32 %v7950, 1e-05
        %v7953 = vadd.f32 %v7951, 1e-05
        %v7954 = vrsqrt.pop %v7952
        %v7955 = vrsqrt.pop %v7953
        %v7956 = vmul.f32 %v7924, %v7954
        %v7957 = vmul.f32 %v7925, %v7954
        %v7958 = vmul.f32 %v7926, %v7954
        %v7959 = vmul.f32 %v7927, %v7954
        %v7960 = vmul.f32 %v7928, %v7955
        %v7961 = vmul.f32 %v7929, %v7955
        %v7962 = vmul.f32 %v7930, %v7955
        %v7963 = vmul.f32 %v7931, %v7955
        %v7965 = vlaneseq
        %v7966 = vshrl.u32 %v7965, 7
        %v7967 = vsub.s32 0, %v7966
        %v7968 = vrot.slane %v7909, %v7967
        %v7969 = vlaneseq
        %v7970 = vshrl.u32 %v7969, 7
        %v7971 = vsub.s32 1, %v7970
        %v7972 = vrot.slane %v7909, %v7971
        %v7973 = vlaneseq
        %v7974 = vshrl.u32 %v7973, 7
        %v7975 = vsub.s32 2, %v7974
        %v7976 = vrot.slane %v7909, %v7975
        %v7977 = vlaneseq
        %v7978 = vshrl.u32 %v7977, 7
        %v7979 = vsub.s32 3, %v7978
        %v7980 = vrot.slane %v7909, %v7979
        %v7985 = vmul.f32 %v7956, %v7968
        %v7986 = vmul.f32 %v7957, %v7972
        %v7987 = vmul.f32 %v7958, %v7976
        %v7988 = vmul.f32 %v7959, %v7980
        %v7989 = vmul.f32 %v7960, %v7968
        %v7990 = vmul.f32 %v7961, %v7972
        %v7991 = vmul.f32 %v7962, %v7976
        %v7992 = vmul.f32 %v7963, %v7980
        %v7994 = vlaneseq
        %v7995 = vshrl.u32 %v7994, 7
        %v7996 = vsub.s32 0, %v7995
        %v7997 = vrot.slane %v7910, %v7996
        %v7998 = vlaneseq
        %v7999 = vshrl.u32 %v7998, 7
        %v8000 = vsub.s32 1, %v7999
        %v8001 = vrot.slane %v7910, %v8000
        %v8002 = vlaneseq
        %v8003 = vshrl.u32 %v8002, 7
        %v8004 = vsub.s32 2, %v8003
        %v8005 = vrot.slane %v7910, %v8004
        %v8006 = vlaneseq
        %v8007 = vshrl.u32 %v8006, 7
        %v8008 = vsub.s32 3, %v8007
        %v8009 = vrot.slane %v7910, %v8008
        %v8014 = vadd.f32 %v7985, %v7997
        %v8015 = vadd.f32 %v7986, %v8001
        %v8016 = vadd.f32 %v7987, %v8005
        %v8017 = vadd.f32 %v7988, %v8009
        %v8018 = vadd.f32 %v7989, %v7997
        %v8019 = vadd.f32 %v7990, %v8001
        %v8020 = vadd.f32 %v7991, %v8005
        %v8021 = vadd.f32 %v7992, %v8009
        %v8022 = vpack.c.bf16 %v8018, %v8014
        %v8023 = vpack.c.bf16 %v8019, %v8015
        %v8024 = vpack.c.bf16 %v8020, %v8016
        %v8025 = vpack.c.bf16 %v8021, %v8017
        %v8026 = vld [vmem:[%s902] sm:$0xff]
        %v8027 = vld [vmem:[%s902 + $0x8] sm:$0xff]
        %v8028 = vld [vmem:[%s902 + $0x10] sm:$0xff]
        %v8029 = vld [vmem:[%s902 + $0x18] sm:$0xff]
        %v8030 = vld [vmem:[%s902 + $0x20] sm:$0xff]
        %v8031 = vld [vmem:[%s902 + $0x28] sm:$0xff]
        %v8032 = vld [vmem:[%s902 + $0x30] sm:$0xff]
        %v8033 = vld [vmem:[%s902 + $0x38] sm:$0xff]
        %v8034 = vld [vmem:[%s902 + $0x40] sm:$0xff]
        %v8035 = vld [vmem:[%s902 + $0x48] sm:$0xff]
        %v8036 = vld [vmem:[%s902 + $0x50] sm:$0xff]
        %v8037 = vld [vmem:[%s902 + $0x58] sm:$0xff]
        %v8038 = vld [vmem:[%s902 + $0x60] sm:$0xff]
        %v8039 = vld [vmem:[%s902 + $0x68] sm:$0xff]
        %v8040 = vld [vmem:[%s902 + $0x70] sm:$0xff]
        %v8041 = vld [vmem:[%s902 + $0x78] sm:$0xff]
        %v8042 = vld [vmem:[%s902 + $0x80] sm:$0xff]
        %v8043 = vld [vmem:[%s902 + $0x88] sm:$0xff]
        %v8044 = vld [vmem:[%s902 + $0x90] sm:$0xff]
        %v8045 = vld [vmem:[%s902 + $0x98] sm:$0xff]
        %v8046 = vld [vmem:[%s902 + $0xa0] sm:$0xff]
        %v8047 = vld [vmem:[%s902 + $0xa8] sm:$0xff]
        %v8048 = vld [vmem:[%s902 + $0xb0] sm:$0xff]
        %v8049 = vld [vmem:[%s902 + $0xb8] sm:$0xff]
        %v8050 = vld [vmem:[%s902 + $0xc0] sm:$0xff]
        %v8051 = vld [vmem:[%s902 + $0xc8] sm:$0xff]
        %v8052 = vld [vmem:[%s902 + $0xd0] sm:$0xff]
        %v8053 = vld [vmem:[%s902 + $0xd8] sm:$0xff]
        %v8054 = vld [vmem:[%s902 + $0xe0] sm:$0xff]
        %v8055 = vld [vmem:[%s902 + $0xe8] sm:$0xff]
        %v8056 = vld [vmem:[%s902 + $0xf0] sm:$0xff]
        %v8057 = vld [vmem:[%s902 + $0xf8] sm:$0xff]
        %v8058 = vld [vmem:[%s902 + $0x100] sm:$0xff]
        %v8059 = vld [vmem:[%s902 + $0x108] sm:$0xff]
        %v8060 = vld [vmem:[%s902 + $0x110] sm:$0xff]
        %v8061 = vld [vmem:[%s902 + $0x118] sm:$0xff]
        %v8062 = vld [vmem:[%s902 + $0x120] sm:$0xff]
        %v8063 = vld [vmem:[%s902 + $0x128] sm:$0xff]
        %v8064 = vld [vmem:[%s902 + $0x130] sm:$0xff]
        %v8065 = vld [vmem:[%s902 + $0x138] sm:$0xff]
        %v8066 = vld [vmem:[%s902 + $0x140] sm:$0xff]
        %v8067 = vld [vmem:[%s902 + $0x148] sm:$0xff]
        %v8068 = vld [vmem:[%s902 + $0x150] sm:$0xff]
        %v8069 = vld [vmem:[%s902 + $0x158] sm:$0xff]
        %v8070 = vld [vmem:[%s902 + $0x160] sm:$0xff]
        %v8071 = vld [vmem:[%s902 + $0x168] sm:$0xff]
        %v8072 = vld [vmem:[%s902 + $0x170] sm:$0xff]
        %v8073 = vld [vmem:[%s902 + $0x178] sm:$0xff]
        %v8074 = vld [vmem:[%s902 + $0x180] sm:$0xff]
        %v8075 = vld [vmem:[%s902 + $0x188] sm:$0xff]
        %v8076 = vld [vmem:[%s902 + $0x190] sm:$0xff]
        %v8077 = vld [vmem:[%s902 + $0x198] sm:$0xff]
        %v8078 = vld [vmem:[%s902 + $0x1a0] sm:$0xff]
        %v8079 = vld [vmem:[%s902 + $0x1a8] sm:$0xff]
        %v8080 = vld [vmem:[%s902 + $0x1b0] sm:$0xff]
        %v8081 = vld [vmem:[%s902 + $0x1b8] sm:$0xff]
        %v8082 = vld [vmem:[%s902 + $0x1c0] sm:$0xff]
        %v8083 = vld [vmem:[%s902 + $0x1c8] sm:$0xff]
        %v8084 = vld [vmem:[%s902 + $0x1d0] sm:$0xff]
        %v8085 = vld [vmem:[%s902 + $0x1d8] sm:$0xff]
        %v8086 = vld [vmem:[%s902 + $0x1e0] sm:$0xff]
        %v8087 = vld [vmem:[%s902 + $0x1e8] sm:$0xff]
        %v8088 = vld [vmem:[%s902 + $0x1f0] sm:$0xff]
        %v8089 = vld [vmem:[%s902 + $0x1f8] sm:$0xff]
        %v8090 = vld [vmem:[%s911] sm:$0x3]
        %v8092 = vlaneseq
        %v8093 = vshrl.u32 %v8092, 7
        %v8094 = vsub.s32 0, %v8093
        %v8095 = vrot.slane %v8090, %v8094
        %v8096 = vlaneseq
        %v8097 = vshrl.u32 %v8096, 7
        %v8098 = vsub.s32 1, %v8097
        %v8099 = vrot.slane %v8090, %v8098
        %v8166 = vunpack.c.l.b16 %v8026
        %v8167 = vunpack.c.h.b16 %v8026
        %v8168 = vunpack.c.l.b16 %v8027
        %v8169 = vunpack.c.h.b16 %v8027
        %v8170 = vunpack.c.l.b16 %v8028
        %v8171 = vunpack.c.h.b16 %v8028
        %v8172 = vunpack.c.l.b16 %v8029
        %v8173 = vunpack.c.h.b16 %v8029
        %v8174 = vunpack.c.l.b16 %v8030
        %v8175 = vunpack.c.h.b16 %v8030
        %v8176 = vunpack.c.l.b16 %v8031
        %v8177 = vunpack.c.h.b16 %v8031
        %v8178 = vunpack.c.l.b16 %v8032
        %v8179 = vunpack.c.h.b16 %v8032
        %v8180 = vunpack.c.l.b16 %v8033
        %v8181 = vunpack.c.h.b16 %v8033
        %v8182 = vunpack.c.l.b16 %v8034
        %v8183 = vunpack.c.h.b16 %v8034
        %v8184 = vunpack.c.l.b16 %v8035
        %v8185 = vunpack.c.h.b16 %v8035
        %v8186 = vunpack.c.l.b16 %v8036
        %v8187 = vunpack.c.h.b16 %v8036
        %v8188 = vunpack.c.l.b16 %v8037
        %v8189 = vunpack.c.h.b16 %v8037
        %v8190 = vunpack.c.l.b16 %v8038
        %v8191 = vunpack.c.h.b16 %v8038
        %v8192 = vunpack.c.l.b16 %v8039
        %v8193 = vunpack.c.h.b16 %v8039
        %v8194 = vunpack.c.l.b16 %v8040
        %v8195 = vunpack.c.h.b16 %v8040
        %v8196 = vunpack.c.l.b16 %v8041
        %v8197 = vunpack.c.h.b16 %v8041
        %v8198 = vunpack.c.l.b16 %v8042
        %v8199 = vunpack.c.h.b16 %v8042
        %v8200 = vunpack.c.l.b16 %v8043
        %v8201 = vunpack.c.h.b16 %v8043
        %v8202 = vunpack.c.l.b16 %v8044
        %v8203 = vunpack.c.h.b16 %v8044
        %v8204 = vunpack.c.l.b16 %v8045
        %v8205 = vunpack.c.h.b16 %v8045
        %v8206 = vunpack.c.l.b16 %v8046
        %v8207 = vunpack.c.h.b16 %v8046
        %v8208 = vunpack.c.l.b16 %v8047
        %v8209 = vunpack.c.h.b16 %v8047
        %v8210 = vunpack.c.l.b16 %v8048
        %v8211 = vunpack.c.h.b16 %v8048
        %v8212 = vunpack.c.l.b16 %v8049
        %v8213 = vunpack.c.h.b16 %v8049
        %v8214 = vunpack.c.l.b16 %v8050
        %v8215 = vunpack.c.h.b16 %v8050
        %v8216 = vunpack.c.l.b16 %v8051
        %v8217 = vunpack.c.h.b16 %v8051
        %v8218 = vunpack.c.l.b16 %v8052
        %v8219 = vunpack.c.h.b16 %v8052
        %v8220 = vunpack.c.l.b16 %v8053
        %v8221 = vunpack.c.h.b16 %v8053
        %v8222 = vunpack.c.l.b16 %v8054
        %v8223 = vunpack.c.h.b16 %v8054
        %v8224 = vunpack.c.l.b16 %v8055
        %v8225 = vunpack.c.h.b16 %v8055
        %v8226 = vunpack.c.l.b16 %v8056
        %v8227 = vunpack.c.h.b16 %v8056
        %v8228 = vunpack.c.l.b16 %v8057
        %v8229 = vunpack.c.h.b16 %v8057
        %v8230 = vunpack.c.l.b16 %v8058
        %v8231 = vunpack.c.h.b16 %v8058
        %v8232 = vunpack.c.l.b16 %v8059
        %v8233 = vunpack.c.h.b16 %v8059
        %v8234 = vunpack.c.l.b16 %v8060
        %v8235 = vunpack.c.h.b16 %v8060
        %v8236 = vunpack.c.l.b16 %v8061
        %v8237 = vunpack.c.h.b16 %v8061
        %v8238 = vunpack.c.l.b16 %v8062
        %v8239 = vunpack.c.h.b16 %v8062
        %v8240 = vunpack.c.l.b16 %v8063
        %v8241 = vunpack.c.h.b16 %v8063
        %v8242 = vunpack.c.l.b16 %v8064
        %v8243 = vunpack.c.h.b16 %v8064
        %v8244 = vunpack.c.l.b16 %v8065
        %v8245 = vunpack.c.h.b16 %v8065
        %v8246 = vunpack.c.l.b16 %v8066
        %v8247 = vunpack.c.h.b16 %v8066
        %v8248 = vunpack.c.l.b16 %v8067
        %v8249 = vunpack.c.h.b16 %v8067
        %v8250 = vunpack.c.l.b16 %v8068
        %v8251 = vunpack.c.h.b16 %v8068
        %v8252 = vunpack.c.l.b16 %v8069
        %v8253 = vunpack.c.h.b16 %v8069
        %v8254 = vunpack.c.l.b16 %v8070
        %v8255 = vunpack.c.h.b16 %v8070
        %v8256 = vunpack.c.l.b16 %v8071
        %v8257 = vunpack.c.h.b16 %v8071
        %v8258 = vunpack.c.l.b16 %v8072
        %v8259 = vunpack.c.h.b16 %v8072
        %v8260 = vunpack.c.l.b16 %v8073
        %v8261 = vunpack.c.h.b16 %v8073
        %v8262 = vunpack.c.l.b16 %v8074
        %v8263 = vunpack.c.h.b16 %v8074
        %v8264 = vunpack.c.l.b16 %v8075
        %v8265 = vunpack.c.h.b16 %v8075
        %v8266 = vunpack.c.l.b16 %v8076
        %v8267 = vunpack.c.h.b16 %v8076
        %v8268 = vunpack.c.l.b16 %v8077
        %v8269 = vunpack.c.h.b16 %v8077
        %v8270 = vunpack.c.l.b16 %v8078
        %v8271 = vunpack.c.h.b16 %v8078
        %v8272 = vunpack.c.l.b16 %v8079
        %v8273 = vunpack.c.h.b16 %v8079
        %v8274 = vunpack.c.l.b16 %v8080
        %v8275 = vunpack.c.h.b16 %v8080
        %v8276 = vunpack.c.l.b16 %v8081
        %v8277 = vunpack.c.h.b16 %v8081
        %v8278 = vunpack.c.l.b16 %v8082
        %v8279 = vunpack.c.h.b16 %v8082
        %v8280 = vunpack.c.l.b16 %v8083
        %v8281 = vunpack.c.h.b16 %v8083
        %v8282 = vunpack.c.l.b16 %v8084
        %v8283 = vunpack.c.h.b16 %v8084
        %v8284 = vunpack.c.l.b16 %v8085
        %v8285 = vunpack.c.h.b16 %v8085
        %v8286 = vunpack.c.l.b16 %v8086
        %v8287 = vunpack.c.h.b16 %v8086
        %v8288 = vunpack.c.l.b16 %v8087
        %v8289 = vunpack.c.h.b16 %v8087
        %v8290 = vunpack.c.l.b16 %v8088
        %v8291 = vunpack.c.h.b16 %v8088
        %v8292 = vunpack.c.l.b16 %v8089
        %v8293 = vunpack.c.h.b16 %v8089
        %v8294 = vpack.c.b16 %v8168, %v8166
        %v8295 = vpack.c.b16 %v8169, %v8167
        %v8296 = vpack.c.b16 %v8172, %v8170
        %v8297 = vpack.c.b16 %v8173, %v8171
        %v8298 = vpack.c.b16 %v8176, %v8174
        %v8299 = vpack.c.b16 %v8177, %v8175
        %v8300 = vpack.c.b16 %v8180, %v8178
        %v8301 = vpack.c.b16 %v8181, %v8179
        %v8302 = vpack.c.b16 %v8184, %v8182
        %v8303 = vpack.c.b16 %v8185, %v8183
        %v8304 = vpack.c.b16 %v8188, %v8186
        %v8305 = vpack.c.b16 %v8189, %v8187
        %v8306 = vpack.c.b16 %v8192, %v8190
        %v8307 = vpack.c.b16 %v8193, %v8191
        %v8308 = vpack.c.b16 %v8196, %v8194
        %v8309 = vpack.c.b16 %v8197, %v8195
        %v8310 = vpack.c.b16 %v8200, %v8198
        %v8311 = vpack.c.b16 %v8201, %v8199
        %v8312 = vpack.c.b16 %v8204, %v8202
        %v8313 = vpack.c.b16 %v8205, %v8203
        %v8314 = vpack.c.b16 %v8208, %v8206
        %v8315 = vpack.c.b16 %v8209, %v8207
        %v8316 = vpack.c.b16 %v8212, %v8210
        %v8317 = vpack.c.b16 %v8213, %v8211
        %v8318 = vpack.c.b16 %v8216, %v8214
        %v8319 = vpack.c.b16 %v8217, %v8215
        %v8320 = vpack.c.b16 %v8220, %v8218
        %v8321 = vpack.c.b16 %v8221, %v8219
        %v8322 = vpack.c.b16 %v8224, %v8222
        %v8323 = vpack.c.b16 %v8225, %v8223
        %v8324 = vpack.c.b16 %v8228, %v8226
        %v8325 = vpack.c.b16 %v8229, %v8227
        %v8326 = vpack.c.b16 %v8232, %v8230
        %v8327 = vpack.c.b16 %v8233, %v8231
        %v8328 = vpack.c.b16 %v8236, %v8234
        %v8329 = vpack.c.b16 %v8237, %v8235
        %v8330 = vpack.c.b16 %v8240, %v8238
        %v8331 = vpack.c.b16 %v8241, %v8239
        %v8332 = vpack.c.b16 %v8244, %v8242
        %v8333 = vpack.c.b16 %v8245, %v8243
        %v8334 = vpack.c.b16 %v8248, %v8246
        %v8335 = vpack.c.b16 %v8249, %v8247
        %v8336 = vpack.c.b16 %v8252, %v8250
        %v8337 = vpack.c.b16 %v8253, %v8251
        %v8338 = vpack.c.b16 %v8256, %v8254
        %v8339 = vpack.c.b16 %v8257, %v8255
        %v8340 = vpack.c.b16 %v8260, %v8258
        %v8341 = vpack.c.b16 %v8261, %v8259
        %v8342 = vpack.c.b16 %v8264, %v8262
        %v8343 = vpack.c.b16 %v8265, %v8263
        %v8344 = vpack.c.b16 %v8268, %v8266
        %v8345 = vpack.c.b16 %v8269, %v8267
        %v8346 = vpack.c.b16 %v8272, %v8270
        %v8347 = vpack.c.b16 %v8273, %v8271
        %v8348 = vpack.c.b16 %v8276, %v8274
        %v8349 = vpack.c.b16 %v8277, %v8275
        %v8350 = vpack.c.b16 %v8280, %v8278
        %v8351 = vpack.c.b16 %v8281, %v8279
        %v8352 = vpack.c.b16 %v8284, %v8282
        %v8353 = vpack.c.b16 %v8285, %v8283
        %v8354 = vpack.c.b16 %v8288, %v8286
        %v8355 = vpack.c.b16 %v8289, %v8287
        %v8356 = vpack.c.b16 %v8292, %v8290
        %v8357 = vpack.c.b16 %v8293, %v8291
        %8422 = vmatprep.subr.bf16.mxu0 %v8295
        %8423 = vmatpush1.bf16.msra.mxu0 %v8294
        %8424 = vmatprep.subr.bf16.mxu0 %v8297
        %8425 = vmatpush1.bf16.msra.mxu0 %v8296
        %8426 = vmatprep.subr.bf16.mxu0 %v8299
        %8427 = vmatpush1.bf16.msra.mxu0 %v8298
        %8428 = vmatprep.subr.bf16.mxu0 %v8301
        %8429 = vmatpush1.bf16.msra.mxu0 %v8300
        %8430 = vmatprep.subr.bf16.mxu0 %v8303
        %8431 = vmatpush1.bf16.msra.mxu0 %v8302
        %8432 = vmatprep.subr.bf16.mxu0 %v8305
        %8433 = vmatpush1.bf16.msra.mxu0 %v8304
        %8434 = vmatprep.subr.bf16.mxu0 %v8307
        %8435 = vmatpush1.bf16.msra.mxu0 %v8306
        %8436 = vmatprep.subr.bf16.mxu0 %v8309
        %8437 = vmatpush1.bf16.msra.mxu0 %v8308
        %8438 = vmatprep.subr.bf16.mxu0 %v8311
        %8439 = vmatpush1.bf16.msra.mxu0 %v8310
        %8440 = vmatprep.subr.bf16.mxu0 %v8313
        %8441 = vmatpush1.bf16.msra.mxu0 %v8312
        %8442 = vmatprep.subr.bf16.mxu0 %v8315
        %8443 = vmatpush1.bf16.msra.mxu0 %v8314
        %8444 = vmatprep.subr.bf16.mxu0 %v8317
        %8445 = vmatpush1.bf16.msra.mxu0 %v8316
        %8446 = vmatprep.subr.bf16.mxu0 %v8319
        %8447 = vmatpush1.bf16.msra.mxu0 %v8318
        %8448 = vmatprep.subr.bf16.mxu0 %v8321
        %8449 = vmatpush1.bf16.msra.mxu0 %v8320
        %8450 = vmatprep.subr.bf16.mxu0 %v8323
        %8451 = vmatpush1.bf16.msra.mxu0 %v8322
        %8452 = vmatprep.subr.bf16.mxu0 %v8325
        %8453 = vmatpush1.bf16.msra.mxu0 %v8324
        %8454 = vmatprep.mubr.bf16.mxu0 %v8023
        %8455 = vmatmul.mubr.bf16.gmra.mrb[0].mxu0 %v8022
        %v8456 = vpop.f32.mrb[0].mxu0
        %v8457 = vadd.f32 %v8095, %v8456
        %v8458 = vpop.f32.mrb[0].mxu0
        %v8459 = vadd.f32 %v8099, %v8458
        %v8460 = vpop.f32.mrb[0].mxu0
        %v8461 = vadd.f32 %v8095, %v8460
        %v8462 = vpop.f32.mrb[0].mxu0
        %v8463 = vadd.f32 %v8099, %v8462
        %8464 = vdwg.mxu0
        %8465 = vmatprep.subr.bf16.mxu0 %v8327
        %8466 = vmatpush1.bf16.msra.mxu0 %v8326
        %8467 = vmatprep.subr.bf16.mxu0 %v8329
        %8468 = vmatpush1.bf16.msra.mxu0 %v8328
        %8469 = vmatprep.subr.bf16.mxu0 %v8331
        %8470 = vmatpush1.bf16.msra.mxu0 %v8330
        %8471 = vmatprep.subr.bf16.mxu0 %v8333
        %8472 = vmatpush1.bf16.msra.mxu0 %v8332
        %8473 = vmatprep.subr.bf16.mxu0 %v8335
        %8474 = vmatpush1.bf16.msra.mxu0 %v8334
        %8475 = vmatprep.subr.bf16.mxu0 %v8337
        %8476 = vmatpush1.bf16.msra.mxu0 %v8336
        %8477 = vmatprep.subr.bf16.mxu0 %v8339
        %8478 = vmatpush1.bf16.msra.mxu0 %v8338
        %8479 = vmatprep.subr.bf16.mxu0 %v8341
        %8480 = vmatpush1.bf16.msra.mxu0 %v8340
        %8481 = vmatprep.subr.bf16.mxu0 %v8343
        %8482 = vmatpush1.bf16.msra.mxu0 %v8342
        %8483 = vmatprep.subr.bf16.mxu0 %v8345
        %8484 = vmatpush1.bf16.msra.mxu0 %v8344
        %8485 = vmatprep.subr.bf16.mxu0 %v8347
        %8486 = vmatpush1.bf16.msra.mxu0 %v8346
        %8487 = vmatprep.subr.bf16.mxu0 %v8349
        %8488 = vmatpush1.bf16.msra.mxu0 %v8348
        %8489 = vmatprep.subr.bf16.mxu0 %v8351
        %8490 = vmatpush1.bf16.msra.mxu0 %v8350
        %8491 = vmatprep.subr.bf16.mxu0 %v8353
        %8492 = vmatpush1.bf16.msra.mxu0 %v8352
        %8493 = vmatprep.subr.bf16.mxu0 %v8355
        %8494 = vmatpush1.bf16.msra.mxu0 %v8354
        %8495 = vmatprep.subr.bf16.mxu0 %v8357
        %8496 = vmatpush1.bf16.msra.mxu0 %v8356
        %8497 = vmatprep.mubr.bf16.mxu0 %v8025
        %8498 = vmatmul.mubr.bf16.gmra.mrb[0].mxu0 %v8024
        %v8499 = vpop.f32.mrb[0].mxu0
        %v8500 = vadd.f32 %v8457, %v8499
        %v8501 = vpop.f32.mrb[0].mxu0
        %v8502 = vadd.f32 %v8459, %v8501
        %v8503 = vpop.f32.mrb[0].mxu0
        %v8504 = vadd.f32 %v8461, %v8503
        %v8505 = vpop.f32.mrb[0].mxu0
        %v8506 = vadd.f32 %v8463, %v8505
        %8507 = vdwg.mxu0
        %v8508 = vmax.f32 %v8500, 0.0
        %v8509 = vmax.f32 %v8502, 0.0
        %v8510 = vmax.f32 %v8504, 0.0
        %v8511 = vmax.f32 %v8506, 0.0
        %v8512 = vpack.c.bf16 %v8510, %v8508
        %v8513 = vpack.c.bf16 %v8511, %v8509
        %v8514 = vld [vmem:[%s920] sm:$0xff]
        %v8515 = vld [vmem:[%s920 + $0x8] sm:$0xff]
        %v8516 = vld [vmem:[%s920 + $0x10] sm:$0xff]
        %v8517 = vld [vmem:[%s920 + $0x18] sm:$0xff]
        %v8518 = vld [vmem:[%s920 + $0x20] sm:$0xff]
        %v8519 = vld [vmem:[%s920 + $0x28] sm:$0xff]
        %v8520 = vld [vmem:[%s920 + $0x30] sm:$0xff]
        %v8521 = vld [vmem:[%s920 + $0x38] sm:$0xff]
        %v8522 = vld [vmem:[%s920 + $0x40] sm:$0xff]
        %v8523 = vld [vmem:[%s920 + $0x48] sm:$0xff]
        %v8524 = vld [vmem:[%s920 + $0x50] sm:$0xff]
        %v8525 = vld [vmem:[%s920 + $0x58] sm:$0xff]
        %v8526 = vld [vmem:[%s920 + $0x60] sm:$0xff]
        %v8527 = vld [vmem:[%s920 + $0x68] sm:$0xff]
        %v8528 = vld [vmem:[%s920 + $0x70] sm:$0xff]
        %v8529 = vld [vmem:[%s920 + $0x78] sm:$0xff]
        %v8530 = vld [vmem:[%s920 + $0x80] sm:$0xff]
        %v8531 = vld [vmem:[%s920 + $0x88] sm:$0xff]
        %v8532 = vld [vmem:[%s920 + $0x90] sm:$0xff]
        %v8533 = vld [vmem:[%s920 + $0x98] sm:$0xff]
        %v8534 = vld [vmem:[%s920 + $0xa0] sm:$0xff]
        %v8535 = vld [vmem:[%s920 + $0xa8] sm:$0xff]
        %v8536 = vld [vmem:[%s920 + $0xb0] sm:$0xff]
        %v8537 = vld [vmem:[%s920 + $0xb8] sm:$0xff]
        %v8538 = vld [vmem:[%s920 + $0xc0] sm:$0xff]
        %v8539 = vld [vmem:[%s920 + $0xc8] sm:$0xff]
        %v8540 = vld [vmem:[%s920 + $0xd0] sm:$0xff]
        %v8541 = vld [vmem:[%s920 + $0xd8] sm:$0xff]
        %v8542 = vld [vmem:[%s920 + $0xe0] sm:$0xff]
        %v8543 = vld [vmem:[%s920 + $0xe8] sm:$0xff]
        %v8544 = vld [vmem:[%s920 + $0xf0] sm:$0xff]
        %v8545 = vld [vmem:[%s920 + $0xf8] sm:$0xff]
        %v8546 = vld [vmem:[%s920 + $0x100] sm:$0xff]
        %v8547 = vld [vmem:[%s920 + $0x108] sm:$0xff]
        %v8548 = vld [vmem:[%s920 + $0x110] sm:$0xff]
        %v8549 = vld [vmem:[%s920 + $0x118] sm:$0xff]
        %v8550 = vld [vmem:[%s920 + $0x120] sm:$0xff]
        %v8551 = vld [vmem:[%s920 + $0x128] sm:$0xff]
        %v8552 = vld [vmem:[%s920 + $0x130] sm:$0xff]
        %v8553 = vld [vmem:[%s920 + $0x138] sm:$0xff]
        %v8554 = vld [vmem:[%s920 + $0x140] sm:$0xff]
        %v8555 = vld [vmem:[%s920 + $0x148] sm:$0xff]
        %v8556 = vld [vmem:[%s920 + $0x150] sm:$0xff]
        %v8557 = vld [vmem:[%s920 + $0x158] sm:$0xff]
        %v8558 = vld [vmem:[%s920 + $0x160] sm:$0xff]
        %v8559 = vld [vmem:[%s920 + $0x168] sm:$0xff]
        %v8560 = vld [vmem:[%s920 + $0x170] sm:$0xff]
        %v8561 = vld [vmem:[%s920 + $0x178] sm:$0xff]
        %v8562 = vld [vmem:[%s920 + $0x180] sm:$0xff]
        %v8563 = vld [vmem:[%s920 + $0x188] sm:$0xff]
        %v8564 = vld [vmem:[%s920 + $0x190] sm:$0xff]
        %v8565 = vld [vmem:[%s920 + $0x198] sm:$0xff]
        %v8566 = vld [vmem:[%s920 + $0x1a0] sm:$0xff]
        %v8567 = vld [vmem:[%s920 + $0x1a8] sm:$0xff]
        %v8568 = vld [vmem:[%s920 + $0x1b0] sm:$0xff]
        %v8569 = vld [vmem:[%s920 + $0x1b8] sm:$0xff]
        %v8570 = vld [vmem:[%s920 + $0x1c0] sm:$0xff]
        %v8571 = vld [vmem:[%s920 + $0x1c8] sm:$0xff]
        %v8572 = vld [vmem:[%s920 + $0x1d0] sm:$0xff]
        %v8573 = vld [vmem:[%s920 + $0x1d8] sm:$0xff]
        %v8574 = vld [vmem:[%s920 + $0x1e0] sm:$0xff]
        %v8575 = vld [vmem:[%s920 + $0x1e8] sm:$0xff]
        %v8576 = vld [vmem:[%s920 + $0x1f0] sm:$0xff]
        %v8577 = vld [vmem:[%s920 + $0x1f8] sm:$0xff]
        %v8578 = vld [vmem:[%s929] sm:$0xf]
        %v8580 = vlaneseq
        %v8581 = vshrl.u32 %v8580, 7
        %v8582 = vsub.s32 0, %v8581
        %v8583 = vrot.slane %v8578, %v8582
        %v8584 = vlaneseq
        %v8585 = vshrl.u32 %v8584, 7
        %v8586 = vsub.s32 1, %v8585
        %v8587 = vrot.slane %v8578, %v8586
        %v8588 = vlaneseq
        %v8589 = vshrl.u32 %v8588, 7
        %v8590 = vsub.s32 2, %v8589
        %v8591 = vrot.slane %v8578, %v8590
        %v8592 = vlaneseq
        %v8593 = vshrl.u32 %v8592, 7
        %v8594 = vsub.s32 3, %v8593
        %v8595 = vrot.slane %v8578, %v8594
        %v8664 = vunpack.c.l.b16 %v8514
        %v8665 = vunpack.c.h.b16 %v8514
        %v8666 = vunpack.c.l.b16 %v8515
        %v8667 = vunpack.c.h.b16 %v8515
        %v8668 = vunpack.c.l.b16 %v8516
        %v8669 = vunpack.c.h.b16 %v8516
        %v8670 = vunpack.c.l.b16 %v8517
        %v8671 = vunpack.c.h.b16 %v8517
        %v8672 = vunpack.c.l.b16 %v8518
        %v8673 = vunpack.c.h.b16 %v8518
        %v8674 = vunpack.c.l.b16 %v8519
        %v8675 = vunpack.c.h.b16 %v8519
        %v8676 = vunpack.c.l.b16 %v8520
        %v8677 = vunpack.c.h.b16 %v8520
        %v8678 = vunpack.c.l.b16 %v8521
        %v8679 = vunpack.c.h.b16 %v8521
        %v8680 = vunpack.c.l.b16 %v8522
        %v8681 = vunpack.c.h.b16 %v8522
        %v8682 = vunpack.c.l.b16 %v8523
        %v8683 = vunpack.c.h.b16 %v8523
        %v8684 = vunpack.c.l.b16 %v8524
        %v8685 = vunpack.c.h.b16 %v8524
        %v8686 = vunpack.c.l.b16 %v8525
        %v8687 = vunpack.c.h.b16 %v8525
        %v8688 = vunpack.c.l.b16 %v8526
        %v8689 = vunpack.c.h.b16 %v8526
        %v8690 = vunpack.c.l.b16 %v8527
        %v8691 = vunpack.c.h.b16 %v8527
        %v8692 = vunpack.c.l.b16 %v8528
        %v8693 = vunpack.c.h.b16 %v8528
        %v8694 = vunpack.c.l.b16 %v8529
        %v8695 = vunpack.c.h.b16 %v8529
        %v8696 = vunpack.c.l.b16 %v8530
        %v8697 = vunpack.c.h.b16 %v8530
        %v8698 = vunpack.c.l.b16 %v8531
        %v8699 = vunpack.c.h.b16 %v8531
        %v8700 = vunpack.c.l.b16 %v8532
        %v8701 = vunpack.c.h.b16 %v8532
        %v8702 = vunpack.c.l.b16 %v8533
        %v8703 = vunpack.c.h.b16 %v8533
        %v8704 = vunpack.c.l.b16 %v8534
        %v8705 = vunpack.c.h.b16 %v8534
        %v8706 = vunpack.c.l.b16 %v8535
        %v8707 = vunpack.c.h.b16 %v8535
        %v8708 = vunpack.c.l.b16 %v8536
        %v8709 = vunpack.c.h.b16 %v8536
        %v8710 = vunpack.c.l.b16 %v8537
        %v8711 = vunpack.c.h.b16 %v8537
        %v8712 = vunpack.c.l.b16 %v8538
        %v8713 = vunpack.c.h.b16 %v8538
        %v8714 = vunpack.c.l.b16 %v8539
        %v8715 = vunpack.c.h.b16 %v8539
        %v8716 = vunpack.c.l.b16 %v8540
        %v8717 = vunpack.c.h.b16 %v8540
        %v8718 = vunpack.c.l.b16 %v8541
        %v8719 = vunpack.c.h.b16 %v8541
        %v8720 = vunpack.c.l.b16 %v8542
        %v8721 = vunpack.c.h.b16 %v8542
        %v8722 = vunpack.c.l.b16 %v8543
        %v8723 = vunpack.c.h.b16 %v8543
        %v8724 = vunpack.c.l.b16 %v8544
        %v8725 = vunpack.c.h.b16 %v8544
        %v8726 = vunpack.c.l.b16 %v8545
        %v8727 = vunpack.c.h.b16 %v8545
        %v8728 = vunpack.c.l.b16 %v8546
        %v8729 = vunpack.c.h.b16 %v8546
        %v8730 = vunpack.c.l.b16 %v8547
        %v8731 = vunpack.c.h.b16 %v8547
        %v8732 = vunpack.c.l.b16 %v8548
        %v8733 = vunpack.c.h.b16 %v8548
        %v8734 = vunpack.c.l.b16 %v8549
        %v8735 = vunpack.c.h.b16 %v8549
        %v8736 = vunpack.c.l.b16 %v8550
        %v8737 = vunpack.c.h.b16 %v8550
        %v8738 = vunpack.c.l.b16 %v8551
        %v8739 = vunpack.c.h.b16 %v8551
        %v8740 = vunpack.c.l.b16 %v8552
        %v8741 = vunpack.c.h.b16 %v8552
        %v8742 = vunpack.c.l.b16 %v8553
        %v8743 = vunpack.c.h.b16 %v8553
        %v8744 = vunpack.c.l.b16 %v8554
        %v8745 = vunpack.c.h.b16 %v8554
        %v8746 = vunpack.c.l.b16 %v8555
        %v8747 = vunpack.c.h.b16 %v8555
        %v8748 = vunpack.c.l.b16 %v8556
        %v8749 = vunpack.c.h.b16 %v8556
        %v8750 = vunpack.c.l.b16 %v8557
        %v8751 = vunpack.c.h.b16 %v8557
        %v8752 = vunpack.c.l.b16 %v8558
        %v8753 = vunpack.c.h.b16 %v8558
        %v8754 = vunpack.c.l.b16 %v8559
        %v8755 = vunpack.c.h.b16 %v8559
        %v8756 = vunpack.c.l.b16 %v8560
        %v8757 = vunpack.c.h.b16 %v8560
        %v8758 = vunpack.c.l.b16 %v8561
        %v8759 = vunpack.c.h.b16 %v8561
        %v8760 = vunpack.c.l.b16 %v8562
        %v8761 = vunpack.c.h.b16 %v8562
        %v8762 = vunpack.c.l.b16 %v8563
        %v8763 = vunpack.c.h.b16 %v8563
        %v8764 = vunpack.c.l.b16 %v8564
        %v8765 = vunpack.c.h.b16 %v8564
        %v8766 = vunpack.c.l.b16 %v8565
        %v8767 = vunpack.c.h.b16 %v8565
        %v8768 = vunpack.c.l.b16 %v8566
        %v8769 = vunpack.c.h.b16 %v8566
        %v8770 = vunpack.c.l.b16 %v8567
        %v8771 = vunpack.c.h.b16 %v8567
        %v8772 = vunpack.c.l.b16 %v8568
        %v8773 = vunpack.c.h.b16 %v8568
        %v8774 = vunpack.c.l.b16 %v8569
        %v8775 = vunpack.c.h.b16 %v8569
        %v8776 = vunpack.c.l.b16 %v8570
        %v8777 = vunpack.c.h.b16 %v8570
        %v8778 = vunpack.c.l.b16 %v8571
        %v8779 = vunpack.c.h.b16 %v8571
        %v8780 = vunpack.c.l.b16 %v8572
        %v8781 = vunpack.c.h.b16 %v8572
        %v8782 = vunpack.c.l.b16 %v8573
        %v8783 = vunpack.c.h.b16 %v8573
        %v8784 = vunpack.c.l.b16 %v8574
        %v8785 = vunpack.c.h.b16 %v8574
        %v8786 = vunpack.c.l.b16 %v8575
        %v8787 = vunpack.c.h.b16 %v8575
        %v8788 = vunpack.c.l.b16 %v8576
        %v8789 = vunpack.c.h.b16 %v8576
        %v8790 = vunpack.c.l.b16 %v8577
        %v8791 = vunpack.c.h.b16 %v8577
        %v8792 = vpack.c.b16 %v8668, %v8664
        %v8793 = vpack.c.b16 %v8669, %v8665
        %v8794 = vpack.c.b16 %v8670, %v8666
        %v8795 = vpack.c.b16 %v8671, %v8667
        %v8796 = vpack.c.b16 %v8676, %v8672
        %v8797 = vpack.c.b16 %v8677, %v8673
        %v8798 = vpack.c.b16 %v8678, %v8674
        %v8799 = vpack.c.b16 %v8679, %v8675
        %v8800 = vpack.c.b16 %v8684, %v8680
        %v8801 = vpack.c.b16 %v8685, %v8681
        %v8802 = vpack.c.b16 %v8686, %v8682
        %v8803 = vpack.c.b16 %v8687, %v8683
        %v8804 = vpack.c.b16 %v8692, %v8688
        %v8805 = vpack.c.b16 %v8693, %v8689
        %v8806 = vpack.c.b16 %v8694, %v8690
        %v8807 = vpack.c.b16 %v8695, %v8691
        %v8808 = vpack.c.b16 %v8700, %v8696
        %v8809 = vpack.c.b16 %v8701, %v8697
        %v8810 = vpack.c.b16 %v8702, %v8698
        %v8811 = vpack.c.b16 %v8703, %v8699
        %v8812 = vpack.c.b16 %v8708, %v8704
        %v8813 = vpack.c.b16 %v8709, %v8705
        %v8814 = vpack.c.b16 %v8710, %v8706
        %v8815 = vpack.c.b16 %v8711, %v8707
        %v8816 = vpack.c.b16 %v8716, %v8712
        %v8817 = vpack.c.b16 %v8717, %v8713
        %v8818 = vpack.c.b16 %v8718, %v8714
        %v8819 = vpack.c.b16 %v8719, %v8715
        %v8820 = vpack.c.b16 %v8724, %v8720
        %v8821 = vpack.c.b16 %v8725, %v8721
        %v8822 = vpack.c.b16 %v8726, %v8722
        %v8823 = vpack.c.b16 %v8727, %v8723
        %v8824 = vpack.c.b16 %v8732, %v8728
        %v8825 = vpack.c.b16 %v8733, %v8729
        %v8826 = vpack.c.b16 %v8734, %v8730
        %v8827 = vpack.c.b16 %v8735, %v8731
        %v8828 = vpack.c.b16 %v8740, %v8736
        %v8829 = vpack.c.b16 %v8741, %v8737
        %v8830 = vpack.c.b16 %v8742, %v8738
        %v8831 = vpack.c.b16 %v8743, %v8739
        %v8832 = vpack.c.b16 %v8748, %v8744
        %v8833 = vpack.c.b16 %v8749, %v8745
        %v8834 = vpack.c.b16 %v8750, %v8746
        %v8835 = vpack.c.b16 %v8751, %v8747
        %v8836 = vpack.c.b16 %v8756, %v8752
        %v8837 = vpack.c.b16 %v8757, %v8753
        %v8838 = vpack.c.b16 %v8758, %v8754
        %v8839 = vpack.c.b16 %v8759, %v8755
        %v8840 = vpack.c.b16 %v8764, %v8760
        %v8841 = vpack.c.b16 %v8765, %v8761
        %v8842 = vpack.c.b16 %v8766, %v8762
        %v8843 = vpack.c.b16 %v8767, %v8763
        %v8844 = vpack.c.b16 %v8772, %v8768
        %v8845 = vpack.c.b16 %v8773, %v8769
        %v8846 = vpack.c.b16 %v8774, %v8770
        %v8847 = vpack.c.b16 %v8775, %v8771
        %v8848 = vpack.c.b16 %v8780, %v8776
        %v8849 = vpack.c.b16 %v8781, %v8777
        %v8850 = vpack.c.b16 %v8782, %v8778
        %v8851 = vpack.c.b16 %v8783, %v8779
        %v8852 = vpack.c.b16 %v8788, %v8784
        %v8853 = vpack.c.b16 %v8789, %v8785
        %v8854 = vpack.c.b16 %v8790, %v8786
        %v8855 = vpack.c.b16 %v8791, %v8787
        %8920 = vmatprep.subr.bf16.mxu0 %v8793
        %8921 = vmatpush1.bf16.msra.mxu0 %v8792
        %8922 = vmatprep.subr.bf16.mxu0 %v8797
        %8923 = vmatpush1.bf16.msra.mxu0 %v8796
        %8924 = vmatprep.subr.bf16.mxu0 %v8801
        %8925 = vmatpush1.bf16.msra.mxu0 %v8800
        %8926 = vmatprep.subr.bf16.mxu0 %v8805
        %8927 = vmatpush1.bf16.msra.mxu0 %v8804
        %8928 = vmatprep.subr.bf16.mxu0 %v8809
        %8929 = vmatpush1.bf16.msra.mxu0 %v8808
        %8930 = vmatprep.subr.bf16.mxu0 %v8813
        %8931 = vmatpush1.bf16.msra.mxu0 %v8812
        %8932 = vmatprep.subr.bf16.mxu0 %v8817
        %8933 = vmatpush1.bf16.msra.mxu0 %v8816
        %8934 = vmatprep.subr.bf16.mxu0 %v8821
        %8935 = vmatpush1.bf16.msra.mxu0 %v8820
        %8936 = vmatprep.subr.bf16.mxu0 %v8825
        %8937 = vmatpush1.bf16.msra.mxu0 %v8824
        %8938 = vmatprep.subr.bf16.mxu0 %v8829
        %8939 = vmatpush1.bf16.msra.mxu0 %v8828
        %8940 = vmatprep.subr.bf16.mxu0 %v8833
        %8941 = vmatpush1.bf16.msra.mxu0 %v8832
        %8942 = vmatprep.subr.bf16.mxu0 %v8837
        %8943 = vmatpush1.bf16.msra.mxu0 %v8836
        %8944 = vmatprep.subr.bf16.mxu0 %v8841
        %8945 = vmatpush1.bf16.msra.mxu0 %v8840
        %8946 = vmatprep.subr.bf16.mxu0 %v8845
        %8947 = vmatpush1.bf16.msra.mxu0 %v8844
        %8948 = vmatprep.subr.bf16.mxu0 %v8849
        %8949 = vmatpush1.bf16.msra.mxu0 %v8848
        %8950 = vmatprep.subr.bf16.mxu0 %v8853
        %8951 = vmatpush1.bf16.msra.mxu0 %v8852
        %8952 = vmatprep.mubr.bf16.mxu0 %v8513
        %8953 = vmatmul.mubr.bf16.gmra.mrb[0].mxu0 %v8512
        %v8954 = vpop.f32.mrb[0].mxu0
        %v8955 = vadd.f32 %v8583, %v8954
        %v8956 = vpop.f32.mrb[0].mxu0
        %v8957 = vadd.f32 %v8587, %v8956
        %v8958 = vpop.f32.mrb[0].mxu0
        %v8959 = vadd.f32 %v8583, %v8958
        %v8960 = vpop.f32.mrb[0].mxu0
        %v8961 = vadd.f32 %v8587, %v8960
        %8962 = vdwg.mxu0
        %8963 = vmatprep.subr.bf16.mxu0 %v8795
        %8964 = vmatpush1.bf16.msra.mxu0 %v8794
        %8965 = vmatprep.subr.bf16.mxu0 %v8799
        %8966 = vmatpush1.bf16.msra.mxu0 %v8798
        %8967 = vmatprep.subr.bf16.mxu0 %v8803
        %8968 = vmatpush1.bf16.msra.mxu0 %v8802
        %8969 = vmatprep.subr.bf16.mxu0 %v8807
        %8970 = vmatpush1.bf16.msra.mxu0 %v8806
        %8971 = vmatprep.subr.bf16.mxu0 %v8811
        %8972 = vmatpush1.bf16.msra.mxu0 %v8810
        %8973 = vmatprep.subr.bf16.mxu0 %v8815
        %8974 = vmatpush1.bf16.msra.mxu0 %v8814
        %8975 = vmatprep.subr.bf16.mxu0 %v8819
        %8976 = vmatpush1.bf16.msra.mxu0 %v8818
        %8977 = vmatprep.subr.bf16.mxu0 %v8823
        %8978 = vmatpush1.bf16.msra.mxu0 %v8822
        %8979 = vmatprep.subr.bf16.mxu0 %v8827
        %8980 = vmatpush1.bf16.msra.mxu0 %v8826
        %8981 = vmatprep.subr.bf16.mxu0 %v8831
        %8982 = vmatpush1.bf16.msra.mxu0 %v8830
        %8983 = vmatprep.subr.bf16.mxu0 %v8835
        %8984 = vmatpush1.bf16.msra.mxu0 %v8834
        %8985 = vmatprep.subr.bf16.mxu0 %v8839
        %8986 = vmatpush1.bf16.msra.mxu0 %v8838
        %8987 = vmatprep.subr.bf16.mxu0 %v8843
        %8988 = vmatpush1.bf16.msra.mxu0 %v8842
        %8989 = vmatprep.subr.bf16.mxu0 %v8847
        %8990 = vmatpush1.bf16.msra.mxu0 %v8846
        %8991 = vmatprep.subr.bf16.mxu0 %v8851
        %8992 = vmatpush1.bf16.msra.mxu0 %v8850
        %8993 = vmatprep.subr.bf16.mxu0 %v8855
        %8994 = vmatpush1.bf16.msra.mxu0 %v8854
        %8995 = vmatprep.mubr.bf16.mxu0 %v8513
        %8996 = vmatmul.mubr.bf16.gmra.mrb[0].mxu0 %v8512
        %v8997 = vpop.f32.mrb[0].mxu0
        %v8998 = vadd.f32 %v8591, %v8997
        %v8999 = vpop.f32.mrb[0].mxu0
        %v9000 = vadd.f32 %v8595, %v8999
        %v9001 = vpop.f32.mrb[0].mxu0
        %v9002 = vadd.f32 %v8591, %v9001
        %v9003 = vpop.f32.mrb[0].mxu0
        %v9004 = vadd.f32 %v8595, %v9003
        %9005 = vdwg.mxu0
        %v9006 = vadd.f32 %v8014, %v8955
        %v9007 = vadd.f32 %v8015, %v8957
        %v9008 = vadd.f32 %v8016, %v8998
        %v9009 = vadd.f32 %v8017, %v9000
        %v9010 = vadd.f32 %v8018, %v8959
        %v9011 = vadd.f32 %v8019, %v8961
        %v9012 = vadd.f32 %v8020, %v9002
        %v9013 = vadd.f32 %v8021, %v9004
        %v9014 = vld [vmem:[%s938] sm:$0xf]
        %v9015 = vld [vmem:[%s947] sm:$0xf]
        %v9016 = vadd.f32 %v9006, %v9007
        %v9017 = vadd.f32 %v9016, %v9008
        %v9018 = vadd.f32 %v9017, %v9009
        %9019 = vadd.xlane.f32.xlu0 %v9018
        %v9020 = vpop.xlane.xlu0 %9019
        %v9021 = vadd.f32 %v9010, %v9011
        %v9022 = vadd.f32 %v9021, %v9012
        %v9023 = vadd.f32 %v9022, %v9013
        %9024 = vadd.xlane.f32.xlu0 %v9023
        %v9025 = vpop.xlane.xlu0 %9024
        %v9026 = vmul.f32 %v9020, %v7921
        %v9027 = vmul.f32 %v9025, %v7921
        %v9028 = vsub.f32 %v9006, %v9026
        %v9029 = vsub.f32 %v9007, %v9026
        %v9030 = vsub.f32 %v9008, %v9026
        %v9031 = vsub.f32 %v9009, %v9026
        %v9032 = vsub.f32 %v9010, %v9027
        %v9033 = vsub.f32 %v9011, %v9027
        %v9034 = vsub.f32 %v9012, %v9027
        %v9035 = vsub.f32 %v9013, %v9027
        %v9036 = vmul.f32 %v9028, %v9028
        %v9037 = vmul.f32 %v9029, %v9029
        %v9038 = vmul.f32 %v9030, %v9030
        %v9039 = vmul.f32 %v9031, %v9031
        %v9040 = vmul.f32 %v9032, %v9032
        %v9041 = vmul.f32 %v9033, %v9033
        %v9042 = vmul.f32 %v9034, %v9034
        %v9043 = vmul.f32 %v9035, %v9035
        %v9044 = vadd.f32 %v9036, %v9037
        %v9045 = vadd.f32 %v9044, %v9038
        %v9046 = vadd.f32 %v9045, %v9039
        %9047 = vadd.xlane.f32.xlu0 %v9046
        %v9048 = vpop.xlane.xlu0 %9047
        %v9049 = vadd.f32 %v9040, %v9041
        %v9050 = vadd.f32 %v9049, %v9042
        %v9051 = vadd.f32 %v9050, %v9043
        %9052 = vadd.xlane.f32.xlu0 %v9051
        %v9053 = vpop.xlane.xlu0 %9052
        %v9054 = vmul.f32 %v9048, %v7921
        %v9055 = vmul.f32 %v9053, %v7921
        %v9056 = vadd.f32 %v9054, 1e-05
        %v9057 = vadd.f32 %v9055, 1e-05
        %v9058 = vrsqrt.pop %v9056
        %v9059 = vrsqrt.pop %v9057
        %v9060 = vmul.f32 %v9028, %v9058
        %v9061 = vmul.f32 %v9029, %v9058
        %v9062 = vmul.f32 %v9030, %v9058
        %v9063 = vmul.f32 %v9031, %v9058
        %v9064 = vmul.f32 %v9032, %v9059
        %v9065 = vmul.f32 %v9033, %v9059
        %v9066 = vmul.f32 %v9034, %v9059
        %v9067 = vmul.f32 %v9035, %v9059
        %v9069 = vlaneseq
        %v9070 = vshrl.u32 %v9069, 7
        %v9071 = vsub.s32 0, %v9070
        %v9072 = vrot.slane %v9014, %v9071
        %v9073 = vlaneseq
        %v9074 = vshrl.u32 %v9073, 7
        %v9075 = vsub.s32 1, %v9074
        %v9076 = vrot.slane %v9014, %v9075
        %v9077 = vlaneseq
        %v9078 = vshrl.u32 %v9077, 7
        %v9079 = vsub.s32 2, %v9078
        %v9080 = vrot.slane %v9014, %v9079
        %v9081 = vlaneseq
        %v9082 = vshrl.u32 %v9081, 7
        %v9083 = vsub.s32 3, %v9082
        %v9084 = vrot.slane %v9014, %v9083
        %v9089 = vmul.f32 %v9060, %v9072
        %v9090 = vmul.f32 %v9061, %v9076
        %v9091 = vmul.f32 %v9062, %v9080
        %v9092 = vmul.f32 %v9063, %v9084
        %v9093 = vmul.f32 %v9064, %v9072
        %v9094 = vmul.f32 %v9065, %v9076
        %v9095 = vmul.f32 %v9066, %v9080
        %v9096 = vmul.f32 %v9067, %v9084
        %v9098 = vlaneseq
        %v9099 = vshrl.u32 %v9098, 7
        %v9100 = vsub.s32 0, %v9099
        %v9101 = vrot.slane %v9015, %v9100
        %v9102 = vlaneseq
        %v9103 = vshrl.u32 %v9102, 7
        %v9104 = vsub.s32 1, %v9103
        %v9105 = vrot.slane %v9015, %v9104
        %v9106 = vlaneseq
        %v9107 = vshrl.u32 %v9106, 7
        %v9108 = vsub.s32 2, %v9107
        %v9109 = vrot.slane %v9015, %v9108
        %v9110 = vlaneseq
        %v9111 = vshrl.u32 %v9110, 7
        %v9112 = vsub.s32 3, %v9111
        %v9113 = vrot.slane %v9015, %v9112
        %v9118 = vadd.f32 %v9089, %v9101
        %v9119 = vadd.f32 %v9090, %v9105
        %v9120 = vadd.f32 %v9091, %v9109
        %v9121 = vadd.f32 %v9092, %v9113
        %v9122 = vadd.f32 %v9093, %v9101
        %v9123 = vadd.f32 %v9094, %v9105
        %v9124 = vadd.f32 %v9095, %v9109
        %v9125 = vadd.f32 %v9096, %v9113
        %9126 = vst [vmem:[#allocation2] sm:$0xff] %v9118
        %9127 = vst [vmem:[#allocation2 + $0x8] sm:$0xff] %v9119
        %9128 = vst [vmem:[#allocation2 + $0x10] sm:$0xff] %v9120
        %9129 = vst [vmem:[#allocation2 + $0x18] sm:$0xff] %v9121
        %9130 = vst [vmem:[#allocation2 + $0x20] sm:$0xff] %v9122
        %9131 = vst [vmem:[#allocation2 + $0x28] sm:$0xff] %v9123
        %9132 = vst [vmem:[#allocation2 + $0x30] sm:$0xff] %v9124
        %9133 = vst [vmem:[#allocation2 + $0x38] sm:$0xff] %v9125
        %p9134 = scmp.eq.s32.totalorder %s34, 1
        // Predicated region
        $region169: #{tpu_custom_call.1} parent=91 // pred_check
          %p9135 = pneg %p9134
        $region170: #{tpu_custom_call.1} parent=91 // pred_check_branch
          %9137 = sbr.rel (%p9135) target = $region172
        $region171: #{tpu_custom_call.1} parent=91 // pred_region
          %9138 = vst [vmem:[#allocation26] sm:$0xff] %v9118
          %9139 = vst [vmem:[#allocation26 + $0x8] sm:$0xff] %v9119
          %9140 = vst [vmem:[#allocation26 + $0x10] sm:$0xff] %v9120
          %9141 = vst [vmem:[#allocation26 + $0x18] sm:$0xff] %v9121
          %9142 = vst [vmem:[#allocation26 + $0x20] sm:$0xff] %v9122
          %9143 = vst [vmem:[#allocation26 + $0x28] sm:$0xff] %v9123
          %9144 = vst [vmem:[#allocation26 + $0x30] sm:$0xff] %v9124
          %9145 = vst [vmem:[#allocation26 + $0x38] sm:$0xff] %v9125
        $region172: #{tpu_custom_call.1} parent=91 // pred_fallthru
          _
        // Predicated region
        $region173: #{tpu_custom_call.1} parent=91 // pred_check
          %p9146 = pneg %p485
        $region174: #{tpu_custom_call.1} parent=91 // pred_check_branch
          %9148 = sbr.rel (%p9146) target = $region176
        $region175: #{tpu_custom_call.1} parent=91 // pred_region
          %s9150 = ssub.s32 1024, 1024
          %9151 = vsyncadd [#allocation5], %s9150
          %s9152 = sshll.u32 [#allocation26], 4
          %s9153 = int_to_ptr.vmem [resolvable:$true] %s9152
          %9158 = dma.vmem_to_hbm [thread:$0]  %s9153, 1024, %s18, [#allocation5], 512, 512, 32
        $region176: #{tpu_custom_call.1} parent=91 // pred_fallthru
          _
        // Predicated region
        $region177: #{tpu_custom_call.1} parent=91 // pred_check
          %p9159 = pneg %p485
        $region178: #{tpu_custom_call.1} parent=91 // pred_check_branch
          %9161 = sbr.rel (%p9159) target = $region180
        $region179: #{tpu_custom_call.1} parent=91 // pred_region
          %9162 = dma.done [#allocation5], 1024
        $region180: #{tpu_custom_call.1} parent=91 // pred_fallthru
          _
      $region92: #{tpu_custom_call.1} parent=5 // pred_fallthru
        _
      %p9163 = scmp.le.s32.totalorder 2, %s29
      // Predicated region
      $region181: #{tpu_custom_call.1} parent=5 // pred_check
        %p9164 = pneg %p9163
      $region182: #{tpu_custom_call.1} parent=5 // pred_check_branch
        %9166 = sbr.rel (%p9164) target = $region184
      $region183: #{tpu_custom_call.1} parent=5 // pred_region
        %s9167 = ssub.s32 %s29, 2
      $region184: #{tpu_custom_call.1} parent=5 // pred_fallthru
        _
    $region6: #{tpu_custom_call.1} parent=1 // loop_footer
      %s33 = sadd.s32 1, %s29
    $region7: #{tpu_custom_call.1} parent=1 // loop_footer_branch
      %28 = sbr.rel target = $region3
    $region8: #{tpu_custom_call.1} parent=1 // loop_exit
      _
    %9168 = vsyncpa [#allocation4], 1
    %s9169 = scalar_lea.sflag [#allocation4], 1
    %9170 = vsyncpa %s9169, 1
    %9171 = vsyncpa [#allocation7], 1
    %9172 = vsyncpa [#allocation10], 1
    %9173 = vsyncpa [#allocation13], 1
    %9174 = vsyncpa [#allocation5], 1
    %s9175 = scalar_lea.sflag [#allocation5], 1
    %9176 = vsyncpa %s9175, 1

</llo_original>
